<compile_context>
chip_gen: v5e
topology: v5e:2x2
jax: 0.10.0
libtpu: 0.0.40
codegen_flags: <defaults>
</compile_context>

<pallas_src>
import functools
import math

import jax
import jax.numpy as jnp
from jax import lax
from jax.experimental import pallas as pl
from jax.experimental.pallas import tpu as pltpu

_VMEM = pl.BlockSpec(memory_space=pltpu.MemorySpace.VMEM)
_HIGHEST = lax.Precision.HIGHEST


# ----------------------------------------------------------------------------
# Fused Pallas kernel: all LSTM layers (both directions) + Linear head.
# ----------------------------------------------------------------------------
def _fused_lstm_fc_kernel(
    proj0_ref,   # (T*BP, 8*HP) f32  layer-0 direction-preselected input projection
    whh_ref,     # (L, 2*HP, 8*HP) bf16 recurrent weights (block structure)
    wa_ref,      # (max(L-1,1), 2*HP, 8*HP) f32 hoisted input weights, as-computed order
    wb_ref,      # (max(L-1,1), 2*HP, 8*HP) f32 hoisted input weights, time-reversed order
    bih_ref,     # (max(L-1,1), 1, 8*HP) f32    combined biases for layers >= 1
    fcw_ref,     # (L, 2*HP, 3) f32             fc weight per-layer blocks (padded rows zero)
    fcb_ref,     # (1, 3) f32
    out_ref,     # (BP, 3) f32
    proj_scr,    # scratch (T*BP, 8*HP) f32     per-layer hoisted input projection
    *, T, BP, HP, L,
):
    H2 = 2 * HP  # one [gate_fwd|gate_bwd] block = H2 lanes = multiple of 128

    finals = []
    h_list = []                                   # previous layer's per-step h (registers)
    for l in range(L):                            # static, fully unrolled
        whh = whh_ref[l]                          # (2*HP, 8*HP) bf16
        if l == 0:
            src = proj0_ref
        else:
            # Hoisted, direction-preselected input projection for this layer:
            # two big MXU matmuls over all timesteps, fully off the serial chain.
            hcat = jnp.concatenate(h_list, axis=0)          # (T*BP, 2*HP)
            hcat_rev = jnp.concatenate(h_list[::-1], axis=0)
            proj_scr[...] = (
                jnp.dot(hcat, wa_ref[l - 1], precision=_HIGHEST,
                        preferred_element_type=jnp.float32)
                + jnp.dot(hcat_rev, wb_ref[l - 1], precision=_HIGHEST,
                          preferred_element_type=jnp.float32)
                + bih_ref[l - 1]
            )
            src = proj_scr

        h = jnp.zeros((BP, H2), jnp.float32)      # [h_fwd | h_bwd] (as computed)
        c = jnp.zeros((BP, H2), jnp.float32)
        new_h_list = []
        for s in range(T):                        # static, fully unrolled
            p = src[s * BP:(s + 1) * BP, :]       # (BP, 8*HP), already dir-selected
            if s == 0:
                g = p                             # h == 0 -> skip the useless dot
            else:
                # Single-pass bf16 MXU matmul on the serial recurrence chain.
                rec = jnp.dot(h.astype(jnp.bfloat16), whh,
                              preferred_element_type=jnp.float32)
                g = p + rec
            # Gate layout [i_f|i_b | f_f|f_b | g_f|g_b | o_f|o_b]; each slice is a
            # whole number of 128-lane vregs.
            i_a = jax.nn.sigmoid(g[:, 0:H2])
            f_a = jax.nn.sigmoid(g[:, H2:2 * H2])
            g_a = jnp.tanh(g[:, 2 * H2:3 * H2])
            o_a = jax.nn.sigmoid(g[:, 3 * H2:4 * H2])
            c = f_a * c + i_a * g_a
            h = o_a * jnp.tanh(c)
            if l < L - 1:
                new_h_list.append(h)              # keep in registers (1 vreg each)
        h_list = new_h_list
        # h == [h_fwd(T-1) | h_bwd(0)] == PyTorch final hidden states of this layer.
        finals.append(h)

    # fc head: accumulated per-layer partial dots (no lane-shuffle concatenation).
    acc = jnp.zeros((BP, 3), jnp.float32)
    for l in range(L):
        acc = acc + jnp.dot(finals[l], fcw_ref[l], precision=_HIGHEST,
                            preferred_element_type=jnp.float32)
    out_ref[...] = acc + fcb_ref[...]


# ----------------------------------------------------------------------------
# Weight rearrangement (wrapper-side, cheap XLA, done once under jit)
# ----------------------------------------------------------------------------
def _interleave_pad_gate_cols(mat_f, mat_b, H, HP):
    """mat_f, mat_b: (D, 4H) in PyTorch gate order (i,f,g,o) along columns.
    Returns (D, 8*HP) columns [i_f|i_b|f_f|f_b|g_f|g_b|o_f|o_b], each gate block
    zero-padded from H to HP lanes."""
    D = mat_f.shape[0]
    padc = ((0, 0), (0, 0), (0, HP - H))
    f = jnp.pad(mat_f.reshape(D, 4, H), padc)
    b = jnp.pad(mat_b.reshape(D, 4, H), padc)
    return jnp.stack([f, b], axis=2).reshape(D, 8 * HP)


def _pad_hidden_rows(mat, H, HP):
    """mat: (2H, C) rows [fwd(H) | bwd(H)] -> (2*HP, C) with zero-padded rows."""
    return jnp.concatenate([
        jnp.pad(mat[:H], ((0, HP - H), (0, 0))),
        jnp.pad(mat[H:], ((0, HP - H), (0, 0))),
    ], axis=0)


def _prepare_weights(params, H, HP, L):
    lstm = params["lstm"]
    z4 = lambda rows: jnp.zeros((rows, 4 * H), jnp.float32)

    # Layer-0 gather table (V+1, 8*HP): per-token gate pre-activations for both
    # directions, combined biases (b_ih + b_hh) folded in, padded lanes zero.
    l0 = lstm[0]
    table = _interleave_pad_gate_cols(l0["w_ih_f"].T, l0["w_ih_b"].T, H, HP)
    table = table + _interleave_pad_gate_cols(
        (l0["b_ih_f"] + l0["b_hh_f"]).reshape(1, 4 * H),
        (l0["b_ih_b"] + l0["b_hh_b"]).reshape(1, 4 * H), H, HP)

    whh_list, wa_list, wb_list, bih_list = [], [], [], []
    for l in range(L):
        p = lstm[l]
        # Recurrent block structure: h_fwd rows -> fwd gate cols; h_bwd rows -> bwd cols.
        top = _interleave_pad_gate_cols(
            jnp.pad(p["w_hh_f"].T, ((0, HP - H), (0, 0))), z4(HP), H, HP)
        bot = _interleave_pad_gate_cols(
            z4(HP), jnp.pad(p["w_hh_b"].T, ((0, HP - H), (0, 0))), H, HP)
        whh_list.append(jnp.concatenate([top, bot], axis=0))          # (2HP, 8HP)
        if l >= 1:
            wif = p["w_ih_f"].T   # (2H, 4H): rows [prev_fwd(H) | prev_bwd(H)]
            wib = p["w_ih_b"].T
            # W_A multiplies the as-computed order [h_fwd(s) | h_bwd(T-1-s)];
            # W_B multiplies the time-reversed order [h_fwd(T-1-s) | h_bwd(s)].
            # Together they give fwd gates <- x(s), bwd gates <- x(T-1-s) with no
            # per-step selects inside the recurrence.
            wa = jnp.concatenate([
                _interleave_pad_gate_cols(
                    jnp.pad(wif[:H], ((0, HP - H), (0, 0))), z4(HP), H, HP),
                _interleave_pad_gate_cols(
                    z4(HP), jnp.pad(wib[H:], ((0, HP - H), (0, 0))), H, HP),
            ], axis=0)
            wb = jnp.concatenate([
                _interleave_pad_gate_cols(
                    z4(HP), jnp.pad(wib[:H], ((0, HP - H), (0, 0))), H, HP),
                _interleave_pad_gate_cols(
                    jnp.pad(wif[H:], ((0, HP - H), (0, 0))), z4(HP), H, HP),
            ], axis=0)
            wa_list.append(wa)
            wb_list.append(wb)
            bih_list.append(_interleave_pad_gate_cols(
                (p["b_ih_f"] + p["b_hh_f"]).reshape(1, 4 * H),
                (p["b_ih_b"] + p["b_hh_b"]).reshape(1, 4 * H), H, HP))

    whh = jnp.stack(whh_list).astype(jnp.bfloat16)                    # (L, 2HP, 8HP)
    if L > 1:
        wa = jnp.stack(wa_list)                                       # (L-1, 2HP, 8HP)
        wb = jnp.stack(wb_list)
        bih = jnp.stack(bih_list)                                     # (L-1, 1, 8HP)
    else:                                                             # unused dummies
        wa = jnp.zeros((1, 2 * HP, 8 * HP), jnp.float32)
        wb = jnp.zeros((1, 2 * HP, 8 * HP), jnp.float32)
        bih = jnp.zeros((1, 1, 8 * HP), jnp.float32)

    fcw_t = params["fc_w"].T                                          # (2H*L, 3)
    fcw = jnp.stack([_pad_hidden_rows(fcw_t[l * 2 * H:(l + 1) * 2 * H], H, HP)
                     for l in range(L)])                              # (L, 2HP, 3)
    fcb = params["fc_b"].reshape(1, 3)
    return table, whh, wa, wb, bih, fcw, fcb


# ----------------------------------------------------------------------------
# Model forward (single fused pallas_call)
# ----------------------------------------------------------------------------
def artikel_lstm_forward(x_ids, params, hidden_dim, num_layers):
    B, T = x_ids.shape
    H = hidden_dim
    HP = ((H + 63) // 64) * 64            # pad per-direction hidden so 2*HP % 128 == 0
    BP = max(8, ((B + 7) // 8) * 8)       # pad batch to the 8-row sublane height
    L = num_layers

    table, whh, wa, wb, bih, fcw, fcb = _prepare_weights(params, H, HP, L)

    # Pad batch rows with token 0 (their outputs are sliced away below).
    x_pad = jnp.zeros((BP, T), x_ids.dtype).at[:B].set(x_ids)

    # Layer-0 input projection via embedding-row gather (== one_hot @ W_ih^T + b),
    # direction-preselected: fwd gate lanes take timestep s, bwd lanes timestep T-1-s.
    gathered = jnp.transpose(table[x_pad], (1, 0, 2))                 # (T, BP, 8HP)
    lane_is_fwd = ((jnp.arange(8 * HP) // HP) % 2 == 0)
    proj0 = jnp.where(lane_is_fwd[None, None, :], gathered, gathered[::-1])
    proj0 = proj0.reshape(T * BP, 8 * HP)

    kernel = functools.partial(_fused_lstm_fc_kernel, T=T, BP=BP, HP=HP, L=L)
    out = pl.pallas_call(
        kernel,
        out_shape=jax.ShapeDtypeStruct((BP, 3), jnp.float32),
        in_specs=[_VMEM] * 7,
        out_specs=_VMEM,
        scratch_shapes=[pltpu.VMEM((T * BP, 8 * HP), jnp.float32)],
    )(proj0, whh, wa, wb, bih, fcw, fcb)
    return out[:B]


# ----------------------------------------------------------------------------
# Pure-JAX reference (PyTorch-faithful, full f32, for correctness check)
# ----------------------------------------------------------------------------
def _ref_lstm_direction(x_tbd, w_ih, w_hh, b_ih, b_hh):
    T, B, _ = x_tbd.shape
    H = w_hh.shape[1]
    h = jnp.zeros((B, H), jnp.float32)
    c = jnp.zeros((B, H), jnp.float32)
    hs = []
    for t in range(T):
        gates = (jnp.dot(x_tbd[t], w_ih.T, precision=_HIGHEST)
                 + jnp.dot(h, w_hh.T, precision=_HIGHEST) + b_ih + b_hh)
        i_g = jax.nn.sigmoid(gates[:, 0:H])
        f_g = jax.nn.sigmoid(gates[:, H:2 * H])
        g_g = jnp.tanh(gates[:, 2 * H:3 * H])
        o_g = jax.nn.sigmoid(gates[:, 3 * H:4 * H])
        c = f_g * c + i_g * g_g
        h = o_g * jnp.tanh(c)
        hs.append(h)
    return jnp.stack(hs, axis=0)


def _ref_forward(x_ids, params, vocab_size, num_layers):
    emb = jax.nn.one_hot(x_ids, vocab_size + 1, dtype=jnp.float32)
    layer_in = jnp.transpose(emb, (1, 0, 2))
    finals = []
    for l in range(num_layers):
        p = params["lstm"][l]
        h_fwd = _ref_lstm_direction(
            layer_in, p["w_ih_f"], p["w_hh_f"], p["b_ih_f"], p["b_hh_f"])
        h_bwd_rev = _ref_lstm_direction(
            layer_in[::-1], p["w_ih_b"], p["w_hh_b"], p["b_ih_b"], p["b_hh_b"])
        finals.append(h_fwd[-1])
        finals.append(h_bwd_rev[-1])
        layer_in = jnp.concatenate([h_fwd, h_bwd_rev[::-1]], axis=-1)
    hidden_cat = jnp.concatenate(finals, axis=1)
    return jnp.dot(hidden_cat, params["fc_w"].T, precision=_HIGHEST) + params["fc_b"]


# ----------------------------------------------------------------------------
# Deterministic parameter init (mirrors nn.LSTM / nn.Linear shapes & scales)
# ----------------------------------------------------------------------------
def init_params(key, vocab_size, embedding_dim, hidden_dim, num_layers):
    assert embedding_dim == vocab_size + 1, "one_hot width must match LSTM input size"
    k = 1.0 / math.sqrt(hidden_dim)
    params = {"lstm": []}
    for l in range(num_layers):
        in_size = embedding_dim if l == 0 else 2 * hidden_dim
        layer = {}
        for d in ("f", "b"):
            key, k1, k2, k3, k4 = jax.random.split(key, 5)
            layer[f"w_ih_{d}"] = jax.random.uniform(
                k1, (4 * hidden_dim, in_size), jnp.float32, -k, k)
            layer[f"w_hh_{d}"] = jax.random.uniform(
                k2, (4 * hidden_dim, hidden_dim), jnp.float32, -k, k)
            layer[f"b_ih_{d}"] = jax.random.uniform(
                k3, (4 * hidden_dim,), jnp.float32, -k, k)
            layer[f"b_hh_{d}"] = jax.random.uniform(
                k4, (4 * hidden_dim,), jnp.float32, -k, k)
        params["lstm"].append(layer)
    fc_in = 2 * hidden_dim * num_layers
    kf = 1.0 / math.sqrt(fc_in)
    key, k1, k2 = jax.random.split(key, 3)
    params["fc_w"] = jax.random.uniform(k1, (3, fc_in), jnp.float32, -kf, kf)
    params["fc_b"] = jax.random.uniform(k2, (3,), jnp.float32, -kf, kf)
    return params


# ----------------------------------------------------------------------------
# Main
# ----------------------------------------------------------------------------
if __name__ == "__main__":
    VOCAB_SIZE = 15
    EMBEDDING_DIM = VOCAB_SIZE + 1   # 16 (F.one_hot width feeding the LSTM)
    HIDDEN_DIM = 32
    NUM_LAYERS = 2
    BATCH, SEQ = 2, 8

    root = jax.random.PRNGKey(0)
    k_x, k_p = jax.random.split(root)
    x_ids = jax.random.randint(k_x, (BATCH, SEQ), 0, VOCAB_SIZE + 1, dtype=jnp.int32)
    params = init_params(k_p, VOCAB_SIZE, EMBEDDING_DIM, HIDDEN_DIM, NUM_LAYERS)

    fwd = jax.jit(
        lambda ids: artikel_lstm_forward(ids, params, HIDDEN_DIM, NUM_LAYERS))
    out = jax.block_until_ready(fwd(x_ids))
    assert out.shape == (BATCH, 3), out.shape

    ref = jax.block_until_ready(_ref_forward(x_ids, params, VOCAB_SIZE, NUM_LAYERS))
    # Tolerance loosened vs the old all-f32 version: the per-step recurrent matmul
    # is now a single-pass bf16 MXU dot (per the perf review); everything else
    # (layer-0 gather, hoisted projections, fc head) stays f32 @ HIGHEST.
    assert jnp.allclose(out, ref, atol=2e-2, rtol=2e-2), (out, ref)

    print("KERNEL_OK")
</pallas_src>

<mosaic_0001>
module attributes {stable_mosaic.version = 11 : i64} {
  func.func @_fused_lstm_fc_kernel(%arg0: memref<64x512xf32, #tpu.memory_space<vmem>>, %arg1: memref<2x128x512xbf16, #tpu.memory_space<vmem>>, %arg2: memref<1x128x512xf32, #tpu.memory_space<vmem>>, %arg3: memref<1x128x512xf32, #tpu.memory_space<vmem>>, %arg4: memref<1x1x512xf32, #tpu.memory_space<vmem>>, %arg5: memref<2x128x3xf32, #tpu.memory_space<vmem>>, %arg6: memref<1x3xf32, #tpu.memory_space<vmem>>, %arg7: memref<8x3xf32, #tpu.memory_space<vmem>>, %arg8: memref<64x512xf32, #tpu.memory_space<vmem>>) attributes {dimension_semantics = [], scalar_prefetch = 0 : i64, scratch_operands = 1 : i64, tpu.core_type = #tpu.core_type<tc>} {
    %c0 = arith.constant 0 : index
    %c0_0 = arith.constant 0 : index
    %c0_1 = arith.constant 0 : index
    %0 = vector.load %arg1[%c0, %c0_0, %c0_1] : memref<2x128x512xbf16, #tpu.memory_space<vmem>>, vector<1x128x512xbf16>
    %1 = vector.shape_cast %0 : vector<1x128x512xbf16> to vector<128x512xbf16>
    %cst = arith.constant 0.000000e+00 : f32
    %2 = vector.broadcast %cst : f32 to vector<8x128xf32>
    %c0_2 = arith.constant 0 : index
    %c0_3 = arith.constant 0 : index
    %3 = vector.load %arg0[%c0_2, %c0_3] : memref<64x512xf32, #tpu.memory_space<vmem>>, vector<8x512xf32>
    %4 = vector.extract_strided_slice %3 {offsets = [0, 0], sizes = [8, 128], strides = [1, 1]} : vector<8x512xf32> to vector<8x128xf32>
    %5 = arith.negf %4 : vector<8x128xf32>
    %6 = math.exp %5 : vector<8x128xf32>
    %cst_4 = arith.constant 1.000000e+00 : f32
    %7 = vector.broadcast %cst_4 : f32 to vector<8x128xf32>
    %8 = arith.addf %7, %6 : vector<8x128xf32>
    %9 = arith.divf %7, %8 : vector<8x128xf32>
    %10 = vector.extract_strided_slice %3 {offsets = [0, 128], sizes = [8, 128], strides = [1, 1]} : vector<8x512xf32> to vector<8x128xf32>
    %11 = arith.negf %10 : vector<8x128xf32>
    %12 = math.exp %11 : vector<8x128xf32>
    %cst_5 = arith.constant 1.000000e+00 : f32
    %13 = vector.broadcast %cst_5 : f32 to vector<8x128xf32>
    %14 = arith.addf %13, %12 : vector<8x128xf32>
    %15 = arith.divf %13, %14 : vector<8x128xf32>
    %16 = vector.extract_strided_slice %3 {offsets = [0, 256], sizes = [8, 128], strides = [1, 1]} : vector<8x512xf32> to vector<8x128xf32>
    %17 = math.tanh %16 : vector<8x128xf32>
    %18 = vector.extract_strided_slice %3 {offsets = [0, 384], sizes = [8, 128], strides = [1, 1]} : vector<8x512xf32> to vector<8x128xf32>
    %19 = arith.negf %18 : vector<8x128xf32>
    %20 = math.exp %19 : vector<8x128xf32>
    %cst_6 = arith.constant 1.000000e+00 : f32
    %21 = vector.broadcast %cst_6 : f32 to vector<8x128xf32>
    %22 = arith.addf %21, %20 : vector<8x128xf32>
    %23 = arith.divf %21, %22 : vector<8x128xf32>
    %24 = arith.mulf %15, %2 : vector<8x128xf32>
    %25 = arith.mulf %9, %17 : vector<8x128xf32>
    %26 = arith.addf %24, %25 : vector<8x128xf32>
    %27 = math.tanh %26 : vector<8x128xf32>
    %28 = arith.mulf %23, %27 : vector<8x128xf32>
    %c8 = arith.constant 8 : index
    %c0_7 = arith.constant 0 : index
    %29 = vector.load %arg0[%c8, %c0_7] : memref<64x512xf32, #tpu.memory_space<vmem>>, vector<8x512xf32>
    %30 = arith.truncf %28 : vector<8x128xf32> to vector<8x128xbf16>
    %cst_8 = arith.constant dense<0.000000e+00> : vector<8x512xf32>
    %31 = tpu.matmul %30, %1, %cst_8 {dimension_numbers = #tpu.dot_dimension_numbers<[1], [0], [0], [1], [0, 0, 1, 1], [], []>} : vector<8x128xbf16>, vector<128x512xbf16>, vector<8x512xf32> -> vector<8x512xf32>
    %32 = arith.addf %29, %31 : vector<8x512xf32>
    %33 = vector.extract_strided_slice %32 {offsets = [0, 0], sizes = [8, 128], strides = [1, 1]} : vector<8x512xf32> to vector<8x128xf32>
    %34 = arith.negf %33 : vector<8x128xf32>
    %35 = math.exp %34 : vector<8x128xf32>
    %cst_9 = arith.constant 1.000000e+00 : f32
    %36 = vector.broadcast %cst_9 : f32 to vector<8x128xf32>
    %37 = arith.addf %36, %35 : vector<8x128xf32>
    %38 = arith.divf %36, %37 : vector<8x128xf32>
    %39 = vector.extract_strided_slice %32 {offsets = [0, 128], sizes = [8, 128], strides = [1, 1]} : vector<8x512xf32> to vector<8x128xf32>
    %40 = arith.negf %39 : vector<8x128xf32>
    %41 = math.exp %40 : vector<8x128xf32>
    %cst_10 = arith.constant 1.000000e+00 : f32
    %42 = vector.broadcast %cst_10 : f32 to vector<8x128xf32>
    %43 = arith.addf %42, %41 : vector<8x128xf32>
    %44 = arith.divf %42, %43 : vector<8x128xf32>
    %45 = vector.extract_strided_slice %32 {offsets = [0, 256], sizes = [8, 128], strides = [1, 1]} : vector<8x512xf32> to vector<8x128xf32>
    %46 = math.tanh %45 : vector<8x128xf32>
    %47 = vector.extract_strided_slice %32 {offsets = [0, 384], sizes = [8, 128], strides = [1, 1]} : vector<8x512xf32> to vector<8x128xf32>
    %48 = arith.negf %47 : vector<8x128xf32>
    %49 = math.exp %48 : vector<8x128xf32>
    %cst_11 = arith.constant 1.000000e+00 : f32
    %50 = vector.broadcast %cst_11 : f32 to vector<8x128xf32>
    %51 = arith.addf %50, %49 : vector<8x128xf32>
    %52 = arith.divf %50, %51 : vector<8x128xf32>
    %53 = arith.mulf %44, %26 : vector<8x128xf32>
    %54 = arith.mulf %38, %46 : vector<8x128xf32>
    %55 = arith.addf %53, %54 : vector<8x128xf32>
    %56 = math.tanh %55 : vector<8x128xf32>
    %57 = arith.mulf %52, %56 : vector<8x128xf32>
    %c16 = arith.constant 16 : index
    %c0_12 = arith.constant 0 : index
    %58 = vector.load %arg0[%c16, %c0_12] : memref<64x512xf32, #tpu.memory_space<vmem>>, vector<8x512xf32>
    %59 = arith.truncf %57 : vector<8x128xf32> to vector<8x128xbf16>
    %cst_13 = arith.constant dense<0.000000e+00> : vector<8x512xf32>
    %60 = tpu.matmul %59, %1, %cst_13 {dimension_numbers = #tpu.dot_dimension_numbers<[1], [0], [0], [1], [0, 0, 1, 1], [], []>} : vector<8x128xbf16>, vector<128x512xbf16>, vector<8x512xf32> -> vector<8x512xf32>
    %61 = arith.addf %58, %60 : vector<8x512xf32>
    %62 = vector.extract_strided_slice %61 {offsets = [0, 0], sizes = [8, 128], strides = [1, 1]} : vector<8x512xf32> to vector<8x128xf32>
    %63 = arith.negf %62 : vector<8x128xf32>
    %64 = math.exp %63 : vector<8x128xf32>
    %cst_14 = arith.constant 1.000000e+00 : f32
    %65 = vector.broadcast %cst_14 : f32 to vector<8x128xf32>
    %66 = arith.addf %65, %64 : vector<8x128xf32>
    %67 = arith.divf %65, %66 : vector<8x128xf32>
    %68 = vector.extract_strided_slice %61 {offsets = [0, 128], sizes = [8, 128], strides = [1, 1]} : vector<8x512xf32> to vector<8x128xf32>
    %69 = arith.negf %68 : vector<8x128xf32>
    %70 = math.exp %69 : vector<8x128xf32>
    %cst_15 = arith.constant 1.000000e+00 : f32
    %71 = vector.broadcast %cst_15 : f32 to vector<8x128xf32>
    %72 = arith.addf %71, %70 : vector<8x128xf32>
    %73 = arith.divf %71, %72 : vector<8x128xf32>
    %74 = vector.extract_strided_slice %61 {offsets = [0, 256], sizes = [8, 128], strides = [1, 1]} : vector<8x512xf32> to vector<8x128xf32>
    %75 = math.tanh %74 : vector<8x128xf32>
    %76 = vector.extract_strided_slice %61 {offsets = [0, 384], sizes = [8, 128], strides = [1, 1]} : vector<8x512xf32> to vector<8x128xf32>
    %77 = arith.negf %76 : vector<8x128xf32>
    %78 = math.exp %77 : vector<8x128xf32>
    %cst_16 = arith.constant 1.000000e+00 : f32
    %79 = vector.broadcast %cst_16 : f32 to vector<8x128xf32>
    %80 = arith.addf %79, %78 : vector<8x128xf32>
    %81 = arith.divf %79, %80 : vector<8x128xf32>
    %82 = arith.mulf %73, %55 : vector<8x128xf32>
    %83 = arith.mulf %67, %75 : vector<8x128xf32>
    %84 = arith.addf %82, %83 : vector<8x128xf32>
    %85 = math.tanh %84 : vector<8x128xf32>
    %86 = arith.mulf %81, %85 : vector<8x128xf32>
    %c24 = arith.constant 24 : index
    %c0_17 = arith.constant 0 : index
    %87 = vector.load %arg0[%c24, %c0_17] : memref<64x512xf32, #tpu.memory_space<vmem>>, vector<8x512xf32>
    %88 = arith.truncf %86 : vector<8x128xf32> to vector<8x128xbf16>
    %cst_18 = arith.constant dense<0.000000e+00> : vector<8x512xf32>
    %89 = tpu.matmul %88, %1, %cst_18 {dimension_numbers = #tpu.dot_dimension_numbers<[1], [0], [0], [1], [0, 0, 1, 1], [], []>} : vector<8x128xbf16>, vector<128x512xbf16>, vector<8x512xf32> -> vector<8x512xf32>
    %90 = arith.addf %87, %89 : vector<8x512xf32>
    %91 = vector.extract_strided_slice %90 {offsets = [0, 0], sizes = [8, 128], strides = [1, 1]} : vector<8x512xf32> to vector<8x128xf32>
    %92 = arith.negf %91 : vector<8x128xf32>
    %93 = math.exp %92 : vector<8x128xf32>
    %cst_19 = arith.constant 1.000000e+00 : f32
    %94 = vector.broadcast %cst_19 : f32 to vector<8x128xf32>
    %95 = arith.addf %94, %93 : vector<8x128xf32>
    %96 = arith.divf %94, %95 : vector<8x128xf32>
    %97 = vector.extract_strided_slice %90 {offsets = [0, 128], sizes = [8, 128], strides = [1, 1]} : vector<8x512xf32> to vector<8x128xf32>
    %98 = arith.negf %97 : vector<8x128xf32>
    %99 = math.exp %98 : vector<8x128xf32>
    %cst_20 = arith.constant 1.000000e+00 : f32
    %100 = vector.broadcast %cst_20 : f32 to vector<8x128xf32>
    %101 = arith.addf %100, %99 : vector<8x128xf32>
    %102 = arith.divf %100, %101 : vector<8x128xf32>
    %103 = vector.extract_strided_slice %90 {offsets = [0, 256], sizes = [8, 128], strides = [1, 1]} : vector<8x512xf32> to vector<8x128xf32>
    %104 = math.tanh %103 : vector<8x128xf32>
    %105 = vector.extract_strided_slice %90 {offsets = [0, 384], sizes = [8, 128], strides = [1, 1]} : vector<8x512xf32> to vector<8x128xf32>
    %106 = arith.negf %105 : vector<8x128xf32>
    %107 = math.exp %106 : vector<8x128xf32>
    %cst_21 = arith.constant 1.000000e+00 : f32
    %108 = vector.broadcast %cst_21 : f32 to vector<8x128xf32>
    %109 = arith.addf %108, %107 : vector<8x128xf32>
    %110 = arith.divf %108, %109 : vector<8x128xf32>
    %111 = arith.mulf %102, %84 : vector<8x128xf32>
    %112 = arith.mulf %96, %104 : vector<8x128xf32>
    %113 = arith.addf %111, %112 : vector<8x128xf32>
    %114 = math.tanh %113 : vector<8x128xf32>
    %115 = arith.mulf %110, %114 : vector<8x128xf32>
    %c32 = arith.constant 32 : index
    %c0_22 = arith.constant 0 : index
    %116 = vector.load %arg0[%c32, %c0_22] : memref<64x512xf32, #tpu.memory_space<vmem>>, vector<8x512xf32>
    %117 = arith.truncf %115 : vector<8x128xf32> to vector<8x128xbf16>
    %cst_23 = arith.constant dense<0.000000e+00> : vector<8x512xf32>
    %118 = tpu.matmul %117, %1, %cst_23 {dimension_numbers = #tpu.dot_dimension_numbers<[1], [0], [0], [1], [0, 0, 1, 1], [], []>} : vector<8x128xbf16>, vector<128x512xbf16>, vector<8x512xf32> -> vector<8x512xf32>
    %119 = arith.addf %116, %118 : vector<8x512xf32>
    %120 = vector.extract_strided_slice %119 {offsets = [0, 0], sizes = [8, 128], strides = [1, 1]} : vector<8x512xf32> to vector<8x128xf32>
    %121 = arith.negf %120 : vector<8x128xf32>
    %122 = math.exp %121 : vector<8x128xf32>
    %cst_24 = arith.constant 1.000000e+00 : f32
    %123 = vector.broadcast %cst_24 : f32 to vector<8x128xf32>
    %124 = arith.addf %123, %122 : vector<8x128xf32>
    %125 = arith.divf %123, %124 : vector<8x128xf32>
    %126 = vector.extract_strided_slice %119 {offsets = [0, 128], sizes = [8, 128], strides = [1, 1]} : vector<8x512xf32> to vector<8x128xf32>
    %127 = arith.negf %126 : vector<8x128xf32>
    %128 = math.exp %127 : vector<8x128xf32>
    %cst_25 = arith.constant 1.000000e+00 : f32
    %129 = vector.broadcast %cst_25 : f32 to vector<8x128xf32>
    %130 = arith.addf %129, %128 : vector<8x128xf32>
    %131 = arith.divf %129, %130 : vector<8x128xf32>
    %132 = vector.extract_strided_slice %119 {offsets = [0, 256], sizes = [8, 128], strides = [1, 1]} : vector<8x512xf32> to vector<8x128xf32>
    %133 = math.tanh %132 : vector<8x128xf32>
    %134 = vector.extract_strided_slice %119 {offsets = [0, 384], sizes = [8, 128], strides = [1, 1]} : vector<8x512xf32> to vector<8x128xf32>
    %135 = arith.negf %134 : vector<8x128xf32>
    %136 = math.exp %135 : vector<8x128xf32>
    %cst_26 = arith.constant 1.000000e+00 : f32
    %137 = vector.broadcast %cst_26 : f32 to vector<8x128xf32>
    %138 = arith.addf %137, %136 : vector<8x128xf32>
    %139 = arith.divf %137, %138 : vector<8x128xf32>
    %140 = arith.mulf %131, %113 : vector<8x128xf32>
    %141 = arith.mulf %125, %133 : vector<8x128xf32>
    %142 = arith.addf %140, %141 : vector<8x128xf32>
    %143 = math.tanh %142 : vector<8x128xf32>
    %144 = arith.mulf %139, %143 : vector<8x128xf32>
    %c40 = arith.constant 40 : index
    %c0_27 = arith.constant 0 : index
    %145 = vector.load %arg0[%c40, %c0_27] : memref<64x512xf32, #tpu.memory_space<vmem>>, vector<8x512xf32>
    %146 = arith.truncf %144 : vector<8x128xf32> to vector<8x128xbf16>
    %cst_28 = arith.constant dense<0.000000e+00> : vector<8x512xf32>
    %147 = tpu.matmul %146, %1, %cst_28 {dimension_numbers = #tpu.dot_dimension_numbers<[1], [0], [0], [1], [0, 0, 1, 1], [], []>} : vector<8x128xbf16>, vector<128x512xbf16>, vector<8x512xf32> -> vector<8x512xf32>
    %148 = arith.addf %145, %147 : vector<8x512xf32>
    %149 = vector.extract_strided_slice %148 {offsets = [0, 0], sizes = [8, 128], strides = [1, 1]} : vector<8x512xf32> to vector<8x128xf32>
    %150 = arith.negf %149 : vector<8x128xf32>
    %151 = math.exp %150 : vector<8x128xf32>
    %cst_29 = arith.constant 1.000000e+00 : f32
    %152 = vector.broadcast %cst_29 : f32 to vector<8x128xf32>
    %153 = arith.addf %152, %151 : vector<8x128xf32>
    %154 = arith.divf %152, %153 : vector<8x128xf32>
    %155 = vector.extract_strided_slice %148 {offsets = [0, 128], sizes = [8, 128], strides = [1, 1]} : vector<8x512xf32> to vector<8x128xf32>
    %156 = arith.negf %155 : vector<8x128xf32>
    %157 = math.exp %156 : vector<8x128xf32>
    %cst_30 = arith.constant 1.000000e+00 : f32
    %158 = vector.broadcast %cst_30 : f32 to vector<8x128xf32>
    %159 = arith.addf %158, %157 : vector<8x128xf32>
    %160 = arith.divf %158, %159 : vector<8x128xf32>
    %161 = vector.extract_strided_slice %148 {offsets = [0, 256], sizes = [8, 128], strides = [1, 1]} : vector<8x512xf32> to vector<8x128xf32>
    %162 = math.tanh %161 : vector<8x128xf32>
    %163 = vector.extract_strided_slice %148 {offsets = [0, 384], sizes = [8, 128], strides = [1, 1]} : vector<8x512xf32> to vector<8x128xf32>
    %164 = arith.negf %163 : vector<8x128xf32>
    %165 = math.exp %164 : vector<8x128xf32>
    %cst_31 = arith.constant 1.000000e+00 : f32
    %166 = vector.broadcast %cst_31 : f32 to vector<8x128xf32>
    %167 = arith.addf %166, %165 : vector<8x128xf32>
    %168 = arith.divf %166, %167 : vector<8x128xf32>
    %169 = arith.mulf %160, %142 : vector<8x128xf32>
    %170 = arith.mulf %154, %162 : vector<8x128xf32>
    %171 = arith.addf %169, %170 : vector<8x128xf32>
    %172 = math.tanh %171 : vector<8x128xf32>
    %173 = arith.mulf %168, %172 : vector<8x128xf32>
    %c48 = arith.constant 48 : index
    %c0_32 = arith.constant 0 : index
    %174 = vector.load %arg0[%c48, %c0_32] : memref<64x512xf32, #tpu.memory_space<vmem>>, vector<8x512xf32>
    %175 = arith.truncf %173 : vector<8x128xf32> to vector<8x128xbf16>
    %cst_33 = arith.constant dense<0.000000e+00> : vector<8x512xf32>
    %176 = tpu.matmul %175, %1, %cst_33 {dimension_numbers = #tpu.dot_dimension_numbers<[1], [0], [0], [1], [0, 0, 1, 1], [], []>} : vector<8x128xbf16>, vector<128x512xbf16>, vector<8x512xf32> -> vector<8x512xf32>
    %177 = arith.addf %174, %176 : vector<8x512xf32>
    %178 = vector.extract_strided_slice %177 {offsets = [0, 0], sizes = [8, 128], strides = [1, 1]} : vector<8x512xf32> to vector<8x128xf32>
    %179 = arith.negf %178 : vector<8x128xf32>
    %180 = math.exp %179 : vector<8x128xf32>
    %cst_34 = arith.constant 1.000000e+00 : f32
    %181 = vector.broadcast %cst_34 : f32 to vector<8x128xf32>
    %182 = arith.addf %181, %180 : vector<8x128xf32>
    %183 = arith.divf %181, %182 : vector<8x128xf32>
    %184 = vector.extract_strided_slice %177 {offsets = [0, 128], sizes = [8, 128], strides = [1, 1]} : vector<8x512xf32> to vector<8x128xf32>
    %185 = arith.negf %184 : vector<8x128xf32>
    %186 = math.exp %185 : vector<8x128xf32>
    %cst_35 = arith.constant 1.000000e+00 : f32
    %187 = vector.broadcast %cst_35 : f32 to vector<8x128xf32>
    %188 = arith.addf %187, %186 : vector<8x128xf32>
    %189 = arith.divf %187, %188 : vector<8x128xf32>
    %190 = vector.extract_strided_slice %177 {offsets = [0, 256], sizes = [8, 128], strides = [1, 1]} : vector<8x512xf32> to vector<8x128xf32>
    %191 = math.tanh %190 : vector<8x128xf32>
    %192 = vector.extract_strided_slice %177 {offsets = [0, 384], sizes = [8, 128], strides = [1, 1]} : vector<8x512xf32> to vector<8x128xf32>
    %193 = arith.negf %192 : vector<8x128xf32>
    %194 = math.exp %193 : vector<8x128xf32>
    %cst_36 = arith.constant 1.000000e+00 : f32
    %195 = vector.broadcast %cst_36 : f32 to vector<8x128xf32>
    %196 = arith.addf %195, %194 : vector<8x128xf32>
    %197 = arith.divf %195, %196 : vector<8x128xf32>
    %198 = arith.mulf %189, %171 : vector<8x128xf32>
    %199 = arith.mulf %183, %191 : vector<8x128xf32>
    %200 = arith.addf %198, %199 : vector<8x128xf32>
    %201 = math.tanh %200 : vector<8x128xf32>
    %202 = arith.mulf %197, %201 : vector<8x128xf32>
    %c56 = arith.constant 56 : index
    %c0_37 = arith.constant 0 : index
    %203 = vector.load %arg0[%c56, %c0_37] : memref<64x512xf32, #tpu.memory_space<vmem>>, vector<8x512xf32>
    %204 = arith.truncf %202 : vector<8x128xf32> to vector<8x128xbf16>
    %cst_38 = arith.constant dense<0.000000e+00> : vector<8x512xf32>
    %205 = tpu.matmul %204, %1, %cst_38 {dimension_numbers = #tpu.dot_dimension_numbers<[1], [0], [0], [1], [0, 0, 1, 1], [], []>} : vector<8x128xbf16>, vector<128x512xbf16>, vector<8x512xf32> -> vector<8x512xf32>
    %206 = arith.addf %203, %205 : vector<8x512xf32>
    %207 = vector.extract_strided_slice %206 {offsets = [0, 0], sizes = [8, 128], strides = [1, 1]} : vector<8x512xf32> to vector<8x128xf32>
    %208 = arith.negf %207 : vector<8x128xf32>
    %209 = math.exp %208 : vector<8x128xf32>
    %cst_39 = arith.constant 1.000000e+00 : f32
    %210 = vector.broadcast %cst_39 : f32 to vector<8x128xf32>
    %211 = arith.addf %210, %209 : vector<8x128xf32>
    %212 = arith.divf %210, %211 : vector<8x128xf32>
    %213 = vector.extract_strided_slice %206 {offsets = [0, 128], sizes = [8, 128], strides = [1, 1]} : vector<8x512xf32> to vector<8x128xf32>
    %214 = arith.negf %213 : vector<8x128xf32>
    %215 = math.exp %214 : vector<8x128xf32>
    %cst_40 = arith.constant 1.000000e+00 : f32
    %216 = vector.broadcast %cst_40 : f32 to vector<8x128xf32>
    %217 = arith.addf %216, %215 : vector<8x128xf32>
    %218 = arith.divf %216, %217 : vector<8x128xf32>
    %219 = vector.extract_strided_slice %206 {offsets = [0, 256], sizes = [8, 128], strides = [1, 1]} : vector<8x512xf32> to vector<8x128xf32>
    %220 = math.tanh %219 : vector<8x128xf32>
    %221 = vector.extract_strided_slice %206 {offsets = [0, 384], sizes = [8, 128], strides = [1, 1]} : vector<8x512xf32> to vector<8x128xf32>
    %222 = arith.negf %221 : vector<8x128xf32>
    %223 = math.exp %222 : vector<8x128xf32>
    %cst_41 = arith.constant 1.000000e+00 : f32
    %224 = vector.broadcast %cst_41 : f32 to vector<8x128xf32>
    %225 = arith.addf %224, %223 : vector<8x128xf32>
    %226 = arith.divf %224, %225 : vector<8x128xf32>
    %227 = arith.mulf %218, %200 : vector<8x128xf32>
    %228 = arith.mulf %212, %220 : vector<8x128xf32>
    %229 = arith.addf %227, %228 : vector<8x128xf32>
    %230 = math.tanh %229 : vector<8x128xf32>
    %231 = arith.mulf %226, %230 : vector<8x128xf32>
    %c1 = arith.constant 1 : index
    %c0_42 = arith.constant 0 : index
    %c0_43 = arith.constant 0 : index
    %232 = vector.load %arg1[%c1, %c0_42, %c0_43] : memref<2x128x512xbf16, #tpu.memory_space<vmem>>, vector<1x128x512xbf16>
    %233 = vector.shape_cast %232 : vector<1x128x512xbf16> to vector<128x512xbf16>
    %234 = tpu.concatenate %28, %57, %86, %115, %144, %173, %202, %231 in 0 : vector<8x128xf32>, vector<8x128xf32>, vector<8x128xf32>, vector<8x128xf32>, vector<8x128xf32>, vector<8x128xf32>, vector<8x128xf32>, vector<8x128xf32> -> vector<64x128xf32>
    %235 = tpu.concatenate %231, %202, %173, %144, %115, %86, %57, %28 in 0 : vector<8x128xf32>, vector<8x128xf32>, vector<8x128xf32>, vector<8x128xf32>, vector<8x128xf32>, vector<8x128xf32>, vector<8x128xf32>, vector<8x128xf32> -> vector<64x128xf32>
    %c0_44 = arith.constant 0 : index
    %c0_45 = arith.constant 0 : index
    %c0_46 = arith.constant 0 : index
    %236 = vector.load %arg2[%c0_44, %c0_45, %c0_46] : memref<1x128x512xf32, #tpu.memory_space<vmem>>, vector<1x128x512xf32>
    %237 = vector.shape_cast %236 : vector<1x128x512xf32> to vector<128x512xf32>
    %cst_47 = arith.constant dense<0.000000e+00> : vector<64x512xf32>
    %238 = tpu.matmul %234, %237, %cst_47 {dimension_numbers = #tpu.dot_dimension_numbers<[1], [0], [0], [1], [0, 0, 1, 1], [], []>, precision = #tpu.contract_precision<fp32>} : vector<64x128xf32>, vector<128x512xf32>, vector<64x512xf32> -> vector<64x512xf32>
    %c0_48 = arith.constant 0 : index
    %c0_49 = arith.constant 0 : index
    %c0_50 = arith.constant 0 : index
    %239 = vector.load %arg3[%c0_48, %c0_49, %c0_50] : memref<1x128x512xf32, #tpu.memory_space<vmem>>, vector<1x128x512xf32>
    %240 = vector.shape_cast %239 : vector<1x128x512xf32> to vector<128x512xf32>
    %cst_51 = arith.constant dense<0.000000e+00> : vector<64x512xf32>
    %241 = tpu.matmul %235, %240, %cst_51 {dimension_numbers = #tpu.dot_dimension_numbers<[1], [0], [0], [1], [0, 0, 1, 1], [], []>, precision = #tpu.contract_precision<fp32>} : vector<64x128xf32>, vector<128x512xf32>, vector<64x512xf32> -> vector<64x512xf32>
    %242 = arith.addf %238, %241 : vector<64x512xf32>
    %c0_52 = arith.constant 0 : index
    %c0_53 = arith.constant 0 : index
    %c0_54 = arith.constant 0 : index
    %243 = vector.load %arg4[%c0_52, %c0_53, %c0_54] : memref<1x1x512xf32, #tpu.memory_space<vmem>>, vector<1x1x512xf32>
    %244 = vector.shape_cast %243 : vector<1x1x512xf32> to vector<1x512xf32>
    %245 = vector.broadcast %244 : vector<1x512xf32> to vector<64x512xf32>
    %246 = arith.addf %242, %245 : vector<64x512xf32>
    %c0_55 = arith.constant 0 : index
    %c0_56 = arith.constant 0 : index
    %247 = vector.load %arg8[%c0_55, %c0_56] : memref<64x512xf32, #tpu.memory_space<vmem>>, vector<64x512xf32>
    tpu.vector_store %arg8[%c0_55, %c0_56], %246 {strides = array<i32>} : memref<64x512xf32, #tpu.memory_space<vmem>>, vector<64x512xf32>,
    %cst_57 = arith.constant 0.000000e+00 : f32
    %248 = vector.broadcast %cst_57 : f32 to vector<8x128xf32>
    %c0_58 = arith.constant 0 : index
    %c0_59 = arith.constant 0 : index
    %249 = vector.load %arg8[%c0_58, %c0_59] : memref<64x512xf32, #tpu.memory_space<vmem>>, vector<8x512xf32>
    %250 = vector.extract_strided_slice %249 {offsets = [0, 0], sizes = [8, 128], strides = [1, 1]} : vector<8x512xf32> to vector<8x128xf32>
    %251 = arith.negf %250 : vector<8x128xf32>
    %252 = math.exp %251 : vector<8x128xf32>
    %cst_60 = arith.constant 1.000000e+00 : f32
    %253 = vector.broadcast %cst_60 : f32 to vector<8x128xf32>
    %254 = arith.addf %253, %252 : vector<8x128xf32>
    %255 = arith.divf %253, %254 : vector<8x128xf32>
    %256 = vector.extract_strided_slice %249 {offsets = [0, 128], sizes = [8, 128], strides = [1, 1]} : vector<8x512xf32> to vector<8x128xf32>
    %257 = arith.negf %256 : vector<8x128xf32>
    %258 = math.exp %257 : vector<8x128xf32>
    %cst_61 = arith.constant 1.000000e+00 : f32
    %259 = vector.broadcast %cst_61 : f32 to vector<8x128xf32>
    %260 = arith.addf %259, %258 : vector<8x128xf32>
    %261 = arith.divf %259, %260 : vector<8x128xf32>
    %262 = vector.extract_strided_slice %249 {offsets = [0, 256], sizes = [8, 128], strides = [1, 1]} : vector<8x512xf32> to vector<8x128xf32>
    %263 = math.tanh %262 : vector<8x128xf32>
    %264 = vector.extract_strided_slice %249 {offsets = [0, 384], sizes = [8, 128], strides = [1, 1]} : vector<8x512xf32> to vector<8x128xf32>
    %265 = arith.negf %264 : vector<8x128xf32>
    %266 = math.exp %265 : vector<8x128xf32>
    %cst_62 = arith.constant 1.000000e+00 : f32
    %267 = vector.broadcast %cst_62 : f32 to vector<8x128xf32>
    %268 = arith.addf %267, %266 : vector<8x128xf32>
    %269 = arith.divf %267, %268 : vector<8x128xf32>
    %270 = arith.mulf %261, %248 : vector<8x128xf32>
    %271 = arith.mulf %255, %263 : vector<8x128xf32>
    %272 = arith.addf %270, %271 : vector<8x128xf32>
    %273 = math.tanh %272 : vector<8x128xf32>
    %274 = arith.mulf %269, %273 : vector<8x128xf32>
    %c8_63 = arith.constant 8 : index
    %c0_64 = arith.constant 0 : index
    %275 = vector.load %arg8[%c8_63, %c0_64] : memref<64x512xf32, #tpu.memory_space<vmem>>, vector<8x512xf32>
    %276 = arith.truncf %274 : vector<8x128xf32> to vector<8x128xbf16>
    %cst_65 = arith.constant dense<0.000000e+00> : vector<8x512xf32>
    %277 = tpu.matmul %276, %233, %cst_65 {dimension_numbers = #tpu.dot_dimension_numbers<[1], [0], [0], [1], [0, 0, 1, 1], [], []>} : vector<8x128xbf16>, vector<128x512xbf16>, vector<8x512xf32> -> vector<8x512xf32>
    %278 = arith.addf %275, %277 : vector<8x512xf32>
    %279 = vector.extract_strided_slice %278 {offsets = [0, 0], sizes = [8, 128], strides = [1, 1]} : vector<8x512xf32> to vector<8x128xf32>
    %280 = arith.negf %279 : vector<8x128xf32>
    %281 = math.exp %280 : vector<8x128xf32>
    %cst_66 = arith.constant 1.000000e+00 : f32
    %282 = vector.broadcast %cst_66 : f32 to vector<8x128xf32>
    %283 = arith.addf %282, %281 : vector<8x128xf32>
    %284 = arith.divf %282, %283 : vector<8x128xf32>
    %285 = vector.extract_strided_slice %278 {offsets = [0, 128], sizes = [8, 128], strides = [1, 1]} : vector<8x512xf32> to vector<8x128xf32>
    %286 = arith.negf %285 : vector<8x128xf32>
    %287 = math.exp %286 : vector<8x128xf32>
    %cst_67 = arith.constant 1.000000e+00 : f32
    %288 = vector.broadcast %cst_67 : f32 to vector<8x128xf32>
    %289 = arith.addf %288, %287 : vector<8x128xf32>
    %290 = arith.divf %288, %289 : vector<8x128xf32>
    %291 = vector.extract_strided_slice %278 {offsets = [0, 256], sizes = [8, 128], strides = [1, 1]} : vector<8x512xf32> to vector<8x128xf32>
    %292 = math.tanh %291 : vector<8x128xf32>
    %293 = vector.extract_strided_slice %278 {offsets = [0, 384], sizes = [8, 128], strides = [1, 1]} : vector<8x512xf32> to vector<8x128xf32>
    %294 = arith.negf %293 : vector<8x128xf32>
    %295 = math.exp %294 : vector<8x128xf32>
    %cst_68 = arith.constant 1.000000e+00 : f32
    %296 = vector.broadcast %cst_68 : f32 to vector<8x128xf32>
    %297 = arith.addf %296, %295 : vector<8x128xf32>
    %298 = arith.divf %296, %297 : vector<8x128xf32>
    %299 = arith.mulf %290, %272 : vector<8x128xf32>
    %300 = arith.mulf %284, %292 : vector<8x128xf32>
    %301 = arith.addf %299, %300 : vector<8x128xf32>
    %302 = math.tanh %301 : vector<8x128xf32>
    %303 = arith.mulf %298, %302 : vector<8x128xf32>
    %c16_69 = arith.constant 16 : index
    %c0_70 = arith.constant 0 : index
    %304 = vector.load %arg8[%c16_69, %c0_70] : memref<64x512xf32, #tpu.memory_space<vmem>>, vector<8x512xf32>
    %305 = arith.truncf %303 : vector<8x128xf32> to vector<8x128xbf16>
    %cst_71 = arith.constant dense<0.000000e+00> : vector<8x512xf32>
    %306 = tpu.matmul %305, %233, %cst_71 {dimension_numbers = #tpu.dot_dimension_numbers<[1], [0], [0], [1], [0, 0, 1, 1], [], []>} : vector<8x128xbf16>, vector<128x512xbf16>, vector<8x512xf32> -> vector<8x512xf32>
    %307 = arith.addf %304, %306 : vector<8x512xf32>
    %308 = vector.extract_strided_slice %307 {offsets = [0, 0], sizes = [8, 128], strides = [1, 1]} : vector<8x512xf32> to vector<8x128xf32>
    %309 = arith.negf %308 : vector<8x128xf32>
    %310 = math.exp %309 : vector<8x128xf32>
    %cst_72 = arith.constant 1.000000e+00 : f32
    %311 = vector.broadcast %cst_72 : f32 to vector<8x128xf32>
    %312 = arith.addf %311, %310 : vector<8x128xf32>
    %313 = arith.divf %311, %312 : vector<8x128xf32>
    %314 = vector.extract_strided_slice %307 {offsets = [0, 128], sizes = [8, 128], strides = [1, 1]} : vector<8x512xf32> to vector<8x128xf32>
    %315 = arith.negf %314 : vector<8x128xf32>
    %316 = math.exp %315 : vector<8x128xf32>
    %cst_73 = arith.constant 1.000000e+00 : f32
    %317 = vector.broadcast %cst_73 : f32 to vector<8x128xf32>
    %318 = arith.addf %317, %316 : vector<8x128xf32>
    %319 = arith.divf %317, %318 : vector<8x128xf32>
    %320 = vector.extract_strided_slice %307 {offsets = [0, 256], sizes = [8, 128], strides = [1, 1]} : vector<8x512xf32> to vector<8x128xf32>
    %321 = math.tanh %320 : vector<8x128xf32>
    %322 = vector.extract_strided_slice %307 {offsets = [0, 384], sizes = [8, 128], strides = [1, 1]} : vector<8x512xf32> to vector<8x128xf32>
    %323 = arith.negf %322 : vector<8x128xf32>
    %324 = math.exp %323 : vector<8x128xf32>
    %cst_74 = arith.constant 1.000000e+00 : f32
    %325 = vector.broadcast %cst_74 : f32 to vector<8x128xf32>
    %326 = arith.addf %325, %324 : vector<8x128xf32>
    %327 = arith.divf %325, %326 : vector<8x128xf32>
    %328 = arith.mulf %319, %301 : vector<8x128xf32>
    %329 = arith.mulf %313, %321 : vector<8x128xf32>
    %330 = arith.addf %328, %329 : vector<8x128xf32>
    %331 = math.tanh %330 : vector<8x128xf32>
    %332 = arith.mulf %327, %331 : vector<8x128xf32>
    %c24_75 = arith.constant 24 : index
    %c0_76 = arith.constant 0 : index
    %333 = vector.load %arg8[%c24_75, %c0_76] : memref<64x512xf32, #tpu.memory_space<vmem>>, vector<8x512xf32>
    %334 = arith.truncf %332 : vector<8x128xf32> to vector<8x128xbf16>
    %cst_77 = arith.constant dense<0.000000e+00> : vector<8x512xf32>
    %335 = tpu.matmul %334, %233, %cst_77 {dimension_numbers = #tpu.dot_dimension_numbers<[1], [0], [0], [1], [0, 0, 1, 1], [], []>} : vector<8x128xbf16>, vector<128x512xbf16>, vector<8x512xf32> -> vector<8x512xf32>
    %336 = arith.addf %333, %335 : vector<8x512xf32>
    %337 = vector.extract_strided_slice %336 {offsets = [0, 0], sizes = [8, 128], strides = [1, 1]} : vector<8x512xf32> to vector<8x128xf32>
    %338 = arith.negf %337 : vector<8x128xf32>
    %339 = math.exp %338 : vector<8x128xf32>
    %cst_78 = arith.constant 1.000000e+00 : f32
    %340 = vector.broadcast %cst_78 : f32 to vector<8x128xf32>
    %341 = arith.addf %340, %339 : vector<8x128xf32>
    %342 = arith.divf %340, %341 : vector<8x128xf32>
    %343 = vector.extract_strided_slice %336 {offsets = [0, 128], sizes = [8, 128], strides = [1, 1]} : vector<8x512xf32> to vector<8x128xf32>
    %344 = arith.negf %343 : vector<8x128xf32>
    %345 = math.exp %344 : vector<8x128xf32>
    %cst_79 = arith.constant 1.000000e+00 : f32
    %346 = vector.broadcast %cst_79 : f32 to vector<8x128xf32>
    %347 = arith.addf %346, %345 : vector<8x128xf32>
    %348 = arith.divf %346, %347 : vector<8x128xf32>
    %349 = vector.extract_strided_slice %336 {offsets = [0, 256], sizes = [8, 128], strides = [1, 1]} : vector<8x512xf32> to vector<8x128xf32>
    %350 = math.tanh %349 : vector<8x128xf32>
    %351 = vector.extract_strided_slice %336 {offsets = [0, 384], sizes = [8, 128], strides = [1, 1]} : vector<8x512xf32> to vector<8x128xf32>
    %352 = arith.negf %351 : vector<8x128xf32>
    %353 = math.exp %352 : vector<8x128xf32>
    %cst_80 = arith.constant 1.000000e+00 : f32
    %354 = vector.broadcast %cst_80 : f32 to vector<8x128xf32>
    %355 = arith.addf %354, %353 : vector<8x128xf32>
    %356 = arith.divf %354, %355 : vector<8x128xf32>
    %357 = arith.mulf %348, %330 : vector<8x128xf32>
    %358 = arith.mulf %342, %350 : vector<8x128xf32>
    %359 = arith.addf %357, %358 : vector<8x128xf32>
    %360 = math.tanh %359 : vector<8x128xf32>
    %361 = arith.mulf %356, %360 : vector<8x128xf32>
    %c32_81 = arith.constant 32 : index
    %c0_82 = arith.constant 0 : index
    %362 = vector.load %arg8[%c32_81, %c0_82] : memref<64x512xf32, #tpu.memory_space<vmem>>, vector<8x512xf32>
    %363 = arith.truncf %361 : vector<8x128xf32> to vector<8x128xbf16>
    %cst_83 = arith.constant dense<0.000000e+00> : vector<8x512xf32>
    %364 = tpu.matmul %363, %233, %cst_83 {dimension_numbers = #tpu.dot_dimension_numbers<[1], [0], [0], [1], [0, 0, 1, 1], [], []>} : vector<8x128xbf16>, vector<128x512xbf16>, vector<8x512xf32> -> vector<8x512xf32>
    %365 = arith.addf %362, %364 : vector<8x512xf32>
    %366 = vector.extract_strided_slice %365 {offsets = [0, 0], sizes = [8, 128], strides = [1, 1]} : vector<8x512xf32> to vector<8x128xf32>
    %367 = arith.negf %366 : vector<8x128xf32>
    %368 = math.exp %367 : vector<8x128xf32>
    %cst_84 = arith.constant 1.000000e+00 : f32
    %369 = vector.broadcast %cst_84 : f32 to vector<8x128xf32>
    %370 = arith.addf %369, %368 : vector<8x128xf32>
    %371 = arith.divf %369, %370 : vector<8x128xf32>
    %372 = vector.extract_strided_slice %365 {offsets = [0, 128], sizes = [8, 128], strides = [1, 1]} : vector<8x512xf32> to vector<8x128xf32>
    %373 = arith.negf %372 : vector<8x128xf32>
    %374 = math.exp %373 : vector<8x128xf32>
    %cst_85 = arith.constant 1.000000e+00 : f32
    %375 = vector.broadcast %cst_85 : f32 to vector<8x128xf32>
    %376 = arith.addf %375, %374 : vector<8x128xf32>
    %377 = arith.divf %375, %376 : vector<8x128xf32>
    %378 = vector.extract_strided_slice %365 {offsets = [0, 256], sizes = [8, 128], strides = [1, 1]} : vector<8x512xf32> to vector<8x128xf32>
    %379 = math.tanh %378 : vector<8x128xf32>
    %380 = vector.extract_strided_slice %365 {offsets = [0, 384], sizes = [8, 128], strides = [1, 1]} : vector<8x512xf32> to vector<8x128xf32>
    %381 = arith.negf %380 : vector<8x128xf32>
    %382 = math.exp %381 : vector<8x128xf32>
    %cst_86 = arith.constant 1.000000e+00 : f32
    %383 = vector.broadcast %cst_86 : f32 to vector<8x128xf32>
    %384 = arith.addf %383, %382 : vector<8x128xf32>
    %385 = arith.divf %383, %384 : vector<8x128xf32>
    %386 = arith.mulf %377, %359 : vector<8x128xf32>
    %387 = arith.mulf %371, %379 : vector<8x128xf32>
    %388 = arith.addf %386, %387 : vector<8x128xf32>
    %389 = math.tanh %388 : vector<8x128xf32>
    %390 = arith.mulf %385, %389 : vector<8x128xf32>
    %c40_87 = arith.constant 40 : index
    %c0_88 = arith.constant 0 : index
    %391 = vector.load %arg8[%c40_87, %c0_88] : memref<64x512xf32, #tpu.memory_space<vmem>>, vector<8x512xf32>
    %392 = arith.truncf %390 : vector<8x128xf32> to vector<8x128xbf16>
    %cst_89 = arith.constant dense<0.000000e+00> : vector<8x512xf32>
    %393 = tpu.matmul %392, %233, %cst_89 {dimension_numbers = #tpu.dot_dimension_numbers<[1], [0], [0], [1], [0, 0, 1, 1], [], []>} : vector<8x128xbf16>, vector<128x512xbf16>, vector<8x512xf32> -> vector<8x512xf32>
    %394 = arith.addf %391, %393 : vector<8x512xf32>
    %395 = vector.extract_strided_slice %394 {offsets = [0, 0], sizes = [8, 128], strides = [1, 1]} : vector<8x512xf32> to vector<8x128xf32>
    %396 = arith.negf %395 : vector<8x128xf32>
    %397 = math.exp %396 : vector<8x128xf32>
    %cst_90 = arith.constant 1.000000e+00 : f32
    %398 = vector.broadcast %cst_90 : f32 to vector<8x128xf32>
    %399 = arith.addf %398, %397 : vector<8x128xf32>
    %400 = arith.divf %398, %399 : vector<8x128xf32>
    %401 = vector.extract_strided_slice %394 {offsets = [0, 128], sizes = [8, 128], strides = [1, 1]} : vector<8x512xf32> to vector<8x128xf32>
    %402 = arith.negf %401 : vector<8x128xf32>
    %403 = math.exp %402 : vector<8x128xf32>
    %cst_91 = arith.constant 1.000000e+00 : f32
    %404 = vector.broadcast %cst_91 : f32 to vector<8x128xf32>
    %405 = arith.addf %404, %403 : vector<8x128xf32>
    %406 = arith.divf %404, %405 : vector<8x128xf32>
    %407 = vector.extract_strided_slice %394 {offsets = [0, 256], sizes = [8, 128], strides = [1, 1]} : vector<8x512xf32> to vector<8x128xf32>
    %408 = math.tanh %407 : vector<8x128xf32>
    %409 = vector.extract_strided_slice %394 {offsets = [0, 384], sizes = [8, 128], strides = [1, 1]} : vector<8x512xf32> to vector<8x128xf32>
    %410 = arith.negf %409 : vector<8x128xf32>
    %411 = math.exp %410 : vector<8x128xf32>
    %cst_92 = arith.constant 1.000000e+00 : f32
    %412 = vector.broadcast %cst_92 : f32 to vector<8x128xf32>
    %413 = arith.addf %412, %411 : vector<8x128xf32>
    %414 = arith.divf %412, %413 : vector<8x128xf32>
    %415 = arith.mulf %406, %388 : vector<8x128xf32>
    %416 = arith.mulf %400, %408 : vector<8x128xf32>
    %417 = arith.addf %415, %416 : vector<8x128xf32>
    %418 = math.tanh %417 : vector<8x128xf32>
    %419 = arith.mulf %414, %418 : vector<8x128xf32>
    %c48_93 = arith.constant 48 : index
    %c0_94 = arith.constant 0 : index
    %420 = vector.load %arg8[%c48_93, %c0_94] : memref<64x512xf32, #tpu.memory_space<vmem>>, vector<8x512xf32>
    %421 = arith.truncf %419 : vector<8x128xf32> to vector<8x128xbf16>
    %cst_95 = arith.constant dense<0.000000e+00> : vector<8x512xf32>
    %422 = tpu.matmul %421, %233, %cst_95 {dimension_numbers = #tpu.dot_dimension_numbers<[1], [0], [0], [1], [0, 0, 1, 1], [], []>} : vector<8x128xbf16>, vector<128x512xbf16>, vector<8x512xf32> -> vector<8x512xf32>
    %423 = arith.addf %420, %422 : vector<8x512xf32>
    %424 = vector.extract_strided_slice %423 {offsets = [0, 0], sizes = [8, 128], strides = [1, 1]} : vector<8x512xf32> to vector<8x128xf32>
    %425 = arith.negf %424 : vector<8x128xf32>
    %426 = math.exp %425 : vector<8x128xf32>
    %cst_96 = arith.constant 1.000000e+00 : f32
    %427 = vector.broadcast %cst_96 : f32 to vector<8x128xf32>
    %428 = arith.addf %427, %426 : vector<8x128xf32>
    %429 = arith.divf %427, %428 : vector<8x128xf32>
    %430 = vector.extract_strided_slice %423 {offsets = [0, 128], sizes = [8, 128], strides = [1, 1]} : vector<8x512xf32> to vector<8x128xf32>
    %431 = arith.negf %430 : vector<8x128xf32>
    %432 = math.exp %431 : vector<8x128xf32>
    %cst_97 = arith.constant 1.000000e+00 : f32
    %433 = vector.broadcast %cst_97 : f32 to vector<8x128xf32>
    %434 = arith.addf %433, %432 : vector<8x128xf32>
    %435 = arith.divf %433, %434 : vector<8x128xf32>
    %436 = vector.extract_strided_slice %423 {offsets = [0, 256], sizes = [8, 128], strides = [1, 1]} : vector<8x512xf32> to vector<8x128xf32>
    %437 = math.tanh %436 : vector<8x128xf32>
    %438 = vector.extract_strided_slice %423 {offsets = [0, 384], sizes = [8, 128], strides = [1, 1]} : vector<8x512xf32> to vector<8x128xf32>
    %439 = arith.negf %438 : vector<8x128xf32>
    %440 = math.exp %439 : vector<8x128xf32>
    %cst_98 = arith.constant 1.000000e+00 : f32
    %441 = vector.broadcast %cst_98 : f32 to vector<8x128xf32>
    %442 = arith.addf %441, %440 : vector<8x128xf32>
    %443 = arith.divf %441, %442 : vector<8x128xf32>
    %444 = arith.mulf %435, %417 : vector<8x128xf32>
    %445 = arith.mulf %429, %437 : vector<8x128xf32>
    %446 = arith.addf %444, %445 : vector<8x128xf32>
    %447 = math.tanh %446 : vector<8x128xf32>
    %448 = arith.mulf %443, %447 : vector<8x128xf32>
    %c56_99 = arith.constant 56 : index
    %c0_100 = arith.constant 0 : index
    %449 = vector.load %arg8[%c56_99, %c0_100] : memref<64x512xf32, #tpu.memory_space<vmem>>, vector<8x512xf32>
    %450 = arith.truncf %448 : vector<8x128xf32> to vector<8x128xbf16>
    %cst_101 = arith.constant dense<0.000000e+00> : vector<8x512xf32>
    %451 = tpu.matmul %450, %233, %cst_101 {dimension_numbers = #tpu.dot_dimension_numbers<[1], [0], [0], [1], [0, 0, 1, 1], [], []>} : vector<8x128xbf16>, vector<128x512xbf16>, vector<8x512xf32> -> vector<8x512xf32>
    %452 = arith.addf %449, %451 : vector<8x512xf32>
    %453 = vector.extract_strided_slice %452 {offsets = [0, 0], sizes = [8, 128], strides = [1, 1]} : vector<8x512xf32> to vector<8x128xf32>
    %454 = arith.negf %453 : vector<8x128xf32>
    %455 = math.exp %454 : vector<8x128xf32>
    %cst_102 = arith.constant 1.000000e+00 : f32
    %456 = vector.broadcast %cst_102 : f32 to vector<8x128xf32>
    %457 = arith.addf %456, %455 : vector<8x128xf32>
    %458 = arith.divf %456, %457 : vector<8x128xf32>
    %459 = vector.extract_strided_slice %452 {offsets = [0, 128], sizes = [8, 128], strides = [1, 1]} : vector<8x512xf32> to vector<8x128xf32>
    %460 = arith.negf %459 : vector<8x128xf32>
    %461 = math.exp %460 : vector<8x128xf32>
    %cst_103 = arith.constant 1.000000e+00 : f32
    %462 = vector.broadcast %cst_103 : f32 to vector<8x128xf32>
    %463 = arith.addf %462, %461 : vector<8x128xf32>
    %464 = arith.divf %462, %463 : vector<8x128xf32>
    %465 = vector.extract_strided_slice %452 {offsets = [0, 256], sizes = [8, 128], strides = [1, 1]} : vector<8x512xf32> to vector<8x128xf32>
    %466 = math.tanh %465 : vector<8x128xf32>
    %467 = vector.extract_strided_slice %452 {offsets = [0, 384], sizes = [8, 128], strides = [1, 1]} : vector<8x512xf32> to vector<8x128xf32>
    %468 = arith.negf %467 : vector<8x128xf32>
    %469 = math.exp %468 : vector<8x128xf32>
    %cst_104 = arith.constant 1.000000e+00 : f32
    %470 = vector.broadcast %cst_104 : f32 to vector<8x128xf32>
    %471 = arith.addf %470, %469 : vector<8x128xf32>
    %472 = arith.divf %470, %471 : vector<8x128xf32>
    %473 = arith.mulf %464, %446 : vector<8x128xf32>
    %474 = arith.mulf %458, %466 : vector<8x128xf32>
    %475 = arith.addf %473, %474 : vector<8x128xf32>
    %476 = math.tanh %475 : vector<8x128xf32>
    %477 = arith.mulf %472, %476 : vector<8x128xf32>
    %cst_105 = arith.constant 0.000000e+00 : f32
    %478 = vector.broadcast %cst_105 : f32 to vector<8x3xf32>
    %c0_106 = arith.constant 0 : index
    %c0_107 = arith.constant 0 : index
    %c0_108 = arith.constant 0 : index
    %479 = vector.load %arg5[%c0_106, %c0_107, %c0_108] : memref<2x128x3xf32, #tpu.memory_space<vmem>>, vector<1x128x3xf32>
    %480 = vector.shape_cast %479 : vector<1x128x3xf32> to vector<128x3xf32>
    %cst_109 = arith.constant dense<0.000000e+00> : vector<8x3xf32>
    %481 = tpu.matmul %231, %480, %cst_109 {dimension_numbers = #tpu.dot_dimension_numbers<[1], [0], [0], [1], [0, 0, 1, 1], [], []>, precision = #tpu.contract_precision<fp32>} : vector<8x128xf32>, vector<128x3xf32>, vector<8x3xf32> -> vector<8x3xf32>
    %482 = arith.addf %478, %481 : vector<8x3xf32>
    %c1_110 = arith.constant 1 : index
    %c0_111 = arith.constant 0 : index
    %c0_112 = arith.constant 0 : index
    %483 = vector.load %arg5[%c1_110, %c0_111, %c0_112] : memref<2x128x3xf32, #tpu.memory_space<vmem>>, vector<1x128x3xf32>
    %484 = vector.shape_cast %483 : vector<1x128x3xf32> to vector<128x3xf32>
    %cst_113 = arith.constant dense<0.000000e+00> : vector<8x3xf32>
    %485 = tpu.matmul %477, %484, %cst_113 {dimension_numbers = #tpu.dot_dimension_numbers<[1], [0], [0], [1], [0, 0, 1, 1], [], []>, precision = #tpu.contract_precision<fp32>} : vector<8x128xf32>, vector<128x3xf32>, vector<8x3xf32> -> vector<8x3xf32>
    %486 = arith.addf %482, %485 : vector<8x3xf32>
    %c0_114 = arith.constant 0 : index
    %c0_115 = arith.constant 0 : index
    %487 = vector.load %arg6[%c0_114, %c0_115] : memref<1x3xf32, #tpu.memory_space<vmem>>, vector<1x3xf32>
    %488 = vector.broadcast %487 : vector<1x3xf32> to vector<8x3xf32>
    %489 = arith.addf %486, %488 : vector<8x3xf32>
    %c0_116 = arith.constant 0 : index
    %c0_117 = arith.constant 0 : index
    %490 = vector.load %arg7[%c0_116, %c0_117] : memref<8x3xf32, #tpu.memory_space<vmem>>, vector<8x3xf32>
    tpu.vector_store %arg7[%c0_116, %c0_117], %489 {strides = array<i32>} : memref<8x3xf32, #tpu.memory_space<vmem>>, vector<8x3xf32>,
    return
  }
}

</mosaic_0001>

<llo_original>
// kernel: _lambda_.1
$region0: #{_lambda_.1}
  #allocation0 [shape = 'u32[]', space=smem, size = 0x4, offset = 0x4, fixed_abs, tag = 'smem constant byte address 0x4 - core index']
  #allocation1 [shape = 'u32[72,128]{1,0:T(1,128)}', space=vmem, size = 0x9000, scoped, tag = 'internal scratch']
  #allocation2 [shape = 'f32[64,512]{1,0:T(8,128)}', space=vmem, size = 0x20000, scoped, tag = 'scratch operand']
  %s0 = inlined_call_operand.vmem [shape: f32[64,512], index: 0, kind: input, shape index: {}]
  %s1 = inlined_call_operand.vmem [shape: bf16[2,128,512], index: 1, kind: input, shape index: {}]
  %s2 = inlined_call_operand.vmem [shape: f32[1,128,512], index: 2, kind: input, shape index: {}]
  %s3 = inlined_call_operand.vmem [shape: f32[1,128,512], index: 3, kind: input, shape index: {}]
  %s4 = inlined_call_operand.vmem [shape: f32[1,1,512], index: 4, kind: input, shape index: {}]
  %s5 = inlined_call_operand.vmem [shape: f32[2,128,3], index: 5, kind: input, shape index: {}]
  %s6 = inlined_call_operand.vmem [shape: f32[1,3], index: 6, kind: input, shape index: {}]
  %s7 = inlined_call_operand.vmem [shape: f32[8,3], index: 7, kind: output, shape index: {}]
  %s8 = sld [smem:[#allocation0]]
  $region38: #{_lambda_.1} parent=0
    _
  %s10 = ssub.s32 1, %s8
  %s11 = scalar_select 0, %s10, %s8
  // Predicated region
  $region2: #{_lambda_.1} parent=0 // pred_check
    _
  $region3: #{_lambda_.1} parent=0 // pred_check_branch
    %13 = sbr.rel (0) target = $region5
  $region4: #{_lambda_.1} parent=0 // pred_region
    _
  $region5: #{_lambda_.1} parent=0 // pred_fallthru
    _
  // Predicated region
  $region6: #{_lambda_.1} parent=0 // pred_check
    _
  $region7: #{_lambda_.1} parent=0 // pred_check_branch
    %15 = sbr.rel (0) target = $region9
  $region8: #{_lambda_.1} parent=0 // pred_region
    _
  $region9: #{_lambda_.1} parent=0 // pred_fallthru
    _
  // Predicated region
  $region10: #{_lambda_.1} parent=0 // pred_check
    _
  $region11: #{_lambda_.1} parent=0 // pred_check_branch
    %17 = sbr.rel (0) target = $region13
  $region12: #{_lambda_.1} parent=0 // pred_region
    _
  $region13: #{_lambda_.1} parent=0 // pred_fallthru
    _
  // Predicated region
  $region14: #{_lambda_.1} parent=0 // pred_check
    _
  $region15: #{_lambda_.1} parent=0 // pred_check_branch
    %19 = sbr.rel (0) target = $region17
  $region16: #{_lambda_.1} parent=0 // pred_region
    _
  $region17: #{_lambda_.1} parent=0 // pred_fallthru
    _
  // Predicated region
  $region18: #{_lambda_.1} parent=0 // pred_check
    _
  $region19: #{_lambda_.1} parent=0 // pred_check_branch
    %21 = sbr.rel (0) target = $region21
  $region20: #{_lambda_.1} parent=0 // pred_region
    _
  $region21: #{_lambda_.1} parent=0 // pred_fallthru
    _
  // Predicated region
  $region22: #{_lambda_.1} parent=0 // pred_check
    _
  $region23: #{_lambda_.1} parent=0 // pred_check_branch
    %23 = sbr.rel (0) target = $region25
  $region24: #{_lambda_.1} parent=0 // pred_region
    _
  $region25: #{_lambda_.1} parent=0 // pred_fallthru
    _
  // Predicated region
  $region26: #{_lambda_.1} parent=0 // pred_check
    _
  $region27: #{_lambda_.1} parent=0 // pred_check_branch
    %25 = sbr.rel (0) target = $region29
  $region28: #{_lambda_.1} parent=0 // pred_region
    _
  $region29: #{_lambda_.1} parent=0 // pred_fallthru
    _
  %v26 = vld [vmem:[%s1] sm:$0xff]
  %v27 = vld [vmem:[%s1 + $0x8] sm:$0xff]
  %v28 = vld [vmem:[%s1 + $0x10] sm:$0xff]
  %v29 = vld [vmem:[%s1 + $0x18] sm:$0xff]
  %v30 = vld [vmem:[%s1 + $0x20] sm:$0xff]
  %v31 = vld [vmem:[%s1 + $0x28] sm:$0xff]
  %v32 = vld [vmem:[%s1 + $0x30] sm:$0xff]
  %v33 = vld [vmem:[%s1 + $0x38] sm:$0xff]
  %v34 = vld [vmem:[%s1 + $0x40] sm:$0xff]
  %v35 = vld [vmem:[%s1 + $0x48] sm:$0xff]
  %v36 = vld [vmem:[%s1 + $0x50] sm:$0xff]
  %v37 = vld [vmem:[%s1 + $0x58] sm:$0xff]
  %v38 = vld [vmem:[%s1 + $0x60] sm:$0xff]
  %v39 = vld [vmem:[%s1 + $0x68] sm:$0xff]
  %v40 = vld [vmem:[%s1 + $0x70] sm:$0xff]
  %v41 = vld [vmem:[%s1 + $0x78] sm:$0xff]
  %v42 = vld [vmem:[%s1 + $0x80] sm:$0xff]
  %v43 = vld [vmem:[%s1 + $0x88] sm:$0xff]
  %v44 = vld [vmem:[%s1 + $0x90] sm:$0xff]
  %v45 = vld [vmem:[%s1 + $0x98] sm:$0xff]
  %v46 = vld [vmem:[%s1 + $0xa0] sm:$0xff]
  %v47 = vld [vmem:[%s1 + $0xa8] sm:$0xff]
  %v48 = vld [vmem:[%s1 + $0xb0] sm:$0xff]
  %v49 = vld [vmem:[%s1 + $0xb8] sm:$0xff]
  %v50 = vld [vmem:[%s1 + $0xc0] sm:$0xff]
  %v51 = vld [vmem:[%s1 + $0xc8] sm:$0xff]
  %v52 = vld [vmem:[%s1 + $0xd0] sm:$0xff]
  %v53 = vld [vmem:[%s1 + $0xd8] sm:$0xff]
  %v54 = vld [vmem:[%s1 + $0xe0] sm:$0xff]
  %v55 = vld [vmem:[%s1 + $0xe8] sm:$0xff]
  %v56 = vld [vmem:[%s1 + $0xf0] sm:$0xff]
  %v57 = vld [vmem:[%s1 + $0xf8] sm:$0xff]
  %v58 = vld [vmem:[%s0] sm:$0xff]
  %v59 = vld [vmem:[%s0 + $0x8] sm:$0xff]
  %v60 = vld [vmem:[%s0 + $0x10] sm:$0xff]
  %v61 = vld [vmem:[%s0 + $0x18] sm:$0xff]
  %v62 = vxor.u32 %v58, 2147483648
  %v63 = vmul.f32 %v62, 1.442695
  %v64 = vpow.pop %v63
  %v65 = vadd.f32 %v64, 1.0
  %v66 = vrcp.pop %v65
  %v67 = vmul.f32 %v65, %v66
  %v68 = vsub.f32 1.0, %v67
  %v69 = vmul.f32 %v66, %v68
  %v70 = vadd.f32 %v66, %v69
  %vm71 = vweird.f32 %v65
  %vm72 = vweird.f32 %v66
  %vm73 = vmor %vm71, %vm72
  %v74 = vsel %vm73, %v66, %v70
  %v75 = vand.u32 2147483647, %v65
  %vm76 = vcmp.eq.f32.partialorder %v75, 8.507059e+37
  %v77 = vand.u32 %v65, 2147483648
  %v78 = vor.u32 1.1754944e-38, %v77
  %v79 = vsel %vm76, %v78, %v74
  %v80 = vmul.f32 1.0, %v79
  %v81 = vxor.u32 %v59, 2147483648
  %v82 = vmul.f32 %v81, 1.442695
  %v83 = vpow.pop %v82
  %v84 = vadd.f32 %v83, 1.0
  %v85 = vrcp.pop %v84
  %v86 = vmul.f32 %v84, %v85
  %v87 = vsub.f32 1.0, %v86
  %v88 = vmul.f32 %v85, %v87
  %v89 = vadd.f32 %v85, %v88
  %vm90 = vweird.f32 %v84
  %vm91 = vweird.f32 %v85
  %vm92 = vmor %vm90, %vm91
  %v93 = vsel %vm92, %v85, %v89
  %v94 = vand.u32 2147483647, %v84
  %vm95 = vcmp.eq.f32.partialorder %v94, 8.507059e+37
  %v96 = vand.u32 %v84, 2147483648
  %v97 = vor.u32 1.1754944e-38, %v96
  %v98 = vsel %vm95, %v97, %v93
  %v99 = vmul.f32 1.0, %v98
  %v100 = vtanh.pop %v60
  %v101 = vxor.u32 %v61, 2147483648
  %v102 = vmul.f32 %v101, 1.442695
  %v103 = vpow.pop %v102
  %v104 = vadd.f32 %v103, 1.0
  %v105 = vrcp.pop %v104
  %v106 = vmul.f32 %v104, %v105
  %v107 = vsub.f32 1.0, %v106
  %v108 = vmul.f32 %v105, %v107
  %v109 = vadd.f32 %v105, %v108
  %vm110 = vweird.f32 %v104
  %vm111 = vweird.f32 %v105
  %vm112 = vmor %vm110, %vm111
  %v113 = vsel %vm112, %v105, %v109
  %v114 = vand.u32 2147483647, %v104
  %vm115 = vcmp.eq.f32.partialorder %v114, 8.507059e+37
  %v116 = vand.u32 %v104, 2147483648
  %v117 = vor.u32 1.1754944e-38, %v116
  %v118 = vsel %vm115, %v117, %v113
  %v119 = vmul.f32 1.0, %v118
  %v120 = vmul.f32 %v99, 0.0
  %v121 = vmul.f32 %v80, %v100
  %v122 = vadd.f32 %v120, %v121
  %v123 = vtanh.pop %v122
  %v124 = vmul.f32 %v119, %v123
  %v125 = vld [vmem:[%s0 + $0x20] sm:$0xff]
  %v126 = vld [vmem:[%s0 + $0x28] sm:$0xff]
  %v127 = vld [vmem:[%s0 + $0x30] sm:$0xff]
  %v128 = vld [vmem:[%s0 + $0x38] sm:$0xff]
  %v129 = vpack.c.bf16 %v124, %v124
  %v162 = vunpack.c.l.b16 %v26
  %v163 = vunpack.c.h.b16 %v26
  %v164 = vunpack.c.l.b16 %v27
  %v165 = vunpack.c.h.b16 %v27
  %v166 = vunpack.c.l.b16 %v28
  %v167 = vunpack.c.h.b16 %v28
  %v168 = vunpack.c.l.b16 %v29
  %v169 = vunpack.c.h.b16 %v29
  %v170 = vunpack.c.l.b16 %v30
  %v171 = vunpack.c.h.b16 %v30
  %v172 = vunpack.c.l.b16 %v31
  %v173 = vunpack.c.h.b16 %v31
  %v174 = vunpack.c.l.b16 %v32
  %v175 = vunpack.c.h.b16 %v32
  %v176 = vunpack.c.l.b16 %v33
  %v177 = vunpack.c.h.b16 %v33
  %v178 = vunpack.c.l.b16 %v34
  %v179 = vunpack.c.h.b16 %v34
  %v180 = vunpack.c.l.b16 %v35
  %v181 = vunpack.c.h.b16 %v35
  %v182 = vunpack.c.l.b16 %v36
  %v183 = vunpack.c.h.b16 %v36
  %v184 = vunpack.c.l.b16 %v37
  %v185 = vunpack.c.h.b16 %v37
  %v186 = vunpack.c.l.b16 %v38
  %v187 = vunpack.c.h.b16 %v38
  %v188 = vunpack.c.l.b16 %v39
  %v189 = vunpack.c.h.b16 %v39
  %v190 = vunpack.c.l.b16 %v40
  %v191 = vunpack.c.h.b16 %v40
  %v192 = vunpack.c.l.b16 %v41
  %v193 = vunpack.c.h.b16 %v41
  %v194 = vunpack.c.l.b16 %v42
  %v195 = vunpack.c.h.b16 %v42
  %v196 = vunpack.c.l.b16 %v43
  %v197 = vunpack.c.h.b16 %v43
  %v198 = vunpack.c.l.b16 %v44
  %v199 = vunpack.c.h.b16 %v44
  %v200 = vunpack.c.l.b16 %v45
  %v201 = vunpack.c.h.b16 %v45
  %v202 = vunpack.c.l.b16 %v46
  %v203 = vunpack.c.h.b16 %v46
  %v204 = vunpack.c.l.b16 %v47
  %v205 = vunpack.c.h.b16 %v47
  %v206 = vunpack.c.l.b16 %v48
  %v207 = vunpack.c.h.b16 %v48
  %v208 = vunpack.c.l.b16 %v49
  %v209 = vunpack.c.h.b16 %v49
  %v210 = vunpack.c.l.b16 %v50
  %v211 = vunpack.c.h.b16 %v50
  %v212 = vunpack.c.l.b16 %v51
  %v213 = vunpack.c.h.b16 %v51
  %v214 = vunpack.c.l.b16 %v52
  %v215 = vunpack.c.h.b16 %v52
  %v216 = vunpack.c.l.b16 %v53
  %v217 = vunpack.c.h.b16 %v53
  %v218 = vunpack.c.l.b16 %v54
  %v219 = vunpack.c.h.b16 %v54
  %v220 = vunpack.c.l.b16 %v55
  %v221 = vunpack.c.h.b16 %v55
  %v222 = vunpack.c.l.b16 %v56
  %v223 = vunpack.c.h.b16 %v56
  %v224 = vunpack.c.l.b16 %v57
  %v225 = vunpack.c.h.b16 %v57
  %v226 = vpack.c.b16 %v166, %v162
  %v227 = vpack.c.b16 %v167, %v163
  %v228 = vpack.c.b16 %v168, %v164
  %v229 = vpack.c.b16 %v169, %v165
  %v230 = vpack.c.b16 %v174, %v170
  %v231 = vpack.c.b16 %v175, %v171
  %v232 = vpack.c.b16 %v176, %v172
  %v233 = vpack.c.b16 %v177, %v173
  %v234 = vpack.c.b16 %v182, %v178
  %v235 = vpack.c.b16 %v183, %v179
  %v236 = vpack.c.b16 %v184, %v180
  %v237 = vpack.c.b16 %v185, %v181
  %v238 = vpack.c.b16 %v190, %v186
  %v239 = vpack.c.b16 %v191, %v187
  %v240 = vpack.c.b16 %v192, %v188
  %v241 = vpack.c.b16 %v193, %v189
  %v242 = vpack.c.b16 %v198, %v194
  %v243 = vpack.c.b16 %v199, %v195
  %v244 = vpack.c.b16 %v200, %v196
  %v245 = vpack.c.b16 %v201, %v197
  %v246 = vpack.c.b16 %v206, %v202
  %v247 = vpack.c.b16 %v207, %v203
  %v248 = vpack.c.b16 %v208, %v204
  %v249 = vpack.c.b16 %v209, %v205
  %v250 = vpack.c.b16 %v214, %v210
  %v251 = vpack.c.b16 %v215, %v211
  %v252 = vpack.c.b16 %v216, %v212
  %v253 = vpack.c.b16 %v217, %v213
  %v254 = vpack.c.b16 %v222, %v218
  %v255 = vpack.c.b16 %v223, %v219
  %v256 = vpack.c.b16 %v224, %v220
  %v257 = vpack.c.b16 %v225, %v221
  %290 = vmatpush.bf16.msra.mxu0 %v254
  %291 = vmatpush.bf16.msra.mxu0 %v250
  %292 = vmatpush.bf16.msra.mxu0 %v246
  %293 = vmatpush.bf16.msra.mxu0 %v242
  %294 = vmatpush.bf16.msra.mxu0 %v238
  %295 = vmatpush.bf16.msra.mxu0 %v234
  %296 = vmatpush.bf16.msra.mxu0 %v230
  %297 = vmatpush.bf16.msra.mxu0 %v226
  %298 = vmatmul.bf16.gmra.mxu0 %v129
  %v299 = vpop.f32.mrf.mxu0
  %v300 = vadd.f32 0.0, %v299
  %v301 = vpop.f32.mrf.mxu0
  %302 = vdwg.mxu0
  %303 = vmatpush.bf16.msra.mxu0 %v255
  %304 = vmatpush.bf16.msra.mxu0 %v251
  %305 = vmatpush.bf16.msra.mxu0 %v247
  %306 = vmatpush.bf16.msra.mxu0 %v243
  %307 = vmatpush.bf16.msra.mxu0 %v239
  %308 = vmatpush.bf16.msra.mxu0 %v235
  %309 = vmatpush.bf16.msra.mxu0 %v231
  %310 = vmatpush.bf16.msra.mxu0 %v227
  %311 = vmatmul.bf16.gmra.mxu0 %v129
  %v312 = vpop.f32.mrf.mxu0
  %v313 = vadd.f32 0.0, %v312
  %v314 = vpop.f32.mrf.mxu0
  %315 = vdwg.mxu0
  %316 = vmatpush.bf16.msra.mxu0 %v256
  %317 = vmatpush.bf16.msra.mxu0 %v252
  %318 = vmatpush.bf16.msra.mxu0 %v248
  %319 = vmatpush.bf16.msra.mxu0 %v244
  %320 = vmatpush.bf16.msra.mxu0 %v240
  %321 = vmatpush.bf16.msra.mxu0 %v236
  %322 = vmatpush.bf16.msra.mxu0 %v232
  %323 = vmatpush.bf16.msra.mxu0 %v228
  %324 = vmatmul.bf16.gmra.mxu0 %v129
  %v325 = vpop.f32.mrf.mxu0
  %v326 = vadd.f32 0.0, %v325
  %v327 = vpop.f32.mrf.mxu0
  %328 = vdwg.mxu0
  %329 = vmatpush.bf16.msra.mxu0 %v257
  %330 = vmatpush.bf16.msra.mxu0 %v253
  %331 = vmatpush.bf16.msra.mxu0 %v249
  %332 = vmatpush.bf16.msra.mxu0 %v245
  %333 = vmatpush.bf16.msra.mxu0 %v241
  %334 = vmatpush.bf16.msra.mxu0 %v237
  %335 = vmatpush.bf16.msra.mxu0 %v233
  %336 = vmatpush.bf16.msra.mxu0 %v229
  %337 = vmatmul.bf16.gmra.mxu0 %v129
  %v338 = vpop.f32.mrf.mxu0
  %v339 = vadd.f32 0.0, %v338
  %v340 = vpop.f32.mrf.mxu0
  %341 = vdwg.mxu0
  %v342 = vadd.f32 %v125, %v300
  %v343 = vadd.f32 %v126, %v313
  %v344 = vadd.f32 %v127, %v326
  %v345 = vadd.f32 %v128, %v339
  %v346 = vxor.u32 %v342, 2147483648
  %v347 = vmul.f32 %v346, 1.442695
  %v348 = vpow.pop %v347
  %v349 = vadd.f32 %v348, 1.0
  %v350 = vrcp.pop %v349
  %v351 = vmul.f32 %v349, %v350
  %v352 = vsub.f32 1.0, %v351
  %v353 = vmul.f32 %v350, %v352
  %v354 = vadd.f32 %v350, %v353
  %vm355 = vweird.f32 %v349
  %vm356 = vweird.f32 %v350
  %vm357 = vmor %vm355, %vm356
  %v358 = vsel %vm357, %v350, %v354
  %v359 = vand.u32 2147483647, %v349
  %vm360 = vcmp.eq.f32.partialorder %v359, 8.507059e+37
  %v361 = vand.u32 %v349, 2147483648
  %v362 = vor.u32 1.1754944e-38, %v361
  %v363 = vsel %vm360, %v362, %v358
  %v364 = vmul.f32 1.0, %v363
  %v365 = vxor.u32 %v343, 2147483648
  %v366 = vmul.f32 %v365, 1.442695
  %v367 = vpow.pop %v366
  %v368 = vadd.f32 %v367, 1.0
  %v369 = vrcp.pop %v368
  %v370 = vmul.f32 %v368, %v369
  %v371 = vsub.f32 1.0, %v370
  %v372 = vmul.f32 %v369, %v371
  %v373 = vadd.f32 %v369, %v372
  %vm374 = vweird.f32 %v368
  %vm375 = vweird.f32 %v369
  %vm376 = vmor %vm374, %vm375
  %v377 = vsel %vm376, %v369, %v373
  %v378 = vand.u32 2147483647, %v368
  %vm379 = vcmp.eq.f32.partialorder %v378, 8.507059e+37
  %v380 = vand.u32 %v368, 2147483648
  %v381 = vor.u32 1.1754944e-38, %v380
  %v382 = vsel %vm379, %v381, %v377
  %v383 = vmul.f32 1.0, %v382
  %v384 = vtanh.pop %v344
  %v385 = vxor.u32 %v345, 2147483648
  %v386 = vmul.f32 %v385, 1.442695
  %v387 = vpow.pop %v386
  %v388 = vadd.f32 %v387, 1.0
  %v389 = vrcp.pop %v388
  %v390 = vmul.f32 %v388, %v389
  %v391 = vsub.f32 1.0, %v390
  %v392 = vmul.f32 %v389, %v391
  %v393 = vadd.f32 %v389, %v392
  %vm394 = vweird.f32 %v388
  %vm395 = vweird.f32 %v389
  %vm396 = vmor %vm394, %vm395
  %v397 = vsel %vm396, %v389, %v393
  %v398 = vand.u32 2147483647, %v388
  %vm399 = vcmp.eq.f32.partialorder %v398, 8.507059e+37
  %v400 = vand.u32 %v388, 2147483648
  %v401 = vor.u32 1.1754944e-38, %v400
  %v402 = vsel %vm399, %v401, %v397
  %v403 = vmul.f32 1.0, %v402
  %v404 = vmul.f32 %v383, %v122
  %v405 = vmul.f32 %v364, %v384
  %v406 = vadd.f32 %v404, %v405
  %v407 = vtanh.pop %v406
  %v408 = vmul.f32 %v403, %v407
  %v409 = vld [vmem:[%s0 + $0x40] sm:$0xff]
  %v410 = vld [vmem:[%s0 + $0x48] sm:$0xff]
  %v411 = vld [vmem:[%s0 + $0x50] sm:$0xff]
  %v412 = vld [vmem:[%s0 + $0x58] sm:$0xff]
  %v413 = vpack.c.bf16 %v408, %v408
  %414 = vmatpush.bf16.msra.mxu0 %v254
  %415 = vmatpush.bf16.msra.mxu0 %v250
  %416 = vmatpush.bf16.msra.mxu0 %v246
  %417 = vmatpush.bf16.msra.mxu0 %v242
  %418 = vmatpush.bf16.msra.mxu0 %v238
  %419 = vmatpush.bf16.msra.mxu0 %v234
  %420 = vmatpush.bf16.msra.mxu0 %v230
  %421 = vmatpush.bf16.msra.mxu0 %v226
  %422 = vmatmul.bf16.gmra.mxu0 %v413
  %v423 = vpop.f32.mrf.mxu0
  %v424 = vadd.f32 0.0, %v423
  %v425 = vpop.f32.mrf.mxu0
  %426 = vdwg.mxu0
  %427 = vmatpush.bf16.msra.mxu0 %v255
  %428 = vmatpush.bf16.msra.mxu0 %v251
  %429 = vmatpush.bf16.msra.mxu0 %v247
  %430 = vmatpush.bf16.msra.mxu0 %v243
  %431 = vmatpush.bf16.msra.mxu0 %v239
  %432 = vmatpush.bf16.msra.mxu0 %v235
  %433 = vmatpush.bf16.msra.mxu0 %v231
  %434 = vmatpush.bf16.msra.mxu0 %v227
  %435 = vmatmul.bf16.gmra.mxu0 %v413
  %v436 = vpop.f32.mrf.mxu0
  %v437 = vadd.f32 0.0, %v436
  %v438 = vpop.f32.mrf.mxu0
  %439 = vdwg.mxu0
  %440 = vmatpush.bf16.msra.mxu0 %v256
  %441 = vmatpush.bf16.msra.mxu0 %v252
  %442 = vmatpush.bf16.msra.mxu0 %v248
  %443 = vmatpush.bf16.msra.mxu0 %v244
  %444 = vmatpush.bf16.msra.mxu0 %v240
  %445 = vmatpush.bf16.msra.mxu0 %v236
  %446 = vmatpush.bf16.msra.mxu0 %v232
  %447 = vmatpush.bf16.msra.mxu0 %v228
  %448 = vmatmul.bf16.gmra.mxu0 %v413
  %v449 = vpop.f32.mrf.mxu0
  %v450 = vadd.f32 0.0, %v449
  %v451 = vpop.f32.mrf.mxu0
  %452 = vdwg.mxu0
  %453 = vmatpush.bf16.msra.mxu0 %v257
  %454 = vmatpush.bf16.msra.mxu0 %v253
  %455 = vmatpush.bf16.msra.mxu0 %v249
  %456 = vmatpush.bf16.msra.mxu0 %v245
  %457 = vmatpush.bf16.msra.mxu0 %v241
  %458 = vmatpush.bf16.msra.mxu0 %v237
  %459 = vmatpush.bf16.msra.mxu0 %v233
  %460 = vmatpush.bf16.msra.mxu0 %v229
  %461 = vmatmul.bf16.gmra.mxu0 %v413
  %v462 = vpop.f32.mrf.mxu0
  %v463 = vadd.f32 0.0, %v462
  %v464 = vpop.f32.mrf.mxu0
  %465 = vdwg.mxu0
  %v466 = vadd.f32 %v409, %v424
  %v467 = vadd.f32 %v410, %v437
  %v468 = vadd.f32 %v411, %v450
  %v469 = vadd.f32 %v412, %v463
  %v470 = vxor.u32 %v466, 2147483648
  %v471 = vmul.f32 %v470, 1.442695
  %v472 = vpow.pop %v471
  %v473 = vadd.f32 %v472, 1.0
  %v474 = vrcp.pop %v473
  %v475 = vmul.f32 %v473, %v474
  %v476 = vsub.f32 1.0, %v475
  %v477 = vmul.f32 %v474, %v476
  %v478 = vadd.f32 %v474, %v477
  %vm479 = vweird.f32 %v473
  %vm480 = vweird.f32 %v474
  %vm481 = vmor %vm479, %vm480
  %v482 = vsel %vm481, %v474, %v478
  %v483 = vand.u32 2147483647, %v473
  %vm484 = vcmp.eq.f32.partialorder %v483, 8.507059e+37
  %v485 = vand.u32 %v473, 2147483648
  %v486 = vor.u32 1.1754944e-38, %v485
  %v487 = vsel %vm484, %v486, %v482
  %v488 = vmul.f32 1.0, %v487
  %v489 = vxor.u32 %v467, 2147483648
  %v490 = vmul.f32 %v489, 1.442695
  %v491 = vpow.pop %v490
  %v492 = vadd.f32 %v491, 1.0
  %v493 = vrcp.pop %v492
  %v494 = vmul.f32 %v492, %v493
  %v495 = vsub.f32 1.0, %v494
  %v496 = vmul.f32 %v493, %v495
  %v497 = vadd.f32 %v493, %v496
  %vm498 = vweird.f32 %v492
  %vm499 = vweird.f32 %v493
  %vm500 = vmor %vm498, %vm499
  %v501 = vsel %vm500, %v493, %v497
  %v502 = vand.u32 2147483647, %v492
  %vm503 = vcmp.eq.f32.partialorder %v502, 8.507059e+37
  %v504 = vand.u32 %v492, 2147483648
  %v505 = vor.u32 1.1754944e-38, %v504
  %v506 = vsel %vm503, %v505, %v501
  %v507 = vmul.f32 1.0, %v506
  %v508 = vtanh.pop %v468
  %v509 = vxor.u32 %v469, 2147483648
  %v510 = vmul.f32 %v509, 1.442695
  %v511 = vpow.pop %v510
  %v512 = vadd.f32 %v511, 1.0
  %v513 = vrcp.pop %v512
  %v514 = vmul.f32 %v512, %v513
  %v515 = vsub.f32 1.0, %v514
  %v516 = vmul.f32 %v513, %v515
  %v517 = vadd.f32 %v513, %v516
  %vm518 = vweird.f32 %v512
  %vm519 = vweird.f32 %v513
  %vm520 = vmor %vm518, %vm519
  %v521 = vsel %vm520, %v513, %v517
  %v522 = vand.u32 2147483647, %v512
  %vm523 = vcmp.eq.f32.partialorder %v522, 8.507059e+37
  %v524 = vand.u32 %v512, 2147483648
  %v525 = vor.u32 1.1754944e-38, %v524
  %v526 = vsel %vm523, %v525, %v521
  %v527 = vmul.f32 1.0, %v526
  %v528 = vmul.f32 %v507, %v406
  %v529 = vmul.f32 %v488, %v508
  %v530 = vadd.f32 %v528, %v529
  %v531 = vtanh.pop %v530
  %v532 = vmul.f32 %v527, %v531
  %v533 = vld [vmem:[%s0 + $0x60] sm:$0xff]
  %v534 = vld [vmem:[%s0 + $0x68] sm:$0xff]
  %v535 = vld [vmem:[%s0 + $0x70] sm:$0xff]
  %v536 = vld [vmem:[%s0 + $0x78] sm:$0xff]
  %v537 = vpack.c.bf16 %v532, %v532
  %538 = vmatpush.bf16.msra.mxu0 %v254
  %539 = vmatpush.bf16.msra.mxu0 %v250
  %540 = vmatpush.bf16.msra.mxu0 %v246
  %541 = vmatpush.bf16.msra.mxu0 %v242
  %542 = vmatpush.bf16.msra.mxu0 %v238
  %543 = vmatpush.bf16.msra.mxu0 %v234
  %544 = vmatpush.bf16.msra.mxu0 %v230
  %545 = vmatpush.bf16.msra.mxu0 %v226
  %546 = vmatmul.bf16.gmra.mxu0 %v537
  %v547 = vpop.f32.mrf.mxu0
  %v548 = vadd.f32 0.0, %v547
  %v549 = vpop.f32.mrf.mxu0
  %550 = vdwg.mxu0
  %551 = vmatpush.bf16.msra.mxu0 %v255
  %552 = vmatpush.bf16.msra.mxu0 %v251
  %553 = vmatpush.bf16.msra.mxu0 %v247
  %554 = vmatpush.bf16.msra.mxu0 %v243
  %555 = vmatpush.bf16.msra.mxu0 %v239
  %556 = vmatpush.bf16.msra.mxu0 %v235
  %557 = vmatpush.bf16.msra.mxu0 %v231
  %558 = vmatpush.bf16.msra.mxu0 %v227
  %559 = vmatmul.bf16.gmra.mxu0 %v537
  %v560 = vpop.f32.mrf.mxu0
  %v561 = vadd.f32 0.0, %v560
  %v562 = vpop.f32.mrf.mxu0
  %563 = vdwg.mxu0
  %564 = vmatpush.bf16.msra.mxu0 %v256
  %565 = vmatpush.bf16.msra.mxu0 %v252
  %566 = vmatpush.bf16.msra.mxu0 %v248
  %567 = vmatpush.bf16.msra.mxu0 %v244
  %568 = vmatpush.bf16.msra.mxu0 %v240
  %569 = vmatpush.bf16.msra.mxu0 %v236
  %570 = vmatpush.bf16.msra.mxu0 %v232
  %571 = vmatpush.bf16.msra.mxu0 %v228
  %572 = vmatmul.bf16.gmra.mxu0 %v537
  %v573 = vpop.f32.mrf.mxu0
  %v574 = vadd.f32 0.0, %v573
  %v575 = vpop.f32.mrf.mxu0
  %576 = vdwg.mxu0
  %577 = vmatpush.bf16.msra.mxu0 %v257
  %578 = vmatpush.bf16.msra.mxu0 %v253
  %579 = vmatpush.bf16.msra.mxu0 %v249
  %580 = vmatpush.bf16.msra.mxu0 %v245
  %581 = vmatpush.bf16.msra.mxu0 %v241
  %582 = vmatpush.bf16.msra.mxu0 %v237
  %583 = vmatpush.bf16.msra.mxu0 %v233
  %584 = vmatpush.bf16.msra.mxu0 %v229
  %585 = vmatmul.bf16.gmra.mxu0 %v537
  %v586 = vpop.f32.mrf.mxu0
  %v587 = vadd.f32 0.0, %v586
  %v588 = vpop.f32.mrf.mxu0
  %589 = vdwg.mxu0
  %v590 = vadd.f32 %v533, %v548
  %v591 = vadd.f32 %v534, %v561
  %v592 = vadd.f32 %v535, %v574
  %v593 = vadd.f32 %v536, %v587
  %v594 = vxor.u32 %v590, 2147483648
  %v595 = vmul.f32 %v594, 1.442695
  %v596 = vpow.pop %v595
  %v597 = vadd.f32 %v596, 1.0
  %v598 = vrcp.pop %v597
  %v599 = vmul.f32 %v597, %v598
  %v600 = vsub.f32 1.0, %v599
  %v601 = vmul.f32 %v598, %v600
  %v602 = vadd.f32 %v598, %v601
  %vm603 = vweird.f32 %v597
  %vm604 = vweird.f32 %v598
  %vm605 = vmor %vm603, %vm604
  %v606 = vsel %vm605, %v598, %v602
  %v607 = vand.u32 2147483647, %v597
  %vm608 = vcmp.eq.f32.partialorder %v607, 8.507059e+37
  %v609 = vand.u32 %v597, 2147483648
  %v610 = vor.u32 1.1754944e-38, %v609
  %v611 = vsel %vm608, %v610, %v606
  %v612 = vmul.f32 1.0, %v611
  %v613 = vxor.u32 %v591, 2147483648
  %v614 = vmul.f32 %v613, 1.442695
  %v615 = vpow.pop %v614
  %v616 = vadd.f32 %v615, 1.0
  %v617 = vrcp.pop %v616
  %v618 = vmul.f32 %v616, %v617
  %v619 = vsub.f32 1.0, %v618
  %v620 = vmul.f32 %v617, %v619
  %v621 = vadd.f32 %v617, %v620
  %vm622 = vweird.f32 %v616
  %vm623 = vweird.f32 %v617
  %vm624 = vmor %vm622, %vm623
  %v625 = vsel %vm624, %v617, %v621
  %v626 = vand.u32 2147483647, %v616
  %vm627 = vcmp.eq.f32.partialorder %v626, 8.507059e+37
  %v628 = vand.u32 %v616, 2147483648
  %v629 = vor.u32 1.1754944e-38, %v628
  %v630 = vsel %vm627, %v629, %v625
  %v631 = vmul.f32 1.0, %v630
  %v632 = vtanh.pop %v592
  %v633 = vxor.u32 %v593, 2147483648
  %v634 = vmul.f32 %v633, 1.442695
  %v635 = vpow.pop %v634
  %v636 = vadd.f32 %v635, 1.0
  %v637 = vrcp.pop %v636
  %v638 = vmul.f32 %v636, %v637
  %v639 = vsub.f32 1.0, %v638
  %v640 = vmul.f32 %v637, %v639
  %v641 = vadd.f32 %v637, %v640
  %vm642 = vweird.f32 %v636
  %vm643 = vweird.f32 %v637
  %vm644 = vmor %vm642, %vm643
  %v645 = vsel %vm644, %v637, %v641
  %v646 = vand.u32 2147483647, %v636
  %vm647 = vcmp.eq.f32.partialorder %v646, 8.507059e+37
  %v648 = vand.u32 %v636, 2147483648
  %v649 = vor.u32 1.1754944e-38, %v648
  %v650 = vsel %vm647, %v649, %v645
  %v651 = vmul.f32 1.0, %v650
  %v652 = vmul.f32 %v631, %v530
  %v653 = vmul.f32 %v612, %v632
  %v654 = vadd.f32 %v652, %v653
  %v655 = vtanh.pop %v654
  %v656 = vmul.f32 %v651, %v655
  %v657 = vld [vmem:[%s0 + $0x80] sm:$0xff]
  %v658 = vld [vmem:[%s0 + $0x88] sm:$0xff]
  %v659 = vld [vmem:[%s0 + $0x90] sm:$0xff]
  %v660 = vld [vmem:[%s0 + $0x98] sm:$0xff]
  %v661 = vpack.c.bf16 %v656, %v656
  %662 = vmatpush.bf16.msra.mxu0 %v254
  %663 = vmatpush.bf16.msra.mxu0 %v250
  %664 = vmatpush.bf16.msra.mxu0 %v246
  %665 = vmatpush.bf16.msra.mxu0 %v242
  %666 = vmatpush.bf16.msra.mxu0 %v238
  %667 = vmatpush.bf16.msra.mxu0 %v234
  %668 = vmatpush.bf16.msra.mxu0 %v230
  %669 = vmatpush.bf16.msra.mxu0 %v226
  %670 = vmatmul.bf16.gmra.mxu0 %v661
  %v671 = vpop.f32.mrf.mxu0
  %v672 = vadd.f32 0.0, %v671
  %v673 = vpop.f32.mrf.mxu0
  %674 = vdwg.mxu0
  %675 = vmatpush.bf16.msra.mxu0 %v255
  %676 = vmatpush.bf16.msra.mxu0 %v251
  %677 = vmatpush.bf16.msra.mxu0 %v247
  %678 = vmatpush.bf16.msra.mxu0 %v243
  %679 = vmatpush.bf16.msra.mxu0 %v239
  %680 = vmatpush.bf16.msra.mxu0 %v235
  %681 = vmatpush.bf16.msra.mxu0 %v231
  %682 = vmatpush.bf16.msra.mxu0 %v227
  %683 = vmatmul.bf16.gmra.mxu0 %v661
  %v684 = vpop.f32.mrf.mxu0
  %v685 = vadd.f32 0.0, %v684
  %v686 = vpop.f32.mrf.mxu0
  %687 = vdwg.mxu0
  %688 = vmatpush.bf16.msra.mxu0 %v256
  %689 = vmatpush.bf16.msra.mxu0 %v252
  %690 = vmatpush.bf16.msra.mxu0 %v248
  %691 = vmatpush.bf16.msra.mxu0 %v244
  %692 = vmatpush.bf16.msra.mxu0 %v240
  %693 = vmatpush.bf16.msra.mxu0 %v236
  %694 = vmatpush.bf16.msra.mxu0 %v232
  %695 = vmatpush.bf16.msra.mxu0 %v228
  %696 = vmatmul.bf16.gmra.mxu0 %v661
  %v697 = vpop.f32.mrf.mxu0
  %v698 = vadd.f32 0.0, %v697
  %v699 = vpop.f32.mrf.mxu0
  %700 = vdwg.mxu0
  %701 = vmatpush.bf16.msra.mxu0 %v257
  %702 = vmatpush.bf16.msra.mxu0 %v253
  %703 = vmatpush.bf16.msra.mxu0 %v249
  %704 = vmatpush.bf16.msra.mxu0 %v245
  %705 = vmatpush.bf16.msra.mxu0 %v241
  %706 = vmatpush.bf16.msra.mxu0 %v237
  %707 = vmatpush.bf16.msra.mxu0 %v233
  %708 = vmatpush.bf16.msra.mxu0 %v229
  %709 = vmatmul.bf16.gmra.mxu0 %v661
  %v710 = vpop.f32.mrf.mxu0
  %v711 = vadd.f32 0.0, %v710
  %v712 = vpop.f32.mrf.mxu0
  %713 = vdwg.mxu0
  %v714 = vadd.f32 %v657, %v672
  %v715 = vadd.f32 %v658, %v685
  %v716 = vadd.f32 %v659, %v698
  %v717 = vadd.f32 %v660, %v711
  %v718 = vxor.u32 %v714, 2147483648
  %v719 = vmul.f32 %v718, 1.442695
  %v720 = vpow.pop %v719
  %v721 = vadd.f32 %v720, 1.0
  %v722 = vrcp.pop %v721
  %v723 = vmul.f32 %v721, %v722
  %v724 = vsub.f32 1.0, %v723
  %v725 = vmul.f32 %v722, %v724
  %v726 = vadd.f32 %v722, %v725
  %vm727 = vweird.f32 %v721
  %vm728 = vweird.f32 %v722
  %vm729 = vmor %vm727, %vm728
  %v730 = vsel %vm729, %v722, %v726
  %v731 = vand.u32 2147483647, %v721
  %vm732 = vcmp.eq.f32.partialorder %v731, 8.507059e+37
  %v733 = vand.u32 %v721, 2147483648
  %v734 = vor.u32 1.1754944e-38, %v733
  %v735 = vsel %vm732, %v734, %v730
  %v736 = vmul.f32 1.0, %v735
  %v737 = vxor.u32 %v715, 2147483648
  %v738 = vmul.f32 %v737, 1.442695
  %v739 = vpow.pop %v738
  %v740 = vadd.f32 %v739, 1.0
  %v741 = vrcp.pop %v740
  %v742 = vmul.f32 %v740, %v741
  %v743 = vsub.f32 1.0, %v742
  %v744 = vmul.f32 %v741, %v743
  %v745 = vadd.f32 %v741, %v744
  %vm746 = vweird.f32 %v740
  %vm747 = vweird.f32 %v741
  %vm748 = vmor %vm746, %vm747
  %v749 = vsel %vm748, %v741, %v745
  %v750 = vand.u32 2147483647, %v740
  %vm751 = vcmp.eq.f32.partialorder %v750, 8.507059e+37
  %v752 = vand.u32 %v740, 2147483648
  %v753 = vor.u32 1.1754944e-38, %v752
  %v754 = vsel %vm751, %v753, %v749
  %v755 = vmul.f32 1.0, %v754
  %v756 = vtanh.pop %v716
  %v757 = vxor.u32 %v717, 2147483648
  %v758 = vmul.f32 %v757, 1.442695
  %v759 = vpow.pop %v758
  %v760 = vadd.f32 %v759, 1.0
  %v761 = vrcp.pop %v760
  %v762 = vmul.f32 %v760, %v761
  %v763 = vsub.f32 1.0, %v762
  %v764 = vmul.f32 %v761, %v763
  %v765 = vadd.f32 %v761, %v764
  %vm766 = vweird.f32 %v760
  %vm767 = vweird.f32 %v761
  %vm768 = vmor %vm766, %vm767
  %v769 = vsel %vm768, %v761, %v765
  %v770 = vand.u32 2147483647, %v760
  %vm771 = vcmp.eq.f32.partialorder %v770, 8.507059e+37
  %v772 = vand.u32 %v760, 2147483648
  %v773 = vor.u32 1.1754944e-38, %v772
  %v774 = vsel %vm771, %v773, %v769
  %v775 = vmul.f32 1.0, %v774
  %v776 = vmul.f32 %v755, %v654
  %v777 = vmul.f32 %v736, %v756
  %v778 = vadd.f32 %v776, %v777
  %v779 = vtanh.pop %v778
  %v780 = vmul.f32 %v775, %v779
  %v781 = vld [vmem:[%s0 + $0xa0] sm:$0xff]
  %v782 = vld [vmem:[%s0 + $0xa8] sm:$0xff]
  %v783 = vld [vmem:[%s0 + $0xb0] sm:$0xff]
  %v784 = vld [vmem:[%s0 + $0xb8] sm:$0xff]
  %v785 = vpack.c.bf16 %v780, %v780
  %786 = vmatpush.bf16.msra.mxu0 %v254
  %787 = vmatpush.bf16.msra.mxu0 %v250
  %788 = vmatpush.bf16.msra.mxu0 %v246
  %789 = vmatpush.bf16.msra.mxu0 %v242
  %790 = vmatpush.bf16.msra.mxu0 %v238
  %791 = vmatpush.bf16.msra.mxu0 %v234
  %792 = vmatpush.bf16.msra.mxu0 %v230
  %793 = vmatpush.bf16.msra.mxu0 %v226
  %794 = vmatmul.bf16.gmra.mxu0 %v785
  %v795 = vpop.f32.mrf.mxu0
  %v796 = vadd.f32 0.0, %v795
  %v797 = vpop.f32.mrf.mxu0
  %798 = vdwg.mxu0
  %799 = vmatpush.bf16.msra.mxu0 %v255
  %800 = vmatpush.bf16.msra.mxu0 %v251
  %801 = vmatpush.bf16.msra.mxu0 %v247
  %802 = vmatpush.bf16.msra.mxu0 %v243
  %803 = vmatpush.bf16.msra.mxu0 %v239
  %804 = vmatpush.bf16.msra.mxu0 %v235
  %805 = vmatpush.bf16.msra.mxu0 %v231
  %806 = vmatpush.bf16.msra.mxu0 %v227
  %807 = vmatmul.bf16.gmra.mxu0 %v785
  %v808 = vpop.f32.mrf.mxu0
  %v809 = vadd.f32 0.0, %v808
  %v810 = vpop.f32.mrf.mxu0
  %811 = vdwg.mxu0
  %812 = vmatpush.bf16.msra.mxu0 %v256
  %813 = vmatpush.bf16.msra.mxu0 %v252
  %814 = vmatpush.bf16.msra.mxu0 %v248
  %815 = vmatpush.bf16.msra.mxu0 %v244
  %816 = vmatpush.bf16.msra.mxu0 %v240
  %817 = vmatpush.bf16.msra.mxu0 %v236
  %818 = vmatpush.bf16.msra.mxu0 %v232
  %819 = vmatpush.bf16.msra.mxu0 %v228
  %820 = vmatmul.bf16.gmra.mxu0 %v785
  %v821 = vpop.f32.mrf.mxu0
  %v822 = vadd.f32 0.0, %v821
  %v823 = vpop.f32.mrf.mxu0
  %824 = vdwg.mxu0
  %825 = vmatpush.bf16.msra.mxu0 %v257
  %826 = vmatpush.bf16.msra.mxu0 %v253
  %827 = vmatpush.bf16.msra.mxu0 %v249
  %828 = vmatpush.bf16.msra.mxu0 %v245
  %829 = vmatpush.bf16.msra.mxu0 %v241
  %830 = vmatpush.bf16.msra.mxu0 %v237
  %831 = vmatpush.bf16.msra.mxu0 %v233
  %832 = vmatpush.bf16.msra.mxu0 %v229
  %833 = vmatmul.bf16.gmra.mxu0 %v785
  %v834 = vpop.f32.mrf.mxu0
  %v835 = vadd.f32 0.0, %v834
  %v836 = vpop.f32.mrf.mxu0
  %837 = vdwg.mxu0
  %v838 = vadd.f32 %v781, %v796
  %v839 = vadd.f32 %v782, %v809
  %v840 = vadd.f32 %v783, %v822
  %v841 = vadd.f32 %v784, %v835
  %v842 = vxor.u32 %v838, 2147483648
  %v843 = vmul.f32 %v842, 1.442695
  %v844 = vpow.pop %v843
  %v845 = vadd.f32 %v844, 1.0
  %v846 = vrcp.pop %v845
  %v847 = vmul.f32 %v845, %v846
  %v848 = vsub.f32 1.0, %v847
  %v849 = vmul.f32 %v846, %v848
  %v850 = vadd.f32 %v846, %v849
  %vm851 = vweird.f32 %v845
  %vm852 = vweird.f32 %v846
  %vm853 = vmor %vm851, %vm852
  %v854 = vsel %vm853, %v846, %v850
  %v855 = vand.u32 2147483647, %v845
  %vm856 = vcmp.eq.f32.partialorder %v855, 8.507059e+37
  %v857 = vand.u32 %v845, 2147483648
  %v858 = vor.u32 1.1754944e-38, %v857
  %v859 = vsel %vm856, %v858, %v854
  %v860 = vmul.f32 1.0, %v859
  %v861 = vxor.u32 %v839, 2147483648
  %v862 = vmul.f32 %v861, 1.442695
  %v863 = vpow.pop %v862
  %v864 = vadd.f32 %v863, 1.0
  %v865 = vrcp.pop %v864
  %v866 = vmul.f32 %v864, %v865
  %v867 = vsub.f32 1.0, %v866
  %v868 = vmul.f32 %v865, %v867
  %v869 = vadd.f32 %v865, %v868
  %vm870 = vweird.f32 %v864
  %vm871 = vweird.f32 %v865
  %vm872 = vmor %vm870, %vm871
  %v873 = vsel %vm872, %v865, %v869
  %v874 = vand.u32 2147483647, %v864
  %vm875 = vcmp.eq.f32.partialorder %v874, 8.507059e+37
  %v876 = vand.u32 %v864, 2147483648
  %v877 = vor.u32 1.1754944e-38, %v876
  %v878 = vsel %vm875, %v877, %v873
  %v879 = vmul.f32 1.0, %v878
  %v880 = vtanh.pop %v840
  %v881 = vxor.u32 %v841, 2147483648
  %v882 = vmul.f32 %v881, 1.442695
  %v883 = vpow.pop %v882
  %v884 = vadd.f32 %v883, 1.0
  %v885 = vrcp.pop %v884
  %v886 = vmul.f32 %v884, %v885
  %v887 = vsub.f32 1.0, %v886
  %v888 = vmul.f32 %v885, %v887
  %v889 = vadd.f32 %v885, %v888
  %vm890 = vweird.f32 %v884
  %vm891 = vweird.f32 %v885
  %vm892 = vmor %vm890, %vm891
  %v893 = vsel %vm892, %v885, %v889
  %v894 = vand.u32 2147483647, %v884
  %vm895 = vcmp.eq.f32.partialorder %v894, 8.507059e+37
  %v896 = vand.u32 %v884, 2147483648
  %v897 = vor.u32 1.1754944e-38, %v896
  %v898 = vsel %vm895, %v897, %v893
  %v899 = vmul.f32 1.0, %v898
  %v900 = vmul.f32 %v879, %v778
  %v901 = vmul.f32 %v860, %v880
  %v902 = vadd.f32 %v900, %v901
  %v903 = vtanh.pop %v902
  %v904 = vmul.f32 %v899, %v903
  %v905 = vld [vmem:[%s0 + $0xc0] sm:$0xff]
  %v906 = vld [vmem:[%s0 + $0xc8] sm:$0xff]
  %v907 = vld [vmem:[%s0 + $0xd0] sm:$0xff]
  %v908 = vld [vmem:[%s0 + $0xd8] sm:$0xff]
  %v909 = vpack.c.bf16 %v904, %v904
  %910 = vmatpush.bf16.msra.mxu0 %v254
  %911 = vmatpush.bf16.msra.mxu0 %v250
  %912 = vmatpush.bf16.msra.mxu0 %v246
  %913 = vmatpush.bf16.msra.mxu0 %v242
  %914 = vmatpush.bf16.msra.mxu0 %v238
  %915 = vmatpush.bf16.msra.mxu0 %v234
  %916 = vmatpush.bf16.msra.mxu0 %v230
  %917 = vmatpush.bf16.msra.mxu0 %v226
  %918 = vmatmul.bf16.gmra.mxu0 %v909
  %v919 = vpop.f32.mrf.mxu0
  %v920 = vadd.f32 0.0, %v919
  %v921 = vpop.f32.mrf.mxu0
  %922 = vdwg.mxu0
  %923 = vmatpush.bf16.msra.mxu0 %v255
  %924 = vmatpush.bf16.msra.mxu0 %v251
  %925 = vmatpush.bf16.msra.mxu0 %v247
  %926 = vmatpush.bf16.msra.mxu0 %v243
  %927 = vmatpush.bf16.msra.mxu0 %v239
  %928 = vmatpush.bf16.msra.mxu0 %v235
  %929 = vmatpush.bf16.msra.mxu0 %v231
  %930 = vmatpush.bf16.msra.mxu0 %v227
  %931 = vmatmul.bf16.gmra.mxu0 %v909
  %v932 = vpop.f32.mrf.mxu0
  %v933 = vadd.f32 0.0, %v932
  %v934 = vpop.f32.mrf.mxu0
  %935 = vdwg.mxu0
  %936 = vmatpush.bf16.msra.mxu0 %v256
  %937 = vmatpush.bf16.msra.mxu0 %v252
  %938 = vmatpush.bf16.msra.mxu0 %v248
  %939 = vmatpush.bf16.msra.mxu0 %v244
  %940 = vmatpush.bf16.msra.mxu0 %v240
  %941 = vmatpush.bf16.msra.mxu0 %v236
  %942 = vmatpush.bf16.msra.mxu0 %v232
  %943 = vmatpush.bf16.msra.mxu0 %v228
  %944 = vmatmul.bf16.gmra.mxu0 %v909
  %v945 = vpop.f32.mrf.mxu0
  %v946 = vadd.f32 0.0, %v945
  %v947 = vpop.f32.mrf.mxu0
  %948 = vdwg.mxu0
  %949 = vmatpush.bf16.msra.mxu0 %v257
  %950 = vmatpush.bf16.msra.mxu0 %v253
  %951 = vmatpush.bf16.msra.mxu0 %v249
  %952 = vmatpush.bf16.msra.mxu0 %v245
  %953 = vmatpush.bf16.msra.mxu0 %v241
  %954 = vmatpush.bf16.msra.mxu0 %v237
  %955 = vmatpush.bf16.msra.mxu0 %v233
  %956 = vmatpush.bf16.msra.mxu0 %v229
  %957 = vmatmul.bf16.gmra.mxu0 %v909
  %v958 = vpop.f32.mrf.mxu0
  %v959 = vadd.f32 0.0, %v958
  %v960 = vpop.f32.mrf.mxu0
  %961 = vdwg.mxu0
  %v962 = vadd.f32 %v905, %v920
  %v963 = vadd.f32 %v906, %v933
  %v964 = vadd.f32 %v907, %v946
  %v965 = vadd.f32 %v908, %v959
  %v966 = vxor.u32 %v962, 2147483648
  %v967 = vmul.f32 %v966, 1.442695
  %v968 = vpow.pop %v967
  %v969 = vadd.f32 %v968, 1.0
  %v970 = vrcp.pop %v969
  %v971 = vmul.f32 %v969, %v970
  %v972 = vsub.f32 1.0, %v971
  %v973 = vmul.f32 %v970, %v972
  %v974 = vadd.f32 %v970, %v973
  %vm975 = vweird.f32 %v969
  %vm976 = vweird.f32 %v970
  %vm977 = vmor %vm975, %vm976
  %v978 = vsel %vm977, %v970, %v974
  %v979 = vand.u32 2147483647, %v969
  %vm980 = vcmp.eq.f32.partialorder %v979, 8.507059e+37
  %v981 = vand.u32 %v969, 2147483648
  %v982 = vor.u32 1.1754944e-38, %v981
  %v983 = vsel %vm980, %v982, %v978
  %v984 = vmul.f32 1.0, %v983
  %v985 = vxor.u32 %v963, 2147483648
  %v986 = vmul.f32 %v985, 1.442695
  %v987 = vpow.pop %v986
  %v988 = vadd.f32 %v987, 1.0
  %v989 = vrcp.pop %v988
  %v990 = vmul.f32 %v988, %v989
  %v991 = vsub.f32 1.0, %v990
  %v992 = vmul.f32 %v989, %v991
  %v993 = vadd.f32 %v989, %v992
  %vm994 = vweird.f32 %v988
  %vm995 = vweird.f32 %v989
  %vm996 = vmor %vm994, %vm995
  %v997 = vsel %vm996, %v989, %v993
  %v998 = vand.u32 2147483647, %v988
  %vm999 = vcmp.eq.f32.partialorder %v998, 8.507059e+37
  %v1000 = vand.u32 %v988, 2147483648
  %v1001 = vor.u32 1.1754944e-38, %v1000
  %v1002 = vsel %vm999, %v1001, %v997
  %v1003 = vmul.f32 1.0, %v1002
  %v1004 = vtanh.pop %v964
  %v1005 = vxor.u32 %v965, 2147483648
  %v1006 = vmul.f32 %v1005, 1.442695
  %v1007 = vpow.pop %v1006
  %v1008 = vadd.f32 %v1007, 1.0
  %v1009 = vrcp.pop %v1008
  %v1010 = vmul.f32 %v1008, %v1009
  %v1011 = vsub.f32 1.0, %v1010
  %v1012 = vmul.f32 %v1009, %v1011
  %v1013 = vadd.f32 %v1009, %v1012
  %vm1014 = vweird.f32 %v1008
  %vm1015 = vweird.f32 %v1009
  %vm1016 = vmor %vm1014, %vm1015
  %v1017 = vsel %vm1016, %v1009, %v1013
  %v1018 = vand.u32 2147483647, %v1008
  %vm1019 = vcmp.eq.f32.partialorder %v1018, 8.507059e+37
  %v1020 = vand.u32 %v1008, 2147483648
  %v1021 = vor.u32 1.1754944e-38, %v1020
  %v1022 = vsel %vm1019, %v1021, %v1017
  %v1023 = vmul.f32 1.0, %v1022
  %v1024 = vmul.f32 %v1003, %v902
  %v1025 = vmul.f32 %v984, %v1004
  %v1026 = vadd.f32 %v1024, %v1025
  %v1027 = vtanh.pop %v1026
  %v1028 = vmul.f32 %v1023, %v1027
  %v1029 = vld [vmem:[%s0 + $0xe0] sm:$0xff]
  %v1030 = vld [vmem:[%s0 + $0xe8] sm:$0xff]
  %v1031 = vld [vmem:[%s0 + $0xf0] sm:$0xff]
  %v1032 = vld [vmem:[%s0 + $0xf8] sm:$0xff]
  %v1033 = vpack.c.bf16 %v1028, %v1028
  %1034 = vmatpush.bf16.msra.mxu0 %v254
  %1035 = vmatpush.bf16.msra.mxu0 %v250
  %1036 = vmatpush.bf16.msra.mxu0 %v246
  %1037 = vmatpush.bf16.msra.mxu0 %v242
  %1038 = vmatpush.bf16.msra.mxu0 %v238
  %1039 = vmatpush.bf16.msra.mxu0 %v234
  %1040 = vmatpush.bf16.msra.mxu0 %v230
  %1041 = vmatpush.bf16.msra.mxu0 %v226
  %1042 = vmatmul.bf16.gmra.mxu0 %v1033
  %v1043 = vpop.f32.mrf.mxu0
  %v1044 = vadd.f32 0.0, %v1043
  %v1045 = vpop.f32.mrf.mxu0
  %1046 = vdwg.mxu0
  %1047 = vmatpush.bf16.msra.mxu0 %v255
  %1048 = vmatpush.bf16.msra.mxu0 %v251
  %1049 = vmatpush.bf16.msra.mxu0 %v247
  %1050 = vmatpush.bf16.msra.mxu0 %v243
  %1051 = vmatpush.bf16.msra.mxu0 %v239
  %1052 = vmatpush.bf16.msra.mxu0 %v235
  %1053 = vmatpush.bf16.msra.mxu0 %v231
  %1054 = vmatpush.bf16.msra.mxu0 %v227
  %1055 = vmatmul.bf16.gmra.mxu0 %v1033
  %v1056 = vpop.f32.mrf.mxu0
  %v1057 = vadd.f32 0.0, %v1056
  %v1058 = vpop.f32.mrf.mxu0
  %1059 = vdwg.mxu0
  %1060 = vmatpush.bf16.msra.mxu0 %v256
  %1061 = vmatpush.bf16.msra.mxu0 %v252
  %1062 = vmatpush.bf16.msra.mxu0 %v248
  %1063 = vmatpush.bf16.msra.mxu0 %v244
  %1064 = vmatpush.bf16.msra.mxu0 %v240
  %1065 = vmatpush.bf16.msra.mxu0 %v236
  %1066 = vmatpush.bf16.msra.mxu0 %v232
  %1067 = vmatpush.bf16.msra.mxu0 %v228
  %1068 = vmatmul.bf16.gmra.mxu0 %v1033
  %v1069 = vpop.f32.mrf.mxu0
  %v1070 = vadd.f32 0.0, %v1069
  %v1071 = vpop.f32.mrf.mxu0
  %1072 = vdwg.mxu0
  %1073 = vmatpush.bf16.msra.mxu0 %v257
  %1074 = vmatpush.bf16.msra.mxu0 %v253
  %1075 = vmatpush.bf16.msra.mxu0 %v249
  %1076 = vmatpush.bf16.msra.mxu0 %v245
  %1077 = vmatpush.bf16.msra.mxu0 %v241
  %1078 = vmatpush.bf16.msra.mxu0 %v237
  %1079 = vmatpush.bf16.msra.mxu0 %v233
  %1080 = vmatpush.bf16.msra.mxu0 %v229
  %1081 = vmatmul.bf16.gmra.mxu0 %v1033
  %v1082 = vpop.f32.mrf.mxu0
  %v1083 = vadd.f32 0.0, %v1082
  %v1084 = vpop.f32.mrf.mxu0
  %1085 = vdwg.mxu0
  %v1086 = vadd.f32 %v1029, %v1044
  %v1087 = vadd.f32 %v1030, %v1057
  %v1088 = vadd.f32 %v1031, %v1070
  %v1089 = vadd.f32 %v1032, %v1083
  %v1090 = vxor.u32 %v1086, 2147483648
  %v1091 = vmul.f32 %v1090, 1.442695
  %v1092 = vpow.pop %v1091
  %v1093 = vadd.f32 %v1092, 1.0
  %v1094 = vrcp.pop %v1093
  %v1095 = vmul.f32 %v1093, %v1094
  %v1096 = vsub.f32 1.0, %v1095
  %v1097 = vmul.f32 %v1094, %v1096
  %v1098 = vadd.f32 %v1094, %v1097
  %vm1099 = vweird.f32 %v1093
  %vm1100 = vweird.f32 %v1094
  %vm1101 = vmor %vm1099, %vm1100
  %v1102 = vsel %vm1101, %v1094, %v1098
  %v1103 = vand.u32 2147483647, %v1093
  %vm1104 = vcmp.eq.f32.partialorder %v1103, 8.507059e+37
  %v1105 = vand.u32 %v1093, 2147483648
  %v1106 = vor.u32 1.1754944e-38, %v1105
  %v1107 = vsel %vm1104, %v1106, %v1102
  %v1108 = vmul.f32 1.0, %v1107
  %v1109 = vxor.u32 %v1087, 2147483648
  %v1110 = vmul.f32 %v1109, 1.442695
  %v1111 = vpow.pop %v1110
  %v1112 = vadd.f32 %v1111, 1.0
  %v1113 = vrcp.pop %v1112
  %v1114 = vmul.f32 %v1112, %v1113
  %v1115 = vsub.f32 1.0, %v1114
  %v1116 = vmul.f32 %v1113, %v1115
  %v1117 = vadd.f32 %v1113, %v1116
  %vm1118 = vweird.f32 %v1112
  %vm1119 = vweird.f32 %v1113
  %vm1120 = vmor %vm1118, %vm1119
  %v1121 = vsel %vm1120, %v1113, %v1117
  %v1122 = vand.u32 2147483647, %v1112
  %vm1123 = vcmp.eq.f32.partialorder %v1122, 8.507059e+37
  %v1124 = vand.u32 %v1112, 2147483648
  %v1125 = vor.u32 1.1754944e-38, %v1124
  %v1126 = vsel %vm1123, %v1125, %v1121
  %v1127 = vmul.f32 1.0, %v1126
  %v1128 = vtanh.pop %v1088
  %v1129 = vxor.u32 %v1089, 2147483648
  %v1130 = vmul.f32 %v1129, 1.442695
  %v1131 = vpow.pop %v1130
  %v1132 = vadd.f32 %v1131, 1.0
  %v1133 = vrcp.pop %v1132
  %v1134 = vmul.f32 %v1132, %v1133
  %v1135 = vsub.f32 1.0, %v1134
  %v1136 = vmul.f32 %v1133, %v1135
  %v1137 = vadd.f32 %v1133, %v1136
  %vm1138 = vweird.f32 %v1132
  %vm1139 = vweird.f32 %v1133
  %vm1140 = vmor %vm1138, %vm1139
  %v1141 = vsel %vm1140, %v1133, %v1137
  %v1142 = vand.u32 2147483647, %v1132
  %vm1143 = vcmp.eq.f32.partialorder %v1142, 8.507059e+37
  %v1144 = vand.u32 %v1132, 2147483648
  %v1145 = vor.u32 1.1754944e-38, %v1144
  %v1146 = vsel %vm1143, %v1145, %v1141
  %v1147 = vmul.f32 1.0, %v1146
  %v1148 = vmul.f32 %v1127, %v1026
  %v1149 = vmul.f32 %v1108, %v1128
  %v1150 = vadd.f32 %v1148, %v1149
  %v1151 = vtanh.pop %v1150
  %v1152 = vmul.f32 %v1147, %v1151
  %s1153 = scalar_lea.vmem %s1, 256
  %v1154 = vld [vmem:[%s1153] sm:$0xff]
  %v1155 = vld [vmem:[%s1153 + $0x8] sm:$0xff]
  %v1156 = vld [vmem:[%s1153 + $0x10] sm:$0xff]
  %v1157 = vld [vmem:[%s1153 + $0x18] sm:$0xff]
  %v1158 = vld [vmem:[%s1153 + $0x20] sm:$0xff]
  %v1159 = vld [vmem:[%s1153 + $0x28] sm:$0xff]
  %v1160 = vld [vmem:[%s1153 + $0x30] sm:$0xff]
  %v1161 = vld [vmem:[%s1153 + $0x38] sm:$0xff]
  %v1162 = vld [vmem:[%s1153 + $0x40] sm:$0xff]
  %v1163 = vld [vmem:[%s1153 + $0x48] sm:$0xff]
  %v1164 = vld [vmem:[%s1153 + $0x50] sm:$0xff]
  %v1165 = vld [vmem:[%s1153 + $0x58] sm:$0xff]
  %v1166 = vld [vmem:[%s1153 + $0x60] sm:$0xff]
  %v1167 = vld [vmem:[%s1153 + $0x68] sm:$0xff]
  %v1168 = vld [vmem:[%s1153 + $0x70] sm:$0xff]
  %v1169 = vld [vmem:[%s1153 + $0x78] sm:$0xff]
  %v1170 = vld [vmem:[%s1153 + $0x80] sm:$0xff]
  %v1171 = vld [vmem:[%s1153 + $0x88] sm:$0xff]
  %v1172 = vld [vmem:[%s1153 + $0x90] sm:$0xff]
  %v1173 = vld [vmem:[%s1153 + $0x98] sm:$0xff]
  %v1174 = vld [vmem:[%s1153 + $0xa0] sm:$0xff]
  %v1175 = vld [vmem:[%s1153 + $0xa8] sm:$0xff]
  %v1176 = vld [vmem:[%s1153 + $0xb0] sm:$0xff]
  %v1177 = vld [vmem:[%s1153 + $0xb8] sm:$0xff]
  %v1178 = vld [vmem:[%s1153 + $0xc0] sm:$0xff]
  %v1179 = vld [vmem:[%s1153 + $0xc8] sm:$0xff]
  %v1180 = vld [vmem:[%s1153 + $0xd0] sm:$0xff]
  %v1181 = vld [vmem:[%s1153 + $0xd8] sm:$0xff]
  %v1182 = vld [vmem:[%s1153 + $0xe0] sm:$0xff]
  %v1183 = vld [vmem:[%s1153 + $0xe8] sm:$0xff]
  %v1184 = vld [vmem:[%s1153 + $0xf0] sm:$0xff]
  %v1185 = vld [vmem:[%s1153 + $0xf8] sm:$0xff]
  %v1186 = vld [vmem:[%s2] sm:$0xff]
  %v1187 = vld [vmem:[%s2 + $0x8] sm:$0xff]
  %v1188 = vld [vmem:[%s2 + $0x10] sm:$0xff]
  %v1189 = vld [vmem:[%s2 + $0x18] sm:$0xff]
  %v1190 = vld [vmem:[%s2 + $0x20] sm:$0xff]
  %v1191 = vld [vmem:[%s2 + $0x28] sm:$0xff]
  %v1192 = vld [vmem:[%s2 + $0x30] sm:$0xff]
  %v1193 = vld [vmem:[%s2 + $0x38] sm:$0xff]
  %v1194 = vld [vmem:[%s2 + $0x40] sm:$0xff]
  %v1195 = vld [vmem:[%s2 + $0x48] sm:$0xff]
  %v1196 = vld [vmem:[%s2 + $0x50] sm:$0xff]
  %v1197 = vld [vmem:[%s2 + $0x58] sm:$0xff]
  %v1198 = vld [vmem:[%s2 + $0x60] sm:$0xff]
  %v1199 = vld [vmem:[%s2 + $0x68] sm:$0xff]
  %v1200 = vld [vmem:[%s2 + $0x70] sm:$0xff]
  %v1201 = vld [vmem:[%s2 + $0x78] sm:$0xff]
  %v1202 = vld [vmem:[%s2 + $0x80] sm:$0xff]
  %v1203 = vld [vmem:[%s2 + $0x88] sm:$0xff]
  %v1204 = vld [vmem:[%s2 + $0x90] sm:$0xff]
  %v1205 = vld [vmem:[%s2 + $0x98] sm:$0xff]
  %v1206 = vld [vmem:[%s2 + $0xa0] sm:$0xff]
  %v1207 = vld [vmem:[%s2 + $0xa8] sm:$0xff]
  %v1208 = vld [vmem:[%s2 + $0xb0] sm:$0xff]
  %v1209 = vld [vmem:[%s2 + $0xb8] sm:$0xff]
  %v1210 = vld [vmem:[%s2 + $0xc0] sm:$0xff]
  %v1211 = vld [vmem:[%s2 + $0xc8] sm:$0xff]
  %v1212 = vld [vmem:[%s2 + $0xd0] sm:$0xff]
  %v1213 = vld [vmem:[%s2 + $0xd8] sm:$0xff]
  %v1214 = vld [vmem:[%s2 + $0xe0] sm:$0xff]
  %v1215 = vld [vmem:[%s2 + $0xe8] sm:$0xff]
  %v1216 = vld [vmem:[%s2 + $0xf0] sm:$0xff]
  %v1217 = vld [vmem:[%s2 + $0xf8] sm:$0xff]
  %v1218 = vld [vmem:[%s2 + $0x100] sm:$0xff]
  %v1219 = vld [vmem:[%s2 + $0x108] sm:$0xff]
  %v1220 = vld [vmem:[%s2 + $0x110] sm:$0xff]
  %v1221 = vld [vmem:[%s2 + $0x118] sm:$0xff]
  %v1222 = vld [vmem:[%s2 + $0x120] sm:$0xff]
  %v1223 = vld [vmem:[%s2 + $0x128] sm:$0xff]
  %v1224 = vld [vmem:[%s2 + $0x130] sm:$0xff]
  %v1225 = vld [vmem:[%s2 + $0x138] sm:$0xff]
  %v1226 = vld [vmem:[%s2 + $0x140] sm:$0xff]
  %v1227 = vld [vmem:[%s2 + $0x148] sm:$0xff]
  %v1228 = vld [vmem:[%s2 + $0x150] sm:$0xff]
  %v1229 = vld [vmem:[%s2 + $0x158] sm:$0xff]
  %v1230 = vld [vmem:[%s2 + $0x160] sm:$0xff]
  %v1231 = vld [vmem:[%s2 + $0x168] sm:$0xff]
  %v1232 = vld [vmem:[%s2 + $0x170] sm:$0xff]
  %v1233 = vld [vmem:[%s2 + $0x178] sm:$0xff]
  %v1234 = vld [vmem:[%s2 + $0x180] sm:$0xff]
  %v1235 = vld [vmem:[%s2 + $0x188] sm:$0xff]
  %v1236 = vld [vmem:[%s2 + $0x190] sm:$0xff]
  %v1237 = vld [vmem:[%s2 + $0x198] sm:$0xff]
  %v1238 = vld [vmem:[%s2 + $0x1a0] sm:$0xff]
  %v1239 = vld [vmem:[%s2 + $0x1a8] sm:$0xff]
  %v1240 = vld [vmem:[%s2 + $0x1b0] sm:$0xff]
  %v1241 = vld [vmem:[%s2 + $0x1b8] sm:$0xff]
  %v1242 = vld [vmem:[%s2 + $0x1c0] sm:$0xff]
  %v1243 = vld [vmem:[%s2 + $0x1c8] sm:$0xff]
  %v1244 = vld [vmem:[%s2 + $0x1d0] sm:$0xff]
  %v1245 = vld [vmem:[%s2 + $0x1d8] sm:$0xff]
  %v1246 = vld [vmem:[%s2 + $0x1e0] sm:$0xff]
  %v1247 = vld [vmem:[%s2 + $0x1e8] sm:$0xff]
  %v1248 = vld [vmem:[%s2 + $0x1f0] sm:$0xff]
  %v1249 = vld [vmem:[%s2 + $0x1f8] sm:$0xff]
  %v1250 = vld [vmem:[%s3] sm:$0xff]
  %v1251 = vld [vmem:[%s3 + $0x8] sm:$0xff]
  %v1252 = vld [vmem:[%s3 + $0x10] sm:$0xff]
  %v1253 = vld [vmem:[%s3 + $0x18] sm:$0xff]
  %v1254 = vld [vmem:[%s3 + $0x20] sm:$0xff]
  %v1255 = vld [vmem:[%s3 + $0x28] sm:$0xff]
  %v1256 = vld [vmem:[%s3 + $0x30] sm:$0xff]
  %v1257 = vld [vmem:[%s3 + $0x38] sm:$0xff]
  %v1258 = vld [vmem:[%s3 + $0x40] sm:$0xff]
  %v1259 = vld [vmem:[%s3 + $0x48] sm:$0xff]
  %v1260 = vld [vmem:[%s3 + $0x50] sm:$0xff]
  %v1261 = vld [vmem:[%s3 + $0x58] sm:$0xff]
  %v1262 = vld [vmem:[%s3 + $0x60] sm:$0xff]
  %v1263 = vld [vmem:[%s3 + $0x68] sm:$0xff]
  %v1264 = vld [vmem:[%s3 + $0x70] sm:$0xff]
  %v1265 = vld [vmem:[%s3 + $0x78] sm:$0xff]
  %v1266 = vld [vmem:[%s3 + $0x80] sm:$0xff]
  %v1267 = vld [vmem:[%s3 + $0x88] sm:$0xff]
  %v1268 = vld [vmem:[%s3 + $0x90] sm:$0xff]
  %v1269 = vld [vmem:[%s3 + $0x98] sm:$0xff]
  %v1270 = vld [vmem:[%s3 + $0xa0] sm:$0xff]
  %v1271 = vld [vmem:[%s3 + $0xa8] sm:$0xff]
  %v1272 = vld [vmem:[%s3 + $0xb0] sm:$0xff]
  %v1273 = vld [vmem:[%s3 + $0xb8] sm:$0xff]
  %v1274 = vld [vmem:[%s3 + $0xc0] sm:$0xff]
  %v1275 = vld [vmem:[%s3 + $0xc8] sm:$0xff]
  %v1276 = vld [vmem:[%s3 + $0xd0] sm:$0xff]
  %v1277 = vld [vmem:[%s3 + $0xd8] sm:$0xff]
  %v1278 = vld [vmem:[%s3 + $0xe0] sm:$0xff]
  %v1279 = vld [vmem:[%s3 + $0xe8] sm:$0xff]
  %v1280 = vld [vmem:[%s3 + $0xf0] sm:$0xff]
  %v1281 = vld [vmem:[%s3 + $0xf8] sm:$0xff]
  %v1282 = vld [vmem:[%s3 + $0x100] sm:$0xff]
  %v1283 = vld [vmem:[%s3 + $0x108] sm:$0xff]
  %v1284 = vld [vmem:[%s3 + $0x110] sm:$0xff]
  %v1285 = vld [vmem:[%s3 + $0x118] sm:$0xff]
  %v1286 = vld [vmem:[%s3 + $0x120] sm:$0xff]
  %v1287 = vld [vmem:[%s3 + $0x128] sm:$0xff]
  %v1288 = vld [vmem:[%s3 + $0x130] sm:$0xff]
  %v1289 = vld [vmem:[%s3 + $0x138] sm:$0xff]
  %v1290 = vld [vmem:[%s3 + $0x140] sm:$0xff]
  %v1291 = vld [vmem:[%s3 + $0x148] sm:$0xff]
  %v1292 = vld [vmem:[%s3 + $0x150] sm:$0xff]
  %v1293 = vld [vmem:[%s3 + $0x158] sm:$0xff]
  %v1294 = vld [vmem:[%s3 + $0x160] sm:$0xff]
  %v1295 = vld [vmem:[%s3 + $0x168] sm:$0xff]
  %v1296 = vld [vmem:[%s3 + $0x170] sm:$0xff]
  %v1297 = vld [vmem:[%s3 + $0x178] sm:$0xff]
  %v1298 = vld [vmem:[%s3 + $0x180] sm:$0xff]
  %v1299 = vld [vmem:[%s3 + $0x188] sm:$0xff]
  %v1300 = vld [vmem:[%s3 + $0x190] sm:$0xff]
  %v1301 = vld [vmem:[%s3 + $0x198] sm:$0xff]
  %v1302 = vld [vmem:[%s3 + $0x1a0] sm:$0xff]
  %v1303 = vld [vmem:[%s3 + $0x1a8] sm:$0xff]
  %v1304 = vld [vmem:[%s3 + $0x1b0] sm:$0xff]
  %v1305 = vld [vmem:[%s3 + $0x1b8] sm:$0xff]
  %v1306 = vld [vmem:[%s3 + $0x1c0] sm:$0xff]
  %v1307 = vld [vmem:[%s3 + $0x1c8] sm:$0xff]
  %v1308 = vld [vmem:[%s3 + $0x1d0] sm:$0xff]
  %v1309 = vld [vmem:[%s3 + $0x1d8] sm:$0xff]
  %v1310 = vld [vmem:[%s3 + $0x1e0] sm:$0xff]
  %v1311 = vld [vmem:[%s3 + $0x1e8] sm:$0xff]
  %v1312 = vld [vmem:[%s3 + $0x1f0] sm:$0xff]
  %v1313 = vld [vmem:[%s3 + $0x1f8] sm:$0xff]
  %v1314 = vand.u32 %v1310, 4294901760
  %1315 = vmatpush.msra.mxu0 %v1314
  %v1316 = vand.u32 %v1306, 4294901760
  %1317 = vmatpush.msra.mxu0 %v1316
  %v1318 = vand.u32 %v1302, 4294901760
  %1319 = vmatpush.msra.mxu0 %v1318
  %v1320 = vand.u32 %v1298, 4294901760
  %1321 = vmatpush.msra.mxu0 %v1320
  %v1322 = vand.u32 %v1294, 4294901760
  %1323 = vmatpush.msra.mxu0 %v1322
  %v1324 = vand.u32 %v1290, 4294901760
  %1325 = vmatpush.msra.mxu0 %v1324
  %v1326 = vand.u32 %v1286, 4294901760
  %1327 = vmatpush.msra.mxu0 %v1326
  %v1328 = vand.u32 %v1282, 4294901760
  %1329 = vmatpush.msra.mxu0 %v1328
  %v1330 = vand.u32 %v1278, 4294901760
  %1331 = vmatpush.msra.mxu0 %v1330
  %v1332 = vand.u32 %v1274, 4294901760
  %1333 = vmatpush.msra.mxu0 %v1332
  %v1334 = vand.u32 %v1270, 4294901760
  %1335 = vmatpush.msra.mxu0 %v1334
  %v1336 = vand.u32 %v1266, 4294901760
  %1337 = vmatpush.msra.mxu0 %v1336
  %v1338 = vand.u32 %v1262, 4294901760
  %1339 = vmatpush.msra.mxu0 %v1338
  %v1340 = vand.u32 %v1258, 4294901760
  %1341 = vmatpush.msra.mxu0 %v1340
  %v1342 = vand.u32 %v1254, 4294901760
  %1343 = vmatpush.msra.mxu0 %v1342
  %v1344 = vand.u32 %v1250, 4294901760
  %1345 = vmatpush.msra.mxu0 %v1344
  %v1346 = vand.u32 %v1152, 4294901760
  %v1347 = vsub.f32 %v1152, %v1346
  %v1348 = vand.u32 %v1347, 4294901760
  %v1349 = vsub.f32 %v1347, %v1348
  %v1350 = vand.u32 %v1349, 4294901760
  %1351 = vmatmul.f32.gmra.mxu0 %v1350
  %v1352 = vpop.f32.mrf.mxu0
  %v1353 = vadd.f32 0.0, %v1352
  %v1354 = vand.u32 %v1028, 4294901760
  %v1355 = vsub.f32 %v1028, %v1354
  %v1356 = vand.u32 %v1355, 4294901760
  %v1357 = vsub.f32 %v1355, %v1356
  %v1358 = vand.u32 %v1357, 4294901760
  %1359 = vmatmul.f32.gmra.mxu0 %v1358
  %v1360 = vpop.f32.mrf.mxu0
  %v1361 = vadd.f32 0.0, %v1360
  %v1362 = vand.u32 %v904, 4294901760
  %v1363 = vsub.f32 %v904, %v1362
  %v1364 = vand.u32 %v1363, 4294901760
  %v1365 = vsub.f32 %v1363, %v1364
  %v1366 = vand.u32 %v1365, 4294901760
  %1367 = vmatmul.f32.gmra.mxu0 %v1366
  %v1368 = vpop.f32.mrf.mxu0
  %v1369 = vadd.f32 0.0, %v1368
  %v1370 = vand.u32 %v780, 4294901760
  %v1371 = vsub.f32 %v780, %v1370
  %v1372 = vand.u32 %v1371, 4294901760
  %v1373 = vsub.f32 %v1371, %v1372
  %v1374 = vand.u32 %v1373, 4294901760
  %1375 = vmatmul.f32.gmra.mxu0 %v1374
  %v1376 = vpop.f32.mrf.mxu0
  %v1377 = vadd.f32 0.0, %v1376
  %v1378 = vand.u32 %v656, 4294901760
  %v1379 = vsub.f32 %v656, %v1378
  %v1380 = vand.u32 %v1379, 4294901760
  %v1381 = vsub.f32 %v1379, %v1380
  %v1382 = vand.u32 %v1381, 4294901760
  %1383 = vmatmul.f32.gmra.mxu0 %v1382
  %v1384 = vpop.f32.mrf.mxu0
  %v1385 = vadd.f32 0.0, %v1384
  %v1386 = vand.u32 %v532, 4294901760
  %v1387 = vsub.f32 %v532, %v1386
  %v1388 = vand.u32 %v1387, 4294901760
  %v1389 = vsub.f32 %v1387, %v1388
  %v1390 = vand.u32 %v1389, 4294901760
  %1391 = vmatmul.f32.gmra.mxu0 %v1390
  %v1392 = vpop.f32.mrf.mxu0
  %v1393 = vadd.f32 0.0, %v1392
  %v1394 = vand.u32 %v408, 4294901760
  %v1395 = vsub.f32 %v408, %v1394
  %v1396 = vand.u32 %v1395, 4294901760
  %v1397 = vsub.f32 %v1395, %v1396
  %v1398 = vand.u32 %v1397, 4294901760
  %1399 = vmatmul.f32.gmra.mxu0 %v1398
  %v1400 = vpop.f32.mrf.mxu0
  %v1401 = vadd.f32 0.0, %v1400
  %v1402 = vand.u32 %v124, 4294901760
  %v1403 = vsub.f32 %v124, %v1402
  %v1404 = vand.u32 %v1403, 4294901760
  %v1405 = vsub.f32 %v1403, %v1404
  %v1406 = vand.u32 %v1405, 4294901760
  %1407 = vmatmul.f32.gmra.mxu0 %v1406
  %v1408 = vpop.f32.mrf.mxu0
  %v1409 = vadd.f32 0.0, %v1408
  %1410 = vdwg.mxu0
  %v1411 = vand.u32 %v1310, 4294901760
  %v1412 = vsub.f32 %v1310, %v1411
  %v1413 = vand.u32 %v1412, 4294901760
  %v1414 = vsub.f32 %v1412, %v1413
  %v1415 = vand.u32 %v1414, 4294901760
  %1416 = vmatpush.msra.mxu0 %v1415
  %v1417 = vand.u32 %v1306, 4294901760
  %v1418 = vsub.f32 %v1306, %v1417
  %v1419 = vand.u32 %v1418, 4294901760
  %v1420 = vsub.f32 %v1418, %v1419
  %v1421 = vand.u32 %v1420, 4294901760
  %1422 = vmatpush.msra.mxu0 %v1421
  %v1423 = vand.u32 %v1302, 4294901760
  %v1424 = vsub.f32 %v1302, %v1423
  %v1425 = vand.u32 %v1424, 4294901760
  %v1426 = vsub.f32 %v1424, %v1425
  %v1427 = vand.u32 %v1426, 4294901760
  %1428 = vmatpush.msra.mxu0 %v1427
  %v1429 = vand.u32 %v1298, 4294901760
  %v1430 = vsub.f32 %v1298, %v1429
  %v1431 = vand.u32 %v1430, 4294901760
  %v1432 = vsub.f32 %v1430, %v1431
  %v1433 = vand.u32 %v1432, 4294901760
  %1434 = vmatpush.msra.mxu0 %v1433
  %v1435 = vand.u32 %v1294, 4294901760
  %v1436 = vsub.f32 %v1294, %v1435
  %v1437 = vand.u32 %v1436, 4294901760
  %v1438 = vsub.f32 %v1436, %v1437
  %v1439 = vand.u32 %v1438, 4294901760
  %1440 = vmatpush.msra.mxu0 %v1439
  %v1441 = vand.u32 %v1290, 4294901760
  %v1442 = vsub.f32 %v1290, %v1441
  %v1443 = vand.u32 %v1442, 4294901760
  %v1444 = vsub.f32 %v1442, %v1443
  %v1445 = vand.u32 %v1444, 4294901760
  %1446 = vmatpush.msra.mxu0 %v1445
  %v1447 = vand.u32 %v1286, 4294901760
  %v1448 = vsub.f32 %v1286, %v1447
  %v1449 = vand.u32 %v1448, 4294901760
  %v1450 = vsub.f32 %v1448, %v1449
  %v1451 = vand.u32 %v1450, 4294901760
  %1452 = vmatpush.msra.mxu0 %v1451
  %v1453 = vand.u32 %v1282, 4294901760
  %v1454 = vsub.f32 %v1282, %v1453
  %v1455 = vand.u32 %v1454, 4294901760
  %v1456 = vsub.f32 %v1454, %v1455
  %v1457 = vand.u32 %v1456, 4294901760
  %1458 = vmatpush.msra.mxu0 %v1457
  %v1459 = vand.u32 %v1278, 4294901760
  %v1460 = vsub.f32 %v1278, %v1459
  %v1461 = vand.u32 %v1460, 4294901760
  %v1462 = vsub.f32 %v1460, %v1461
  %v1463 = vand.u32 %v1462, 4294901760
  %1464 = vmatpush.msra.mxu0 %v1463
  %v1465 = vand.u32 %v1274, 4294901760
  %v1466 = vsub.f32 %v1274, %v1465
  %v1467 = vand.u32 %v1466, 4294901760
  %v1468 = vsub.f32 %v1466, %v1467
  %v1469 = vand.u32 %v1468, 4294901760
  %1470 = vmatpush.msra.mxu0 %v1469
  %v1471 = vand.u32 %v1270, 4294901760
  %v1472 = vsub.f32 %v1270, %v1471
  %v1473 = vand.u32 %v1472, 4294901760
  %v1474 = vsub.f32 %v1472, %v1473
  %v1475 = vand.u32 %v1474, 4294901760
  %1476 = vmatpush.msra.mxu0 %v1475
  %v1477 = vand.u32 %v1266, 4294901760
  %v1478 = vsub.f32 %v1266, %v1477
  %v1479 = vand.u32 %v1478, 4294901760
  %v1480 = vsub.f32 %v1478, %v1479
  %v1481 = vand.u32 %v1480, 4294901760
  %1482 = vmatpush.msra.mxu0 %v1481
  %v1483 = vand.u32 %v1262, 4294901760
  %v1484 = vsub.f32 %v1262, %v1483
  %v1485 = vand.u32 %v1484, 4294901760
  %v1486 = vsub.f32 %v1484, %v1485
  %v1487 = vand.u32 %v1486, 4294901760
  %1488 = vmatpush.msra.mxu0 %v1487
  %v1489 = vand.u32 %v1258, 4294901760
  %v1490 = vsub.f32 %v1258, %v1489
  %v1491 = vand.u32 %v1490, 4294901760
  %v1492 = vsub.f32 %v1490, %v1491
  %v1493 = vand.u32 %v1492, 4294901760
  %1494 = vmatpush.msra.mxu0 %v1493
  %v1495 = vand.u32 %v1254, 4294901760
  %v1496 = vsub.f32 %v1254, %v1495
  %v1497 = vand.u32 %v1496, 4294901760
  %v1498 = vsub.f32 %v1496, %v1497
  %v1499 = vand.u32 %v1498, 4294901760
  %1500 = vmatpush.msra.mxu0 %v1499
  %v1501 = vand.u32 %v1250, 4294901760
  %v1502 = vsub.f32 %v1250, %v1501
  %v1503 = vand.u32 %v1502, 4294901760
  %v1504 = vsub.f32 %v1502, %v1503
  %v1505 = vand.u32 %v1504, 4294901760
  %1506 = vmatpush.msra.mxu0 %v1505
  %v1507 = vand.u32 %v1152, 4294901760
  %1508 = vmatmul.f32.gmra.mxu0 %v1507
  %v1509 = vpop.f32.mrf.mxu0
  %v1510 = vadd.f32 %v1353, %v1509
  %v1511 = vand.u32 %v1028, 4294901760
  %1512 = vmatmul.f32.gmra.mxu0 %v1511
  %v1513 = vpop.f32.mrf.mxu0
  %v1514 = vadd.f32 %v1361, %v1513
  %v1515 = vand.u32 %v904, 4294901760
  %1516 = vmatmul.f32.gmra.mxu0 %v1515
  %v1517 = vpop.f32.mrf.mxu0
  %v1518 = vadd.f32 %v1369, %v1517
  %v1519 = vand.u32 %v780, 4294901760
  %1520 = vmatmul.f32.gmra.mxu0 %v1519
  %v1521 = vpop.f32.mrf.mxu0
  %v1522 = vadd.f32 %v1377, %v1521
  %v1523 = vand.u32 %v656, 4294901760
  %1524 = vmatmul.f32.gmra.mxu0 %v1523
  %v1525 = vpop.f32.mrf.mxu0
  %v1526 = vadd.f32 %v1385, %v1525
  %v1527 = vand.u32 %v532, 4294901760
  %1528 = vmatmul.f32.gmra.mxu0 %v1527
  %v1529 = vpop.f32.mrf.mxu0
  %v1530 = vadd.f32 %v1393, %v1529
  %v1531 = vand.u32 %v408, 4294901760
  %1532 = vmatmul.f32.gmra.mxu0 %v1531
  %v1533 = vpop.f32.mrf.mxu0
  %v1534 = vadd.f32 %v1401, %v1533
  %v1535 = vand.u32 %v124, 4294901760
  %1536 = vmatmul.f32.gmra.mxu0 %v1535
  %v1537 = vpop.f32.mrf.mxu0
  %v1538 = vadd.f32 %v1409, %v1537
  %1539 = vdwg.mxu0
  %v1540 = vand.u32 %v1310, 4294901760
  %v1541 = vsub.f32 %v1310, %v1540
  %1542 = vmatpush.msra.mxu0 %v1541
  %v1543 = vand.u32 %v1306, 4294901760
  %v1544 = vsub.f32 %v1306, %v1543
  %1545 = vmatpush.msra.mxu0 %v1544
  %v1546 = vand.u32 %v1302, 4294901760
  %v1547 = vsub.f32 %v1302, %v1546
  %1548 = vmatpush.msra.mxu0 %v1547
  %v1549 = vand.u32 %v1298, 4294901760
  %v1550 = vsub.f32 %v1298, %v1549
  %1551 = vmatpush.msra.mxu0 %v1550
  %v1552 = vand.u32 %v1294, 4294901760
  %v1553 = vsub.f32 %v1294, %v1552
  %1554 = vmatpush.msra.mxu0 %v1553
  %v1555 = vand.u32 %v1290, 4294901760
  %v1556 = vsub.f32 %v1290, %v1555
  %1557 = vmatpush.msra.mxu0 %v1556
  %v1558 = vand.u32 %v1286, 4294901760
  %v1559 = vsub.f32 %v1286, %v1558
  %1560 = vmatpush.msra.mxu0 %v1559
  %v1561 = vand.u32 %v1282, 4294901760
  %v1562 = vsub.f32 %v1282, %v1561
  %1563 = vmatpush.msra.mxu0 %v1562
  %v1564 = vand.u32 %v1278, 4294901760
  %v1565 = vsub.f32 %v1278, %v1564
  %1566 = vmatpush.msra.mxu0 %v1565
  %v1567 = vand.u32 %v1274, 4294901760
  %v1568 = vsub.f32 %v1274, %v1567
  %1569 = vmatpush.msra.mxu0 %v1568
  %v1570 = vand.u32 %v1270, 4294901760
  %v1571 = vsub.f32 %v1270, %v1570
  %1572 = vmatpush.msra.mxu0 %v1571
  %v1573 = vand.u32 %v1266, 4294901760
  %v1574 = vsub.f32 %v1266, %v1573
  %1575 = vmatpush.msra.mxu0 %v1574
  %v1576 = vand.u32 %v1262, 4294901760
  %v1577 = vsub.f32 %v1262, %v1576
  %1578 = vmatpush.msra.mxu0 %v1577
  %v1579 = vand.u32 %v1258, 4294901760
  %v1580 = vsub.f32 %v1258, %v1579
  %1581 = vmatpush.msra.mxu0 %v1580
  %v1582 = vand.u32 %v1254, 4294901760
  %v1583 = vsub.f32 %v1254, %v1582
  %1584 = vmatpush.msra.mxu0 %v1583
  %v1585 = vand.u32 %v1250, 4294901760
  %v1586 = vsub.f32 %v1250, %v1585
  %1587 = vmatpush.msra.mxu0 %v1586
  %v1588 = vand.u32 %v1152, 4294901760
  %v1589 = vsub.f32 %v1152, %v1588
  %1590 = vmatmul.f32.gmra.mxu0 %v1589
  %v1591 = vpop.f32.mrf.mxu0
  %v1592 = vadd.f32 %v1510, %v1591
  %v1593 = vand.u32 %v1028, 4294901760
  %v1594 = vsub.f32 %v1028, %v1593
  %1595 = vmatmul.f32.gmra.mxu0 %v1594
  %v1596 = vpop.f32.mrf.mxu0
  %v1597 = vadd.f32 %v1514, %v1596
  %v1598 = vand.u32 %v904, 4294901760
  %v1599 = vsub.f32 %v904, %v1598
  %1600 = vmatmul.f32.gmra.mxu0 %v1599
  %v1601 = vpop.f32.mrf.mxu0
  %v1602 = vadd.f32 %v1518, %v1601
  %v1603 = vand.u32 %v780, 4294901760
  %v1604 = vsub.f32 %v780, %v1603
  %1605 = vmatmul.f32.gmra.mxu0 %v1604
  %v1606 = vpop.f32.mrf.mxu0
  %v1607 = vadd.f32 %v1522, %v1606
  %v1608 = vand.u32 %v656, 4294901760
  %v1609 = vsub.f32 %v656, %v1608
  %1610 = vmatmul.f32.gmra.mxu0 %v1609
  %v1611 = vpop.f32.mrf.mxu0
  %v1612 = vadd.f32 %v1526, %v1611
  %v1613 = vand.u32 %v532, 4294901760
  %v1614 = vsub.f32 %v532, %v1613
  %1615 = vmatmul.f32.gmra.mxu0 %v1614
  %v1616 = vpop.f32.mrf.mxu0
  %v1617 = vadd.f32 %v1530, %v1616
  %v1618 = vand.u32 %v408, 4294901760
  %v1619 = vsub.f32 %v408, %v1618
  %1620 = vmatmul.f32.gmra.mxu0 %v1619
  %v1621 = vpop.f32.mrf.mxu0
  %v1622 = vadd.f32 %v1534, %v1621
  %v1623 = vand.u32 %v124, 4294901760
  %v1624 = vsub.f32 %v124, %v1623
  %1625 = vmatmul.f32.gmra.mxu0 %v1624
  %v1626 = vpop.f32.mrf.mxu0
  %v1627 = vadd.f32 %v1538, %v1626
  %1628 = vdwg.mxu0
  %v1629 = vand.u32 %v1310, 4294901760
  %1630 = vmatpush.msra.mxu0 %v1629
  %v1631 = vand.u32 %v1306, 4294901760
  %1632 = vmatpush.msra.mxu0 %v1631
  %v1633 = vand.u32 %v1302, 4294901760
  %1634 = vmatpush.msra.mxu0 %v1633
  %v1635 = vand.u32 %v1298, 4294901760
  %1636 = vmatpush.msra.mxu0 %v1635
  %v1637 = vand.u32 %v1294, 4294901760
  %1638 = vmatpush.msra.mxu0 %v1637
  %v1639 = vand.u32 %v1290, 4294901760
  %1640 = vmatpush.msra.mxu0 %v1639
  %v1641 = vand.u32 %v1286, 4294901760
  %1642 = vmatpush.msra.mxu0 %v1641
  %v1643 = vand.u32 %v1282, 4294901760
  %1644 = vmatpush.msra.mxu0 %v1643
  %v1645 = vand.u32 %v1278, 4294901760
  %1646 = vmatpush.msra.mxu0 %v1645
  %v1647 = vand.u32 %v1274, 4294901760
  %1648 = vmatpush.msra.mxu0 %v1647
  %v1649 = vand.u32 %v1270, 4294901760
  %1650 = vmatpush.msra.mxu0 %v1649
  %v1651 = vand.u32 %v1266, 4294901760
  %1652 = vmatpush.msra.mxu0 %v1651
  %v1653 = vand.u32 %v1262, 4294901760
  %1654 = vmatpush.msra.mxu0 %v1653
  %v1655 = vand.u32 %v1258, 4294901760
  %1656 = vmatpush.msra.mxu0 %v1655
  %v1657 = vand.u32 %v1254, 4294901760
  %1658 = vmatpush.msra.mxu0 %v1657
  %v1659 = vand.u32 %v1250, 4294901760
  %1660 = vmatpush.msra.mxu0 %v1659
  %v1661 = vand.u32 %v1152, 4294901760
  %v1662 = vsub.f32 %v1152, %v1661
  %v1663 = vand.u32 %v1662, 4294901760
  %1664 = vmatmul.f32.gmra.mxu0 %v1663
  %v1665 = vpop.f32.mrf.mxu0
  %v1666 = vadd.f32 %v1592, %v1665
  %v1667 = vand.u32 %v1028, 4294901760
  %v1668 = vsub.f32 %v1028, %v1667
  %v1669 = vand.u32 %v1668, 4294901760
  %1670 = vmatmul.f32.gmra.mxu0 %v1669
  %v1671 = vpop.f32.mrf.mxu0
  %v1672 = vadd.f32 %v1597, %v1671
  %v1673 = vand.u32 %v904, 4294901760
  %v1674 = vsub.f32 %v904, %v1673
  %v1675 = vand.u32 %v1674, 4294901760
  %1676 = vmatmul.f32.gmra.mxu0 %v1675
  %v1677 = vpop.f32.mrf.mxu0
  %v1678 = vadd.f32 %v1602, %v1677
  %v1679 = vand.u32 %v780, 4294901760
  %v1680 = vsub.f32 %v780, %v1679
  %v1681 = vand.u32 %v1680, 4294901760
  %1682 = vmatmul.f32.gmra.mxu0 %v1681
  %v1683 = vpop.f32.mrf.mxu0
  %v1684 = vadd.f32 %v1607, %v1683
  %v1685 = vand.u32 %v656, 4294901760
  %v1686 = vsub.f32 %v656, %v1685
  %v1687 = vand.u32 %v1686, 4294901760
  %1688 = vmatmul.f32.gmra.mxu0 %v1687
  %v1689 = vpop.f32.mrf.mxu0
  %v1690 = vadd.f32 %v1612, %v1689
  %v1691 = vand.u32 %v532, 4294901760
  %v1692 = vsub.f32 %v532, %v1691
  %v1693 = vand.u32 %v1692, 4294901760
  %1694 = vmatmul.f32.gmra.mxu0 %v1693
  %v1695 = vpop.f32.mrf.mxu0
  %v1696 = vadd.f32 %v1617, %v1695
  %v1697 = vand.u32 %v408, 4294901760
  %v1698 = vsub.f32 %v408, %v1697
  %v1699 = vand.u32 %v1698, 4294901760
  %1700 = vmatmul.f32.gmra.mxu0 %v1699
  %v1701 = vpop.f32.mrf.mxu0
  %v1702 = vadd.f32 %v1622, %v1701
  %v1703 = vand.u32 %v124, 4294901760
  %v1704 = vsub.f32 %v124, %v1703
  %v1705 = vand.u32 %v1704, 4294901760
  %1706 = vmatmul.f32.gmra.mxu0 %v1705
  %v1707 = vpop.f32.mrf.mxu0
  %v1708 = vadd.f32 %v1627, %v1707
  %1709 = vdwg.mxu0
  %v1710 = vand.u32 %v1310, 4294901760
  %v1711 = vsub.f32 %v1310, %v1710
  %v1712 = vand.u32 %v1711, 4294901760
  %1713 = vmatpush.msra.mxu0 %v1712
  %v1714 = vand.u32 %v1306, 4294901760
  %v1715 = vsub.f32 %v1306, %v1714
  %v1716 = vand.u32 %v1715, 4294901760
  %1717 = vmatpush.msra.mxu0 %v1716
  %v1718 = vand.u32 %v1302, 4294901760
  %v1719 = vsub.f32 %v1302, %v1718
  %v1720 = vand.u32 %v1719, 4294901760
  %1721 = vmatpush.msra.mxu0 %v1720
  %v1722 = vand.u32 %v1298, 4294901760
  %v1723 = vsub.f32 %v1298, %v1722
  %v1724 = vand.u32 %v1723, 4294901760
  %1725 = vmatpush.msra.mxu0 %v1724
  %v1726 = vand.u32 %v1294, 4294901760
  %v1727 = vsub.f32 %v1294, %v1726
  %v1728 = vand.u32 %v1727, 4294901760
  %1729 = vmatpush.msra.mxu0 %v1728
  %v1730 = vand.u32 %v1290, 4294901760
  %v1731 = vsub.f32 %v1290, %v1730
  %v1732 = vand.u32 %v1731, 4294901760
  %1733 = vmatpush.msra.mxu0 %v1732
  %v1734 = vand.u32 %v1286, 4294901760
  %v1735 = vsub.f32 %v1286, %v1734
  %v1736 = vand.u32 %v1735, 4294901760
  %1737 = vmatpush.msra.mxu0 %v1736
  %v1738 = vand.u32 %v1282, 4294901760
  %v1739 = vsub.f32 %v1282, %v1738
  %v1740 = vand.u32 %v1739, 4294901760
  %1741 = vmatpush.msra.mxu0 %v1740
  %v1742 = vand.u32 %v1278, 4294901760
  %v1743 = vsub.f32 %v1278, %v1742
  %v1744 = vand.u32 %v1743, 4294901760
  %1745 = vmatpush.msra.mxu0 %v1744
  %v1746 = vand.u32 %v1274, 4294901760
  %v1747 = vsub.f32 %v1274, %v1746
  %v1748 = vand.u32 %v1747, 4294901760
  %1749 = vmatpush.msra.mxu0 %v1748
  %v1750 = vand.u32 %v1270, 4294901760
  %v1751 = vsub.f32 %v1270, %v1750
  %v1752 = vand.u32 %v1751, 4294901760
  %1753 = vmatpush.msra.mxu0 %v1752
  %v1754 = vand.u32 %v1266, 4294901760
  %v1755 = vsub.f32 %v1266, %v1754
  %v1756 = vand.u32 %v1755, 4294901760
  %1757 = vmatpush.msra.mxu0 %v1756
  %v1758 = vand.u32 %v1262, 4294901760
  %v1759 = vsub.f32 %v1262, %v1758
  %v1760 = vand.u32 %v1759, 4294901760
  %1761 = vmatpush.msra.mxu0 %v1760
  %v1762 = vand.u32 %v1258, 4294901760
  %v1763 = vsub.f32 %v1258, %v1762
  %v1764 = vand.u32 %v1763, 4294901760
  %1765 = vmatpush.msra.mxu0 %v1764
  %v1766 = vand.u32 %v1254, 4294901760
  %v1767 = vsub.f32 %v1254, %v1766
  %v1768 = vand.u32 %v1767, 4294901760
  %1769 = vmatpush.msra.mxu0 %v1768
  %v1770 = vand.u32 %v1250, 4294901760
  %v1771 = vsub.f32 %v1250, %v1770
  %v1772 = vand.u32 %v1771, 4294901760
  %1773 = vmatpush.msra.mxu0 %v1772
  %v1774 = vand.u32 %v1152, 4294901760
  %1775 = vmatmul.f32.gmra.mxu0 %v1774
  %v1776 = vpop.f32.mrf.mxu0
  %v1777 = vadd.f32 %v1666, %v1776
  %v1778 = vand.u32 %v1028, 4294901760
  %1779 = vmatmul.f32.gmra.mxu0 %v1778
  %v1780 = vpop.f32.mrf.mxu0
  %v1781 = vadd.f32 %v1672, %v1780
  %v1782 = vand.u32 %v904, 4294901760
  %1783 = vmatmul.f32.gmra.mxu0 %v1782
  %v1784 = vpop.f32.mrf.mxu0
  %v1785 = vadd.f32 %v1678, %v1784
  %v1786 = vand.u32 %v780, 4294901760
  %1787 = vmatmul.f32.gmra.mxu0 %v1786
  %v1788 = vpop.f32.mrf.mxu0
  %v1789 = vadd.f32 %v1684, %v1788
  %v1790 = vand.u32 %v656, 4294901760
  %1791 = vmatmul.f32.gmra.mxu0 %v1790
  %v1792 = vpop.f32.mrf.mxu0
  %v1793 = vadd.f32 %v1690, %v1792
  %v1794 = vand.u32 %v532, 4294901760
  %1795 = vmatmul.f32.gmra.mxu0 %v1794
  %v1796 = vpop.f32.mrf.mxu0
  %v1797 = vadd.f32 %v1696, %v1796
  %v1798 = vand.u32 %v408, 4294901760
  %1799 = vmatmul.f32.gmra.mxu0 %v1798
  %v1800 = vpop.f32.mrf.mxu0
  %v1801 = vadd.f32 %v1702, %v1800
  %v1802 = vand.u32 %v124, 4294901760
  %1803 = vmatmul.f32.gmra.mxu0 %v1802
  %v1804 = vpop.f32.mrf.mxu0
  %v1805 = vadd.f32 %v1708, %v1804
  %1806 = vdwg.mxu0
  %v1807 = vand.u32 %v1310, 4294901760
  %1808 = vmatpush.msra.mxu0 %v1807
  %v1809 = vand.u32 %v1306, 4294901760
  %1810 = vmatpush.msra.mxu0 %v1809
  %v1811 = vand.u32 %v1302, 4294901760
  %1812 = vmatpush.msra.mxu0 %v1811
  %v1813 = vand.u32 %v1298, 4294901760
  %1814 = vmatpush.msra.mxu0 %v1813
  %v1815 = vand.u32 %v1294, 4294901760
  %1816 = vmatpush.msra.mxu0 %v1815
  %v1817 = vand.u32 %v1290, 4294901760
  %1818 = vmatpush.msra.mxu0 %v1817
  %v1819 = vand.u32 %v1286, 4294901760
  %1820 = vmatpush.msra.mxu0 %v1819
  %v1821 = vand.u32 %v1282, 4294901760
  %1822 = vmatpush.msra.mxu0 %v1821
  %v1823 = vand.u32 %v1278, 4294901760
  %1824 = vmatpush.msra.mxu0 %v1823
  %v1825 = vand.u32 %v1274, 4294901760
  %1826 = vmatpush.msra.mxu0 %v1825
  %v1827 = vand.u32 %v1270, 4294901760
  %1828 = vmatpush.msra.mxu0 %v1827
  %v1829 = vand.u32 %v1266, 4294901760
  %1830 = vmatpush.msra.mxu0 %v1829
  %v1831 = vand.u32 %v1262, 4294901760
  %1832 = vmatpush.msra.mxu0 %v1831
  %v1833 = vand.u32 %v1258, 4294901760
  %1834 = vmatpush.msra.mxu0 %v1833
  %v1835 = vand.u32 %v1254, 4294901760
  %1836 = vmatpush.msra.mxu0 %v1835
  %v1837 = vand.u32 %v1250, 4294901760
  %1838 = vmatpush.msra.mxu0 %v1837
  %v1839 = vand.u32 %v1152, 4294901760
  %1840 = vmatmul.f32.gmra.mxu0 %v1839
  %v1841 = vpop.f32.mrf.mxu0
  %v1842 = vadd.f32 %v1777, %v1841
  %v1843 = vand.u32 %v1028, 4294901760
  %1844 = vmatmul.f32.gmra.mxu0 %v1843
  %v1845 = vpop.f32.mrf.mxu0
  %v1846 = vadd.f32 %v1781, %v1845
  %v1847 = vand.u32 %v904, 4294901760
  %1848 = vmatmul.f32.gmra.mxu0 %v1847
  %v1849 = vpop.f32.mrf.mxu0
  %v1850 = vadd.f32 %v1785, %v1849
  %v1851 = vand.u32 %v780, 4294901760
  %1852 = vmatmul.f32.gmra.mxu0 %v1851
  %v1853 = vpop.f32.mrf.mxu0
  %v1854 = vadd.f32 %v1789, %v1853
  %v1855 = vand.u32 %v656, 4294901760
  %1856 = vmatmul.f32.gmra.mxu0 %v1855
  %v1857 = vpop.f32.mrf.mxu0
  %v1858 = vadd.f32 %v1793, %v1857
  %v1859 = vand.u32 %v532, 4294901760
  %1860 = vmatmul.f32.gmra.mxu0 %v1859
  %v1861 = vpop.f32.mrf.mxu0
  %v1862 = vadd.f32 %v1797, %v1861
  %v1863 = vand.u32 %v408, 4294901760
  %1864 = vmatmul.f32.gmra.mxu0 %v1863
  %v1865 = vpop.f32.mrf.mxu0
  %v1866 = vadd.f32 %v1801, %v1865
  %v1867 = vand.u32 %v124, 4294901760
  %1868 = vmatmul.f32.gmra.mxu0 %v1867
  %v1869 = vpop.f32.mrf.mxu0
  %v1870 = vadd.f32 %v1805, %v1869
  %1871 = vdwg.mxu0
  %v1872 = vand.u32 %v1311, 4294901760
  %1873 = vmatpush.msra.mxu0 %v1872
  %v1874 = vand.u32 %v1307, 4294901760
  %1875 = vmatpush.msra.mxu0 %v1874
  %v1876 = vand.u32 %v1303, 4294901760
  %1877 = vmatpush.msra.mxu0 %v1876
  %v1878 = vand.u32 %v1299, 4294901760
  %1879 = vmatpush.msra.mxu0 %v1878
  %v1880 = vand.u32 %v1295, 4294901760
  %1881 = vmatpush.msra.mxu0 %v1880
  %v1882 = vand.u32 %v1291, 4294901760
  %1883 = vmatpush.msra.mxu0 %v1882
  %v1884 = vand.u32 %v1287, 4294901760
  %1885 = vmatpush.msra.mxu0 %v1884
  %v1886 = vand.u32 %v1283, 4294901760
  %1887 = vmatpush.msra.mxu0 %v1886
  %v1888 = vand.u32 %v1279, 4294901760
  %1889 = vmatpush.msra.mxu0 %v1888
  %v1890 = vand.u32 %v1275, 4294901760
  %1891 = vmatpush.msra.mxu0 %v1890
  %v1892 = vand.u32 %v1271, 4294901760
  %1893 = vmatpush.msra.mxu0 %v1892
  %v1894 = vand.u32 %v1267, 4294901760
  %1895 = vmatpush.msra.mxu0 %v1894
  %v1896 = vand.u32 %v1263, 4294901760
  %1897 = vmatpush.msra.mxu0 %v1896
  %v1898 = vand.u32 %v1259, 4294901760
  %1899 = vmatpush.msra.mxu0 %v1898
  %v1900 = vand.u32 %v1255, 4294901760
  %1901 = vmatpush.msra.mxu0 %v1900
  %v1902 = vand.u32 %v1251, 4294901760
  %1903 = vmatpush.msra.mxu0 %v1902
  %v1904 = vand.u32 %v1152, 4294901760
  %v1905 = vsub.f32 %v1152, %v1904
  %v1906 = vand.u32 %v1905, 4294901760
  %v1907 = vsub.f32 %v1905, %v1906
  %v1908 = vand.u32 %v1907, 4294901760
  %1909 = vmatmul.f32.gmra.mxu0 %v1908
  %v1910 = vpop.f32.mrf.mxu0
  %v1911 = vadd.f32 0.0, %v1910
  %v1912 = vand.u32 %v1028, 4294901760
  %v1913 = vsub.f32 %v1028, %v1912
  %v1914 = vand.u32 %v1913, 4294901760
  %v1915 = vsub.f32 %v1913, %v1914
  %v1916 = vand.u32 %v1915, 4294901760
  %1917 = vmatmul.f32.gmra.mxu0 %v1916
  %v1918 = vpop.f32.mrf.mxu0
  %v1919 = vadd.f32 0.0, %v1918
  %v1920 = vand.u32 %v904, 4294901760
  %v1921 = vsub.f32 %v904, %v1920
  %v1922 = vand.u32 %v1921, 4294901760
  %v1923 = vsub.f32 %v1921, %v1922
  %v1924 = vand.u32 %v1923, 4294901760
  %1925 = vmatmul.f32.gmra.mxu0 %v1924
  %v1926 = vpop.f32.mrf.mxu0
  %v1927 = vadd.f32 0.0, %v1926
  %v1928 = vand.u32 %v780, 4294901760
  %v1929 = vsub.f32 %v780, %v1928
  %v1930 = vand.u32 %v1929, 4294901760
  %v1931 = vsub.f32 %v1929, %v1930
  %v1932 = vand.u32 %v1931, 4294901760
  %1933 = vmatmul.f32.gmra.mxu0 %v1932
  %v1934 = vpop.f32.mrf.mxu0
  %v1935 = vadd.f32 0.0, %v1934
  %v1936 = vand.u32 %v656, 4294901760
  %v1937 = vsub.f32 %v656, %v1936
  %v1938 = vand.u32 %v1937, 4294901760
  %v1939 = vsub.f32 %v1937, %v1938
  %v1940 = vand.u32 %v1939, 4294901760
  %1941 = vmatmul.f32.gmra.mxu0 %v1940
  %v1942 = vpop.f32.mrf.mxu0
  %v1943 = vadd.f32 0.0, %v1942
  %v1944 = vand.u32 %v532, 4294901760
  %v1945 = vsub.f32 %v532, %v1944
  %v1946 = vand.u32 %v1945, 4294901760
  %v1947 = vsub.f32 %v1945, %v1946
  %v1948 = vand.u32 %v1947, 4294901760
  %1949 = vmatmul.f32.gmra.mxu0 %v1948
  %v1950 = vpop.f32.mrf.mxu0
  %v1951 = vadd.f32 0.0, %v1950
  %v1952 = vand.u32 %v408, 4294901760
  %v1953 = vsub.f32 %v408, %v1952
  %v1954 = vand.u32 %v1953, 4294901760
  %v1955 = vsub.f32 %v1953, %v1954
  %v1956 = vand.u32 %v1955, 4294901760
  %1957 = vmatmul.f32.gmra.mxu0 %v1956
  %v1958 = vpop.f32.mrf.mxu0
  %v1959 = vadd.f32 0.0, %v1958
  %v1960 = vand.u32 %v124, 4294901760
  %v1961 = vsub.f32 %v124, %v1960
  %v1962 = vand.u32 %v1961, 4294901760
  %v1963 = vsub.f32 %v1961, %v1962
  %v1964 = vand.u32 %v1963, 4294901760
  %1965 = vmatmul.f32.gmra.mxu0 %v1964
  %v1966 = vpop.f32.mrf.mxu0
  %v1967 = vadd.f32 0.0, %v1966
  %1968 = vdwg.mxu0
  %v1969 = vand.u32 %v1311, 4294901760
  %v1970 = vsub.f32 %v1311, %v1969
  %v1971 = vand.u32 %v1970, 4294901760
  %v1972 = vsub.f32 %v1970, %v1971
  %v1973 = vand.u32 %v1972, 4294901760
  %1974 = vmatpush.msra.mxu0 %v1973
  %v1975 = vand.u32 %v1307, 4294901760
  %v1976 = vsub.f32 %v1307, %v1975
  %v1977 = vand.u32 %v1976, 4294901760
  %v1978 = vsub.f32 %v1976, %v1977
  %v1979 = vand.u32 %v1978, 4294901760
  %1980 = vmatpush.msra.mxu0 %v1979
  %v1981 = vand.u32 %v1303, 4294901760
  %v1982 = vsub.f32 %v1303, %v1981
  %v1983 = vand.u32 %v1982, 4294901760
  %v1984 = vsub.f32 %v1982, %v1983
  %v1985 = vand.u32 %v1984, 4294901760
  %1986 = vmatpush.msra.mxu0 %v1985
  %v1987 = vand.u32 %v1299, 4294901760
  %v1988 = vsub.f32 %v1299, %v1987
  %v1989 = vand.u32 %v1988, 4294901760
  %v1990 = vsub.f32 %v1988, %v1989
  %v1991 = vand.u32 %v1990, 4294901760
  %1992 = vmatpush.msra.mxu0 %v1991
  %v1993 = vand.u32 %v1295, 4294901760
  %v1994 = vsub.f32 %v1295, %v1993
  %v1995 = vand.u32 %v1994, 4294901760
  %v1996 = vsub.f32 %v1994, %v1995
  %v1997 = vand.u32 %v1996, 4294901760
  %1998 = vmatpush.msra.mxu0 %v1997
  %v1999 = vand.u32 %v1291, 4294901760
  %v2000 = vsub.f32 %v1291, %v1999
  %v2001 = vand.u32 %v2000, 4294901760
  %v2002 = vsub.f32 %v2000, %v2001
  %v2003 = vand.u32 %v2002, 4294901760
  %2004 = vmatpush.msra.mxu0 %v2003
  %v2005 = vand.u32 %v1287, 4294901760
  %v2006 = vsub.f32 %v1287, %v2005
  %v2007 = vand.u32 %v2006, 4294901760
  %v2008 = vsub.f32 %v2006, %v2007
  %v2009 = vand.u32 %v2008, 4294901760
  %2010 = vmatpush.msra.mxu0 %v2009
  %v2011 = vand.u32 %v1283, 4294901760
  %v2012 = vsub.f32 %v1283, %v2011
  %v2013 = vand.u32 %v2012, 4294901760
  %v2014 = vsub.f32 %v2012, %v2013
  %v2015 = vand.u32 %v2014, 4294901760
  %2016 = vmatpush.msra.mxu0 %v2015
  %v2017 = vand.u32 %v1279, 4294901760
  %v2018 = vsub.f32 %v1279, %v2017
  %v2019 = vand.u32 %v2018, 4294901760
  %v2020 = vsub.f32 %v2018, %v2019
  %v2021 = vand.u32 %v2020, 4294901760
  %2022 = vmatpush.msra.mxu0 %v2021
  %v2023 = vand.u32 %v1275, 4294901760
  %v2024 = vsub.f32 %v1275, %v2023
  %v2025 = vand.u32 %v2024, 4294901760
  %v2026 = vsub.f32 %v2024, %v2025
  %v2027 = vand.u32 %v2026, 4294901760
  %2028 = vmatpush.msra.mxu0 %v2027
  %v2029 = vand.u32 %v1271, 4294901760
  %v2030 = vsub.f32 %v1271, %v2029
  %v2031 = vand.u32 %v2030, 4294901760
  %v2032 = vsub.f32 %v2030, %v2031
  %v2033 = vand.u32 %v2032, 4294901760
  %2034 = vmatpush.msra.mxu0 %v2033
  %v2035 = vand.u32 %v1267, 4294901760
  %v2036 = vsub.f32 %v1267, %v2035
  %v2037 = vand.u32 %v2036, 4294901760
  %v2038 = vsub.f32 %v2036, %v2037
  %v2039 = vand.u32 %v2038, 4294901760
  %2040 = vmatpush.msra.mxu0 %v2039
  %v2041 = vand.u32 %v1263, 4294901760
  %v2042 = vsub.f32 %v1263, %v2041
  %v2043 = vand.u32 %v2042, 4294901760
  %v2044 = vsub.f32 %v2042, %v2043
  %v2045 = vand.u32 %v2044, 4294901760
  %2046 = vmatpush.msra.mxu0 %v2045
  %v2047 = vand.u32 %v1259, 4294901760
  %v2048 = vsub.f32 %v1259, %v2047
  %v2049 = vand.u32 %v2048, 4294901760
  %v2050 = vsub.f32 %v2048, %v2049
  %v2051 = vand.u32 %v2050, 4294901760
  %2052 = vmatpush.msra.mxu0 %v2051
  %v2053 = vand.u32 %v1255, 4294901760
  %v2054 = vsub.f32 %v1255, %v2053
  %v2055 = vand.u32 %v2054, 4294901760
  %v2056 = vsub.f32 %v2054, %v2055
  %v2057 = vand.u32 %v2056, 4294901760
  %2058 = vmatpush.msra.mxu0 %v2057
  %v2059 = vand.u32 %v1251, 4294901760
  %v2060 = vsub.f32 %v1251, %v2059
  %v2061 = vand.u32 %v2060, 4294901760
  %v2062 = vsub.f32 %v2060, %v2061
  %v2063 = vand.u32 %v2062, 4294901760
  %2064 = vmatpush.msra.mxu0 %v2063
  %v2065 = vand.u32 %v1152, 4294901760
  %2066 = vmatmul.f32.gmra.mxu0 %v2065
  %v2067 = vpop.f32.mrf.mxu0
  %v2068 = vadd.f32 %v1911, %v2067
  %v2069 = vand.u32 %v1028, 4294901760
  %2070 = vmatmul.f32.gmra.mxu0 %v2069
  %v2071 = vpop.f32.mrf.mxu0
  %v2072 = vadd.f32 %v1919, %v2071
  %v2073 = vand.u32 %v904, 4294901760
  %2074 = vmatmul.f32.gmra.mxu0 %v2073
  %v2075 = vpop.f32.mrf.mxu0
  %v2076 = vadd.f32 %v1927, %v2075
  %v2077 = vand.u32 %v780, 4294901760
  %2078 = vmatmul.f32.gmra.mxu0 %v2077
  %v2079 = vpop.f32.mrf.mxu0
  %v2080 = vadd.f32 %v1935, %v2079
  %v2081 = vand.u32 %v656, 4294901760
  %2082 = vmatmul.f32.gmra.mxu0 %v2081
  %v2083 = vpop.f32.mrf.mxu0
  %v2084 = vadd.f32 %v1943, %v2083
  %v2085 = vand.u32 %v532, 4294901760
  %2086 = vmatmul.f32.gmra.mxu0 %v2085
  %v2087 = vpop.f32.mrf.mxu0
  %v2088 = vadd.f32 %v1951, %v2087
  %v2089 = vand.u32 %v408, 4294901760
  %2090 = vmatmul.f32.gmra.mxu0 %v2089
  %v2091 = vpop.f32.mrf.mxu0
  %v2092 = vadd.f32 %v1959, %v2091
  %v2093 = vand.u32 %v124, 4294901760
  %2094 = vmatmul.f32.gmra.mxu0 %v2093
  %v2095 = vpop.f32.mrf.mxu0
  %v2096 = vadd.f32 %v1967, %v2095
  %2097 = vdwg.mxu0
  %v2098 = vand.u32 %v1311, 4294901760
  %v2099 = vsub.f32 %v1311, %v2098
  %2100 = vmatpush.msra.mxu0 %v2099
  %v2101 = vand.u32 %v1307, 4294901760
  %v2102 = vsub.f32 %v1307, %v2101
  %2103 = vmatpush.msra.mxu0 %v2102
  %v2104 = vand.u32 %v1303, 4294901760
  %v2105 = vsub.f32 %v1303, %v2104
  %2106 = vmatpush.msra.mxu0 %v2105
  %v2107 = vand.u32 %v1299, 4294901760
  %v2108 = vsub.f32 %v1299, %v2107
  %2109 = vmatpush.msra.mxu0 %v2108
  %v2110 = vand.u32 %v1295, 4294901760
  %v2111 = vsub.f32 %v1295, %v2110
  %2112 = vmatpush.msra.mxu0 %v2111
  %v2113 = vand.u32 %v1291, 4294901760
  %v2114 = vsub.f32 %v1291, %v2113
  %2115 = vmatpush.msra.mxu0 %v2114
  %v2116 = vand.u32 %v1287, 4294901760
  %v2117 = vsub.f32 %v1287, %v2116
  %2118 = vmatpush.msra.mxu0 %v2117
  %v2119 = vand.u32 %v1283, 4294901760
  %v2120 = vsub.f32 %v1283, %v2119
  %2121 = vmatpush.msra.mxu0 %v2120
  %v2122 = vand.u32 %v1279, 4294901760
  %v2123 = vsub.f32 %v1279, %v2122
  %2124 = vmatpush.msra.mxu0 %v2123
  %v2125 = vand.u32 %v1275, 4294901760
  %v2126 = vsub.f32 %v1275, %v2125
  %2127 = vmatpush.msra.mxu0 %v2126
  %v2128 = vand.u32 %v1271, 4294901760
  %v2129 = vsub.f32 %v1271, %v2128
  %2130 = vmatpush.msra.mxu0 %v2129
  %v2131 = vand.u32 %v1267, 4294901760
  %v2132 = vsub.f32 %v1267, %v2131
  %2133 = vmatpush.msra.mxu0 %v2132
  %v2134 = vand.u32 %v1263, 4294901760
  %v2135 = vsub.f32 %v1263, %v2134
  %2136 = vmatpush.msra.mxu0 %v2135
  %v2137 = vand.u32 %v1259, 4294901760
  %v2138 = vsub.f32 %v1259, %v2137
  %2139 = vmatpush.msra.mxu0 %v2138
  %v2140 = vand.u32 %v1255, 4294901760
  %v2141 = vsub.f32 %v1255, %v2140
  %2142 = vmatpush.msra.mxu0 %v2141
  %v2143 = vand.u32 %v1251, 4294901760
  %v2144 = vsub.f32 %v1251, %v2143
  %2145 = vmatpush.msra.mxu0 %v2144
  %v2146 = vand.u32 %v1152, 4294901760
  %v2147 = vsub.f32 %v1152, %v2146
  %2148 = vmatmul.f32.gmra.mxu0 %v2147
  %v2149 = vpop.f32.mrf.mxu0
  %v2150 = vadd.f32 %v2068, %v2149
  %v2151 = vand.u32 %v1028, 4294901760
  %v2152 = vsub.f32 %v1028, %v2151
  %2153 = vmatmul.f32.gmra.mxu0 %v2152
  %v2154 = vpop.f32.mrf.mxu0
  %v2155 = vadd.f32 %v2072, %v2154
  %v2156 = vand.u32 %v904, 4294901760
  %v2157 = vsub.f32 %v904, %v2156
  %2158 = vmatmul.f32.gmra.mxu0 %v2157
  %v2159 = vpop.f32.mrf.mxu0
  %v2160 = vadd.f32 %v2076, %v2159
  %v2161 = vand.u32 %v780, 4294901760
  %v2162 = vsub.f32 %v780, %v2161
  %2163 = vmatmul.f32.gmra.mxu0 %v2162
  %v2164 = vpop.f32.mrf.mxu0
  %v2165 = vadd.f32 %v2080, %v2164
  %v2166 = vand.u32 %v656, 4294901760
  %v2167 = vsub.f32 %v656, %v2166
  %2168 = vmatmul.f32.gmra.mxu0 %v2167
  %v2169 = vpop.f32.mrf.mxu0
  %v2170 = vadd.f32 %v2084, %v2169
  %v2171 = vand.u32 %v532, 4294901760
  %v2172 = vsub.f32 %v532, %v2171
  %2173 = vmatmul.f32.gmra.mxu0 %v2172
  %v2174 = vpop.f32.mrf.mxu0
  %v2175 = vadd.f32 %v2088, %v2174
  %v2176 = vand.u32 %v408, 4294901760
  %v2177 = vsub.f32 %v408, %v2176
  %2178 = vmatmul.f32.gmra.mxu0 %v2177
  %v2179 = vpop.f32.mrf.mxu0
  %v2180 = vadd.f32 %v2092, %v2179
  %v2181 = vand.u32 %v124, 4294901760
  %v2182 = vsub.f32 %v124, %v2181
  %2183 = vmatmul.f32.gmra.mxu0 %v2182
  %v2184 = vpop.f32.mrf.mxu0
  %v2185 = vadd.f32 %v2096, %v2184
  %2186 = vdwg.mxu0
  %v2187 = vand.u32 %v1311, 4294901760
  %2188 = vmatpush.msra.mxu0 %v2187
  %v2189 = vand.u32 %v1307, 4294901760
  %2190 = vmatpush.msra.mxu0 %v2189
  %v2191 = vand.u32 %v1303, 4294901760
  %2192 = vmatpush.msra.mxu0 %v2191
  %v2193 = vand.u32 %v1299, 4294901760
  %2194 = vmatpush.msra.mxu0 %v2193
  %v2195 = vand.u32 %v1295, 4294901760
  %2196 = vmatpush.msra.mxu0 %v2195
  %v2197 = vand.u32 %v1291, 4294901760
  %2198 = vmatpush.msra.mxu0 %v2197
  %v2199 = vand.u32 %v1287, 4294901760
  %2200 = vmatpush.msra.mxu0 %v2199
  %v2201 = vand.u32 %v1283, 4294901760
  %2202 = vmatpush.msra.mxu0 %v2201
  %v2203 = vand.u32 %v1279, 4294901760
  %2204 = vmatpush.msra.mxu0 %v2203
  %v2205 = vand.u32 %v1275, 4294901760
  %2206 = vmatpush.msra.mxu0 %v2205
  %v2207 = vand.u32 %v1271, 4294901760
  %2208 = vmatpush.msra.mxu0 %v2207
  %v2209 = vand.u32 %v1267, 4294901760
  %2210 = vmatpush.msra.mxu0 %v2209
  %v2211 = vand.u32 %v1263, 4294901760
  %2212 = vmatpush.msra.mxu0 %v2211
  %v2213 = vand.u32 %v1259, 4294901760
  %2214 = vmatpush.msra.mxu0 %v2213
  %v2215 = vand.u32 %v1255, 4294901760
  %2216 = vmatpush.msra.mxu0 %v2215
  %v2217 = vand.u32 %v1251, 4294901760
  %2218 = vmatpush.msra.mxu0 %v2217
  %v2219 = vand.u32 %v1152, 4294901760
  %v2220 = vsub.f32 %v1152, %v2219
  %v2221 = vand.u32 %v2220, 4294901760
  %2222 = vmatmul.f32.gmra.mxu0 %v2221
  %v2223 = vpop.f32.mrf.mxu0
  %v2224 = vadd.f32 %v2150, %v2223
  %v2225 = vand.u32 %v1028, 4294901760
  %v2226 = vsub.f32 %v1028, %v2225
  %v2227 = vand.u32 %v2226, 4294901760
  %2228 = vmatmul.f32.gmra.mxu0 %v2227
  %v2229 = vpop.f32.mrf.mxu0
  %v2230 = vadd.f32 %v2155, %v2229
  %v2231 = vand.u32 %v904, 4294901760
  %v2232 = vsub.f32 %v904, %v2231
  %v2233 = vand.u32 %v2232, 4294901760
  %2234 = vmatmul.f32.gmra.mxu0 %v2233
  %v2235 = vpop.f32.mrf.mxu0
  %v2236 = vadd.f32 %v2160, %v2235
  %v2237 = vand.u32 %v780, 4294901760
  %v2238 = vsub.f32 %v780, %v2237
  %v2239 = vand.u32 %v2238, 4294901760
  %2240 = vmatmul.f32.gmra.mxu0 %v2239
  %v2241 = vpop.f32.mrf.mxu0
  %v2242 = vadd.f32 %v2165, %v2241
  %v2243 = vand.u32 %v656, 4294901760
  %v2244 = vsub.f32 %v656, %v2243
  %v2245 = vand.u32 %v2244, 4294901760
  %2246 = vmatmul.f32.gmra.mxu0 %v2245
  %v2247 = vpop.f32.mrf.mxu0
  %v2248 = vadd.f32 %v2170, %v2247
  %v2249 = vand.u32 %v532, 4294901760
  %v2250 = vsub.f32 %v532, %v2249
  %v2251 = vand.u32 %v2250, 4294901760
  %2252 = vmatmul.f32.gmra.mxu0 %v2251
  %v2253 = vpop.f32.mrf.mxu0
  %v2254 = vadd.f32 %v2175, %v2253
  %v2255 = vand.u32 %v408, 4294901760
  %v2256 = vsub.f32 %v408, %v2255
  %v2257 = vand.u32 %v2256, 4294901760
  %2258 = vmatmul.f32.gmra.mxu0 %v2257
  %v2259 = vpop.f32.mrf.mxu0
  %v2260 = vadd.f32 %v2180, %v2259
  %v2261 = vand.u32 %v124, 4294901760
  %v2262 = vsub.f32 %v124, %v2261
  %v2263 = vand.u32 %v2262, 4294901760
  %2264 = vmatmul.f32.gmra.mxu0 %v2263
  %v2265 = vpop.f32.mrf.mxu0
  %v2266 = vadd.f32 %v2185, %v2265
  %2267 = vdwg.mxu0
  %v2268 = vand.u32 %v1311, 4294901760
  %v2269 = vsub.f32 %v1311, %v2268
  %v2270 = vand.u32 %v2269, 4294901760
  %2271 = vmatpush.msra.mxu0 %v2270
  %v2272 = vand.u32 %v1307, 4294901760
  %v2273 = vsub.f32 %v1307, %v2272
  %v2274 = vand.u32 %v2273, 4294901760
  %2275 = vmatpush.msra.mxu0 %v2274
  %v2276 = vand.u32 %v1303, 4294901760
  %v2277 = vsub.f32 %v1303, %v2276
  %v2278 = vand.u32 %v2277, 4294901760
  %2279 = vmatpush.msra.mxu0 %v2278
  %v2280 = vand.u32 %v1299, 4294901760
  %v2281 = vsub.f32 %v1299, %v2280
  %v2282 = vand.u32 %v2281, 4294901760
  %2283 = vmatpush.msra.mxu0 %v2282
  %v2284 = vand.u32 %v1295, 4294901760
  %v2285 = vsub.f32 %v1295, %v2284
  %v2286 = vand.u32 %v2285, 4294901760
  %2287 = vmatpush.msra.mxu0 %v2286
  %v2288 = vand.u32 %v1291, 4294901760
  %v2289 = vsub.f32 %v1291, %v2288
  %v2290 = vand.u32 %v2289, 4294901760
  %2291 = vmatpush.msra.mxu0 %v2290
  %v2292 = vand.u32 %v1287, 4294901760
  %v2293 = vsub.f32 %v1287, %v2292
  %v2294 = vand.u32 %v2293, 4294901760
  %2295 = vmatpush.msra.mxu0 %v2294
  %v2296 = vand.u32 %v1283, 4294901760
  %v2297 = vsub.f32 %v1283, %v2296
  %v2298 = vand.u32 %v2297, 4294901760
  %2299 = vmatpush.msra.mxu0 %v2298
  %v2300 = vand.u32 %v1279, 4294901760
  %v2301 = vsub.f32 %v1279, %v2300
  %v2302 = vand.u32 %v2301, 4294901760
  %2303 = vmatpush.msra.mxu0 %v2302
  %v2304 = vand.u32 %v1275, 4294901760
  %v2305 = vsub.f32 %v1275, %v2304
  %v2306 = vand.u32 %v2305, 4294901760
  %2307 = vmatpush.msra.mxu0 %v2306
  %v2308 = vand.u32 %v1271, 4294901760
  %v2309 = vsub.f32 %v1271, %v2308
  %v2310 = vand.u32 %v2309, 4294901760
  %2311 = vmatpush.msra.mxu0 %v2310
  %v2312 = vand.u32 %v1267, 4294901760
  %v2313 = vsub.f32 %v1267, %v2312
  %v2314 = vand.u32 %v2313, 4294901760
  %2315 = vmatpush.msra.mxu0 %v2314
  %v2316 = vand.u32 %v1263, 4294901760
  %v2317 = vsub.f32 %v1263, %v2316
  %v2318 = vand.u32 %v2317, 4294901760
  %2319 = vmatpush.msra.mxu0 %v2318
  %v2320 = vand.u32 %v1259, 4294901760
  %v2321 = vsub.f32 %v1259, %v2320
  %v2322 = vand.u32 %v2321, 4294901760
  %2323 = vmatpush.msra.mxu0 %v2322
  %v2324 = vand.u32 %v1255, 4294901760
  %v2325 = vsub.f32 %v1255, %v2324
  %v2326 = vand.u32 %v2325, 4294901760
  %2327 = vmatpush.msra.mxu0 %v2326
  %v2328 = vand.u32 %v1251, 4294901760
  %v2329 = vsub.f32 %v1251, %v2328
  %v2330 = vand.u32 %v2329, 4294901760
  %2331 = vmatpush.msra.mxu0 %v2330
  %v2332 = vand.u32 %v1152, 4294901760
  %2333 = vmatmul.f32.gmra.mxu0 %v2332
  %v2334 = vpop.f32.mrf.mxu0
  %v2335 = vadd.f32 %v2224, %v2334
  %v2336 = vand.u32 %v1028, 4294901760
  %2337 = vmatmul.f32.gmra.mxu0 %v2336
  %v2338 = vpop.f32.mrf.mxu0
  %v2339 = vadd.f32 %v2230, %v2338
  %v2340 = vand.u32 %v904, 4294901760
  %2341 = vmatmul.f32.gmra.mxu0 %v2340
  %v2342 = vpop.f32.mrf.mxu0
  %v2343 = vadd.f32 %v2236, %v2342
  %v2344 = vand.u32 %v780, 4294901760
  %2345 = vmatmul.f32.gmra.mxu0 %v2344
  %v2346 = vpop.f32.mrf.mxu0
  %v2347 = vadd.f32 %v2242, %v2346
  %v2348 = vand.u32 %v656, 4294901760
  %2349 = vmatmul.f32.gmra.mxu0 %v2348
  %v2350 = vpop.f32.mrf.mxu0
  %v2351 = vadd.f32 %v2248, %v2350
  %v2352 = vand.u32 %v532, 4294901760
  %2353 = vmatmul.f32.gmra.mxu0 %v2352
  %v2354 = vpop.f32.mrf.mxu0
  %v2355 = vadd.f32 %v2254, %v2354
  %v2356 = vand.u32 %v408, 4294901760
  %2357 = vmatmul.f32.gmra.mxu0 %v2356
  %v2358 = vpop.f32.mrf.mxu0
  %v2359 = vadd.f32 %v2260, %v2358
  %v2360 = vand.u32 %v124, 4294901760
  %2361 = vmatmul.f32.gmra.mxu0 %v2360
  %v2362 = vpop.f32.mrf.mxu0
  %v2363 = vadd.f32 %v2266, %v2362
  %2364 = vdwg.mxu0
  %v2365 = vand.u32 %v1311, 4294901760
  %2366 = vmatpush.msra.mxu0 %v2365
  %v2367 = vand.u32 %v1307, 4294901760
  %2368 = vmatpush.msra.mxu0 %v2367
  %v2369 = vand.u32 %v1303, 4294901760
  %2370 = vmatpush.msra.mxu0 %v2369
  %v2371 = vand.u32 %v1299, 4294901760
  %2372 = vmatpush.msra.mxu0 %v2371
  %v2373 = vand.u32 %v1295, 4294901760
  %2374 = vmatpush.msra.mxu0 %v2373
  %v2375 = vand.u32 %v1291, 4294901760
  %2376 = vmatpush.msra.mxu0 %v2375
  %v2377 = vand.u32 %v1287, 4294901760
  %2378 = vmatpush.msra.mxu0 %v2377
  %v2379 = vand.u32 %v1283, 4294901760
  %2380 = vmatpush.msra.mxu0 %v2379
  %v2381 = vand.u32 %v1279, 4294901760
  %2382 = vmatpush.msra.mxu0 %v2381
  %v2383 = vand.u32 %v1275, 4294901760
  %2384 = vmatpush.msra.mxu0 %v2383
  %v2385 = vand.u32 %v1271, 4294901760
  %2386 = vmatpush.msra.mxu0 %v2385
  %v2387 = vand.u32 %v1267, 4294901760
  %2388 = vmatpush.msra.mxu0 %v2387
  %v2389 = vand.u32 %v1263, 4294901760
  %2390 = vmatpush.msra.mxu0 %v2389
  %v2391 = vand.u32 %v1259, 4294901760
  %2392 = vmatpush.msra.mxu0 %v2391
  %v2393 = vand.u32 %v1255, 4294901760
  %2394 = vmatpush.msra.mxu0 %v2393
  %v2395 = vand.u32 %v1251, 4294901760
  %2396 = vmatpush.msra.mxu0 %v2395
  %v2397 = vand.u32 %v1152, 4294901760
  %2398 = vmatmul.f32.gmra.mxu0 %v2397
  %v2399 = vpop.f32.mrf.mxu0
  %v2400 = vadd.f32 %v2335, %v2399
  %v2401 = vand.u32 %v1028, 4294901760
  %2402 = vmatmul.f32.gmra.mxu0 %v2401
  %v2403 = vpop.f32.mrf.mxu0
  %v2404 = vadd.f32 %v2339, %v2403
  %v2405 = vand.u32 %v904, 4294901760
  %2406 = vmatmul.f32.gmra.mxu0 %v2405
  %v2407 = vpop.f32.mrf.mxu0
  %v2408 = vadd.f32 %v2343, %v2407
  %v2409 = vand.u32 %v780, 4294901760
  %2410 = vmatmul.f32.gmra.mxu0 %v2409
  %v2411 = vpop.f32.mrf.mxu0
  %v2412 = vadd.f32 %v2347, %v2411
  %v2413 = vand.u32 %v656, 4294901760
  %2414 = vmatmul.f32.gmra.mxu0 %v2413
  %v2415 = vpop.f32.mrf.mxu0
  %v2416 = vadd.f32 %v2351, %v2415
  %v2417 = vand.u32 %v532, 4294901760
  %2418 = vmatmul.f32.gmra.mxu0 %v2417
  %v2419 = vpop.f32.mrf.mxu0
  %v2420 = vadd.f32 %v2355, %v2419
  %v2421 = vand.u32 %v408, 4294901760
  %2422 = vmatmul.f32.gmra.mxu0 %v2421
  %v2423 = vpop.f32.mrf.mxu0
  %v2424 = vadd.f32 %v2359, %v2423
  %v2425 = vand.u32 %v124, 4294901760
  %2426 = vmatmul.f32.gmra.mxu0 %v2425
  %v2427 = vpop.f32.mrf.mxu0
  %v2428 = vadd.f32 %v2363, %v2427
  %2429 = vdwg.mxu0
  %v2430 = vand.u32 %v1312, 4294901760
  %2431 = vmatpush.msra.mxu0 %v2430
  %v2432 = vand.u32 %v1308, 4294901760
  %2433 = vmatpush.msra.mxu0 %v2432
  %v2434 = vand.u32 %v1304, 4294901760
  %2435 = vmatpush.msra.mxu0 %v2434
  %v2436 = vand.u32 %v1300, 4294901760
  %2437 = vmatpush.msra.mxu0 %v2436
  %v2438 = vand.u32 %v1296, 4294901760
  %2439 = vmatpush.msra.mxu0 %v2438
  %v2440 = vand.u32 %v1292, 4294901760
  %2441 = vmatpush.msra.mxu0 %v2440
  %v2442 = vand.u32 %v1288, 4294901760
  %2443 = vmatpush.msra.mxu0 %v2442
  %v2444 = vand.u32 %v1284, 4294901760
  %2445 = vmatpush.msra.mxu0 %v2444
  %v2446 = vand.u32 %v1280, 4294901760
  %2447 = vmatpush.msra.mxu0 %v2446
  %v2448 = vand.u32 %v1276, 4294901760
  %2449 = vmatpush.msra.mxu0 %v2448
  %v2450 = vand.u32 %v1272, 4294901760
  %2451 = vmatpush.msra.mxu0 %v2450
  %v2452 = vand.u32 %v1268, 4294901760
  %2453 = vmatpush.msra.mxu0 %v2452
  %v2454 = vand.u32 %v1264, 4294901760
  %2455 = vmatpush.msra.mxu0 %v2454
  %v2456 = vand.u32 %v1260, 4294901760
  %2457 = vmatpush.msra.mxu0 %v2456
  %v2458 = vand.u32 %v1256, 4294901760
  %2459 = vmatpush.msra.mxu0 %v2458
  %v2460 = vand.u32 %v1252, 4294901760
  %2461 = vmatpush.msra.mxu0 %v2460
  %v2462 = vand.u32 %v1152, 4294901760
  %v2463 = vsub.f32 %v1152, %v2462
  %v2464 = vand.u32 %v2463, 4294901760
  %v2465 = vsub.f32 %v2463, %v2464
  %v2466 = vand.u32 %v2465, 4294901760
  %2467 = vmatmul.f32.gmra.mxu0 %v2466
  %v2468 = vpop.f32.mrf.mxu0
  %v2469 = vadd.f32 0.0, %v2468
  %v2470 = vand.u32 %v1028, 4294901760
  %v2471 = vsub.f32 %v1028, %v2470
  %v2472 = vand.u32 %v2471, 4294901760
  %v2473 = vsub.f32 %v2471, %v2472
  %v2474 = vand.u32 %v2473, 4294901760
  %2475 = vmatmul.f32.gmra.mxu0 %v2474
  %v2476 = vpop.f32.mrf.mxu0
  %v2477 = vadd.f32 0.0, %v2476
  %v2478 = vand.u32 %v904, 4294901760
  %v2479 = vsub.f32 %v904, %v2478
  %v2480 = vand.u32 %v2479, 4294901760
  %v2481 = vsub.f32 %v2479, %v2480
  %v2482 = vand.u32 %v2481, 4294901760
  %2483 = vmatmul.f32.gmra.mxu0 %v2482
  %v2484 = vpop.f32.mrf.mxu0
  %v2485 = vadd.f32 0.0, %v2484
  %v2486 = vand.u32 %v780, 4294901760
  %v2487 = vsub.f32 %v780, %v2486
  %v2488 = vand.u32 %v2487, 4294901760
  %v2489 = vsub.f32 %v2487, %v2488
  %v2490 = vand.u32 %v2489, 4294901760
  %2491 = vmatmul.f32.gmra.mxu0 %v2490
  %v2492 = vpop.f32.mrf.mxu0
  %v2493 = vadd.f32 0.0, %v2492
  %v2494 = vand.u32 %v656, 4294901760
  %v2495 = vsub.f32 %v656, %v2494
  %v2496 = vand.u32 %v2495, 4294901760
  %v2497 = vsub.f32 %v2495, %v2496
  %v2498 = vand.u32 %v2497, 4294901760
  %2499 = vmatmul.f32.gmra.mxu0 %v2498
  %v2500 = vpop.f32.mrf.mxu0
  %v2501 = vadd.f32 0.0, %v2500
  %v2502 = vand.u32 %v532, 4294901760
  %v2503 = vsub.f32 %v532, %v2502
  %v2504 = vand.u32 %v2503, 4294901760
  %v2505 = vsub.f32 %v2503, %v2504
  %v2506 = vand.u32 %v2505, 4294901760
  %2507 = vmatmul.f32.gmra.mxu0 %v2506
  %v2508 = vpop.f32.mrf.mxu0
  %v2509 = vadd.f32 0.0, %v2508
  %v2510 = vand.u32 %v408, 4294901760
  %v2511 = vsub.f32 %v408, %v2510
  %v2512 = vand.u32 %v2511, 4294901760
  %v2513 = vsub.f32 %v2511, %v2512
  %v2514 = vand.u32 %v2513, 4294901760
  %2515 = vmatmul.f32.gmra.mxu0 %v2514
  %v2516 = vpop.f32.mrf.mxu0
  %v2517 = vadd.f32 0.0, %v2516
  %v2518 = vand.u32 %v124, 4294901760
  %v2519 = vsub.f32 %v124, %v2518
  %v2520 = vand.u32 %v2519, 4294901760
  %v2521 = vsub.f32 %v2519, %v2520
  %v2522 = vand.u32 %v2521, 4294901760
  %2523 = vmatmul.f32.gmra.mxu0 %v2522
  %v2524 = vpop.f32.mrf.mxu0
  %v2525 = vadd.f32 0.0, %v2524
  %2526 = vdwg.mxu0
  %v2527 = vand.u32 %v1312, 4294901760
  %v2528 = vsub.f32 %v1312, %v2527
  %v2529 = vand.u32 %v2528, 4294901760
  %v2530 = vsub.f32 %v2528, %v2529
  %v2531 = vand.u32 %v2530, 4294901760
  %2532 = vmatpush.msra.mxu0 %v2531
  %v2533 = vand.u32 %v1308, 4294901760
  %v2534 = vsub.f32 %v1308, %v2533
  %v2535 = vand.u32 %v2534, 4294901760
  %v2536 = vsub.f32 %v2534, %v2535
  %v2537 = vand.u32 %v2536, 4294901760
  %2538 = vmatpush.msra.mxu0 %v2537
  %v2539 = vand.u32 %v1304, 4294901760
  %v2540 = vsub.f32 %v1304, %v2539
  %v2541 = vand.u32 %v2540, 4294901760
  %v2542 = vsub.f32 %v2540, %v2541
  %v2543 = vand.u32 %v2542, 4294901760
  %2544 = vmatpush.msra.mxu0 %v2543
  %v2545 = vand.u32 %v1300, 4294901760
  %v2546 = vsub.f32 %v1300, %v2545
  %v2547 = vand.u32 %v2546, 4294901760
  %v2548 = vsub.f32 %v2546, %v2547
  %v2549 = vand.u32 %v2548, 4294901760
  %2550 = vmatpush.msra.mxu0 %v2549
  %v2551 = vand.u32 %v1296, 4294901760
  %v2552 = vsub.f32 %v1296, %v2551
  %v2553 = vand.u32 %v2552, 4294901760
  %v2554 = vsub.f32 %v2552, %v2553
  %v2555 = vand.u32 %v2554, 4294901760
  %2556 = vmatpush.msra.mxu0 %v2555
  %v2557 = vand.u32 %v1292, 4294901760
  %v2558 = vsub.f32 %v1292, %v2557
  %v2559 = vand.u32 %v2558, 4294901760
  %v2560 = vsub.f32 %v2558, %v2559
  %v2561 = vand.u32 %v2560, 4294901760
  %2562 = vmatpush.msra.mxu0 %v2561
  %v2563 = vand.u32 %v1288, 4294901760
  %v2564 = vsub.f32 %v1288, %v2563
  %v2565 = vand.u32 %v2564, 4294901760
  %v2566 = vsub.f32 %v2564, %v2565
  %v2567 = vand.u32 %v2566, 4294901760
  %2568 = vmatpush.msra.mxu0 %v2567
  %v2569 = vand.u32 %v1284, 4294901760
  %v2570 = vsub.f32 %v1284, %v2569
  %v2571 = vand.u32 %v2570, 4294901760
  %v2572 = vsub.f32 %v2570, %v2571
  %v2573 = vand.u32 %v2572, 4294901760
  %2574 = vmatpush.msra.mxu0 %v2573
  %v2575 = vand.u32 %v1280, 4294901760
  %v2576 = vsub.f32 %v1280, %v2575
  %v2577 = vand.u32 %v2576, 4294901760
  %v2578 = vsub.f32 %v2576, %v2577
  %v2579 = vand.u32 %v2578, 4294901760
  %2580 = vmatpush.msra.mxu0 %v2579
  %v2581 = vand.u32 %v1276, 4294901760
  %v2582 = vsub.f32 %v1276, %v2581
  %v2583 = vand.u32 %v2582, 4294901760
  %v2584 = vsub.f32 %v2582, %v2583
  %v2585 = vand.u32 %v2584, 4294901760
  %2586 = vmatpush.msra.mxu0 %v2585
  %v2587 = vand.u32 %v1272, 4294901760
  %v2588 = vsub.f32 %v1272, %v2587
  %v2589 = vand.u32 %v2588, 4294901760
  %v2590 = vsub.f32 %v2588, %v2589
  %v2591 = vand.u32 %v2590, 4294901760
  %2592 = vmatpush.msra.mxu0 %v2591
  %v2593 = vand.u32 %v1268, 4294901760
  %v2594 = vsub.f32 %v1268, %v2593
  %v2595 = vand.u32 %v2594, 4294901760
  %v2596 = vsub.f32 %v2594, %v2595
  %v2597 = vand.u32 %v2596, 4294901760
  %2598 = vmatpush.msra.mxu0 %v2597
  %v2599 = vand.u32 %v1264, 4294901760
  %v2600 = vsub.f32 %v1264, %v2599
  %v2601 = vand.u32 %v2600, 4294901760
  %v2602 = vsub.f32 %v2600, %v2601
  %v2603 = vand.u32 %v2602, 4294901760
  %2604 = vmatpush.msra.mxu0 %v2603
  %v2605 = vand.u32 %v1260, 4294901760
  %v2606 = vsub.f32 %v1260, %v2605
  %v2607 = vand.u32 %v2606, 4294901760
  %v2608 = vsub.f32 %v2606, %v2607
  %v2609 = vand.u32 %v2608, 4294901760
  %2610 = vmatpush.msra.mxu0 %v2609
  %v2611 = vand.u32 %v1256, 4294901760
  %v2612 = vsub.f32 %v1256, %v2611
  %v2613 = vand.u32 %v2612, 4294901760
  %v2614 = vsub.f32 %v2612, %v2613
  %v2615 = vand.u32 %v2614, 4294901760
  %2616 = vmatpush.msra.mxu0 %v2615
  %v2617 = vand.u32 %v1252, 4294901760
  %v2618 = vsub.f32 %v1252, %v2617
  %v2619 = vand.u32 %v2618, 4294901760
  %v2620 = vsub.f32 %v2618, %v2619
  %v2621 = vand.u32 %v2620, 4294901760
  %2622 = vmatpush.msra.mxu0 %v2621
  %v2623 = vand.u32 %v1152, 4294901760
  %2624 = vmatmul.f32.gmra.mxu0 %v2623
  %v2625 = vpop.f32.mrf.mxu0
  %v2626 = vadd.f32 %v2469, %v2625
  %v2627 = vand.u32 %v1028, 4294901760
  %2628 = vmatmul.f32.gmra.mxu0 %v2627
  %v2629 = vpop.f32.mrf.mxu0
  %v2630 = vadd.f32 %v2477, %v2629
  %v2631 = vand.u32 %v904, 4294901760
  %2632 = vmatmul.f32.gmra.mxu0 %v2631
  %v2633 = vpop.f32.mrf.mxu0
  %v2634 = vadd.f32 %v2485, %v2633
  %v2635 = vand.u32 %v780, 4294901760
  %2636 = vmatmul.f32.gmra.mxu0 %v2635
  %v2637 = vpop.f32.mrf.mxu0
  %v2638 = vadd.f32 %v2493, %v2637
  %v2639 = vand.u32 %v656, 4294901760
  %2640 = vmatmul.f32.gmra.mxu0 %v2639
  %v2641 = vpop.f32.mrf.mxu0
  %v2642 = vadd.f32 %v2501, %v2641
  %v2643 = vand.u32 %v532, 4294901760
  %2644 = vmatmul.f32.gmra.mxu0 %v2643
  %v2645 = vpop.f32.mrf.mxu0
  %v2646 = vadd.f32 %v2509, %v2645
  %v2647 = vand.u32 %v408, 4294901760
  %2648 = vmatmul.f32.gmra.mxu0 %v2647
  %v2649 = vpop.f32.mrf.mxu0
  %v2650 = vadd.f32 %v2517, %v2649
  %v2651 = vand.u32 %v124, 4294901760
  %2652 = vmatmul.f32.gmra.mxu0 %v2651
  %v2653 = vpop.f32.mrf.mxu0
  %v2654 = vadd.f32 %v2525, %v2653
  %2655 = vdwg.mxu0
  %v2656 = vand.u32 %v1312, 4294901760
  %v2657 = vsub.f32 %v1312, %v2656
  %2658 = vmatpush.msra.mxu0 %v2657
  %v2659 = vand.u32 %v1308, 4294901760
  %v2660 = vsub.f32 %v1308, %v2659
  %2661 = vmatpush.msra.mxu0 %v2660
  %v2662 = vand.u32 %v1304, 4294901760
  %v2663 = vsub.f32 %v1304, %v2662
  %2664 = vmatpush.msra.mxu0 %v2663
  %v2665 = vand.u32 %v1300, 4294901760
  %v2666 = vsub.f32 %v1300, %v2665
  %2667 = vmatpush.msra.mxu0 %v2666
  %v2668 = vand.u32 %v1296, 4294901760
  %v2669 = vsub.f32 %v1296, %v2668
  %2670 = vmatpush.msra.mxu0 %v2669
  %v2671 = vand.u32 %v1292, 4294901760
  %v2672 = vsub.f32 %v1292, %v2671
  %2673 = vmatpush.msra.mxu0 %v2672
  %v2674 = vand.u32 %v1288, 4294901760
  %v2675 = vsub.f32 %v1288, %v2674
  %2676 = vmatpush.msra.mxu0 %v2675
  %v2677 = vand.u32 %v1284, 4294901760
  %v2678 = vsub.f32 %v1284, %v2677
  %2679 = vmatpush.msra.mxu0 %v2678
  %v2680 = vand.u32 %v1280, 4294901760
  %v2681 = vsub.f32 %v1280, %v2680
  %2682 = vmatpush.msra.mxu0 %v2681
  %v2683 = vand.u32 %v1276, 4294901760
  %v2684 = vsub.f32 %v1276, %v2683
  %2685 = vmatpush.msra.mxu0 %v2684
  %v2686 = vand.u32 %v1272, 4294901760
  %v2687 = vsub.f32 %v1272, %v2686
  %2688 = vmatpush.msra.mxu0 %v2687
  %v2689 = vand.u32 %v1268, 4294901760
  %v2690 = vsub.f32 %v1268, %v2689
  %2691 = vmatpush.msra.mxu0 %v2690
  %v2692 = vand.u32 %v1264, 4294901760
  %v2693 = vsub.f32 %v1264, %v2692
  %2694 = vmatpush.msra.mxu0 %v2693
  %v2695 = vand.u32 %v1260, 4294901760
  %v2696 = vsub.f32 %v1260, %v2695
  %2697 = vmatpush.msra.mxu0 %v2696
  %v2698 = vand.u32 %v1256, 4294901760
  %v2699 = vsub.f32 %v1256, %v2698
  %2700 = vmatpush.msra.mxu0 %v2699
  %v2701 = vand.u32 %v1252, 4294901760
  %v2702 = vsub.f32 %v1252, %v2701
  %2703 = vmatpush.msra.mxu0 %v2702
  %v2704 = vand.u32 %v1152, 4294901760
  %v2705 = vsub.f32 %v1152, %v2704
  %2706 = vmatmul.f32.gmra.mxu0 %v2705
  %v2707 = vpop.f32.mrf.mxu0
  %v2708 = vadd.f32 %v2626, %v2707
  %v2709 = vand.u32 %v1028, 4294901760
  %v2710 = vsub.f32 %v1028, %v2709
  %2711 = vmatmul.f32.gmra.mxu0 %v2710
  %v2712 = vpop.f32.mrf.mxu0
  %v2713 = vadd.f32 %v2630, %v2712
  %v2714 = vand.u32 %v904, 4294901760
  %v2715 = vsub.f32 %v904, %v2714
  %2716 = vmatmul.f32.gmra.mxu0 %v2715
  %v2717 = vpop.f32.mrf.mxu0
  %v2718 = vadd.f32 %v2634, %v2717
  %v2719 = vand.u32 %v780, 4294901760
  %v2720 = vsub.f32 %v780, %v2719
  %2721 = vmatmul.f32.gmra.mxu0 %v2720
  %v2722 = vpop.f32.mrf.mxu0
  %v2723 = vadd.f32 %v2638, %v2722
  %v2724 = vand.u32 %v656, 4294901760
  %v2725 = vsub.f32 %v656, %v2724
  %2726 = vmatmul.f32.gmra.mxu0 %v2725
  %v2727 = vpop.f32.mrf.mxu0
  %v2728 = vadd.f32 %v2642, %v2727
  %v2729 = vand.u32 %v532, 4294901760
  %v2730 = vsub.f32 %v532, %v2729
  %2731 = vmatmul.f32.gmra.mxu0 %v2730
  %v2732 = vpop.f32.mrf.mxu0
  %v2733 = vadd.f32 %v2646, %v2732
  %v2734 = vand.u32 %v408, 4294901760
  %v2735 = vsub.f32 %v408, %v2734
  %2736 = vmatmul.f32.gmra.mxu0 %v2735
  %v2737 = vpop.f32.mrf.mxu0
  %v2738 = vadd.f32 %v2650, %v2737
  %v2739 = vand.u32 %v124, 4294901760
  %v2740 = vsub.f32 %v124, %v2739
  %2741 = vmatmul.f32.gmra.mxu0 %v2740
  %v2742 = vpop.f32.mrf.mxu0
  %v2743 = vadd.f32 %v2654, %v2742
  %2744 = vdwg.mxu0
  %v2745 = vand.u32 %v1312, 4294901760
  %2746 = vmatpush.msra.mxu0 %v2745
  %v2747 = vand.u32 %v1308, 4294901760
  %2748 = vmatpush.msra.mxu0 %v2747
  %v2749 = vand.u32 %v1304, 4294901760
  %2750 = vmatpush.msra.mxu0 %v2749
  %v2751 = vand.u32 %v1300, 4294901760
  %2752 = vmatpush.msra.mxu0 %v2751
  %v2753 = vand.u32 %v1296, 4294901760
  %2754 = vmatpush.msra.mxu0 %v2753
  %v2755 = vand.u32 %v1292, 4294901760
  %2756 = vmatpush.msra.mxu0 %v2755
  %v2757 = vand.u32 %v1288, 4294901760
  %2758 = vmatpush.msra.mxu0 %v2757
  %v2759 = vand.u32 %v1284, 4294901760
  %2760 = vmatpush.msra.mxu0 %v2759
  %v2761 = vand.u32 %v1280, 4294901760
  %2762 = vmatpush.msra.mxu0 %v2761
  %v2763 = vand.u32 %v1276, 4294901760
  %2764 = vmatpush.msra.mxu0 %v2763
  %v2765 = vand.u32 %v1272, 4294901760
  %2766 = vmatpush.msra.mxu0 %v2765
  %v2767 = vand.u32 %v1268, 4294901760
  %2768 = vmatpush.msra.mxu0 %v2767
  %v2769 = vand.u32 %v1264, 4294901760
  %2770 = vmatpush.msra.mxu0 %v2769
  %v2771 = vand.u32 %v1260, 4294901760
  %2772 = vmatpush.msra.mxu0 %v2771
  %v2773 = vand.u32 %v1256, 4294901760
  %2774 = vmatpush.msra.mxu0 %v2773
  %v2775 = vand.u32 %v1252, 4294901760
  %2776 = vmatpush.msra.mxu0 %v2775
  %v2777 = vand.u32 %v1152, 4294901760
  %v2778 = vsub.f32 %v1152, %v2777
  %v2779 = vand.u32 %v2778, 4294901760
  %2780 = vmatmul.f32.gmra.mxu0 %v2779
  %v2781 = vpop.f32.mrf.mxu0
  %v2782 = vadd.f32 %v2708, %v2781
  %v2783 = vand.u32 %v1028, 4294901760
  %v2784 = vsub.f32 %v1028, %v2783
  %v2785 = vand.u32 %v2784, 4294901760
  %2786 = vmatmul.f32.gmra.mxu0 %v2785
  %v2787 = vpop.f32.mrf.mxu0
  %v2788 = vadd.f32 %v2713, %v2787
  %v2789 = vand.u32 %v904, 4294901760
  %v2790 = vsub.f32 %v904, %v2789
  %v2791 = vand.u32 %v2790, 4294901760
  %2792 = vmatmul.f32.gmra.mxu0 %v2791
  %v2793 = vpop.f32.mrf.mxu0
  %v2794 = vadd.f32 %v2718, %v2793
  %v2795 = vand.u32 %v780, 4294901760
  %v2796 = vsub.f32 %v780, %v2795
  %v2797 = vand.u32 %v2796, 4294901760
  %2798 = vmatmul.f32.gmra.mxu0 %v2797
  %v2799 = vpop.f32.mrf.mxu0
  %v2800 = vadd.f32 %v2723, %v2799
  %v2801 = vand.u32 %v656, 4294901760
  %v2802 = vsub.f32 %v656, %v2801
  %v2803 = vand.u32 %v2802, 4294901760
  %2804 = vmatmul.f32.gmra.mxu0 %v2803
  %v2805 = vpop.f32.mrf.mxu0
  %v2806 = vadd.f32 %v2728, %v2805
  %v2807 = vand.u32 %v532, 4294901760
  %v2808 = vsub.f32 %v532, %v2807
  %v2809 = vand.u32 %v2808, 4294901760
  %2810 = vmatmul.f32.gmra.mxu0 %v2809
  %v2811 = vpop.f32.mrf.mxu0
  %v2812 = vadd.f32 %v2733, %v2811
  %v2813 = vand.u32 %v408, 4294901760
  %v2814 = vsub.f32 %v408, %v2813
  %v2815 = vand.u32 %v2814, 4294901760
  %2816 = vmatmul.f32.gmra.mxu0 %v2815
  %v2817 = vpop.f32.mrf.mxu0
  %v2818 = vadd.f32 %v2738, %v2817
  %v2819 = vand.u32 %v124, 4294901760
  %v2820 = vsub.f32 %v124, %v2819
  %v2821 = vand.u32 %v2820, 4294901760
  %2822 = vmatmul.f32.gmra.mxu0 %v2821
  %v2823 = vpop.f32.mrf.mxu0
  %v2824 = vadd.f32 %v2743, %v2823
  %2825 = vdwg.mxu0
  %v2826 = vand.u32 %v1312, 4294901760
  %v2827 = vsub.f32 %v1312, %v2826
  %v2828 = vand.u32 %v2827, 4294901760
  %2829 = vmatpush.msra.mxu0 %v2828
  %v2830 = vand.u32 %v1308, 4294901760
  %v2831 = vsub.f32 %v1308, %v2830
  %v2832 = vand.u32 %v2831, 4294901760
  %2833 = vmatpush.msra.mxu0 %v2832
  %v2834 = vand.u32 %v1304, 4294901760
  %v2835 = vsub.f32 %v1304, %v2834
  %v2836 = vand.u32 %v2835, 4294901760
  %2837 = vmatpush.msra.mxu0 %v2836
  %v2838 = vand.u32 %v1300, 4294901760
  %v2839 = vsub.f32 %v1300, %v2838
  %v2840 = vand.u32 %v2839, 4294901760
  %2841 = vmatpush.msra.mxu0 %v2840
  %v2842 = vand.u32 %v1296, 4294901760
  %v2843 = vsub.f32 %v1296, %v2842
  %v2844 = vand.u32 %v2843, 4294901760
  %2845 = vmatpush.msra.mxu0 %v2844
  %v2846 = vand.u32 %v1292, 4294901760
  %v2847 = vsub.f32 %v1292, %v2846
  %v2848 = vand.u32 %v2847, 4294901760
  %2849 = vmatpush.msra.mxu0 %v2848
  %v2850 = vand.u32 %v1288, 4294901760
  %v2851 = vsub.f32 %v1288, %v2850
  %v2852 = vand.u32 %v2851, 4294901760
  %2853 = vmatpush.msra.mxu0 %v2852
  %v2854 = vand.u32 %v1284, 4294901760
  %v2855 = vsub.f32 %v1284, %v2854
  %v2856 = vand.u32 %v2855, 4294901760
  %2857 = vmatpush.msra.mxu0 %v2856
  %v2858 = vand.u32 %v1280, 4294901760
  %v2859 = vsub.f32 %v1280, %v2858
  %v2860 = vand.u32 %v2859, 4294901760
  %2861 = vmatpush.msra.mxu0 %v2860
  %v2862 = vand.u32 %v1276, 4294901760
  %v2863 = vsub.f32 %v1276, %v2862
  %v2864 = vand.u32 %v2863, 4294901760
  %2865 = vmatpush.msra.mxu0 %v2864
  %v2866 = vand.u32 %v1272, 4294901760
  %v2867 = vsub.f32 %v1272, %v2866
  %v2868 = vand.u32 %v2867, 4294901760
  %2869 = vmatpush.msra.mxu0 %v2868
  %v2870 = vand.u32 %v1268, 4294901760
  %v2871 = vsub.f32 %v1268, %v2870
  %v2872 = vand.u32 %v2871, 4294901760
  %2873 = vmatpush.msra.mxu0 %v2872
  %v2874 = vand.u32 %v1264, 4294901760
  %v2875 = vsub.f32 %v1264, %v2874
  %v2876 = vand.u32 %v2875, 4294901760
  %2877 = vmatpush.msra.mxu0 %v2876
  %v2878 = vand.u32 %v1260, 4294901760
  %v2879 = vsub.f32 %v1260, %v2878
  %v2880 = vand.u32 %v2879, 4294901760
  %2881 = vmatpush.msra.mxu0 %v2880
  %v2882 = vand.u32 %v1256, 4294901760
  %v2883 = vsub.f32 %v1256, %v2882
  %v2884 = vand.u32 %v2883, 4294901760
  %2885 = vmatpush.msra.mxu0 %v2884
  %v2886 = vand.u32 %v1252, 4294901760
  %v2887 = vsub.f32 %v1252, %v2886
  %v2888 = vand.u32 %v2887, 4294901760
  %2889 = vmatpush.msra.mxu0 %v2888
  %v2890 = vand.u32 %v1152, 4294901760
  %2891 = vmatmul.f32.gmra.mxu0 %v2890
  %v2892 = vpop.f32.mrf.mxu0
  %v2893 = vadd.f32 %v2782, %v2892
  %v2894 = vand.u32 %v1028, 4294901760
  %2895 = vmatmul.f32.gmra.mxu0 %v2894
  %v2896 = vpop.f32.mrf.mxu0
  %v2897 = vadd.f32 %v2788, %v2896
  %v2898 = vand.u32 %v904, 4294901760
  %2899 = vmatmul.f32.gmra.mxu0 %v2898
  %v2900 = vpop.f32.mrf.mxu0
  %v2901 = vadd.f32 %v2794, %v2900
  %v2902 = vand.u32 %v780, 4294901760
  %2903 = vmatmul.f32.gmra.mxu0 %v2902
  %v2904 = vpop.f32.mrf.mxu0
  %v2905 = vadd.f32 %v2800, %v2904
  %v2906 = vand.u32 %v656, 4294901760
  %2907 = vmatmul.f32.gmra.mxu0 %v2906
  %v2908 = vpop.f32.mrf.mxu0
  %v2909 = vadd.f32 %v2806, %v2908
  %v2910 = vand.u32 %v532, 4294901760
  %2911 = vmatmul.f32.gmra.mxu0 %v2910
  %v2912 = vpop.f32.mrf.mxu0
  %v2913 = vadd.f32 %v2812, %v2912
  %v2914 = vand.u32 %v408, 4294901760
  %2915 = vmatmul.f32.gmra.mxu0 %v2914
  %v2916 = vpop.f32.mrf.mxu0
  %v2917 = vadd.f32 %v2818, %v2916
  %v2918 = vand.u32 %v124, 4294901760
  %2919 = vmatmul.f32.gmra.mxu0 %v2918
  %v2920 = vpop.f32.mrf.mxu0
  %v2921 = vadd.f32 %v2824, %v2920
  %2922 = vdwg.mxu0
  %v2923 = vand.u32 %v1312, 4294901760
  %2924 = vmatpush.msra.mxu0 %v2923
  %v2925 = vand.u32 %v1308, 4294901760
  %2926 = vmatpush.msra.mxu0 %v2925
  %v2927 = vand.u32 %v1304, 4294901760
  %2928 = vmatpush.msra.mxu0 %v2927
  %v2929 = vand.u32 %v1300, 4294901760
  %2930 = vmatpush.msra.mxu0 %v2929
  %v2931 = vand.u32 %v1296, 4294901760
  %2932 = vmatpush.msra.mxu0 %v2931
  %v2933 = vand.u32 %v1292, 4294901760
  %2934 = vmatpush.msra.mxu0 %v2933
  %v2935 = vand.u32 %v1288, 4294901760
  %2936 = vmatpush.msra.mxu0 %v2935
  %v2937 = vand.u32 %v1284, 4294901760
  %2938 = vmatpush.msra.mxu0 %v2937
  %v2939 = vand.u32 %v1280, 4294901760
  %2940 = vmatpush.msra.mxu0 %v2939
  %v2941 = vand.u32 %v1276, 4294901760
  %2942 = vmatpush.msra.mxu0 %v2941
  %v2943 = vand.u32 %v1272, 4294901760
  %2944 = vmatpush.msra.mxu0 %v2943
  %v2945 = vand.u32 %v1268, 4294901760
  %2946 = vmatpush.msra.mxu0 %v2945
  %v2947 = vand.u32 %v1264, 4294901760
  %2948 = vmatpush.msra.mxu0 %v2947
  %v2949 = vand.u32 %v1260, 4294901760
  %2950 = vmatpush.msra.mxu0 %v2949
  %v2951 = vand.u32 %v1256, 4294901760
  %2952 = vmatpush.msra.mxu0 %v2951
  %v2953 = vand.u32 %v1252, 4294901760
  %2954 = vmatpush.msra.mxu0 %v2953
  %v2955 = vand.u32 %v1152, 4294901760
  %2956 = vmatmul.f32.gmra.mxu0 %v2955
  %v2957 = vpop.f32.mrf.mxu0
  %v2958 = vadd.f32 %v2893, %v2957
  %v2959 = vand.u32 %v1028, 4294901760
  %2960 = vmatmul.f32.gmra.mxu0 %v2959
  %v2961 = vpop.f32.mrf.mxu0
  %v2962 = vadd.f32 %v2897, %v2961
  %v2963 = vand.u32 %v904, 4294901760
  %2964 = vmatmul.f32.gmra.mxu0 %v2963
  %v2965 = vpop.f32.mrf.mxu0
  %v2966 = vadd.f32 %v2901, %v2965
  %v2967 = vand.u32 %v780, 4294901760
  %2968 = vmatmul.f32.gmra.mxu0 %v2967
  %v2969 = vpop.f32.mrf.mxu0
  %v2970 = vadd.f32 %v2905, %v2969
  %v2971 = vand.u32 %v656, 4294901760
  %2972 = vmatmul.f32.gmra.mxu0 %v2971
  %v2973 = vpop.f32.mrf.mxu0
  %v2974 = vadd.f32 %v2909, %v2973
  %v2975 = vand.u32 %v532, 4294901760
  %2976 = vmatmul.f32.gmra.mxu0 %v2975
  %v2977 = vpop.f32.mrf.mxu0
  %v2978 = vadd.f32 %v2913, %v2977
  %v2979 = vand.u32 %v408, 4294901760
  %2980 = vmatmul.f32.gmra.mxu0 %v2979
  %v2981 = vpop.f32.mrf.mxu0
  %v2982 = vadd.f32 %v2917, %v2981
  %v2983 = vand.u32 %v124, 4294901760
  %2984 = vmatmul.f32.gmra.mxu0 %v2983
  %v2985 = vpop.f32.mrf.mxu0
  %v2986 = vadd.f32 %v2921, %v2985
  %2987 = vdwg.mxu0
  %v2988 = vand.u32 %v1313, 4294901760
  %2989 = vmatpush.msra.mxu0 %v2988
  %v2990 = vand.u32 %v1309, 4294901760
  %2991 = vmatpush.msra.mxu0 %v2990
  %v2992 = vand.u32 %v1305, 4294901760
  %2993 = vmatpush.msra.mxu0 %v2992
  %v2994 = vand.u32 %v1301, 4294901760
  %2995 = vmatpush.msra.mxu0 %v2994
  %v2996 = vand.u32 %v1297, 4294901760
  %2997 = vmatpush.msra.mxu0 %v2996
  %v2998 = vand.u32 %v1293, 4294901760
  %2999 = vmatpush.msra.mxu0 %v2998
  %v3000 = vand.u32 %v1289, 4294901760
  %3001 = vmatpush.msra.mxu0 %v3000
  %v3002 = vand.u32 %v1285, 4294901760
  %3003 = vmatpush.msra.mxu0 %v3002
  %v3004 = vand.u32 %v1281, 4294901760
  %3005 = vmatpush.msra.mxu0 %v3004
  %v3006 = vand.u32 %v1277, 4294901760
  %3007 = vmatpush.msra.mxu0 %v3006
  %v3008 = vand.u32 %v1273, 4294901760
  %3009 = vmatpush.msra.mxu0 %v3008
  %v3010 = vand.u32 %v1269, 4294901760
  %3011 = vmatpush.msra.mxu0 %v3010
  %v3012 = vand.u32 %v1265, 4294901760
  %3013 = vmatpush.msra.mxu0 %v3012
  %v3014 = vand.u32 %v1261, 4294901760
  %3015 = vmatpush.msra.mxu0 %v3014
  %v3016 = vand.u32 %v1257, 4294901760
  %3017 = vmatpush.msra.mxu0 %v3016
  %v3018 = vand.u32 %v1253, 4294901760
  %3019 = vmatpush.msra.mxu0 %v3018
  %v3020 = vand.u32 %v1152, 4294901760
  %v3021 = vsub.f32 %v1152, %v3020
  %v3022 = vand.u32 %v3021, 4294901760
  %v3023 = vsub.f32 %v3021, %v3022
  %v3024 = vand.u32 %v3023, 4294901760
  %3025 = vmatmul.f32.gmra.mxu0 %v3024
  %v3026 = vpop.f32.mrf.mxu0
  %v3027 = vadd.f32 0.0, %v3026
  %v3028 = vand.u32 %v1028, 4294901760
  %v3029 = vsub.f32 %v1028, %v3028
  %v3030 = vand.u32 %v3029, 4294901760
  %v3031 = vsub.f32 %v3029, %v3030
  %v3032 = vand.u32 %v3031, 4294901760
  %3033 = vmatmul.f32.gmra.mxu0 %v3032
  %v3034 = vpop.f32.mrf.mxu0
  %v3035 = vadd.f32 0.0, %v3034
  %v3036 = vand.u32 %v904, 4294901760
  %v3037 = vsub.f32 %v904, %v3036
  %v3038 = vand.u32 %v3037, 4294901760
  %v3039 = vsub.f32 %v3037, %v3038
  %v3040 = vand.u32 %v3039, 4294901760
  %3041 = vmatmul.f32.gmra.mxu0 %v3040
  %v3042 = vpop.f32.mrf.mxu0
  %v3043 = vadd.f32 0.0, %v3042
  %v3044 = vand.u32 %v780, 4294901760
  %v3045 = vsub.f32 %v780, %v3044
  %v3046 = vand.u32 %v3045, 4294901760
  %v3047 = vsub.f32 %v3045, %v3046
  %v3048 = vand.u32 %v3047, 4294901760
  %3049 = vmatmul.f32.gmra.mxu0 %v3048
  %v3050 = vpop.f32.mrf.mxu0
  %v3051 = vadd.f32 0.0, %v3050
  %v3052 = vand.u32 %v656, 4294901760
  %v3053 = vsub.f32 %v656, %v3052
  %v3054 = vand.u32 %v3053, 4294901760
  %v3055 = vsub.f32 %v3053, %v3054
  %v3056 = vand.u32 %v3055, 4294901760
  %3057 = vmatmul.f32.gmra.mxu0 %v3056
  %v3058 = vpop.f32.mrf.mxu0
  %v3059 = vadd.f32 0.0, %v3058
  %v3060 = vand.u32 %v532, 4294901760
  %v3061 = vsub.f32 %v532, %v3060
  %v3062 = vand.u32 %v3061, 4294901760
  %v3063 = vsub.f32 %v3061, %v3062
  %v3064 = vand.u32 %v3063, 4294901760
  %3065 = vmatmul.f32.gmra.mxu0 %v3064
  %v3066 = vpop.f32.mrf.mxu0
  %v3067 = vadd.f32 0.0, %v3066
  %v3068 = vand.u32 %v408, 4294901760
  %v3069 = vsub.f32 %v408, %v3068
  %v3070 = vand.u32 %v3069, 4294901760
  %v3071 = vsub.f32 %v3069, %v3070
  %v3072 = vand.u32 %v3071, 4294901760
  %3073 = vmatmul.f32.gmra.mxu0 %v3072
  %v3074 = vpop.f32.mrf.mxu0
  %v3075 = vadd.f32 0.0, %v3074
  %v3076 = vand.u32 %v124, 4294901760
  %v3077 = vsub.f32 %v124, %v3076
  %v3078 = vand.u32 %v3077, 4294901760
  %v3079 = vsub.f32 %v3077, %v3078
  %v3080 = vand.u32 %v3079, 4294901760
  %3081 = vmatmul.f32.gmra.mxu0 %v3080
  %v3082 = vpop.f32.mrf.mxu0
  %v3083 = vadd.f32 0.0, %v3082
  %3084 = vdwg.mxu0
  %v3085 = vand.u32 %v1313, 4294901760
  %v3086 = vsub.f32 %v1313, %v3085
  %v3087 = vand.u32 %v3086, 4294901760
  %v3088 = vsub.f32 %v3086, %v3087
  %v3089 = vand.u32 %v3088, 4294901760
  %3090 = vmatpush.msra.mxu0 %v3089
  %v3091 = vand.u32 %v1309, 4294901760
  %v3092 = vsub.f32 %v1309, %v3091
  %v3093 = vand.u32 %v3092, 4294901760
  %v3094 = vsub.f32 %v3092, %v3093
  %v3095 = vand.u32 %v3094, 4294901760
  %3096 = vmatpush.msra.mxu0 %v3095
  %v3097 = vand.u32 %v1305, 4294901760
  %v3098 = vsub.f32 %v1305, %v3097
  %v3099 = vand.u32 %v3098, 4294901760
  %v3100 = vsub.f32 %v3098, %v3099
  %v3101 = vand.u32 %v3100, 4294901760
  %3102 = vmatpush.msra.mxu0 %v3101
  %v3103 = vand.u32 %v1301, 4294901760
  %v3104 = vsub.f32 %v1301, %v3103
  %v3105 = vand.u32 %v3104, 4294901760
  %v3106 = vsub.f32 %v3104, %v3105
  %v3107 = vand.u32 %v3106, 4294901760
  %3108 = vmatpush.msra.mxu0 %v3107
  %v3109 = vand.u32 %v1297, 4294901760
  %v3110 = vsub.f32 %v1297, %v3109
  %v3111 = vand.u32 %v3110, 4294901760
  %v3112 = vsub.f32 %v3110, %v3111
  %v3113 = vand.u32 %v3112, 4294901760
  %3114 = vmatpush.msra.mxu0 %v3113
  %v3115 = vand.u32 %v1293, 4294901760
  %v3116 = vsub.f32 %v1293, %v3115
  %v3117 = vand.u32 %v3116, 4294901760
  %v3118 = vsub.f32 %v3116, %v3117
  %v3119 = vand.u32 %v3118, 4294901760
  %3120 = vmatpush.msra.mxu0 %v3119
  %v3121 = vand.u32 %v1289, 4294901760
  %v3122 = vsub.f32 %v1289, %v3121
  %v3123 = vand.u32 %v3122, 4294901760
  %v3124 = vsub.f32 %v3122, %v3123
  %v3125 = vand.u32 %v3124, 4294901760
  %3126 = vmatpush.msra.mxu0 %v3125
  %v3127 = vand.u32 %v1285, 4294901760
  %v3128 = vsub.f32 %v1285, %v3127
  %v3129 = vand.u32 %v3128, 4294901760
  %v3130 = vsub.f32 %v3128, %v3129
  %v3131 = vand.u32 %v3130, 4294901760
  %3132 = vmatpush.msra.mxu0 %v3131
  %v3133 = vand.u32 %v1281, 4294901760
  %v3134 = vsub.f32 %v1281, %v3133
  %v3135 = vand.u32 %v3134, 4294901760
  %v3136 = vsub.f32 %v3134, %v3135
  %v3137 = vand.u32 %v3136, 4294901760
  %3138 = vmatpush.msra.mxu0 %v3137
  %v3139 = vand.u32 %v1277, 4294901760
  %v3140 = vsub.f32 %v1277, %v3139
  %v3141 = vand.u32 %v3140, 4294901760
  %v3142 = vsub.f32 %v3140, %v3141
  %v3143 = vand.u32 %v3142, 4294901760
  %3144 = vmatpush.msra.mxu0 %v3143
  %v3145 = vand.u32 %v1273, 4294901760
  %v3146 = vsub.f32 %v1273, %v3145
  %v3147 = vand.u32 %v3146, 4294901760
  %v3148 = vsub.f32 %v3146, %v3147
  %v3149 = vand.u32 %v3148, 4294901760
  %3150 = vmatpush.msra.mxu0 %v3149
  %v3151 = vand.u32 %v1269, 4294901760
  %v3152 = vsub.f32 %v1269, %v3151
  %v3153 = vand.u32 %v3152, 4294901760
  %v3154 = vsub.f32 %v3152, %v3153
  %v3155 = vand.u32 %v3154, 4294901760
  %3156 = vmatpush.msra.mxu0 %v3155
  %v3157 = vand.u32 %v1265, 4294901760
  %v3158 = vsub.f32 %v1265, %v3157
  %v3159 = vand.u32 %v3158, 4294901760
  %v3160 = vsub.f32 %v3158, %v3159
  %v3161 = vand.u32 %v3160, 4294901760
  %3162 = vmatpush.msra.mxu0 %v3161
  %v3163 = vand.u32 %v1261, 4294901760
  %v3164 = vsub.f32 %v1261, %v3163
  %v3165 = vand.u32 %v3164, 4294901760
  %v3166 = vsub.f32 %v3164, %v3165
  %v3167 = vand.u32 %v3166, 4294901760
  %3168 = vmatpush.msra.mxu0 %v3167
  %v3169 = vand.u32 %v1257, 4294901760
  %v3170 = vsub.f32 %v1257, %v3169
  %v3171 = vand.u32 %v3170, 4294901760
  %v3172 = vsub.f32 %v3170, %v3171
  %v3173 = vand.u32 %v3172, 4294901760
  %3174 = vmatpush.msra.mxu0 %v3173
  %v3175 = vand.u32 %v1253, 4294901760
  %v3176 = vsub.f32 %v1253, %v3175
  %v3177 = vand.u32 %v3176, 4294901760
  %v3178 = vsub.f32 %v3176, %v3177
  %v3179 = vand.u32 %v3178, 4294901760
  %3180 = vmatpush.msra.mxu0 %v3179
  %v3181 = vand.u32 %v1152, 4294901760
  %3182 = vmatmul.f32.gmra.mxu0 %v3181
  %v3183 = vpop.f32.mrf.mxu0
  %v3184 = vadd.f32 %v3027, %v3183
  %v3185 = vand.u32 %v1028, 4294901760
  %3186 = vmatmul.f32.gmra.mxu0 %v3185
  %v3187 = vpop.f32.mrf.mxu0
  %v3188 = vadd.f32 %v3035, %v3187
  %v3189 = vand.u32 %v904, 4294901760
  %3190 = vmatmul.f32.gmra.mxu0 %v3189
  %v3191 = vpop.f32.mrf.mxu0
  %v3192 = vadd.f32 %v3043, %v3191
  %v3193 = vand.u32 %v780, 4294901760
  %3194 = vmatmul.f32.gmra.mxu0 %v3193
  %v3195 = vpop.f32.mrf.mxu0
  %v3196 = vadd.f32 %v3051, %v3195
  %v3197 = vand.u32 %v656, 4294901760
  %3198 = vmatmul.f32.gmra.mxu0 %v3197
  %v3199 = vpop.f32.mrf.mxu0
  %v3200 = vadd.f32 %v3059, %v3199
  %v3201 = vand.u32 %v532, 4294901760
  %3202 = vmatmul.f32.gmra.mxu0 %v3201
  %v3203 = vpop.f32.mrf.mxu0
  %v3204 = vadd.f32 %v3067, %v3203
  %v3205 = vand.u32 %v408, 4294901760
  %3206 = vmatmul.f32.gmra.mxu0 %v3205
  %v3207 = vpop.f32.mrf.mxu0
  %v3208 = vadd.f32 %v3075, %v3207
  %v3209 = vand.u32 %v124, 4294901760
  %3210 = vmatmul.f32.gmra.mxu0 %v3209
  %v3211 = vpop.f32.mrf.mxu0
  %v3212 = vadd.f32 %v3083, %v3211
  %3213 = vdwg.mxu0
  %v3214 = vand.u32 %v1313, 4294901760
  %v3215 = vsub.f32 %v1313, %v3214
  %3216 = vmatpush.msra.mxu0 %v3215
  %v3217 = vand.u32 %v1309, 4294901760
  %v3218 = vsub.f32 %v1309, %v3217
  %3219 = vmatpush.msra.mxu0 %v3218
  %v3220 = vand.u32 %v1305, 4294901760
  %v3221 = vsub.f32 %v1305, %v3220
  %3222 = vmatpush.msra.mxu0 %v3221
  %v3223 = vand.u32 %v1301, 4294901760
  %v3224 = vsub.f32 %v1301, %v3223
  %3225 = vmatpush.msra.mxu0 %v3224
  %v3226 = vand.u32 %v1297, 4294901760
  %v3227 = vsub.f32 %v1297, %v3226
  %3228 = vmatpush.msra.mxu0 %v3227
  %v3229 = vand.u32 %v1293, 4294901760
  %v3230 = vsub.f32 %v1293, %v3229
  %3231 = vmatpush.msra.mxu0 %v3230
  %v3232 = vand.u32 %v1289, 4294901760
  %v3233 = vsub.f32 %v1289, %v3232
  %3234 = vmatpush.msra.mxu0 %v3233
  %v3235 = vand.u32 %v1285, 4294901760
  %v3236 = vsub.f32 %v1285, %v3235
  %3237 = vmatpush.msra.mxu0 %v3236
  %v3238 = vand.u32 %v1281, 4294901760
  %v3239 = vsub.f32 %v1281, %v3238
  %3240 = vmatpush.msra.mxu0 %v3239
  %v3241 = vand.u32 %v1277, 4294901760
  %v3242 = vsub.f32 %v1277, %v3241
  %3243 = vmatpush.msra.mxu0 %v3242
  %v3244 = vand.u32 %v1273, 4294901760
  %v3245 = vsub.f32 %v1273, %v3244
  %3246 = vmatpush.msra.mxu0 %v3245
  %v3247 = vand.u32 %v1269, 4294901760
  %v3248 = vsub.f32 %v1269, %v3247
  %3249 = vmatpush.msra.mxu0 %v3248
  %v3250 = vand.u32 %v1265, 4294901760
  %v3251 = vsub.f32 %v1265, %v3250
  %3252 = vmatpush.msra.mxu0 %v3251
  %v3253 = vand.u32 %v1261, 4294901760
  %v3254 = vsub.f32 %v1261, %v3253
  %3255 = vmatpush.msra.mxu0 %v3254
  %v3256 = vand.u32 %v1257, 4294901760
  %v3257 = vsub.f32 %v1257, %v3256
  %3258 = vmatpush.msra.mxu0 %v3257
  %v3259 = vand.u32 %v1253, 4294901760
  %v3260 = vsub.f32 %v1253, %v3259
  %3261 = vmatpush.msra.mxu0 %v3260
  %v3262 = vand.u32 %v1152, 4294901760
  %v3263 = vsub.f32 %v1152, %v3262
  %3264 = vmatmul.f32.gmra.mxu0 %v3263
  %v3265 = vpop.f32.mrf.mxu0
  %v3266 = vadd.f32 %v3184, %v3265
  %v3267 = vand.u32 %v1028, 4294901760
  %v3268 = vsub.f32 %v1028, %v3267
  %3269 = vmatmul.f32.gmra.mxu0 %v3268
  %v3270 = vpop.f32.mrf.mxu0
  %v3271 = vadd.f32 %v3188, %v3270
  %v3272 = vand.u32 %v904, 4294901760
  %v3273 = vsub.f32 %v904, %v3272
  %3274 = vmatmul.f32.gmra.mxu0 %v3273
  %v3275 = vpop.f32.mrf.mxu0
  %v3276 = vadd.f32 %v3192, %v3275
  %v3277 = vand.u32 %v780, 4294901760
  %v3278 = vsub.f32 %v780, %v3277
  %3279 = vmatmul.f32.gmra.mxu0 %v3278
  %v3280 = vpop.f32.mrf.mxu0
  %v3281 = vadd.f32 %v3196, %v3280
  %v3282 = vand.u32 %v656, 4294901760
  %v3283 = vsub.f32 %v656, %v3282
  %3284 = vmatmul.f32.gmra.mxu0 %v3283
  %v3285 = vpop.f32.mrf.mxu0
  %v3286 = vadd.f32 %v3200, %v3285
  %v3287 = vand.u32 %v532, 4294901760
  %v3288 = vsub.f32 %v532, %v3287
  %3289 = vmatmul.f32.gmra.mxu0 %v3288
  %v3290 = vpop.f32.mrf.mxu0
  %v3291 = vadd.f32 %v3204, %v3290
  %v3292 = vand.u32 %v408, 4294901760
  %v3293 = vsub.f32 %v408, %v3292
  %3294 = vmatmul.f32.gmra.mxu0 %v3293
  %v3295 = vpop.f32.mrf.mxu0
  %v3296 = vadd.f32 %v3208, %v3295
  %v3297 = vand.u32 %v124, 4294901760
  %v3298 = vsub.f32 %v124, %v3297
  %3299 = vmatmul.f32.gmra.mxu0 %v3298
  %v3300 = vpop.f32.mrf.mxu0
  %v3301 = vadd.f32 %v3212, %v3300
  %3302 = vdwg.mxu0
  %v3303 = vand.u32 %v1313, 4294901760
  %3304 = vmatpush.msra.mxu0 %v3303
  %v3305 = vand.u32 %v1309, 4294901760
  %3306 = vmatpush.msra.mxu0 %v3305
  %v3307 = vand.u32 %v1305, 4294901760
  %3308 = vmatpush.msra.mxu0 %v3307
  %v3309 = vand.u32 %v1301, 4294901760
  %3310 = vmatpush.msra.mxu0 %v3309
  %v3311 = vand.u32 %v1297, 4294901760
  %3312 = vmatpush.msra.mxu0 %v3311
  %v3313 = vand.u32 %v1293, 4294901760
  %3314 = vmatpush.msra.mxu0 %v3313
  %v3315 = vand.u32 %v1289, 4294901760
  %3316 = vmatpush.msra.mxu0 %v3315
  %v3317 = vand.u32 %v1285, 4294901760
  %3318 = vmatpush.msra.mxu0 %v3317
  %v3319 = vand.u32 %v1281, 4294901760
  %3320 = vmatpush.msra.mxu0 %v3319
  %v3321 = vand.u32 %v1277, 4294901760
  %3322 = vmatpush.msra.mxu0 %v3321
  %v3323 = vand.u32 %v1273, 4294901760
  %3324 = vmatpush.msra.mxu0 %v3323
  %v3325 = vand.u32 %v1269, 4294901760
  %3326 = vmatpush.msra.mxu0 %v3325
  %v3327 = vand.u32 %v1265, 4294901760
  %3328 = vmatpush.msra.mxu0 %v3327
  %v3329 = vand.u32 %v1261, 4294901760
  %3330 = vmatpush.msra.mxu0 %v3329
  %v3331 = vand.u32 %v1257, 4294901760
  %3332 = vmatpush.msra.mxu0 %v3331
  %v3333 = vand.u32 %v1253, 4294901760
  %3334 = vmatpush.msra.mxu0 %v3333
  %v3335 = vand.u32 %v1152, 4294901760
  %v3336 = vsub.f32 %v1152, %v3335
  %v3337 = vand.u32 %v3336, 4294901760
  %3338 = vmatmul.f32.gmra.mxu0 %v3337
  %v3339 = vpop.f32.mrf.mxu0
  %v3340 = vadd.f32 %v3266, %v3339
  %v3341 = vand.u32 %v1028, 4294901760
  %v3342 = vsub.f32 %v1028, %v3341
  %v3343 = vand.u32 %v3342, 4294901760
  %3344 = vmatmul.f32.gmra.mxu0 %v3343
  %v3345 = vpop.f32.mrf.mxu0
  %v3346 = vadd.f32 %v3271, %v3345
  %v3347 = vand.u32 %v904, 4294901760
  %v3348 = vsub.f32 %v904, %v3347
  %v3349 = vand.u32 %v3348, 4294901760
  %3350 = vmatmul.f32.gmra.mxu0 %v3349
  %v3351 = vpop.f32.mrf.mxu0
  %v3352 = vadd.f32 %v3276, %v3351
  %v3353 = vand.u32 %v780, 4294901760
  %v3354 = vsub.f32 %v780, %v3353
  %v3355 = vand.u32 %v3354, 4294901760
  %3356 = vmatmul.f32.gmra.mxu0 %v3355
  %v3357 = vpop.f32.mrf.mxu0
  %v3358 = vadd.f32 %v3281, %v3357
  %v3359 = vand.u32 %v656, 4294901760
  %v3360 = vsub.f32 %v656, %v3359
  %v3361 = vand.u32 %v3360, 4294901760
  %3362 = vmatmul.f32.gmra.mxu0 %v3361
  %v3363 = vpop.f32.mrf.mxu0
  %v3364 = vadd.f32 %v3286, %v3363
  %v3365 = vand.u32 %v532, 4294901760
  %v3366 = vsub.f32 %v532, %v3365
  %v3367 = vand.u32 %v3366, 4294901760
  %3368 = vmatmul.f32.gmra.mxu0 %v3367
  %v3369 = vpop.f32.mrf.mxu0
  %v3370 = vadd.f32 %v3291, %v3369
  %v3371 = vand.u32 %v408, 4294901760
  %v3372 = vsub.f32 %v408, %v3371
  %v3373 = vand.u32 %v3372, 4294901760
  %3374 = vmatmul.f32.gmra.mxu0 %v3373
  %v3375 = vpop.f32.mrf.mxu0
  %v3376 = vadd.f32 %v3296, %v3375
  %v3377 = vand.u32 %v124, 4294901760
  %v3378 = vsub.f32 %v124, %v3377
  %v3379 = vand.u32 %v3378, 4294901760
  %3380 = vmatmul.f32.gmra.mxu0 %v3379
  %v3381 = vpop.f32.mrf.mxu0
  %v3382 = vadd.f32 %v3301, %v3381
  %3383 = vdwg.mxu0
  %v3384 = vand.u32 %v1313, 4294901760
  %v3385 = vsub.f32 %v1313, %v3384
  %v3386 = vand.u32 %v3385, 4294901760
  %3387 = vmatpush.msra.mxu0 %v3386
  %v3388 = vand.u32 %v1309, 4294901760
  %v3389 = vsub.f32 %v1309, %v3388
  %v3390 = vand.u32 %v3389, 4294901760
  %3391 = vmatpush.msra.mxu0 %v3390
  %v3392 = vand.u32 %v1305, 4294901760
  %v3393 = vsub.f32 %v1305, %v3392
  %v3394 = vand.u32 %v3393, 4294901760
  %3395 = vmatpush.msra.mxu0 %v3394
  %v3396 = vand.u32 %v1301, 4294901760
  %v3397 = vsub.f32 %v1301, %v3396
  %v3398 = vand.u32 %v3397, 4294901760
  %3399 = vmatpush.msra.mxu0 %v3398
  %v3400 = vand.u32 %v1297, 4294901760
  %v3401 = vsub.f32 %v1297, %v3400
  %v3402 = vand.u32 %v3401, 4294901760
  %3403 = vmatpush.msra.mxu0 %v3402
  %v3404 = vand.u32 %v1293, 4294901760
  %v3405 = vsub.f32 %v1293, %v3404
  %v3406 = vand.u32 %v3405, 4294901760
  %3407 = vmatpush.msra.mxu0 %v3406
  %v3408 = vand.u32 %v1289, 4294901760
  %v3409 = vsub.f32 %v1289, %v3408
  %v3410 = vand.u32 %v3409, 4294901760
  %3411 = vmatpush.msra.mxu0 %v3410
  %v3412 = vand.u32 %v1285, 4294901760
  %v3413 = vsub.f32 %v1285, %v3412
  %v3414 = vand.u32 %v3413, 4294901760
  %3415 = vmatpush.msra.mxu0 %v3414
  %v3416 = vand.u32 %v1281, 4294901760
  %v3417 = vsub.f32 %v1281, %v3416
  %v3418 = vand.u32 %v3417, 4294901760
  %3419 = vmatpush.msra.mxu0 %v3418
  %v3420 = vand.u32 %v1277, 4294901760
  %v3421 = vsub.f32 %v1277, %v3420
  %v3422 = vand.u32 %v3421, 4294901760
  %3423 = vmatpush.msra.mxu0 %v3422
  %v3424 = vand.u32 %v1273, 4294901760
  %v3425 = vsub.f32 %v1273, %v3424
  %v3426 = vand.u32 %v3425, 4294901760
  %3427 = vmatpush.msra.mxu0 %v3426
  %v3428 = vand.u32 %v1269, 4294901760
  %v3429 = vsub.f32 %v1269, %v3428
  %v3430 = vand.u32 %v3429, 4294901760
  %3431 = vmatpush.msra.mxu0 %v3430
  %v3432 = vand.u32 %v1265, 4294901760
  %v3433 = vsub.f32 %v1265, %v3432
  %v3434 = vand.u32 %v3433, 4294901760
  %3435 = vmatpush.msra.mxu0 %v3434
  %v3436 = vand.u32 %v1261, 4294901760
  %v3437 = vsub.f32 %v1261, %v3436
  %v3438 = vand.u32 %v3437, 4294901760
  %3439 = vmatpush.msra.mxu0 %v3438
  %v3440 = vand.u32 %v1257, 4294901760
  %v3441 = vsub.f32 %v1257, %v3440
  %v3442 = vand.u32 %v3441, 4294901760
  %3443 = vmatpush.msra.mxu0 %v3442
  %v3444 = vand.u32 %v1253, 4294901760
  %v3445 = vsub.f32 %v1253, %v3444
  %v3446 = vand.u32 %v3445, 4294901760
  %3447 = vmatpush.msra.mxu0 %v3446
  %v3448 = vand.u32 %v1152, 4294901760
  %3449 = vmatmul.f32.gmra.mxu0 %v3448
  %v3450 = vpop.f32.mrf.mxu0
  %v3451 = vadd.f32 %v3340, %v3450
  %v3452 = vand.u32 %v1028, 4294901760
  %3453 = vmatmul.f32.gmra.mxu0 %v3452
  %v3454 = vpop.f32.mrf.mxu0
  %v3455 = vadd.f32 %v3346, %v3454
  %v3456 = vand.u32 %v904, 4294901760
  %3457 = vmatmul.f32.gmra.mxu0 %v3456
  %v3458 = vpop.f32.mrf.mxu0
  %v3459 = vadd.f32 %v3352, %v3458
  %v3460 = vand.u32 %v780, 4294901760
  %3461 = vmatmul.f32.gmra.mxu0 %v3460
  %v3462 = vpop.f32.mrf.mxu0
  %v3463 = vadd.f32 %v3358, %v3462
  %v3464 = vand.u32 %v656, 4294901760
  %3465 = vmatmul.f32.gmra.mxu0 %v3464
  %v3466 = vpop.f32.mrf.mxu0
  %v3467 = vadd.f32 %v3364, %v3466
  %v3468 = vand.u32 %v532, 4294901760
  %3469 = vmatmul.f32.gmra.mxu0 %v3468
  %v3470 = vpop.f32.mrf.mxu0
  %v3471 = vadd.f32 %v3370, %v3470
  %v3472 = vand.u32 %v408, 4294901760
  %3473 = vmatmul.f32.gmra.mxu0 %v3472
  %v3474 = vpop.f32.mrf.mxu0
  %v3475 = vadd.f32 %v3376, %v3474
  %v3476 = vand.u32 %v124, 4294901760
  %3477 = vmatmul.f32.gmra.mxu0 %v3476
  %v3478 = vpop.f32.mrf.mxu0
  %v3479 = vadd.f32 %v3382, %v3478
  %3480 = vdwg.mxu0
  %v3481 = vand.u32 %v1313, 4294901760
  %3482 = vmatpush.msra.mxu0 %v3481
  %v3483 = vand.u32 %v1309, 4294901760
  %3484 = vmatpush.msra.mxu0 %v3483
  %v3485 = vand.u32 %v1305, 4294901760
  %3486 = vmatpush.msra.mxu0 %v3485
  %v3487 = vand.u32 %v1301, 4294901760
  %3488 = vmatpush.msra.mxu0 %v3487
  %v3489 = vand.u32 %v1297, 4294901760
  %3490 = vmatpush.msra.mxu0 %v3489
  %v3491 = vand.u32 %v1293, 4294901760
  %3492 = vmatpush.msra.mxu0 %v3491
  %v3493 = vand.u32 %v1289, 4294901760
  %3494 = vmatpush.msra.mxu0 %v3493
  %v3495 = vand.u32 %v1285, 4294901760
  %3496 = vmatpush.msra.mxu0 %v3495
  %v3497 = vand.u32 %v1281, 4294901760
  %3498 = vmatpush.msra.mxu0 %v3497
  %v3499 = vand.u32 %v1277, 4294901760
  %3500 = vmatpush.msra.mxu0 %v3499
  %v3501 = vand.u32 %v1273, 4294901760
  %3502 = vmatpush.msra.mxu0 %v3501
  %v3503 = vand.u32 %v1269, 4294901760
  %3504 = vmatpush.msra.mxu0 %v3503
  %v3505 = vand.u32 %v1265, 4294901760
  %3506 = vmatpush.msra.mxu0 %v3505
  %v3507 = vand.u32 %v1261, 4294901760
  %3508 = vmatpush.msra.mxu0 %v3507
  %v3509 = vand.u32 %v1257, 4294901760
  %3510 = vmatpush.msra.mxu0 %v3509
  %v3511 = vand.u32 %v1253, 4294901760
  %3512 = vmatpush.msra.mxu0 %v3511
  %v3513 = vand.u32 %v1152, 4294901760
  %3514 = vmatmul.f32.gmra.mxu0 %v3513
  %v3515 = vpop.f32.mrf.mxu0
  %v3516 = vadd.f32 %v3451, %v3515
  %v3517 = vand.u32 %v1028, 4294901760
  %3518 = vmatmul.f32.gmra.mxu0 %v3517
  %v3519 = vpop.f32.mrf.mxu0
  %v3520 = vadd.f32 %v3455, %v3519
  %v3521 = vand.u32 %v904, 4294901760
  %3522 = vmatmul.f32.gmra.mxu0 %v3521
  %v3523 = vpop.f32.mrf.mxu0
  %v3524 = vadd.f32 %v3459, %v3523
  %v3525 = vand.u32 %v780, 4294901760
  %3526 = vmatmul.f32.gmra.mxu0 %v3525
  %v3527 = vpop.f32.mrf.mxu0
  %v3528 = vadd.f32 %v3463, %v3527
  %v3529 = vand.u32 %v656, 4294901760
  %3530 = vmatmul.f32.gmra.mxu0 %v3529
  %v3531 = vpop.f32.mrf.mxu0
  %v3532 = vadd.f32 %v3467, %v3531
  %v3533 = vand.u32 %v532, 4294901760
  %3534 = vmatmul.f32.gmra.mxu0 %v3533
  %v3535 = vpop.f32.mrf.mxu0
  %v3536 = vadd.f32 %v3471, %v3535
  %v3537 = vand.u32 %v408, 4294901760
  %3538 = vmatmul.f32.gmra.mxu0 %v3537
  %v3539 = vpop.f32.mrf.mxu0
  %v3540 = vadd.f32 %v3475, %v3539
  %v3541 = vand.u32 %v124, 4294901760
  %3542 = vmatmul.f32.gmra.mxu0 %v3541
  %v3543 = vpop.f32.mrf.mxu0
  %v3544 = vadd.f32 %v3479, %v3543
  %3545 = vdwg.mxu0
  %v3546 = vand.u32 %v1246, 4294901760
  %3547 = vmatpush.msra.mxu0 %v3546
  %v3548 = vand.u32 %v1242, 4294901760
  %3549 = vmatpush.msra.mxu0 %v3548
  %v3550 = vand.u32 %v1238, 4294901760
  %3551 = vmatpush.msra.mxu0 %v3550
  %v3552 = vand.u32 %v1234, 4294901760
  %3553 = vmatpush.msra.mxu0 %v3552
  %v3554 = vand.u32 %v1230, 4294901760
  %3555 = vmatpush.msra.mxu0 %v3554
  %v3556 = vand.u32 %v1226, 4294901760
  %3557 = vmatpush.msra.mxu0 %v3556
  %v3558 = vand.u32 %v1222, 4294901760
  %3559 = vmatpush.msra.mxu0 %v3558
  %v3560 = vand.u32 %v1218, 4294901760
  %3561 = vmatpush.msra.mxu0 %v3560
  %v3562 = vand.u32 %v1214, 4294901760
  %3563 = vmatpush.msra.mxu0 %v3562
  %v3564 = vand.u32 %v1210, 4294901760
  %3565 = vmatpush.msra.mxu0 %v3564
  %v3566 = vand.u32 %v1206, 4294901760
  %3567 = vmatpush.msra.mxu0 %v3566
  %v3568 = vand.u32 %v1202, 4294901760
  %3569 = vmatpush.msra.mxu0 %v3568
  %v3570 = vand.u32 %v1198, 4294901760
  %3571 = vmatpush.msra.mxu0 %v3570
  %v3572 = vand.u32 %v1194, 4294901760
  %3573 = vmatpush.msra.mxu0 %v3572
  %v3574 = vand.u32 %v1190, 4294901760
  %3575 = vmatpush.msra.mxu0 %v3574
  %v3576 = vand.u32 %v1186, 4294901760
  %3577 = vmatpush.msra.mxu0 %v3576
  %v3578 = vand.u32 %v124, 4294901760
  %v3579 = vsub.f32 %v124, %v3578
  %v3580 = vand.u32 %v3579, 4294901760
  %v3581 = vsub.f32 %v3579, %v3580
  %v3582 = vand.u32 %v3581, 4294901760
  %3583 = vmatmul.f32.gmra.mxu0 %v3582
  %v3584 = vpop.f32.mrf.mxu0
  %v3585 = vadd.f32 %v1842, %v3584
  %v3586 = vand.u32 %v408, 4294901760
  %v3587 = vsub.f32 %v408, %v3586
  %v3588 = vand.u32 %v3587, 4294901760
  %v3589 = vsub.f32 %v3587, %v3588
  %v3590 = vand.u32 %v3589, 4294901760
  %3591 = vmatmul.f32.gmra.mxu0 %v3590
  %v3592 = vpop.f32.mrf.mxu0
  %v3593 = vadd.f32 %v1846, %v3592
  %v3594 = vand.u32 %v532, 4294901760
  %v3595 = vsub.f32 %v532, %v3594
  %v3596 = vand.u32 %v3595, 4294901760
  %v3597 = vsub.f32 %v3595, %v3596
  %v3598 = vand.u32 %v3597, 4294901760
  %3599 = vmatmul.f32.gmra.mxu0 %v3598
  %v3600 = vpop.f32.mrf.mxu0
  %v3601 = vadd.f32 %v1850, %v3600
  %v3602 = vand.u32 %v656, 4294901760
  %v3603 = vsub.f32 %v656, %v3602
  %v3604 = vand.u32 %v3603, 4294901760
  %v3605 = vsub.f32 %v3603, %v3604
  %v3606 = vand.u32 %v3605, 4294901760
  %3607 = vmatmul.f32.gmra.mxu0 %v3606
  %v3608 = vpop.f32.mrf.mxu0
  %v3609 = vadd.f32 %v1854, %v3608
  %v3610 = vand.u32 %v780, 4294901760
  %v3611 = vsub.f32 %v780, %v3610
  %v3612 = vand.u32 %v3611, 4294901760
  %v3613 = vsub.f32 %v3611, %v3612
  %v3614 = vand.u32 %v3613, 4294901760
  %3615 = vmatmul.f32.gmra.mxu0 %v3614
  %v3616 = vpop.f32.mrf.mxu0
  %v3617 = vadd.f32 %v1858, %v3616
  %v3618 = vand.u32 %v904, 4294901760
  %v3619 = vsub.f32 %v904, %v3618
  %v3620 = vand.u32 %v3619, 4294901760
  %v3621 = vsub.f32 %v3619, %v3620
  %v3622 = vand.u32 %v3621, 4294901760
  %3623 = vmatmul.f32.gmra.mxu0 %v3622
  %v3624 = vpop.f32.mrf.mxu0
  %v3625 = vadd.f32 %v1862, %v3624
  %v3626 = vand.u32 %v1028, 4294901760
  %v3627 = vsub.f32 %v1028, %v3626
  %v3628 = vand.u32 %v3627, 4294901760
  %v3629 = vsub.f32 %v3627, %v3628
  %v3630 = vand.u32 %v3629, 4294901760
  %3631 = vmatmul.f32.gmra.mxu0 %v3630
  %v3632 = vpop.f32.mrf.mxu0
  %v3633 = vadd.f32 %v1866, %v3632
  %v3634 = vand.u32 %v1152, 4294901760
  %v3635 = vsub.f32 %v1152, %v3634
  %v3636 = vand.u32 %v3635, 4294901760
  %v3637 = vsub.f32 %v3635, %v3636
  %v3638 = vand.u32 %v3637, 4294901760
  %3639 = vmatmul.f32.gmra.mxu0 %v3638
  %v3640 = vpop.f32.mrf.mxu0
  %v3641 = vadd.f32 %v1870, %v3640
  %3642 = vdwg.mxu0
  %v3643 = vand.u32 %v1246, 4294901760
  %v3644 = vsub.f32 %v1246, %v3643
  %v3645 = vand.u32 %v3644, 4294901760
  %v3646 = vsub.f32 %v3644, %v3645
  %v3647 = vand.u32 %v3646, 4294901760
  %3648 = vmatpush.msra.mxu0 %v3647
  %v3649 = vand.u32 %v1242, 4294901760
  %v3650 = vsub.f32 %v1242, %v3649
  %v3651 = vand.u32 %v3650, 4294901760
  %v3652 = vsub.f32 %v3650, %v3651
  %v3653 = vand.u32 %v3652, 4294901760
  %3654 = vmatpush.msra.mxu0 %v3653
  %v3655 = vand.u32 %v1238, 4294901760
  %v3656 = vsub.f32 %v1238, %v3655
  %v3657 = vand.u32 %v3656, 4294901760
  %v3658 = vsub.f32 %v3656, %v3657
  %v3659 = vand.u32 %v3658, 4294901760
  %3660 = vmatpush.msra.mxu0 %v3659
  %v3661 = vand.u32 %v1234, 4294901760
  %v3662 = vsub.f32 %v1234, %v3661
  %v3663 = vand.u32 %v3662, 4294901760
  %v3664 = vsub.f32 %v3662, %v3663
  %v3665 = vand.u32 %v3664, 4294901760
  %3666 = vmatpush.msra.mxu0 %v3665
  %v3667 = vand.u32 %v1230, 4294901760
  %v3668 = vsub.f32 %v1230, %v3667
  %v3669 = vand.u32 %v3668, 4294901760
  %v3670 = vsub.f32 %v3668, %v3669
  %v3671 = vand.u32 %v3670, 4294901760
  %3672 = vmatpush.msra.mxu0 %v3671
  %v3673 = vand.u32 %v1226, 4294901760
  %v3674 = vsub.f32 %v1226, %v3673
  %v3675 = vand.u32 %v3674, 4294901760
  %v3676 = vsub.f32 %v3674, %v3675
  %v3677 = vand.u32 %v3676, 4294901760
  %3678 = vmatpush.msra.mxu0 %v3677
  %v3679 = vand.u32 %v1222, 4294901760
  %v3680 = vsub.f32 %v1222, %v3679
  %v3681 = vand.u32 %v3680, 4294901760
  %v3682 = vsub.f32 %v3680, %v3681
  %v3683 = vand.u32 %v3682, 4294901760
  %3684 = vmatpush.msra.mxu0 %v3683
  %v3685 = vand.u32 %v1218, 4294901760
  %v3686 = vsub.f32 %v1218, %v3685
  %v3687 = vand.u32 %v3686, 4294901760
  %v3688 = vsub.f32 %v3686, %v3687
  %v3689 = vand.u32 %v3688, 4294901760
  %3690 = vmatpush.msra.mxu0 %v3689
  %v3691 = vand.u32 %v1214, 4294901760
  %v3692 = vsub.f32 %v1214, %v3691
  %v3693 = vand.u32 %v3692, 4294901760
  %v3694 = vsub.f32 %v3692, %v3693
  %v3695 = vand.u32 %v3694, 4294901760
  %3696 = vmatpush.msra.mxu0 %v3695
  %v3697 = vand.u32 %v1210, 4294901760
  %v3698 = vsub.f32 %v1210, %v3697
  %v3699 = vand.u32 %v3698, 4294901760
  %v3700 = vsub.f32 %v3698, %v3699
  %v3701 = vand.u32 %v3700, 4294901760
  %3702 = vmatpush.msra.mxu0 %v3701
  %v3703 = vand.u32 %v1206, 4294901760
  %v3704 = vsub.f32 %v1206, %v3703
  %v3705 = vand.u32 %v3704, 4294901760
  %v3706 = vsub.f32 %v3704, %v3705
  %v3707 = vand.u32 %v3706, 4294901760
  %3708 = vmatpush.msra.mxu0 %v3707
  %v3709 = vand.u32 %v1202, 4294901760
  %v3710 = vsub.f32 %v1202, %v3709
  %v3711 = vand.u32 %v3710, 4294901760
  %v3712 = vsub.f32 %v3710, %v3711
  %v3713 = vand.u32 %v3712, 4294901760
  %3714 = vmatpush.msra.mxu0 %v3713
  %v3715 = vand.u32 %v1198, 4294901760
  %v3716 = vsub.f32 %v1198, %v3715
  %v3717 = vand.u32 %v3716, 4294901760
  %v3718 = vsub.f32 %v3716, %v3717
  %v3719 = vand.u32 %v3718, 4294901760
  %3720 = vmatpush.msra.mxu0 %v3719
  %v3721 = vand.u32 %v1194, 4294901760
  %v3722 = vsub.f32 %v1194, %v3721
  %v3723 = vand.u32 %v3722, 4294901760
  %v3724 = vsub.f32 %v3722, %v3723
  %v3725 = vand.u32 %v3724, 4294901760
  %3726 = vmatpush.msra.mxu0 %v3725
  %v3727 = vand.u32 %v1190, 4294901760
  %v3728 = vsub.f32 %v1190, %v3727
  %v3729 = vand.u32 %v3728, 4294901760
  %v3730 = vsub.f32 %v3728, %v3729
  %v3731 = vand.u32 %v3730, 4294901760
  %3732 = vmatpush.msra.mxu0 %v3731
  %v3733 = vand.u32 %v1186, 4294901760
  %v3734 = vsub.f32 %v1186, %v3733
  %v3735 = vand.u32 %v3734, 4294901760
  %v3736 = vsub.f32 %v3734, %v3735
  %v3737 = vand.u32 %v3736, 4294901760
  %3738 = vmatpush.msra.mxu0 %v3737
  %v3739 = vand.u32 %v124, 4294901760
  %3740 = vmatmul.f32.gmra.mxu0 %v3739
  %v3741 = vpop.f32.mrf.mxu0
  %v3742 = vadd.f32 %v3585, %v3741
  %v3743 = vand.u32 %v408, 4294901760
  %3744 = vmatmul.f32.gmra.mxu0 %v3743
  %v3745 = vpop.f32.mrf.mxu0
  %v3746 = vadd.f32 %v3593, %v3745
  %v3747 = vand.u32 %v532, 4294901760
  %3748 = vmatmul.f32.gmra.mxu0 %v3747
  %v3749 = vpop.f32.mrf.mxu0
  %v3750 = vadd.f32 %v3601, %v3749
  %v3751 = vand.u32 %v656, 4294901760
  %3752 = vmatmul.f32.gmra.mxu0 %v3751
  %v3753 = vpop.f32.mrf.mxu0
  %v3754 = vadd.f32 %v3609, %v3753
  %v3755 = vand.u32 %v780, 4294901760
  %3756 = vmatmul.f32.gmra.mxu0 %v3755
  %v3757 = vpop.f32.mrf.mxu0
  %v3758 = vadd.f32 %v3617, %v3757
  %v3759 = vand.u32 %v904, 4294901760
  %3760 = vmatmul.f32.gmra.mxu0 %v3759
  %v3761 = vpop.f32.mrf.mxu0
  %v3762 = vadd.f32 %v3625, %v3761
  %v3763 = vand.u32 %v1028, 4294901760
  %3764 = vmatmul.f32.gmra.mxu0 %v3763
  %v3765 = vpop.f32.mrf.mxu0
  %v3766 = vadd.f32 %v3633, %v3765
  %v3767 = vand.u32 %v1152, 4294901760
  %3768 = vmatmul.f32.gmra.mxu0 %v3767
  %v3769 = vpop.f32.mrf.mxu0
  %v3770 = vadd.f32 %v3641, %v3769
  %3771 = vdwg.mxu0
  %v3772 = vand.u32 %v1246, 4294901760
  %v3773 = vsub.f32 %v1246, %v3772
  %3774 = vmatpush.msra.mxu0 %v3773
  %v3775 = vand.u32 %v1242, 4294901760
  %v3776 = vsub.f32 %v1242, %v3775
  %3777 = vmatpush.msra.mxu0 %v3776
  %v3778 = vand.u32 %v1238, 4294901760
  %v3779 = vsub.f32 %v1238, %v3778
  %3780 = vmatpush.msra.mxu0 %v3779
  %v3781 = vand.u32 %v1234, 4294901760
  %v3782 = vsub.f32 %v1234, %v3781
  %3783 = vmatpush.msra.mxu0 %v3782
  %v3784 = vand.u32 %v1230, 4294901760
  %v3785 = vsub.f32 %v1230, %v3784
  %3786 = vmatpush.msra.mxu0 %v3785
  %v3787 = vand.u32 %v1226, 4294901760
  %v3788 = vsub.f32 %v1226, %v3787
  %3789 = vmatpush.msra.mxu0 %v3788
  %v3790 = vand.u32 %v1222, 4294901760
  %v3791 = vsub.f32 %v1222, %v3790
  %3792 = vmatpush.msra.mxu0 %v3791
  %v3793 = vand.u32 %v1218, 4294901760
  %v3794 = vsub.f32 %v1218, %v3793
  %3795 = vmatpush.msra.mxu0 %v3794
  %v3796 = vand.u32 %v1214, 4294901760
  %v3797 = vsub.f32 %v1214, %v3796
  %3798 = vmatpush.msra.mxu0 %v3797
  %v3799 = vand.u32 %v1210, 4294901760
  %v3800 = vsub.f32 %v1210, %v3799
  %3801 = vmatpush.msra.mxu0 %v3800
  %v3802 = vand.u32 %v1206, 4294901760
  %v3803 = vsub.f32 %v1206, %v3802
  %3804 = vmatpush.msra.mxu0 %v3803
  %v3805 = vand.u32 %v1202, 4294901760
  %v3806 = vsub.f32 %v1202, %v3805
  %3807 = vmatpush.msra.mxu0 %v3806
  %v3808 = vand.u32 %v1198, 4294901760
  %v3809 = vsub.f32 %v1198, %v3808
  %3810 = vmatpush.msra.mxu0 %v3809
  %v3811 = vand.u32 %v1194, 4294901760
  %v3812 = vsub.f32 %v1194, %v3811
  %3813 = vmatpush.msra.mxu0 %v3812
  %v3814 = vand.u32 %v1190, 4294901760
  %v3815 = vsub.f32 %v1190, %v3814
  %3816 = vmatpush.msra.mxu0 %v3815
  %v3817 = vand.u32 %v1186, 4294901760
  %v3818 = vsub.f32 %v1186, %v3817
  %3819 = vmatpush.msra.mxu0 %v3818
  %v3820 = vand.u32 %v124, 4294901760
  %v3821 = vsub.f32 %v124, %v3820
  %3822 = vmatmul.f32.gmra.mxu0 %v3821
  %v3823 = vpop.f32.mrf.mxu0
  %v3824 = vadd.f32 %v3742, %v3823
  %v3825 = vand.u32 %v408, 4294901760
  %v3826 = vsub.f32 %v408, %v3825
  %3827 = vmatmul.f32.gmra.mxu0 %v3826
  %v3828 = vpop.f32.mrf.mxu0
  %v3829 = vadd.f32 %v3746, %v3828
  %v3830 = vand.u32 %v532, 4294901760
  %v3831 = vsub.f32 %v532, %v3830
  %3832 = vmatmul.f32.gmra.mxu0 %v3831
  %v3833 = vpop.f32.mrf.mxu0
  %v3834 = vadd.f32 %v3750, %v3833
  %v3835 = vand.u32 %v656, 4294901760
  %v3836 = vsub.f32 %v656, %v3835
  %3837 = vmatmul.f32.gmra.mxu0 %v3836
  %v3838 = vpop.f32.mrf.mxu0
  %v3839 = vadd.f32 %v3754, %v3838
  %v3840 = vand.u32 %v780, 4294901760
  %v3841 = vsub.f32 %v780, %v3840
  %3842 = vmatmul.f32.gmra.mxu0 %v3841
  %v3843 = vpop.f32.mrf.mxu0
  %v3844 = vadd.f32 %v3758, %v3843
  %v3845 = vand.u32 %v904, 4294901760
  %v3846 = vsub.f32 %v904, %v3845
  %3847 = vmatmul.f32.gmra.mxu0 %v3846
  %v3848 = vpop.f32.mrf.mxu0
  %v3849 = vadd.f32 %v3762, %v3848
  %v3850 = vand.u32 %v1028, 4294901760
  %v3851 = vsub.f32 %v1028, %v3850
  %3852 = vmatmul.f32.gmra.mxu0 %v3851
  %v3853 = vpop.f32.mrf.mxu0
  %v3854 = vadd.f32 %v3766, %v3853
  %v3855 = vand.u32 %v1152, 4294901760
  %v3856 = vsub.f32 %v1152, %v3855
  %3857 = vmatmul.f32.gmra.mxu0 %v3856
  %v3858 = vpop.f32.mrf.mxu0
  %v3859 = vadd.f32 %v3770, %v3858
  %3860 = vdwg.mxu0
  %v3861 = vand.u32 %v1246, 4294901760
  %3862 = vmatpush.msra.mxu0 %v3861
  %v3863 = vand.u32 %v1242, 4294901760
  %3864 = vmatpush.msra.mxu0 %v3863
  %v3865 = vand.u32 %v1238, 4294901760
  %3866 = vmatpush.msra.mxu0 %v3865
  %v3867 = vand.u32 %v1234, 4294901760
  %3868 = vmatpush.msra.mxu0 %v3867
  %v3869 = vand.u32 %v1230, 4294901760
  %3870 = vmatpush.msra.mxu0 %v3869
  %v3871 = vand.u32 %v1226, 4294901760
  %3872 = vmatpush.msra.mxu0 %v3871
  %v3873 = vand.u32 %v1222, 4294901760
  %3874 = vmatpush.msra.mxu0 %v3873
  %v3875 = vand.u32 %v1218, 4294901760
  %3876 = vmatpush.msra.mxu0 %v3875
  %v3877 = vand.u32 %v1214, 4294901760
  %3878 = vmatpush.msra.mxu0 %v3877
  %v3879 = vand.u32 %v1210, 4294901760
  %3880 = vmatpush.msra.mxu0 %v3879
  %v3881 = vand.u32 %v1206, 4294901760
  %3882 = vmatpush.msra.mxu0 %v3881
  %v3883 = vand.u32 %v1202, 4294901760
  %3884 = vmatpush.msra.mxu0 %v3883
  %v3885 = vand.u32 %v1198, 4294901760
  %3886 = vmatpush.msra.mxu0 %v3885
  %v3887 = vand.u32 %v1194, 4294901760
  %3888 = vmatpush.msra.mxu0 %v3887
  %v3889 = vand.u32 %v1190, 4294901760
  %3890 = vmatpush.msra.mxu0 %v3889
  %v3891 = vand.u32 %v1186, 4294901760
  %3892 = vmatpush.msra.mxu0 %v3891
  %v3893 = vand.u32 %v124, 4294901760
  %v3894 = vsub.f32 %v124, %v3893
  %v3895 = vand.u32 %v3894, 4294901760
  %3896 = vmatmul.f32.gmra.mxu0 %v3895
  %v3897 = vpop.f32.mrf.mxu0
  %v3898 = vadd.f32 %v3824, %v3897
  %v3899 = vand.u32 %v408, 4294901760
  %v3900 = vsub.f32 %v408, %v3899
  %v3901 = vand.u32 %v3900, 4294901760
  %3902 = vmatmul.f32.gmra.mxu0 %v3901
  %v3903 = vpop.f32.mrf.mxu0
  %v3904 = vadd.f32 %v3829, %v3903
  %v3905 = vand.u32 %v532, 4294901760
  %v3906 = vsub.f32 %v532, %v3905
  %v3907 = vand.u32 %v3906, 4294901760
  %3908 = vmatmul.f32.gmra.mxu0 %v3907
  %v3909 = vpop.f32.mrf.mxu0
  %v3910 = vadd.f32 %v3834, %v3909
  %v3911 = vand.u32 %v656, 4294901760
  %v3912 = vsub.f32 %v656, %v3911
  %v3913 = vand.u32 %v3912, 4294901760
  %3914 = vmatmul.f32.gmra.mxu0 %v3913
  %v3915 = vpop.f32.mrf.mxu0
  %v3916 = vadd.f32 %v3839, %v3915
  %v3917 = vand.u32 %v780, 4294901760
  %v3918 = vsub.f32 %v780, %v3917
  %v3919 = vand.u32 %v3918, 4294901760
  %3920 = vmatmul.f32.gmra.mxu0 %v3919
  %v3921 = vpop.f32.mrf.mxu0
  %v3922 = vadd.f32 %v3844, %v3921
  %v3923 = vand.u32 %v904, 4294901760
  %v3924 = vsub.f32 %v904, %v3923
  %v3925 = vand.u32 %v3924, 4294901760
  %3926 = vmatmul.f32.gmra.mxu0 %v3925
  %v3927 = vpop.f32.mrf.mxu0
  %v3928 = vadd.f32 %v3849, %v3927
  %v3929 = vand.u32 %v1028, 4294901760
  %v3930 = vsub.f32 %v1028, %v3929
  %v3931 = vand.u32 %v3930, 4294901760
  %3932 = vmatmul.f32.gmra.mxu0 %v3931
  %v3933 = vpop.f32.mrf.mxu0
  %v3934 = vadd.f32 %v3854, %v3933
  %v3935 = vand.u32 %v1152, 4294901760
  %v3936 = vsub.f32 %v1152, %v3935
  %v3937 = vand.u32 %v3936, 4294901760
  %3938 = vmatmul.f32.gmra.mxu0 %v3937
  %v3939 = vpop.f32.mrf.mxu0
  %v3940 = vadd.f32 %v3859, %v3939
  %3941 = vdwg.mxu0
  %v3942 = vand.u32 %v1246, 4294901760
  %v3943 = vsub.f32 %v1246, %v3942
  %v3944 = vand.u32 %v3943, 4294901760
  %3945 = vmatpush.msra.mxu0 %v3944
  %v3946 = vand.u32 %v1242, 4294901760
  %v3947 = vsub.f32 %v1242, %v3946
  %v3948 = vand.u32 %v3947, 4294901760
  %3949 = vmatpush.msra.mxu0 %v3948
  %v3950 = vand.u32 %v1238, 4294901760
  %v3951 = vsub.f32 %v1238, %v3950
  %v3952 = vand.u32 %v3951, 4294901760
  %3953 = vmatpush.msra.mxu0 %v3952
  %v3954 = vand.u32 %v1234, 4294901760
  %v3955 = vsub.f32 %v1234, %v3954
  %v3956 = vand.u32 %v3955, 4294901760
  %3957 = vmatpush.msra.mxu0 %v3956
  %v3958 = vand.u32 %v1230, 4294901760
  %v3959 = vsub.f32 %v1230, %v3958
  %v3960 = vand.u32 %v3959, 4294901760
  %3961 = vmatpush.msra.mxu0 %v3960
  %v3962 = vand.u32 %v1226, 4294901760
  %v3963 = vsub.f32 %v1226, %v3962
  %v3964 = vand.u32 %v3963, 4294901760
  %3965 = vmatpush.msra.mxu0 %v3964
  %v3966 = vand.u32 %v1222, 4294901760
  %v3967 = vsub.f32 %v1222, %v3966
  %v3968 = vand.u32 %v3967, 4294901760
  %3969 = vmatpush.msra.mxu0 %v3968
  %v3970 = vand.u32 %v1218, 4294901760
  %v3971 = vsub.f32 %v1218, %v3970
  %v3972 = vand.u32 %v3971, 4294901760
  %3973 = vmatpush.msra.mxu0 %v3972
  %v3974 = vand.u32 %v1214, 4294901760
  %v3975 = vsub.f32 %v1214, %v3974
  %v3976 = vand.u32 %v3975, 4294901760
  %3977 = vmatpush.msra.mxu0 %v3976
  %v3978 = vand.u32 %v1210, 4294901760
  %v3979 = vsub.f32 %v1210, %v3978
  %v3980 = vand.u32 %v3979, 4294901760
  %3981 = vmatpush.msra.mxu0 %v3980
  %v3982 = vand.u32 %v1206, 4294901760
  %v3983 = vsub.f32 %v1206, %v3982
  %v3984 = vand.u32 %v3983, 4294901760
  %3985 = vmatpush.msra.mxu0 %v3984
  %v3986 = vand.u32 %v1202, 4294901760
  %v3987 = vsub.f32 %v1202, %v3986
  %v3988 = vand.u32 %v3987, 4294901760
  %3989 = vmatpush.msra.mxu0 %v3988
  %v3990 = vand.u32 %v1198, 4294901760
  %v3991 = vsub.f32 %v1198, %v3990
  %v3992 = vand.u32 %v3991, 4294901760
  %3993 = vmatpush.msra.mxu0 %v3992
  %v3994 = vand.u32 %v1194, 4294901760
  %v3995 = vsub.f32 %v1194, %v3994
  %v3996 = vand.u32 %v3995, 4294901760
  %3997 = vmatpush.msra.mxu0 %v3996
  %v3998 = vand.u32 %v1190, 4294901760
  %v3999 = vsub.f32 %v1190, %v3998
  %v4000 = vand.u32 %v3999, 4294901760
  %4001 = vmatpush.msra.mxu0 %v4000
  %v4002 = vand.u32 %v1186, 4294901760
  %v4003 = vsub.f32 %v1186, %v4002
  %v4004 = vand.u32 %v4003, 4294901760
  %4005 = vmatpush.msra.mxu0 %v4004
  %v4006 = vand.u32 %v124, 4294901760
  %4007 = vmatmul.f32.gmra.mxu0 %v4006
  %v4008 = vpop.f32.mrf.mxu0
  %v4009 = vadd.f32 %v3898, %v4008
  %v4010 = vand.u32 %v408, 4294901760
  %4011 = vmatmul.f32.gmra.mxu0 %v4010
  %v4012 = vpop.f32.mrf.mxu0
  %v4013 = vadd.f32 %v3904, %v4012
  %v4014 = vand.u32 %v532, 4294901760
  %4015 = vmatmul.f32.gmra.mxu0 %v4014
  %v4016 = vpop.f32.mrf.mxu0
  %v4017 = vadd.f32 %v3910, %v4016
  %v4018 = vand.u32 %v656, 4294901760
  %4019 = vmatmul.f32.gmra.mxu0 %v4018
  %v4020 = vpop.f32.mrf.mxu0
  %v4021 = vadd.f32 %v3916, %v4020
  %v4022 = vand.u32 %v780, 4294901760
  %4023 = vmatmul.f32.gmra.mxu0 %v4022
  %v4024 = vpop.f32.mrf.mxu0
  %v4025 = vadd.f32 %v3922, %v4024
  %v4026 = vand.u32 %v904, 4294901760
  %4027 = vmatmul.f32.gmra.mxu0 %v4026
  %v4028 = vpop.f32.mrf.mxu0
  %v4029 = vadd.f32 %v3928, %v4028
  %v4030 = vand.u32 %v1028, 4294901760
  %4031 = vmatmul.f32.gmra.mxu0 %v4030
  %v4032 = vpop.f32.mrf.mxu0
  %v4033 = vadd.f32 %v3934, %v4032
  %v4034 = vand.u32 %v1152, 4294901760
  %4035 = vmatmul.f32.gmra.mxu0 %v4034
  %v4036 = vpop.f32.mrf.mxu0
  %v4037 = vadd.f32 %v3940, %v4036
  %4038 = vdwg.mxu0
  %v4039 = vand.u32 %v1246, 4294901760
  %4040 = vmatpush.msra.mxu0 %v4039
  %v4041 = vand.u32 %v1242, 4294901760
  %4042 = vmatpush.msra.mxu0 %v4041
  %v4043 = vand.u32 %v1238, 4294901760
  %4044 = vmatpush.msra.mxu0 %v4043
  %v4045 = vand.u32 %v1234, 4294901760
  %4046 = vmatpush.msra.mxu0 %v4045
  %v4047 = vand.u32 %v1230, 4294901760
  %4048 = vmatpush.msra.mxu0 %v4047
  %v4049 = vand.u32 %v1226, 4294901760
  %4050 = vmatpush.msra.mxu0 %v4049
  %v4051 = vand.u32 %v1222, 4294901760
  %4052 = vmatpush.msra.mxu0 %v4051
  %v4053 = vand.u32 %v1218, 4294901760
  %4054 = vmatpush.msra.mxu0 %v4053
  %v4055 = vand.u32 %v1214, 4294901760
  %4056 = vmatpush.msra.mxu0 %v4055
  %v4057 = vand.u32 %v1210, 4294901760
  %4058 = vmatpush.msra.mxu0 %v4057
  %v4059 = vand.u32 %v1206, 4294901760
  %4060 = vmatpush.msra.mxu0 %v4059
  %v4061 = vand.u32 %v1202, 4294901760
  %4062 = vmatpush.msra.mxu0 %v4061
  %v4063 = vand.u32 %v1198, 4294901760
  %4064 = vmatpush.msra.mxu0 %v4063
  %v4065 = vand.u32 %v1194, 4294901760
  %4066 = vmatpush.msra.mxu0 %v4065
  %v4067 = vand.u32 %v1190, 4294901760
  %4068 = vmatpush.msra.mxu0 %v4067
  %v4069 = vand.u32 %v1186, 4294901760
  %4070 = vmatpush.msra.mxu0 %v4069
  %v4071 = vand.u32 %v124, 4294901760
  %4072 = vmatmul.f32.gmra.mxu0 %v4071
  %v4073 = vpop.f32.mrf.mxu0
  %v4074 = vadd.f32 %v4009, %v4073
  %v4075 = vand.u32 %v408, 4294901760
  %4076 = vmatmul.f32.gmra.mxu0 %v4075
  %v4077 = vpop.f32.mrf.mxu0
  %v4078 = vadd.f32 %v4013, %v4077
  %v4079 = vand.u32 %v532, 4294901760
  %4080 = vmatmul.f32.gmra.mxu0 %v4079
  %v4081 = vpop.f32.mrf.mxu0
  %v4082 = vadd.f32 %v4017, %v4081
  %v4083 = vand.u32 %v656, 4294901760
  %4084 = vmatmul.f32.gmra.mxu0 %v4083
  %v4085 = vpop.f32.mrf.mxu0
  %v4086 = vadd.f32 %v4021, %v4085
  %v4087 = vand.u32 %v780, 4294901760
  %4088 = vmatmul.f32.gmra.mxu0 %v4087
  %v4089 = vpop.f32.mrf.mxu0
  %v4090 = vadd.f32 %v4025, %v4089
  %v4091 = vand.u32 %v904, 4294901760
  %4092 = vmatmul.f32.gmra.mxu0 %v4091
  %v4093 = vpop.f32.mrf.mxu0
  %v4094 = vadd.f32 %v4029, %v4093
  %v4095 = vand.u32 %v1028, 4294901760
  %4096 = vmatmul.f32.gmra.mxu0 %v4095
  %v4097 = vpop.f32.mrf.mxu0
  %v4098 = vadd.f32 %v4033, %v4097
  %v4099 = vand.u32 %v1152, 4294901760
  %4100 = vmatmul.f32.gmra.mxu0 %v4099
  %v4101 = vpop.f32.mrf.mxu0
  %v4102 = vadd.f32 %v4037, %v4101
  %4103 = vdwg.mxu0
  %v4104 = vand.u32 %v1247, 4294901760
  %4105 = vmatpush.msra.mxu0 %v4104
  %v4106 = vand.u32 %v1243, 4294901760
  %4107 = vmatpush.msra.mxu0 %v4106
  %v4108 = vand.u32 %v1239, 4294901760
  %4109 = vmatpush.msra.mxu0 %v4108
  %v4110 = vand.u32 %v1235, 4294901760
  %4111 = vmatpush.msra.mxu0 %v4110
  %v4112 = vand.u32 %v1231, 4294901760
  %4113 = vmatpush.msra.mxu0 %v4112
  %v4114 = vand.u32 %v1227, 4294901760
  %4115 = vmatpush.msra.mxu0 %v4114
  %v4116 = vand.u32 %v1223, 4294901760
  %4117 = vmatpush.msra.mxu0 %v4116
  %v4118 = vand.u32 %v1219, 4294901760
  %4119 = vmatpush.msra.mxu0 %v4118
  %v4120 = vand.u32 %v1215, 4294901760
  %4121 = vmatpush.msra.mxu0 %v4120
  %v4122 = vand.u32 %v1211, 4294901760
  %4123 = vmatpush.msra.mxu0 %v4122
  %v4124 = vand.u32 %v1207, 4294901760
  %4125 = vmatpush.msra.mxu0 %v4124
  %v4126 = vand.u32 %v1203, 4294901760
  %4127 = vmatpush.msra.mxu0 %v4126
  %v4128 = vand.u32 %v1199, 4294901760
  %4129 = vmatpush.msra.mxu0 %v4128
  %v4130 = vand.u32 %v1195, 4294901760
  %4131 = vmatpush.msra.mxu0 %v4130
  %v4132 = vand.u32 %v1191, 4294901760
  %4133 = vmatpush.msra.mxu0 %v4132
  %v4134 = vand.u32 %v1187, 4294901760
  %4135 = vmatpush.msra.mxu0 %v4134
  %v4136 = vand.u32 %v124, 4294901760
  %v4137 = vsub.f32 %v124, %v4136
  %v4138 = vand.u32 %v4137, 4294901760
  %v4139 = vsub.f32 %v4137, %v4138
  %v4140 = vand.u32 %v4139, 4294901760
  %4141 = vmatmul.f32.gmra.mxu0 %v4140
  %v4142 = vpop.f32.mrf.mxu0
  %v4143 = vadd.f32 %v2400, %v4142
  %v4144 = vand.u32 %v408, 4294901760
  %v4145 = vsub.f32 %v408, %v4144
  %v4146 = vand.u32 %v4145, 4294901760
  %v4147 = vsub.f32 %v4145, %v4146
  %v4148 = vand.u32 %v4147, 4294901760
  %4149 = vmatmul.f32.gmra.mxu0 %v4148
  %v4150 = vpop.f32.mrf.mxu0
  %v4151 = vadd.f32 %v2404, %v4150
  %v4152 = vand.u32 %v532, 4294901760
  %v4153 = vsub.f32 %v532, %v4152
  %v4154 = vand.u32 %v4153, 4294901760
  %v4155 = vsub.f32 %v4153, %v4154
  %v4156 = vand.u32 %v4155, 4294901760
  %4157 = vmatmul.f32.gmra.mxu0 %v4156
  %v4158 = vpop.f32.mrf.mxu0
  %v4159 = vadd.f32 %v2408, %v4158
  %v4160 = vand.u32 %v656, 4294901760
  %v4161 = vsub.f32 %v656, %v4160
  %v4162 = vand.u32 %v4161, 4294901760
  %v4163 = vsub.f32 %v4161, %v4162
  %v4164 = vand.u32 %v4163, 4294901760
  %4165 = vmatmul.f32.gmra.mxu0 %v4164
  %v4166 = vpop.f32.mrf.mxu0
  %v4167 = vadd.f32 %v2412, %v4166
  %v4168 = vand.u32 %v780, 4294901760
  %v4169 = vsub.f32 %v780, %v4168
  %v4170 = vand.u32 %v4169, 4294901760
  %v4171 = vsub.f32 %v4169, %v4170
  %v4172 = vand.u32 %v4171, 4294901760
  %4173 = vmatmul.f32.gmra.mxu0 %v4172
  %v4174 = vpop.f32.mrf.mxu0
  %v4175 = vadd.f32 %v2416, %v4174
  %v4176 = vand.u32 %v904, 4294901760
  %v4177 = vsub.f32 %v904, %v4176
  %v4178 = vand.u32 %v4177, 4294901760
  %v4179 = vsub.f32 %v4177, %v4178
  %v4180 = vand.u32 %v4179, 4294901760
  %4181 = vmatmul.f32.gmra.mxu0 %v4180
  %v4182 = vpop.f32.mrf.mxu0
  %v4183 = vadd.f32 %v2420, %v4182
  %v4184 = vand.u32 %v1028, 4294901760
  %v4185 = vsub.f32 %v1028, %v4184
  %v4186 = vand.u32 %v4185, 4294901760
  %v4187 = vsub.f32 %v4185, %v4186
  %v4188 = vand.u32 %v4187, 4294901760
  %4189 = vmatmul.f32.gmra.mxu0 %v4188
  %v4190 = vpop.f32.mrf.mxu0
  %v4191 = vadd.f32 %v2424, %v4190
  %v4192 = vand.u32 %v1152, 4294901760
  %v4193 = vsub.f32 %v1152, %v4192
  %v4194 = vand.u32 %v4193, 4294901760
  %v4195 = vsub.f32 %v4193, %v4194
  %v4196 = vand.u32 %v4195, 4294901760
  %4197 = vmatmul.f32.gmra.mxu0 %v4196
  %v4198 = vpop.f32.mrf.mxu0
  %v4199 = vadd.f32 %v2428, %v4198
  %4200 = vdwg.mxu0
  %v4201 = vand.u32 %v1247, 4294901760
  %v4202 = vsub.f32 %v1247, %v4201
  %v4203 = vand.u32 %v4202, 4294901760
  %v4204 = vsub.f32 %v4202, %v4203
  %v4205 = vand.u32 %v4204, 4294901760
  %4206 = vmatpush.msra.mxu0 %v4205
  %v4207 = vand.u32 %v1243, 4294901760
  %v4208 = vsub.f32 %v1243, %v4207
  %v4209 = vand.u32 %v4208, 4294901760
  %v4210 = vsub.f32 %v4208, %v4209
  %v4211 = vand.u32 %v4210, 4294901760
  %4212 = vmatpush.msra.mxu0 %v4211
  %v4213 = vand.u32 %v1239, 4294901760
  %v4214 = vsub.f32 %v1239, %v4213
  %v4215 = vand.u32 %v4214, 4294901760
  %v4216 = vsub.f32 %v4214, %v4215
  %v4217 = vand.u32 %v4216, 4294901760
  %4218 = vmatpush.msra.mxu0 %v4217
  %v4219 = vand.u32 %v1235, 4294901760
  %v4220 = vsub.f32 %v1235, %v4219
  %v4221 = vand.u32 %v4220, 4294901760
  %v4222 = vsub.f32 %v4220, %v4221
  %v4223 = vand.u32 %v4222, 4294901760
  %4224 = vmatpush.msra.mxu0 %v4223
  %v4225 = vand.u32 %v1231, 4294901760
  %v4226 = vsub.f32 %v1231, %v4225
  %v4227 = vand.u32 %v4226, 4294901760
  %v4228 = vsub.f32 %v4226, %v4227
  %v4229 = vand.u32 %v4228, 4294901760
  %4230 = vmatpush.msra.mxu0 %v4229
  %v4231 = vand.u32 %v1227, 4294901760
  %v4232 = vsub.f32 %v1227, %v4231
  %v4233 = vand.u32 %v4232, 4294901760
  %v4234 = vsub.f32 %v4232, %v4233
  %v4235 = vand.u32 %v4234, 4294901760
  %4236 = vmatpush.msra.mxu0 %v4235
  %v4237 = vand.u32 %v1223, 4294901760
  %v4238 = vsub.f32 %v1223, %v4237
  %v4239 = vand.u32 %v4238, 4294901760
  %v4240 = vsub.f32 %v4238, %v4239
  %v4241 = vand.u32 %v4240, 4294901760
  %4242 = vmatpush.msra.mxu0 %v4241
  %v4243 = vand.u32 %v1219, 4294901760
  %v4244 = vsub.f32 %v1219, %v4243
  %v4245 = vand.u32 %v4244, 4294901760
  %v4246 = vsub.f32 %v4244, %v4245
  %v4247 = vand.u32 %v4246, 4294901760
  %4248 = vmatpush.msra.mxu0 %v4247
  %v4249 = vand.u32 %v1215, 4294901760
  %v4250 = vsub.f32 %v1215, %v4249
  %v4251 = vand.u32 %v4250, 4294901760
  %v4252 = vsub.f32 %v4250, %v4251
  %v4253 = vand.u32 %v4252, 4294901760
  %4254 = vmatpush.msra.mxu0 %v4253
  %v4255 = vand.u32 %v1211, 4294901760
  %v4256 = vsub.f32 %v1211, %v4255
  %v4257 = vand.u32 %v4256, 4294901760
  %v4258 = vsub.f32 %v4256, %v4257
  %v4259 = vand.u32 %v4258, 4294901760
  %4260 = vmatpush.msra.mxu0 %v4259
  %v4261 = vand.u32 %v1207, 4294901760
  %v4262 = vsub.f32 %v1207, %v4261
  %v4263 = vand.u32 %v4262, 4294901760
  %v4264 = vsub.f32 %v4262, %v4263
  %v4265 = vand.u32 %v4264, 4294901760
  %4266 = vmatpush.msra.mxu0 %v4265
  %v4267 = vand.u32 %v1203, 4294901760
  %v4268 = vsub.f32 %v1203, %v4267
  %v4269 = vand.u32 %v4268, 4294901760
  %v4270 = vsub.f32 %v4268, %v4269
  %v4271 = vand.u32 %v4270, 4294901760
  %4272 = vmatpush.msra.mxu0 %v4271
  %v4273 = vand.u32 %v1199, 4294901760
  %v4274 = vsub.f32 %v1199, %v4273
  %v4275 = vand.u32 %v4274, 4294901760
  %v4276 = vsub.f32 %v4274, %v4275
  %v4277 = vand.u32 %v4276, 4294901760
  %4278 = vmatpush.msra.mxu0 %v4277
  %v4279 = vand.u32 %v1195, 4294901760
  %v4280 = vsub.f32 %v1195, %v4279
  %v4281 = vand.u32 %v4280, 4294901760
  %v4282 = vsub.f32 %v4280, %v4281
  %v4283 = vand.u32 %v4282, 4294901760
  %4284 = vmatpush.msra.mxu0 %v4283
  %v4285 = vand.u32 %v1191, 4294901760
  %v4286 = vsub.f32 %v1191, %v4285
  %v4287 = vand.u32 %v4286, 4294901760
  %v4288 = vsub.f32 %v4286, %v4287
  %v4289 = vand.u32 %v4288, 4294901760
  %4290 = vmatpush.msra.mxu0 %v4289
  %v4291 = vand.u32 %v1187, 4294901760
  %v4292 = vsub.f32 %v1187, %v4291
  %v4293 = vand.u32 %v4292, 4294901760
  %v4294 = vsub.f32 %v4292, %v4293
  %v4295 = vand.u32 %v4294, 4294901760
  %4296 = vmatpush.msra.mxu0 %v4295
  %v4297 = vand.u32 %v124, 4294901760
  %4298 = vmatmul.f32.gmra.mxu0 %v4297
  %v4299 = vpop.f32.mrf.mxu0
  %v4300 = vadd.f32 %v4143, %v4299
  %v4301 = vand.u32 %v408, 4294901760
  %4302 = vmatmul.f32.gmra.mxu0 %v4301
  %v4303 = vpop.f32.mrf.mxu0
  %v4304 = vadd.f32 %v4151, %v4303
  %v4305 = vand.u32 %v532, 4294901760
  %4306 = vmatmul.f32.gmra.mxu0 %v4305
  %v4307 = vpop.f32.mrf.mxu0
  %v4308 = vadd.f32 %v4159, %v4307
  %v4309 = vand.u32 %v656, 4294901760
  %4310 = vmatmul.f32.gmra.mxu0 %v4309
  %v4311 = vpop.f32.mrf.mxu0
  %v4312 = vadd.f32 %v4167, %v4311
  %v4313 = vand.u32 %v780, 4294901760
  %4314 = vmatmul.f32.gmra.mxu0 %v4313
  %v4315 = vpop.f32.mrf.mxu0
  %v4316 = vadd.f32 %v4175, %v4315
  %v4317 = vand.u32 %v904, 4294901760
  %4318 = vmatmul.f32.gmra.mxu0 %v4317
  %v4319 = vpop.f32.mrf.mxu0
  %v4320 = vadd.f32 %v4183, %v4319
  %v4321 = vand.u32 %v1028, 4294901760
  %4322 = vmatmul.f32.gmra.mxu0 %v4321
  %v4323 = vpop.f32.mrf.mxu0
  %v4324 = vadd.f32 %v4191, %v4323
  %v4325 = vand.u32 %v1152, 4294901760
  %4326 = vmatmul.f32.gmra.mxu0 %v4325
  %v4327 = vpop.f32.mrf.mxu0
  %v4328 = vadd.f32 %v4199, %v4327
  %4329 = vdwg.mxu0
  %v4330 = vand.u32 %v1247, 4294901760
  %v4331 = vsub.f32 %v1247, %v4330
  %4332 = vmatpush.msra.mxu0 %v4331
  %v4333 = vand.u32 %v1243, 4294901760
  %v4334 = vsub.f32 %v1243, %v4333
  %4335 = vmatpush.msra.mxu0 %v4334
  %v4336 = vand.u32 %v1239, 4294901760
  %v4337 = vsub.f32 %v1239, %v4336
  %4338 = vmatpush.msra.mxu0 %v4337
  %v4339 = vand.u32 %v1235, 4294901760
  %v4340 = vsub.f32 %v1235, %v4339
  %4341 = vmatpush.msra.mxu0 %v4340
  %v4342 = vand.u32 %v1231, 4294901760
  %v4343 = vsub.f32 %v1231, %v4342
  %4344 = vmatpush.msra.mxu0 %v4343
  %v4345 = vand.u32 %v1227, 4294901760
  %v4346 = vsub.f32 %v1227, %v4345
  %4347 = vmatpush.msra.mxu0 %v4346
  %v4348 = vand.u32 %v1223, 4294901760
  %v4349 = vsub.f32 %v1223, %v4348
  %4350 = vmatpush.msra.mxu0 %v4349
  %v4351 = vand.u32 %v1219, 4294901760
  %v4352 = vsub.f32 %v1219, %v4351
  %4353 = vmatpush.msra.mxu0 %v4352
  %v4354 = vand.u32 %v1215, 4294901760
  %v4355 = vsub.f32 %v1215, %v4354
  %4356 = vmatpush.msra.mxu0 %v4355
  %v4357 = vand.u32 %v1211, 4294901760
  %v4358 = vsub.f32 %v1211, %v4357
  %4359 = vmatpush.msra.mxu0 %v4358
  %v4360 = vand.u32 %v1207, 4294901760
  %v4361 = vsub.f32 %v1207, %v4360
  %4362 = vmatpush.msra.mxu0 %v4361
  %v4363 = vand.u32 %v1203, 4294901760
  %v4364 = vsub.f32 %v1203, %v4363
  %4365 = vmatpush.msra.mxu0 %v4364
  %v4366 = vand.u32 %v1199, 4294901760
  %v4367 = vsub.f32 %v1199, %v4366
  %4368 = vmatpush.msra.mxu0 %v4367
  %v4369 = vand.u32 %v1195, 4294901760
  %v4370 = vsub.f32 %v1195, %v4369
  %4371 = vmatpush.msra.mxu0 %v4370
  %v4372 = vand.u32 %v1191, 4294901760
  %v4373 = vsub.f32 %v1191, %v4372
  %4374 = vmatpush.msra.mxu0 %v4373
  %v4375 = vand.u32 %v1187, 4294901760
  %v4376 = vsub.f32 %v1187, %v4375
  %4377 = vmatpush.msra.mxu0 %v4376
  %v4378 = vand.u32 %v124, 4294901760
  %v4379 = vsub.f32 %v124, %v4378
  %4380 = vmatmul.f32.gmra.mxu0 %v4379
  %v4381 = vpop.f32.mrf.mxu0
  %v4382 = vadd.f32 %v4300, %v4381
  %v4383 = vand.u32 %v408, 4294901760
  %v4384 = vsub.f32 %v408, %v4383
  %4385 = vmatmul.f32.gmra.mxu0 %v4384
  %v4386 = vpop.f32.mrf.mxu0
  %v4387 = vadd.f32 %v4304, %v4386
  %v4388 = vand.u32 %v532, 4294901760
  %v4389 = vsub.f32 %v532, %v4388
  %4390 = vmatmul.f32.gmra.mxu0 %v4389
  %v4391 = vpop.f32.mrf.mxu0
  %v4392 = vadd.f32 %v4308, %v4391
  %v4393 = vand.u32 %v656, 4294901760
  %v4394 = vsub.f32 %v656, %v4393
  %4395 = vmatmul.f32.gmra.mxu0 %v4394
  %v4396 = vpop.f32.mrf.mxu0
  %v4397 = vadd.f32 %v4312, %v4396
  %v4398 = vand.u32 %v780, 4294901760
  %v4399 = vsub.f32 %v780, %v4398
  %4400 = vmatmul.f32.gmra.mxu0 %v4399
  %v4401 = vpop.f32.mrf.mxu0
  %v4402 = vadd.f32 %v4316, %v4401
  %v4403 = vand.u32 %v904, 4294901760
  %v4404 = vsub.f32 %v904, %v4403
  %4405 = vmatmul.f32.gmra.mxu0 %v4404
  %v4406 = vpop.f32.mrf.mxu0
  %v4407 = vadd.f32 %v4320, %v4406
  %v4408 = vand.u32 %v1028, 4294901760
  %v4409 = vsub.f32 %v1028, %v4408
  %4410 = vmatmul.f32.gmra.mxu0 %v4409
  %v4411 = vpop.f32.mrf.mxu0
  %v4412 = vadd.f32 %v4324, %v4411
  %v4413 = vand.u32 %v1152, 4294901760
  %v4414 = vsub.f32 %v1152, %v4413
  %4415 = vmatmul.f32.gmra.mxu0 %v4414
  %v4416 = vpop.f32.mrf.mxu0
  %v4417 = vadd.f32 %v4328, %v4416
  %4418 = vdwg.mxu0
  %v4419 = vand.u32 %v1247, 4294901760
  %4420 = vmatpush.msra.mxu0 %v4419
  %v4421 = vand.u32 %v1243, 4294901760
  %4422 = vmatpush.msra.mxu0 %v4421
  %v4423 = vand.u32 %v1239, 4294901760
  %4424 = vmatpush.msra.mxu0 %v4423
  %v4425 = vand.u32 %v1235, 4294901760
  %4426 = vmatpush.msra.mxu0 %v4425
  %v4427 = vand.u32 %v1231, 4294901760
  %4428 = vmatpush.msra.mxu0 %v4427
  %v4429 = vand.u32 %v1227, 4294901760
  %4430 = vmatpush.msra.mxu0 %v4429
  %v4431 = vand.u32 %v1223, 4294901760
  %4432 = vmatpush.msra.mxu0 %v4431
  %v4433 = vand.u32 %v1219, 4294901760
  %4434 = vmatpush.msra.mxu0 %v4433
  %v4435 = vand.u32 %v1215, 4294901760
  %4436 = vmatpush.msra.mxu0 %v4435
  %v4437 = vand.u32 %v1211, 4294901760
  %4438 = vmatpush.msra.mxu0 %v4437
  %v4439 = vand.u32 %v1207, 4294901760
  %4440 = vmatpush.msra.mxu0 %v4439
  %v4441 = vand.u32 %v1203, 4294901760
  %4442 = vmatpush.msra.mxu0 %v4441
  %v4443 = vand.u32 %v1199, 4294901760
  %4444 = vmatpush.msra.mxu0 %v4443
  %v4445 = vand.u32 %v1195, 4294901760
  %4446 = vmatpush.msra.mxu0 %v4445
  %v4447 = vand.u32 %v1191, 4294901760
  %4448 = vmatpush.msra.mxu0 %v4447
  %v4449 = vand.u32 %v1187, 4294901760
  %4450 = vmatpush.msra.mxu0 %v4449
  %v4451 = vand.u32 %v124, 4294901760
  %v4452 = vsub.f32 %v124, %v4451
  %v4453 = vand.u32 %v4452, 4294901760
  %4454 = vmatmul.f32.gmra.mxu0 %v4453
  %v4455 = vpop.f32.mrf.mxu0
  %v4456 = vadd.f32 %v4382, %v4455
  %v4457 = vand.u32 %v408, 4294901760
  %v4458 = vsub.f32 %v408, %v4457
  %v4459 = vand.u32 %v4458, 4294901760
  %4460 = vmatmul.f32.gmra.mxu0 %v4459
  %v4461 = vpop.f32.mrf.mxu0
  %v4462 = vadd.f32 %v4387, %v4461
  %v4463 = vand.u32 %v532, 4294901760
  %v4464 = vsub.f32 %v532, %v4463
  %v4465 = vand.u32 %v4464, 4294901760
  %4466 = vmatmul.f32.gmra.mxu0 %v4465
  %v4467 = vpop.f32.mrf.mxu0
  %v4468 = vadd.f32 %v4392, %v4467
  %v4469 = vand.u32 %v656, 4294901760
  %v4470 = vsub.f32 %v656, %v4469
  %v4471 = vand.u32 %v4470, 4294901760
  %4472 = vmatmul.f32.gmra.mxu0 %v4471
  %v4473 = vpop.f32.mrf.mxu0
  %v4474 = vadd.f32 %v4397, %v4473
  %v4475 = vand.u32 %v780, 4294901760
  %v4476 = vsub.f32 %v780, %v4475
  %v4477 = vand.u32 %v4476, 4294901760
  %4478 = vmatmul.f32.gmra.mxu0 %v4477
  %v4479 = vpop.f32.mrf.mxu0
  %v4480 = vadd.f32 %v4402, %v4479
  %v4481 = vand.u32 %v904, 4294901760
  %v4482 = vsub.f32 %v904, %v4481
  %v4483 = vand.u32 %v4482, 4294901760
  %4484 = vmatmul.f32.gmra.mxu0 %v4483
  %v4485 = vpop.f32.mrf.mxu0
  %v4486 = vadd.f32 %v4407, %v4485
  %v4487 = vand.u32 %v1028, 4294901760
  %v4488 = vsub.f32 %v1028, %v4487
  %v4489 = vand.u32 %v4488, 4294901760
  %4490 = vmatmul.f32.gmra.mxu0 %v4489
  %v4491 = vpop.f32.mrf.mxu0
  %v4492 = vadd.f32 %v4412, %v4491
  %v4493 = vand.u32 %v1152, 4294901760
  %v4494 = vsub.f32 %v1152, %v4493
  %v4495 = vand.u32 %v4494, 4294901760
  %4496 = vmatmul.f32.gmra.mxu0 %v4495
  %v4497 = vpop.f32.mrf.mxu0
  %v4498 = vadd.f32 %v4417, %v4497
  %4499 = vdwg.mxu0
  %v4500 = vand.u32 %v1247, 4294901760
  %v4501 = vsub.f32 %v1247, %v4500
  %v4502 = vand.u32 %v4501, 4294901760
  %4503 = vmatpush.msra.mxu0 %v4502
  %v4504 = vand.u32 %v1243, 4294901760
  %v4505 = vsub.f32 %v1243, %v4504
  %v4506 = vand.u32 %v4505, 4294901760
  %4507 = vmatpush.msra.mxu0 %v4506
  %v4508 = vand.u32 %v1239, 4294901760
  %v4509 = vsub.f32 %v1239, %v4508
  %v4510 = vand.u32 %v4509, 4294901760
  %4511 = vmatpush.msra.mxu0 %v4510
  %v4512 = vand.u32 %v1235, 4294901760
  %v4513 = vsub.f32 %v1235, %v4512
  %v4514 = vand.u32 %v4513, 4294901760
  %4515 = vmatpush.msra.mxu0 %v4514
  %v4516 = vand.u32 %v1231, 4294901760
  %v4517 = vsub.f32 %v1231, %v4516
  %v4518 = vand.u32 %v4517, 4294901760
  %4519 = vmatpush.msra.mxu0 %v4518
  %v4520 = vand.u32 %v1227, 4294901760
  %v4521 = vsub.f32 %v1227, %v4520
  %v4522 = vand.u32 %v4521, 4294901760
  %4523 = vmatpush.msra.mxu0 %v4522
  %v4524 = vand.u32 %v1223, 4294901760
  %v4525 = vsub.f32 %v1223, %v4524
  %v4526 = vand.u32 %v4525, 4294901760
  %4527 = vmatpush.msra.mxu0 %v4526
  %v4528 = vand.u32 %v1219, 4294901760
  %v4529 = vsub.f32 %v1219, %v4528
  %v4530 = vand.u32 %v4529, 4294901760
  %4531 = vmatpush.msra.mxu0 %v4530
  %v4532 = vand.u32 %v1215, 4294901760
  %v4533 = vsub.f32 %v1215, %v4532
  %v4534 = vand.u32 %v4533, 4294901760
  %4535 = vmatpush.msra.mxu0 %v4534
  %v4536 = vand.u32 %v1211, 4294901760
  %v4537 = vsub.f32 %v1211, %v4536
  %v4538 = vand.u32 %v4537, 4294901760
  %4539 = vmatpush.msra.mxu0 %v4538
  %v4540 = vand.u32 %v1207, 4294901760
  %v4541 = vsub.f32 %v1207, %v4540
  %v4542 = vand.u32 %v4541, 4294901760
  %4543 = vmatpush.msra.mxu0 %v4542
  %v4544 = vand.u32 %v1203, 4294901760
  %v4545 = vsub.f32 %v1203, %v4544
  %v4546 = vand.u32 %v4545, 4294901760
  %4547 = vmatpush.msra.mxu0 %v4546
  %v4548 = vand.u32 %v1199, 4294901760
  %v4549 = vsub.f32 %v1199, %v4548
  %v4550 = vand.u32 %v4549, 4294901760
  %4551 = vmatpush.msra.mxu0 %v4550
  %v4552 = vand.u32 %v1195, 4294901760
  %v4553 = vsub.f32 %v1195, %v4552
  %v4554 = vand.u32 %v4553, 4294901760
  %4555 = vmatpush.msra.mxu0 %v4554
  %v4556 = vand.u32 %v1191, 4294901760
  %v4557 = vsub.f32 %v1191, %v4556
  %v4558 = vand.u32 %v4557, 4294901760
  %4559 = vmatpush.msra.mxu0 %v4558
  %v4560 = vand.u32 %v1187, 4294901760
  %v4561 = vsub.f32 %v1187, %v4560
  %v4562 = vand.u32 %v4561, 4294901760
  %4563 = vmatpush.msra.mxu0 %v4562
  %v4564 = vand.u32 %v124, 4294901760
  %4565 = vmatmul.f32.gmra.mxu0 %v4564
  %v4566 = vpop.f32.mrf.mxu0
  %v4567 = vadd.f32 %v4456, %v4566
  %v4568 = vand.u32 %v408, 4294901760
  %4569 = vmatmul.f32.gmra.mxu0 %v4568
  %v4570 = vpop.f32.mrf.mxu0
  %v4571 = vadd.f32 %v4462, %v4570
  %v4572 = vand.u32 %v532, 4294901760
  %4573 = vmatmul.f32.gmra.mxu0 %v4572
  %v4574 = vpop.f32.mrf.mxu0
  %v4575 = vadd.f32 %v4468, %v4574
  %v4576 = vand.u32 %v656, 4294901760
  %4577 = vmatmul.f32.gmra.mxu0 %v4576
  %v4578 = vpop.f32.mrf.mxu0
  %v4579 = vadd.f32 %v4474, %v4578
  %v4580 = vand.u32 %v780, 4294901760
  %4581 = vmatmul.f32.gmra.mxu0 %v4580
  %v4582 = vpop.f32.mrf.mxu0
  %v4583 = vadd.f32 %v4480, %v4582
  %v4584 = vand.u32 %v904, 4294901760
  %4585 = vmatmul.f32.gmra.mxu0 %v4584
  %v4586 = vpop.f32.mrf.mxu0
  %v4587 = vadd.f32 %v4486, %v4586
  %v4588 = vand.u32 %v1028, 4294901760
  %4589 = vmatmul.f32.gmra.mxu0 %v4588
  %v4590 = vpop.f32.mrf.mxu0
  %v4591 = vadd.f32 %v4492, %v4590
  %v4592 = vand.u32 %v1152, 4294901760
  %4593 = vmatmul.f32.gmra.mxu0 %v4592
  %v4594 = vpop.f32.mrf.mxu0
  %v4595 = vadd.f32 %v4498, %v4594
  %4596 = vdwg.mxu0
  %v4597 = vand.u32 %v1247, 4294901760
  %4598 = vmatpush.msra.mxu0 %v4597
  %v4599 = vand.u32 %v1243, 4294901760
  %4600 = vmatpush.msra.mxu0 %v4599
  %v4601 = vand.u32 %v1239, 4294901760
  %4602 = vmatpush.msra.mxu0 %v4601
  %v4603 = vand.u32 %v1235, 4294901760
  %4604 = vmatpush.msra.mxu0 %v4603
  %v4605 = vand.u32 %v1231, 4294901760
  %4606 = vmatpush.msra.mxu0 %v4605
  %v4607 = vand.u32 %v1227, 4294901760
  %4608 = vmatpush.msra.mxu0 %v4607
  %v4609 = vand.u32 %v1223, 4294901760
  %4610 = vmatpush.msra.mxu0 %v4609
  %v4611 = vand.u32 %v1219, 4294901760
  %4612 = vmatpush.msra.mxu0 %v4611
  %v4613 = vand.u32 %v1215, 4294901760
  %4614 = vmatpush.msra.mxu0 %v4613
  %v4615 = vand.u32 %v1211, 4294901760
  %4616 = vmatpush.msra.mxu0 %v4615
  %v4617 = vand.u32 %v1207, 4294901760
  %4618 = vmatpush.msra.mxu0 %v4617
  %v4619 = vand.u32 %v1203, 4294901760
  %4620 = vmatpush.msra.mxu0 %v4619
  %v4621 = vand.u32 %v1199, 4294901760
  %4622 = vmatpush.msra.mxu0 %v4621
  %v4623 = vand.u32 %v1195, 4294901760
  %4624 = vmatpush.msra.mxu0 %v4623
  %v4625 = vand.u32 %v1191, 4294901760
  %4626 = vmatpush.msra.mxu0 %v4625
  %v4627 = vand.u32 %v1187, 4294901760
  %4628 = vmatpush.msra.mxu0 %v4627
  %v4629 = vand.u32 %v124, 4294901760
  %4630 = vmatmul.f32.gmra.mxu0 %v4629
  %v4631 = vpop.f32.mrf.mxu0
  %v4632 = vadd.f32 %v4567, %v4631
  %v4633 = vand.u32 %v408, 4294901760
  %4634 = vmatmul.f32.gmra.mxu0 %v4633
  %v4635 = vpop.f32.mrf.mxu0
  %v4636 = vadd.f32 %v4571, %v4635
  %v4637 = vand.u32 %v532, 4294901760
  %4638 = vmatmul.f32.gmra.mxu0 %v4637
  %v4639 = vpop.f32.mrf.mxu0
  %v4640 = vadd.f32 %v4575, %v4639
  %v4641 = vand.u32 %v656, 4294901760
  %4642 = vmatmul.f32.gmra.mxu0 %v4641
  %v4643 = vpop.f32.mrf.mxu0
  %v4644 = vadd.f32 %v4579, %v4643
  %v4645 = vand.u32 %v780, 4294901760
  %4646 = vmatmul.f32.gmra.mxu0 %v4645
  %v4647 = vpop.f32.mrf.mxu0
  %v4648 = vadd.f32 %v4583, %v4647
  %v4649 = vand.u32 %v904, 4294901760
  %4650 = vmatmul.f32.gmra.mxu0 %v4649
  %v4651 = vpop.f32.mrf.mxu0
  %v4652 = vadd.f32 %v4587, %v4651
  %v4653 = vand.u32 %v1028, 4294901760
  %4654 = vmatmul.f32.gmra.mxu0 %v4653
  %v4655 = vpop.f32.mrf.mxu0
  %v4656 = vadd.f32 %v4591, %v4655
  %v4657 = vand.u32 %v1152, 4294901760
  %4658 = vmatmul.f32.gmra.mxu0 %v4657
  %v4659 = vpop.f32.mrf.mxu0
  %v4660 = vadd.f32 %v4595, %v4659
  %4661 = vdwg.mxu0
  %v4662 = vand.u32 %v1248, 4294901760
  %4663 = vmatpush.msra.mxu0 %v4662
  %v4664 = vand.u32 %v1244, 4294901760
  %4665 = vmatpush.msra.mxu0 %v4664
  %v4666 = vand.u32 %v1240, 4294901760
  %4667 = vmatpush.msra.mxu0 %v4666
  %v4668 = vand.u32 %v1236, 4294901760
  %4669 = vmatpush.msra.mxu0 %v4668
  %v4670 = vand.u32 %v1232, 4294901760
  %4671 = vmatpush.msra.mxu0 %v4670
  %v4672 = vand.u32 %v1228, 4294901760
  %4673 = vmatpush.msra.mxu0 %v4672
  %v4674 = vand.u32 %v1224, 4294901760
  %4675 = vmatpush.msra.mxu0 %v4674
  %v4676 = vand.u32 %v1220, 4294901760
  %4677 = vmatpush.msra.mxu0 %v4676
  %v4678 = vand.u32 %v1216, 4294901760
  %4679 = vmatpush.msra.mxu0 %v4678
  %v4680 = vand.u32 %v1212, 4294901760
  %4681 = vmatpush.msra.mxu0 %v4680
  %v4682 = vand.u32 %v1208, 4294901760
  %4683 = vmatpush.msra.mxu0 %v4682
  %v4684 = vand.u32 %v1204, 4294901760
  %4685 = vmatpush.msra.mxu0 %v4684
  %v4686 = vand.u32 %v1200, 4294901760
  %4687 = vmatpush.msra.mxu0 %v4686
  %v4688 = vand.u32 %v1196, 4294901760
  %4689 = vmatpush.msra.mxu0 %v4688
  %v4690 = vand.u32 %v1192, 4294901760
  %4691 = vmatpush.msra.mxu0 %v4690
  %v4692 = vand.u32 %v1188, 4294901760
  %4693 = vmatpush.msra.mxu0 %v4692
  %v4694 = vand.u32 %v124, 4294901760
  %v4695 = vsub.f32 %v124, %v4694
  %v4696 = vand.u32 %v4695, 4294901760
  %v4697 = vsub.f32 %v4695, %v4696
  %v4698 = vand.u32 %v4697, 4294901760
  %4699 = vmatmul.f32.gmra.mxu0 %v4698
  %v4700 = vpop.f32.mrf.mxu0
  %v4701 = vadd.f32 %v2958, %v4700
  %v4702 = vand.u32 %v408, 4294901760
  %v4703 = vsub.f32 %v408, %v4702
  %v4704 = vand.u32 %v4703, 4294901760
  %v4705 = vsub.f32 %v4703, %v4704
  %v4706 = vand.u32 %v4705, 4294901760
  %4707 = vmatmul.f32.gmra.mxu0 %v4706
  %v4708 = vpop.f32.mrf.mxu0
  %v4709 = vadd.f32 %v2962, %v4708
  %v4710 = vand.u32 %v532, 4294901760
  %v4711 = vsub.f32 %v532, %v4710
  %v4712 = vand.u32 %v4711, 4294901760
  %v4713 = vsub.f32 %v4711, %v4712
  %v4714 = vand.u32 %v4713, 4294901760
  %4715 = vmatmul.f32.gmra.mxu0 %v4714
  %v4716 = vpop.f32.mrf.mxu0
  %v4717 = vadd.f32 %v2966, %v4716
  %v4718 = vand.u32 %v656, 4294901760
  %v4719 = vsub.f32 %v656, %v4718
  %v4720 = vand.u32 %v4719, 4294901760
  %v4721 = vsub.f32 %v4719, %v4720
  %v4722 = vand.u32 %v4721, 4294901760
  %4723 = vmatmul.f32.gmra.mxu0 %v4722
  %v4724 = vpop.f32.mrf.mxu0
  %v4725 = vadd.f32 %v2970, %v4724
  %v4726 = vand.u32 %v780, 4294901760
  %v4727 = vsub.f32 %v780, %v4726
  %v4728 = vand.u32 %v4727, 4294901760
  %v4729 = vsub.f32 %v4727, %v4728
  %v4730 = vand.u32 %v4729, 4294901760
  %4731 = vmatmul.f32.gmra.mxu0 %v4730
  %v4732 = vpop.f32.mrf.mxu0
  %v4733 = vadd.f32 %v2974, %v4732
  %v4734 = vand.u32 %v904, 4294901760
  %v4735 = vsub.f32 %v904, %v4734
  %v4736 = vand.u32 %v4735, 4294901760
  %v4737 = vsub.f32 %v4735, %v4736
  %v4738 = vand.u32 %v4737, 4294901760
  %4739 = vmatmul.f32.gmra.mxu0 %v4738
  %v4740 = vpop.f32.mrf.mxu0
  %v4741 = vadd.f32 %v2978, %v4740
  %v4742 = vand.u32 %v1028, 4294901760
  %v4743 = vsub.f32 %v1028, %v4742
  %v4744 = vand.u32 %v4743, 4294901760
  %v4745 = vsub.f32 %v4743, %v4744
  %v4746 = vand.u32 %v4745, 4294901760
  %4747 = vmatmul.f32.gmra.mxu0 %v4746
  %v4748 = vpop.f32.mrf.mxu0
  %v4749 = vadd.f32 %v2982, %v4748
  %v4750 = vand.u32 %v1152, 4294901760
  %v4751 = vsub.f32 %v1152, %v4750
  %v4752 = vand.u32 %v4751, 4294901760
  %v4753 = vsub.f32 %v4751, %v4752
  %v4754 = vand.u32 %v4753, 4294901760
  %4755 = vmatmul.f32.gmra.mxu0 %v4754
  %v4756 = vpop.f32.mrf.mxu0
  %v4757 = vadd.f32 %v2986, %v4756
  %4758 = vdwg.mxu0
  %v4759 = vand.u32 %v1248, 4294901760
  %v4760 = vsub.f32 %v1248, %v4759
  %v4761 = vand.u32 %v4760, 4294901760
  %v4762 = vsub.f32 %v4760, %v4761
  %v4763 = vand.u32 %v4762, 4294901760
  %4764 = vmatpush.msra.mxu0 %v4763
  %v4765 = vand.u32 %v1244, 4294901760
  %v4766 = vsub.f32 %v1244, %v4765
  %v4767 = vand.u32 %v4766, 4294901760
  %v4768 = vsub.f32 %v4766, %v4767
  %v4769 = vand.u32 %v4768, 4294901760
  %4770 = vmatpush.msra.mxu0 %v4769
  %v4771 = vand.u32 %v1240, 4294901760
  %v4772 = vsub.f32 %v1240, %v4771
  %v4773 = vand.u32 %v4772, 4294901760
  %v4774 = vsub.f32 %v4772, %v4773
  %v4775 = vand.u32 %v4774, 4294901760
  %4776 = vmatpush.msra.mxu0 %v4775
  %v4777 = vand.u32 %v1236, 4294901760
  %v4778 = vsub.f32 %v1236, %v4777
  %v4779 = vand.u32 %v4778, 4294901760
  %v4780 = vsub.f32 %v4778, %v4779
  %v4781 = vand.u32 %v4780, 4294901760
  %4782 = vmatpush.msra.mxu0 %v4781
  %v4783 = vand.u32 %v1232, 4294901760
  %v4784 = vsub.f32 %v1232, %v4783
  %v4785 = vand.u32 %v4784, 4294901760
  %v4786 = vsub.f32 %v4784, %v4785
  %v4787 = vand.u32 %v4786, 4294901760
  %4788 = vmatpush.msra.mxu0 %v4787
  %v4789 = vand.u32 %v1228, 4294901760
  %v4790 = vsub.f32 %v1228, %v4789
  %v4791 = vand.u32 %v4790, 4294901760
  %v4792 = vsub.f32 %v4790, %v4791
  %v4793 = vand.u32 %v4792, 4294901760
  %4794 = vmatpush.msra.mxu0 %v4793
  %v4795 = vand.u32 %v1224, 4294901760
  %v4796 = vsub.f32 %v1224, %v4795
  %v4797 = vand.u32 %v4796, 4294901760
  %v4798 = vsub.f32 %v4796, %v4797
  %v4799 = vand.u32 %v4798, 4294901760
  %4800 = vmatpush.msra.mxu0 %v4799
  %v4801 = vand.u32 %v1220, 4294901760
  %v4802 = vsub.f32 %v1220, %v4801
  %v4803 = vand.u32 %v4802, 4294901760
  %v4804 = vsub.f32 %v4802, %v4803
  %v4805 = vand.u32 %v4804, 4294901760
  %4806 = vmatpush.msra.mxu0 %v4805
  %v4807 = vand.u32 %v1216, 4294901760
  %v4808 = vsub.f32 %v1216, %v4807
  %v4809 = vand.u32 %v4808, 4294901760
  %v4810 = vsub.f32 %v4808, %v4809
  %v4811 = vand.u32 %v4810, 4294901760
  %4812 = vmatpush.msra.mxu0 %v4811
  %v4813 = vand.u32 %v1212, 4294901760
  %v4814 = vsub.f32 %v1212, %v4813
  %v4815 = vand.u32 %v4814, 4294901760
  %v4816 = vsub.f32 %v4814, %v4815
  %v4817 = vand.u32 %v4816, 4294901760
  %4818 = vmatpush.msra.mxu0 %v4817
  %v4819 = vand.u32 %v1208, 4294901760
  %v4820 = vsub.f32 %v1208, %v4819
  %v4821 = vand.u32 %v4820, 4294901760
  %v4822 = vsub.f32 %v4820, %v4821
  %v4823 = vand.u32 %v4822, 4294901760
  %4824 = vmatpush.msra.mxu0 %v4823
  %v4825 = vand.u32 %v1204, 4294901760
  %v4826 = vsub.f32 %v1204, %v4825
  %v4827 = vand.u32 %v4826, 4294901760
  %v4828 = vsub.f32 %v4826, %v4827
  %v4829 = vand.u32 %v4828, 4294901760
  %4830 = vmatpush.msra.mxu0 %v4829
  %v4831 = vand.u32 %v1200, 4294901760
  %v4832 = vsub.f32 %v1200, %v4831
  %v4833 = vand.u32 %v4832, 4294901760
  %v4834 = vsub.f32 %v4832, %v4833
  %v4835 = vand.u32 %v4834, 4294901760
  %4836 = vmatpush.msra.mxu0 %v4835
  %v4837 = vand.u32 %v1196, 4294901760
  %v4838 = vsub.f32 %v1196, %v4837
  %v4839 = vand.u32 %v4838, 4294901760
  %v4840 = vsub.f32 %v4838, %v4839
  %v4841 = vand.u32 %v4840, 4294901760
  %4842 = vmatpush.msra.mxu0 %v4841
  %v4843 = vand.u32 %v1192, 4294901760
  %v4844 = vsub.f32 %v1192, %v4843
  %v4845 = vand.u32 %v4844, 4294901760
  %v4846 = vsub.f32 %v4844, %v4845
  %v4847 = vand.u32 %v4846, 4294901760
  %4848 = vmatpush.msra.mxu0 %v4847
  %v4849 = vand.u32 %v1188, 4294901760
  %v4850 = vsub.f32 %v1188, %v4849
  %v4851 = vand.u32 %v4850, 4294901760
  %v4852 = vsub.f32 %v4850, %v4851
  %v4853 = vand.u32 %v4852, 4294901760
  %4854 = vmatpush.msra.mxu0 %v4853
  %v4855 = vand.u32 %v124, 4294901760
  %4856 = vmatmul.f32.gmra.mxu0 %v4855
  %v4857 = vpop.f32.mrf.mxu0
  %v4858 = vadd.f32 %v4701, %v4857
  %v4859 = vand.u32 %v408, 4294901760
  %4860 = vmatmul.f32.gmra.mxu0 %v4859
  %v4861 = vpop.f32.mrf.mxu0
  %v4862 = vadd.f32 %v4709, %v4861
  %v4863 = vand.u32 %v532, 4294901760
  %4864 = vmatmul.f32.gmra.mxu0 %v4863
  %v4865 = vpop.f32.mrf.mxu0
  %v4866 = vadd.f32 %v4717, %v4865
  %v4867 = vand.u32 %v656, 4294901760
  %4868 = vmatmul.f32.gmra.mxu0 %v4867
  %v4869 = vpop.f32.mrf.mxu0
  %v4870 = vadd.f32 %v4725, %v4869
  %v4871 = vand.u32 %v780, 4294901760
  %4872 = vmatmul.f32.gmra.mxu0 %v4871
  %v4873 = vpop.f32.mrf.mxu0
  %v4874 = vadd.f32 %v4733, %v4873
  %v4875 = vand.u32 %v904, 4294901760
  %4876 = vmatmul.f32.gmra.mxu0 %v4875
  %v4877 = vpop.f32.mrf.mxu0
  %v4878 = vadd.f32 %v4741, %v4877
  %v4879 = vand.u32 %v1028, 4294901760
  %4880 = vmatmul.f32.gmra.mxu0 %v4879
  %v4881 = vpop.f32.mrf.mxu0
  %v4882 = vadd.f32 %v4749, %v4881
  %v4883 = vand.u32 %v1152, 4294901760
  %4884 = vmatmul.f32.gmra.mxu0 %v4883
  %v4885 = vpop.f32.mrf.mxu0
  %v4886 = vadd.f32 %v4757, %v4885
  %4887 = vdwg.mxu0
  %v4888 = vand.u32 %v1248, 4294901760
  %v4889 = vsub.f32 %v1248, %v4888
  %4890 = vmatpush.msra.mxu0 %v4889
  %v4891 = vand.u32 %v1244, 4294901760
  %v4892 = vsub.f32 %v1244, %v4891
  %4893 = vmatpush.msra.mxu0 %v4892
  %v4894 = vand.u32 %v1240, 4294901760
  %v4895 = vsub.f32 %v1240, %v4894
  %4896 = vmatpush.msra.mxu0 %v4895
  %v4897 = vand.u32 %v1236, 4294901760
  %v4898 = vsub.f32 %v1236, %v4897
  %4899 = vmatpush.msra.mxu0 %v4898
  %v4900 = vand.u32 %v1232, 4294901760
  %v4901 = vsub.f32 %v1232, %v4900
  %4902 = vmatpush.msra.mxu0 %v4901
  %v4903 = vand.u32 %v1228, 4294901760
  %v4904 = vsub.f32 %v1228, %v4903
  %4905 = vmatpush.msra.mxu0 %v4904
  %v4906 = vand.u32 %v1224, 4294901760
  %v4907 = vsub.f32 %v1224, %v4906
  %4908 = vmatpush.msra.mxu0 %v4907
  %v4909 = vand.u32 %v1220, 4294901760
  %v4910 = vsub.f32 %v1220, %v4909
  %4911 = vmatpush.msra.mxu0 %v4910
  %v4912 = vand.u32 %v1216, 4294901760
  %v4913 = vsub.f32 %v1216, %v4912
  %4914 = vmatpush.msra.mxu0 %v4913
  %v4915 = vand.u32 %v1212, 4294901760
  %v4916 = vsub.f32 %v1212, %v4915
  %4917 = vmatpush.msra.mxu0 %v4916
  %v4918 = vand.u32 %v1208, 4294901760
  %v4919 = vsub.f32 %v1208, %v4918
  %4920 = vmatpush.msra.mxu0 %v4919
  %v4921 = vand.u32 %v1204, 4294901760
  %v4922 = vsub.f32 %v1204, %v4921
  %4923 = vmatpush.msra.mxu0 %v4922
  %v4924 = vand.u32 %v1200, 4294901760
  %v4925 = vsub.f32 %v1200, %v4924
  %4926 = vmatpush.msra.mxu0 %v4925
  %v4927 = vand.u32 %v1196, 4294901760
  %v4928 = vsub.f32 %v1196, %v4927
  %4929 = vmatpush.msra.mxu0 %v4928
  %v4930 = vand.u32 %v1192, 4294901760
  %v4931 = vsub.f32 %v1192, %v4930
  %4932 = vmatpush.msra.mxu0 %v4931
  %v4933 = vand.u32 %v1188, 4294901760
  %v4934 = vsub.f32 %v1188, %v4933
  %4935 = vmatpush.msra.mxu0 %v4934
  %v4936 = vand.u32 %v124, 4294901760
  %v4937 = vsub.f32 %v124, %v4936
  %4938 = vmatmul.f32.gmra.mxu0 %v4937
  %v4939 = vpop.f32.mrf.mxu0
  %v4940 = vadd.f32 %v4858, %v4939
  %v4941 = vand.u32 %v408, 4294901760
  %v4942 = vsub.f32 %v408, %v4941
  %4943 = vmatmul.f32.gmra.mxu0 %v4942
  %v4944 = vpop.f32.mrf.mxu0
  %v4945 = vadd.f32 %v4862, %v4944
  %v4946 = vand.u32 %v532, 4294901760
  %v4947 = vsub.f32 %v532, %v4946
  %4948 = vmatmul.f32.gmra.mxu0 %v4947
  %v4949 = vpop.f32.mrf.mxu0
  %v4950 = vadd.f32 %v4866, %v4949
  %v4951 = vand.u32 %v656, 4294901760
  %v4952 = vsub.f32 %v656, %v4951
  %4953 = vmatmul.f32.gmra.mxu0 %v4952
  %v4954 = vpop.f32.mrf.mxu0
  %v4955 = vadd.f32 %v4870, %v4954
  %v4956 = vand.u32 %v780, 4294901760
  %v4957 = vsub.f32 %v780, %v4956
  %4958 = vmatmul.f32.gmra.mxu0 %v4957
  %v4959 = vpop.f32.mrf.mxu0
  %v4960 = vadd.f32 %v4874, %v4959
  %v4961 = vand.u32 %v904, 4294901760
  %v4962 = vsub.f32 %v904, %v4961
  %4963 = vmatmul.f32.gmra.mxu0 %v4962
  %v4964 = vpop.f32.mrf.mxu0
  %v4965 = vadd.f32 %v4878, %v4964
  %v4966 = vand.u32 %v1028, 4294901760
  %v4967 = vsub.f32 %v1028, %v4966
  %4968 = vmatmul.f32.gmra.mxu0 %v4967
  %v4969 = vpop.f32.mrf.mxu0
  %v4970 = vadd.f32 %v4882, %v4969
  %v4971 = vand.u32 %v1152, 4294901760
  %v4972 = vsub.f32 %v1152, %v4971
  %4973 = vmatmul.f32.gmra.mxu0 %v4972
  %v4974 = vpop.f32.mrf.mxu0
  %v4975 = vadd.f32 %v4886, %v4974
  %4976 = vdwg.mxu0
  %v4977 = vand.u32 %v1248, 4294901760
  %4978 = vmatpush.msra.mxu0 %v4977
  %v4979 = vand.u32 %v1244, 4294901760
  %4980 = vmatpush.msra.mxu0 %v4979
  %v4981 = vand.u32 %v1240, 4294901760
  %4982 = vmatpush.msra.mxu0 %v4981
  %v4983 = vand.u32 %v1236, 4294901760
  %4984 = vmatpush.msra.mxu0 %v4983
  %v4985 = vand.u32 %v1232, 4294901760
  %4986 = vmatpush.msra.mxu0 %v4985
  %v4987 = vand.u32 %v1228, 4294901760
  %4988 = vmatpush.msra.mxu0 %v4987
  %v4989 = vand.u32 %v1224, 4294901760
  %4990 = vmatpush.msra.mxu0 %v4989
  %v4991 = vand.u32 %v1220, 4294901760
  %4992 = vmatpush.msra.mxu0 %v4991
  %v4993 = vand.u32 %v1216, 4294901760
  %4994 = vmatpush.msra.mxu0 %v4993
  %v4995 = vand.u32 %v1212, 4294901760
  %4996 = vmatpush.msra.mxu0 %v4995
  %v4997 = vand.u32 %v1208, 4294901760
  %4998 = vmatpush.msra.mxu0 %v4997
  %v4999 = vand.u32 %v1204, 4294901760
  %5000 = vmatpush.msra.mxu0 %v4999
  %v5001 = vand.u32 %v1200, 4294901760
  %5002 = vmatpush.msra.mxu0 %v5001
  %v5003 = vand.u32 %v1196, 4294901760
  %5004 = vmatpush.msra.mxu0 %v5003
  %v5005 = vand.u32 %v1192, 4294901760
  %5006 = vmatpush.msra.mxu0 %v5005
  %v5007 = vand.u32 %v1188, 4294901760
  %5008 = vmatpush.msra.mxu0 %v5007
  %v5009 = vand.u32 %v124, 4294901760
  %v5010 = vsub.f32 %v124, %v5009
  %v5011 = vand.u32 %v5010, 4294901760
  %5012 = vmatmul.f32.gmra.mxu0 %v5011
  %v5013 = vpop.f32.mrf.mxu0
  %v5014 = vadd.f32 %v4940, %v5013
  %v5015 = vand.u32 %v408, 4294901760
  %v5016 = vsub.f32 %v408, %v5015
  %v5017 = vand.u32 %v5016, 4294901760
  %5018 = vmatmul.f32.gmra.mxu0 %v5017
  %v5019 = vpop.f32.mrf.mxu0
  %v5020 = vadd.f32 %v4945, %v5019
  %v5021 = vand.u32 %v532, 4294901760
  %v5022 = vsub.f32 %v532, %v5021
  %v5023 = vand.u32 %v5022, 4294901760
  %5024 = vmatmul.f32.gmra.mxu0 %v5023
  %v5025 = vpop.f32.mrf.mxu0
  %v5026 = vadd.f32 %v4950, %v5025
  %v5027 = vand.u32 %v656, 4294901760
  %v5028 = vsub.f32 %v656, %v5027
  %v5029 = vand.u32 %v5028, 4294901760
  %5030 = vmatmul.f32.gmra.mxu0 %v5029
  %v5031 = vpop.f32.mrf.mxu0
  %v5032 = vadd.f32 %v4955, %v5031
  %v5033 = vand.u32 %v780, 4294901760
  %v5034 = vsub.f32 %v780, %v5033
  %v5035 = vand.u32 %v5034, 4294901760
  %5036 = vmatmul.f32.gmra.mxu0 %v5035
  %v5037 = vpop.f32.mrf.mxu0
  %v5038 = vadd.f32 %v4960, %v5037
  %v5039 = vand.u32 %v904, 4294901760
  %v5040 = vsub.f32 %v904, %v5039
  %v5041 = vand.u32 %v5040, 4294901760
  %5042 = vmatmul.f32.gmra.mxu0 %v5041
  %v5043 = vpop.f32.mrf.mxu0
  %v5044 = vadd.f32 %v4965, %v5043
  %v5045 = vand.u32 %v1028, 4294901760
  %v5046 = vsub.f32 %v1028, %v5045
  %v5047 = vand.u32 %v5046, 4294901760
  %5048 = vmatmul.f32.gmra.mxu0 %v5047
  %v5049 = vpop.f32.mrf.mxu0
  %v5050 = vadd.f32 %v4970, %v5049
  %v5051 = vand.u32 %v1152, 4294901760
  %v5052 = vsub.f32 %v1152, %v5051
  %v5053 = vand.u32 %v5052, 4294901760
  %5054 = vmatmul.f32.gmra.mxu0 %v5053
  %v5055 = vpop.f32.mrf.mxu0
  %v5056 = vadd.f32 %v4975, %v5055
  %5057 = vdwg.mxu0
  %v5058 = vand.u32 %v1248, 4294901760
  %v5059 = vsub.f32 %v1248, %v5058
  %v5060 = vand.u32 %v5059, 4294901760
  %5061 = vmatpush.msra.mxu0 %v5060
  %v5062 = vand.u32 %v1244, 4294901760
  %v5063 = vsub.f32 %v1244, %v5062
  %v5064 = vand.u32 %v5063, 4294901760
  %5065 = vmatpush.msra.mxu0 %v5064
  %v5066 = vand.u32 %v1240, 4294901760
  %v5067 = vsub.f32 %v1240, %v5066
  %v5068 = vand.u32 %v5067, 4294901760
  %5069 = vmatpush.msra.mxu0 %v5068
  %v5070 = vand.u32 %v1236, 4294901760
  %v5071 = vsub.f32 %v1236, %v5070
  %v5072 = vand.u32 %v5071, 4294901760
  %5073 = vmatpush.msra.mxu0 %v5072
  %v5074 = vand.u32 %v1232, 4294901760
  %v5075 = vsub.f32 %v1232, %v5074
  %v5076 = vand.u32 %v5075, 4294901760
  %5077 = vmatpush.msra.mxu0 %v5076
  %v5078 = vand.u32 %v1228, 4294901760
  %v5079 = vsub.f32 %v1228, %v5078
  %v5080 = vand.u32 %v5079, 4294901760
  %5081 = vmatpush.msra.mxu0 %v5080
  %v5082 = vand.u32 %v1224, 4294901760
  %v5083 = vsub.f32 %v1224, %v5082
  %v5084 = vand.u32 %v5083, 4294901760
  %5085 = vmatpush.msra.mxu0 %v5084
  %v5086 = vand.u32 %v1220, 4294901760
  %v5087 = vsub.f32 %v1220, %v5086
  %v5088 = vand.u32 %v5087, 4294901760
  %5089 = vmatpush.msra.mxu0 %v5088
  %v5090 = vand.u32 %v1216, 4294901760
  %v5091 = vsub.f32 %v1216, %v5090
  %v5092 = vand.u32 %v5091, 4294901760
  %5093 = vmatpush.msra.mxu0 %v5092
  %v5094 = vand.u32 %v1212, 4294901760
  %v5095 = vsub.f32 %v1212, %v5094
  %v5096 = vand.u32 %v5095, 4294901760
  %5097 = vmatpush.msra.mxu0 %v5096
  %v5098 = vand.u32 %v1208, 4294901760
  %v5099 = vsub.f32 %v1208, %v5098
  %v5100 = vand.u32 %v5099, 4294901760
  %5101 = vmatpush.msra.mxu0 %v5100
  %v5102 = vand.u32 %v1204, 4294901760
  %v5103 = vsub.f32 %v1204, %v5102
  %v5104 = vand.u32 %v5103, 4294901760
  %5105 = vmatpush.msra.mxu0 %v5104
  %v5106 = vand.u32 %v1200, 4294901760
  %v5107 = vsub.f32 %v1200, %v5106
  %v5108 = vand.u32 %v5107, 4294901760
  %5109 = vmatpush.msra.mxu0 %v5108
  %v5110 = vand.u32 %v1196, 4294901760
  %v5111 = vsub.f32 %v1196, %v5110
  %v5112 = vand.u32 %v5111, 4294901760
  %5113 = vmatpush.msra.mxu0 %v5112
  %v5114 = vand.u32 %v1192, 4294901760
  %v5115 = vsub.f32 %v1192, %v5114
  %v5116 = vand.u32 %v5115, 4294901760
  %5117 = vmatpush.msra.mxu0 %v5116
  %v5118 = vand.u32 %v1188, 4294901760
  %v5119 = vsub.f32 %v1188, %v5118
  %v5120 = vand.u32 %v5119, 4294901760
  %5121 = vmatpush.msra.mxu0 %v5120
  %v5122 = vand.u32 %v124, 4294901760
  %5123 = vmatmul.f32.gmra.mxu0 %v5122
  %v5124 = vpop.f32.mrf.mxu0
  %v5125 = vadd.f32 %v5014, %v5124
  %v5126 = vand.u32 %v408, 4294901760
  %5127 = vmatmul.f32.gmra.mxu0 %v5126
  %v5128 = vpop.f32.mrf.mxu0
  %v5129 = vadd.f32 %v5020, %v5128
  %v5130 = vand.u32 %v532, 4294901760
  %5131 = vmatmul.f32.gmra.mxu0 %v5130
  %v5132 = vpop.f32.mrf.mxu0
  %v5133 = vadd.f32 %v5026, %v5132
  %v5134 = vand.u32 %v656, 4294901760
  %5135 = vmatmul.f32.gmra.mxu0 %v5134
  %v5136 = vpop.f32.mrf.mxu0
  %v5137 = vadd.f32 %v5032, %v5136
  %v5138 = vand.u32 %v780, 4294901760
  %5139 = vmatmul.f32.gmra.mxu0 %v5138
  %v5140 = vpop.f32.mrf.mxu0
  %v5141 = vadd.f32 %v5038, %v5140
  %v5142 = vand.u32 %v904, 4294901760
  %5143 = vmatmul.f32.gmra.mxu0 %v5142
  %v5144 = vpop.f32.mrf.mxu0
  %v5145 = vadd.f32 %v5044, %v5144
  %v5146 = vand.u32 %v1028, 4294901760
  %5147 = vmatmul.f32.gmra.mxu0 %v5146
  %v5148 = vpop.f32.mrf.mxu0
  %v5149 = vadd.f32 %v5050, %v5148
  %v5150 = vand.u32 %v1152, 4294901760
  %5151 = vmatmul.f32.gmra.mxu0 %v5150
  %v5152 = vpop.f32.mrf.mxu0
  %v5153 = vadd.f32 %v5056, %v5152
  %5154 = vdwg.mxu0
  %v5155 = vand.u32 %v1248, 4294901760
  %5156 = vmatpush.msra.mxu0 %v5155
  %v5157 = vand.u32 %v1244, 4294901760
  %5158 = vmatpush.msra.mxu0 %v5157
  %v5159 = vand.u32 %v1240, 4294901760
  %5160 = vmatpush.msra.mxu0 %v5159
  %v5161 = vand.u32 %v1236, 4294901760
  %5162 = vmatpush.msra.mxu0 %v5161
  %v5163 = vand.u32 %v1232, 4294901760
  %5164 = vmatpush.msra.mxu0 %v5163
  %v5165 = vand.u32 %v1228, 4294901760
  %5166 = vmatpush.msra.mxu0 %v5165
  %v5167 = vand.u32 %v1224, 4294901760
  %5168 = vmatpush.msra.mxu0 %v5167
  %v5169 = vand.u32 %v1220, 4294901760
  %5170 = vmatpush.msra.mxu0 %v5169
  %v5171 = vand.u32 %v1216, 4294901760
  %5172 = vmatpush.msra.mxu0 %v5171
  %v5173 = vand.u32 %v1212, 4294901760
  %5174 = vmatpush.msra.mxu0 %v5173
  %v5175 = vand.u32 %v1208, 4294901760
  %5176 = vmatpush.msra.mxu0 %v5175
  %v5177 = vand.u32 %v1204, 4294901760
  %5178 = vmatpush.msra.mxu0 %v5177
  %v5179 = vand.u32 %v1200, 4294901760
  %5180 = vmatpush.msra.mxu0 %v5179
  %v5181 = vand.u32 %v1196, 4294901760
  %5182 = vmatpush.msra.mxu0 %v5181
  %v5183 = vand.u32 %v1192, 4294901760
  %5184 = vmatpush.msra.mxu0 %v5183
  %v5185 = vand.u32 %v1188, 4294901760
  %5186 = vmatpush.msra.mxu0 %v5185
  %v5187 = vand.u32 %v124, 4294901760
  %5188 = vmatmul.f32.gmra.mxu0 %v5187
  %v5189 = vpop.f32.mrf.mxu0
  %v5190 = vadd.f32 %v5125, %v5189
  %v5191 = vand.u32 %v408, 4294901760
  %5192 = vmatmul.f32.gmra.mxu0 %v5191
  %v5193 = vpop.f32.mrf.mxu0
  %v5194 = vadd.f32 %v5129, %v5193
  %v5195 = vand.u32 %v532, 4294901760
  %5196 = vmatmul.f32.gmra.mxu0 %v5195
  %v5197 = vpop.f32.mrf.mxu0
  %v5198 = vadd.f32 %v5133, %v5197
  %v5199 = vand.u32 %v656, 4294901760
  %5200 = vmatmul.f32.gmra.mxu0 %v5199
  %v5201 = vpop.f32.mrf.mxu0
  %v5202 = vadd.f32 %v5137, %v5201
  %v5203 = vand.u32 %v780, 4294901760
  %5204 = vmatmul.f32.gmra.mxu0 %v5203
  %v5205 = vpop.f32.mrf.mxu0
  %v5206 = vadd.f32 %v5141, %v5205
  %v5207 = vand.u32 %v904, 4294901760
  %5208 = vmatmul.f32.gmra.mxu0 %v5207
  %v5209 = vpop.f32.mrf.mxu0
  %v5210 = vadd.f32 %v5145, %v5209
  %v5211 = vand.u32 %v1028, 4294901760
  %5212 = vmatmul.f32.gmra.mxu0 %v5211
  %v5213 = vpop.f32.mrf.mxu0
  %v5214 = vadd.f32 %v5149, %v5213
  %v5215 = vand.u32 %v1152, 4294901760
  %5216 = vmatmul.f32.gmra.mxu0 %v5215
  %v5217 = vpop.f32.mrf.mxu0
  %v5218 = vadd.f32 %v5153, %v5217
  %5219 = vdwg.mxu0
  %v5220 = vand.u32 %v1249, 4294901760
  %5221 = vmatpush.msra.mxu0 %v5220
  %v5222 = vand.u32 %v1245, 4294901760
  %5223 = vmatpush.msra.mxu0 %v5222
  %v5224 = vand.u32 %v1241, 4294901760
  %5225 = vmatpush.msra.mxu0 %v5224
  %v5226 = vand.u32 %v1237, 4294901760
  %5227 = vmatpush.msra.mxu0 %v5226
  %v5228 = vand.u32 %v1233, 4294901760
  %5229 = vmatpush.msra.mxu0 %v5228
  %v5230 = vand.u32 %v1229, 4294901760
  %5231 = vmatpush.msra.mxu0 %v5230
  %v5232 = vand.u32 %v1225, 4294901760
  %5233 = vmatpush.msra.mxu0 %v5232
  %v5234 = vand.u32 %v1221, 4294901760
  %5235 = vmatpush.msra.mxu0 %v5234
  %v5236 = vand.u32 %v1217, 4294901760
  %5237 = vmatpush.msra.mxu0 %v5236
  %v5238 = vand.u32 %v1213, 4294901760
  %5239 = vmatpush.msra.mxu0 %v5238
  %v5240 = vand.u32 %v1209, 4294901760
  %5241 = vmatpush.msra.mxu0 %v5240
  %v5242 = vand.u32 %v1205, 4294901760
  %5243 = vmatpush.msra.mxu0 %v5242
  %v5244 = vand.u32 %v1201, 4294901760
  %5245 = vmatpush.msra.mxu0 %v5244
  %v5246 = vand.u32 %v1197, 4294901760
  %5247 = vmatpush.msra.mxu0 %v5246
  %v5248 = vand.u32 %v1193, 4294901760
  %5249 = vmatpush.msra.mxu0 %v5248
  %v5250 = vand.u32 %v1189, 4294901760
  %5251 = vmatpush.msra.mxu0 %v5250
  %v5252 = vand.u32 %v124, 4294901760
  %v5253 = vsub.f32 %v124, %v5252
  %v5254 = vand.u32 %v5253, 4294901760
  %v5255 = vsub.f32 %v5253, %v5254
  %v5256 = vand.u32 %v5255, 4294901760
  %5257 = vmatmul.f32.gmra.mxu0 %v5256
  %v5258 = vpop.f32.mrf.mxu0
  %v5259 = vadd.f32 %v3516, %v5258
  %v5260 = vand.u32 %v408, 4294901760
  %v5261 = vsub.f32 %v408, %v5260
  %v5262 = vand.u32 %v5261, 4294901760
  %v5263 = vsub.f32 %v5261, %v5262
  %v5264 = vand.u32 %v5263, 4294901760
  %5265 = vmatmul.f32.gmra.mxu0 %v5264
  %v5266 = vpop.f32.mrf.mxu0
  %v5267 = vadd.f32 %v3520, %v5266
  %v5268 = vand.u32 %v532, 4294901760
  %v5269 = vsub.f32 %v532, %v5268
  %v5270 = vand.u32 %v5269, 4294901760
  %v5271 = vsub.f32 %v5269, %v5270
  %v5272 = vand.u32 %v5271, 4294901760
  %5273 = vmatmul.f32.gmra.mxu0 %v5272
  %v5274 = vpop.f32.mrf.mxu0
  %v5275 = vadd.f32 %v3524, %v5274
  %v5276 = vand.u32 %v656, 4294901760
  %v5277 = vsub.f32 %v656, %v5276
  %v5278 = vand.u32 %v5277, 4294901760
  %v5279 = vsub.f32 %v5277, %v5278
  %v5280 = vand.u32 %v5279, 4294901760
  %5281 = vmatmul.f32.gmra.mxu0 %v5280
  %v5282 = vpop.f32.mrf.mxu0
  %v5283 = vadd.f32 %v3528, %v5282
  %v5284 = vand.u32 %v780, 4294901760
  %v5285 = vsub.f32 %v780, %v5284
  %v5286 = vand.u32 %v5285, 4294901760
  %v5287 = vsub.f32 %v5285, %v5286
  %v5288 = vand.u32 %v5287, 4294901760
  %5289 = vmatmul.f32.gmra.mxu0 %v5288
  %v5290 = vpop.f32.mrf.mxu0
  %v5291 = vadd.f32 %v3532, %v5290
  %v5292 = vand.u32 %v904, 4294901760
  %v5293 = vsub.f32 %v904, %v5292
  %v5294 = vand.u32 %v5293, 4294901760
  %v5295 = vsub.f32 %v5293, %v5294
  %v5296 = vand.u32 %v5295, 4294901760
  %5297 = vmatmul.f32.gmra.mxu0 %v5296
  %v5298 = vpop.f32.mrf.mxu0
  %v5299 = vadd.f32 %v3536, %v5298
  %v5300 = vand.u32 %v1028, 4294901760
  %v5301 = vsub.f32 %v1028, %v5300
  %v5302 = vand.u32 %v5301, 4294901760
  %v5303 = vsub.f32 %v5301, %v5302
  %v5304 = vand.u32 %v5303, 4294901760
  %5305 = vmatmul.f32.gmra.mxu0 %v5304
  %v5306 = vpop.f32.mrf.mxu0
  %v5307 = vadd.f32 %v3540, %v5306
  %v5308 = vand.u32 %v1152, 4294901760
  %v5309 = vsub.f32 %v1152, %v5308
  %v5310 = vand.u32 %v5309, 4294901760
  %v5311 = vsub.f32 %v5309, %v5310
  %v5312 = vand.u32 %v5311, 4294901760
  %5313 = vmatmul.f32.gmra.mxu0 %v5312
  %v5314 = vpop.f32.mrf.mxu0
  %v5315 = vadd.f32 %v3544, %v5314
  %5316 = vdwg.mxu0
  %v5317 = vand.u32 %v1249, 4294901760
  %v5318 = vsub.f32 %v1249, %v5317
  %v5319 = vand.u32 %v5318, 4294901760
  %v5320 = vsub.f32 %v5318, %v5319
  %v5321 = vand.u32 %v5320, 4294901760
  %5322 = vmatpush.msra.mxu0 %v5321
  %v5323 = vand.u32 %v1245, 4294901760
  %v5324 = vsub.f32 %v1245, %v5323
  %v5325 = vand.u32 %v5324, 4294901760
  %v5326 = vsub.f32 %v5324, %v5325
  %v5327 = vand.u32 %v5326, 4294901760
  %5328 = vmatpush.msra.mxu0 %v5327
  %v5329 = vand.u32 %v1241, 4294901760
  %v5330 = vsub.f32 %v1241, %v5329
  %v5331 = vand.u32 %v5330, 4294901760
  %v5332 = vsub.f32 %v5330, %v5331
  %v5333 = vand.u32 %v5332, 4294901760
  %5334 = vmatpush.msra.mxu0 %v5333
  %v5335 = vand.u32 %v1237, 4294901760
  %v5336 = vsub.f32 %v1237, %v5335
  %v5337 = vand.u32 %v5336, 4294901760
  %v5338 = vsub.f32 %v5336, %v5337
  %v5339 = vand.u32 %v5338, 4294901760
  %5340 = vmatpush.msra.mxu0 %v5339
  %v5341 = vand.u32 %v1233, 4294901760
  %v5342 = vsub.f32 %v1233, %v5341
  %v5343 = vand.u32 %v5342, 4294901760
  %v5344 = vsub.f32 %v5342, %v5343
  %v5345 = vand.u32 %v5344, 4294901760
  %5346 = vmatpush.msra.mxu0 %v5345
  %v5347 = vand.u32 %v1229, 4294901760
  %v5348 = vsub.f32 %v1229, %v5347
  %v5349 = vand.u32 %v5348, 4294901760
  %v5350 = vsub.f32 %v5348, %v5349
  %v5351 = vand.u32 %v5350, 4294901760
  %5352 = vmatpush.msra.mxu0 %v5351
  %v5353 = vand.u32 %v1225, 4294901760
  %v5354 = vsub.f32 %v1225, %v5353
  %v5355 = vand.u32 %v5354, 4294901760
  %v5356 = vsub.f32 %v5354, %v5355
  %v5357 = vand.u32 %v5356, 4294901760
  %5358 = vmatpush.msra.mxu0 %v5357
  %v5359 = vand.u32 %v1221, 4294901760
  %v5360 = vsub.f32 %v1221, %v5359
  %v5361 = vand.u32 %v5360, 4294901760
  %v5362 = vsub.f32 %v5360, %v5361
  %v5363 = vand.u32 %v5362, 4294901760
  %5364 = vmatpush.msra.mxu0 %v5363
  %v5365 = vand.u32 %v1217, 4294901760
  %v5366 = vsub.f32 %v1217, %v5365
  %v5367 = vand.u32 %v5366, 4294901760
  %v5368 = vsub.f32 %v5366, %v5367
  %v5369 = vand.u32 %v5368, 4294901760
  %5370 = vmatpush.msra.mxu0 %v5369
  %v5371 = vand.u32 %v1213, 4294901760
  %v5372 = vsub.f32 %v1213, %v5371
  %v5373 = vand.u32 %v5372, 4294901760
  %v5374 = vsub.f32 %v5372, %v5373
  %v5375 = vand.u32 %v5374, 4294901760
  %5376 = vmatpush.msra.mxu0 %v5375
  %v5377 = vand.u32 %v1209, 4294901760
  %v5378 = vsub.f32 %v1209, %v5377
  %v5379 = vand.u32 %v5378, 4294901760
  %v5380 = vsub.f32 %v5378, %v5379
  %v5381 = vand.u32 %v5380, 4294901760
  %5382 = vmatpush.msra.mxu0 %v5381
  %v5383 = vand.u32 %v1205, 4294901760
  %v5384 = vsub.f32 %v1205, %v5383
  %v5385 = vand.u32 %v5384, 4294901760
  %v5386 = vsub.f32 %v5384, %v5385
  %v5387 = vand.u32 %v5386, 4294901760
  %5388 = vmatpush.msra.mxu0 %v5387
  %v5389 = vand.u32 %v1201, 4294901760
  %v5390 = vsub.f32 %v1201, %v5389
  %v5391 = vand.u32 %v5390, 4294901760
  %v5392 = vsub.f32 %v5390, %v5391
  %v5393 = vand.u32 %v5392, 4294901760
  %5394 = vmatpush.msra.mxu0 %v5393
  %v5395 = vand.u32 %v1197, 4294901760
  %v5396 = vsub.f32 %v1197, %v5395
  %v5397 = vand.u32 %v5396, 4294901760
  %v5398 = vsub.f32 %v5396, %v5397
  %v5399 = vand.u32 %v5398, 4294901760
  %5400 = vmatpush.msra.mxu0 %v5399
  %v5401 = vand.u32 %v1193, 4294901760
  %v5402 = vsub.f32 %v1193, %v5401
  %v5403 = vand.u32 %v5402, 4294901760
  %v5404 = vsub.f32 %v5402, %v5403
  %v5405 = vand.u32 %v5404, 4294901760
  %5406 = vmatpush.msra.mxu0 %v5405
  %v5407 = vand.u32 %v1189, 4294901760
  %v5408 = vsub.f32 %v1189, %v5407
  %v5409 = vand.u32 %v5408, 4294901760
  %v5410 = vsub.f32 %v5408, %v5409
  %v5411 = vand.u32 %v5410, 4294901760
  %5412 = vmatpush.msra.mxu0 %v5411
  %v5413 = vand.u32 %v124, 4294901760
  %5414 = vmatmul.f32.gmra.mxu0 %v5413
  %v5415 = vpop.f32.mrf.mxu0
  %v5416 = vadd.f32 %v5259, %v5415
  %v5417 = vand.u32 %v408, 4294901760
  %5418 = vmatmul.f32.gmra.mxu0 %v5417
  %v5419 = vpop.f32.mrf.mxu0
  %v5420 = vadd.f32 %v5267, %v5419
  %v5421 = vand.u32 %v532, 4294901760
  %5422 = vmatmul.f32.gmra.mxu0 %v5421
  %v5423 = vpop.f32.mrf.mxu0
  %v5424 = vadd.f32 %v5275, %v5423
  %v5425 = vand.u32 %v656, 4294901760
  %5426 = vmatmul.f32.gmra.mxu0 %v5425
  %v5427 = vpop.f32.mrf.mxu0
  %v5428 = vadd.f32 %v5283, %v5427
  %v5429 = vand.u32 %v780, 4294901760
  %5430 = vmatmul.f32.gmra.mxu0 %v5429
  %v5431 = vpop.f32.mrf.mxu0
  %v5432 = vadd.f32 %v5291, %v5431
  %v5433 = vand.u32 %v904, 4294901760
  %5434 = vmatmul.f32.gmra.mxu0 %v5433
  %v5435 = vpop.f32.mrf.mxu0
  %v5436 = vadd.f32 %v5299, %v5435
  %v5437 = vand.u32 %v1028, 4294901760
  %5438 = vmatmul.f32.gmra.mxu0 %v5437
  %v5439 = vpop.f32.mrf.mxu0
  %v5440 = vadd.f32 %v5307, %v5439
  %v5441 = vand.u32 %v1152, 4294901760
  %5442 = vmatmul.f32.gmra.mxu0 %v5441
  %v5443 = vpop.f32.mrf.mxu0
  %v5444 = vadd.f32 %v5315, %v5443
  %5445 = vdwg.mxu0
  %v5446 = vand.u32 %v1249, 4294901760
  %v5447 = vsub.f32 %v1249, %v5446
  %5448 = vmatpush.msra.mxu0 %v5447
  %v5449 = vand.u32 %v1245, 4294901760
  %v5450 = vsub.f32 %v1245, %v5449
  %5451 = vmatpush.msra.mxu0 %v5450
  %v5452 = vand.u32 %v1241, 4294901760
  %v5453 = vsub.f32 %v1241, %v5452
  %5454 = vmatpush.msra.mxu0 %v5453
  %v5455 = vand.u32 %v1237, 4294901760
  %v5456 = vsub.f32 %v1237, %v5455
  %5457 = vmatpush.msra.mxu0 %v5456
  %v5458 = vand.u32 %v1233, 4294901760
  %v5459 = vsub.f32 %v1233, %v5458
  %5460 = vmatpush.msra.mxu0 %v5459
  %v5461 = vand.u32 %v1229, 4294901760
  %v5462 = vsub.f32 %v1229, %v5461
  %5463 = vmatpush.msra.mxu0 %v5462
  %v5464 = vand.u32 %v1225, 4294901760
  %v5465 = vsub.f32 %v1225, %v5464
  %5466 = vmatpush.msra.mxu0 %v5465
  %v5467 = vand.u32 %v1221, 4294901760
  %v5468 = vsub.f32 %v1221, %v5467
  %5469 = vmatpush.msra.mxu0 %v5468
  %v5470 = vand.u32 %v1217, 4294901760
  %v5471 = vsub.f32 %v1217, %v5470
  %5472 = vmatpush.msra.mxu0 %v5471
  %v5473 = vand.u32 %v1213, 4294901760
  %v5474 = vsub.f32 %v1213, %v5473
  %5475 = vmatpush.msra.mxu0 %v5474
  %v5476 = vand.u32 %v1209, 4294901760
  %v5477 = vsub.f32 %v1209, %v5476
  %5478 = vmatpush.msra.mxu0 %v5477
  %v5479 = vand.u32 %v1205, 4294901760
  %v5480 = vsub.f32 %v1205, %v5479
  %5481 = vmatpush.msra.mxu0 %v5480
  %v5482 = vand.u32 %v1201, 4294901760
  %v5483 = vsub.f32 %v1201, %v5482
  %5484 = vmatpush.msra.mxu0 %v5483
  %v5485 = vand.u32 %v1197, 4294901760
  %v5486 = vsub.f32 %v1197, %v5485
  %5487 = vmatpush.msra.mxu0 %v5486
  %v5488 = vand.u32 %v1193, 4294901760
  %v5489 = vsub.f32 %v1193, %v5488
  %5490 = vmatpush.msra.mxu0 %v5489
  %v5491 = vand.u32 %v1189, 4294901760
  %v5492 = vsub.f32 %v1189, %v5491
  %5493 = vmatpush.msra.mxu0 %v5492
  %v5494 = vand.u32 %v124, 4294901760
  %v5495 = vsub.f32 %v124, %v5494
  %5496 = vmatmul.f32.gmra.mxu0 %v5495
  %v5497 = vpop.f32.mrf.mxu0
  %v5498 = vadd.f32 %v5416, %v5497
  %v5499 = vand.u32 %v408, 4294901760
  %v5500 = vsub.f32 %v408, %v5499
  %5501 = vmatmul.f32.gmra.mxu0 %v5500
  %v5502 = vpop.f32.mrf.mxu0
  %v5503 = vadd.f32 %v5420, %v5502
  %v5504 = vand.u32 %v532, 4294901760
  %v5505 = vsub.f32 %v532, %v5504
  %5506 = vmatmul.f32.gmra.mxu0 %v5505
  %v5507 = vpop.f32.mrf.mxu0
  %v5508 = vadd.f32 %v5424, %v5507
  %v5509 = vand.u32 %v656, 4294901760
  %v5510 = vsub.f32 %v656, %v5509
  %5511 = vmatmul.f32.gmra.mxu0 %v5510
  %v5512 = vpop.f32.mrf.mxu0
  %v5513 = vadd.f32 %v5428, %v5512
  %v5514 = vand.u32 %v780, 4294901760
  %v5515 = vsub.f32 %v780, %v5514
  %5516 = vmatmul.f32.gmra.mxu0 %v5515
  %v5517 = vpop.f32.mrf.mxu0
  %v5518 = vadd.f32 %v5432, %v5517
  %v5519 = vand.u32 %v904, 4294901760
  %v5520 = vsub.f32 %v904, %v5519
  %5521 = vmatmul.f32.gmra.mxu0 %v5520
  %v5522 = vpop.f32.mrf.mxu0
  %v5523 = vadd.f32 %v5436, %v5522
  %v5524 = vand.u32 %v1028, 4294901760
  %v5525 = vsub.f32 %v1028, %v5524
  %5526 = vmatmul.f32.gmra.mxu0 %v5525
  %v5527 = vpop.f32.mrf.mxu0
  %v5528 = vadd.f32 %v5440, %v5527
  %v5529 = vand.u32 %v1152, 4294901760
  %v5530 = vsub.f32 %v1152, %v5529
  %5531 = vmatmul.f32.gmra.mxu0 %v5530
  %v5532 = vpop.f32.mrf.mxu0
  %v5533 = vadd.f32 %v5444, %v5532
  %5534 = vdwg.mxu0
  %v5535 = vand.u32 %v1249, 4294901760
  %5536 = vmatpush.msra.mxu0 %v5535
  %v5537 = vand.u32 %v1245, 4294901760
  %5538 = vmatpush.msra.mxu0 %v5537
  %v5539 = vand.u32 %v1241, 4294901760
  %5540 = vmatpush.msra.mxu0 %v5539
  %v5541 = vand.u32 %v1237, 4294901760
  %5542 = vmatpush.msra.mxu0 %v5541
  %v5543 = vand.u32 %v1233, 4294901760
  %5544 = vmatpush.msra.mxu0 %v5543
  %v5545 = vand.u32 %v1229, 4294901760
  %5546 = vmatpush.msra.mxu0 %v5545
  %v5547 = vand.u32 %v1225, 4294901760
  %5548 = vmatpush.msra.mxu0 %v5547
  %v5549 = vand.u32 %v1221, 4294901760
  %5550 = vmatpush.msra.mxu0 %v5549
  %v5551 = vand.u32 %v1217, 4294901760
  %5552 = vmatpush.msra.mxu0 %v5551
  %v5553 = vand.u32 %v1213, 4294901760
  %5554 = vmatpush.msra.mxu0 %v5553
  %v5555 = vand.u32 %v1209, 4294901760
  %5556 = vmatpush.msra.mxu0 %v5555
  %v5557 = vand.u32 %v1205, 4294901760
  %5558 = vmatpush.msra.mxu0 %v5557
  %v5559 = vand.u32 %v1201, 4294901760
  %5560 = vmatpush.msra.mxu0 %v5559
  %v5561 = vand.u32 %v1197, 4294901760
  %5562 = vmatpush.msra.mxu0 %v5561
  %v5563 = vand.u32 %v1193, 4294901760
  %5564 = vmatpush.msra.mxu0 %v5563
  %v5565 = vand.u32 %v1189, 4294901760
  %5566 = vmatpush.msra.mxu0 %v5565
  %v5567 = vand.u32 %v124, 4294901760
  %v5568 = vsub.f32 %v124, %v5567
  %v5569 = vand.u32 %v5568, 4294901760
  %5570 = vmatmul.f32.gmra.mxu0 %v5569
  %v5571 = vpop.f32.mrf.mxu0
  %v5572 = vadd.f32 %v5498, %v5571
  %v5573 = vand.u32 %v408, 4294901760
  %v5574 = vsub.f32 %v408, %v5573
  %v5575 = vand.u32 %v5574, 4294901760
  %5576 = vmatmul.f32.gmra.mxu0 %v5575
  %v5577 = vpop.f32.mrf.mxu0
  %v5578 = vadd.f32 %v5503, %v5577
  %v5579 = vand.u32 %v532, 4294901760
  %v5580 = vsub.f32 %v532, %v5579
  %v5581 = vand.u32 %v5580, 4294901760
  %5582 = vmatmul.f32.gmra.mxu0 %v5581
  %v5583 = vpop.f32.mrf.mxu0
  %v5584 = vadd.f32 %v5508, %v5583
  %v5585 = vand.u32 %v656, 4294901760
  %v5586 = vsub.f32 %v656, %v5585
  %v5587 = vand.u32 %v5586, 4294901760
  %5588 = vmatmul.f32.gmra.mxu0 %v5587
  %v5589 = vpop.f32.mrf.mxu0
  %v5590 = vadd.f32 %v5513, %v5589
  %v5591 = vand.u32 %v780, 4294901760
  %v5592 = vsub.f32 %v780, %v5591
  %v5593 = vand.u32 %v5592, 4294901760
  %5594 = vmatmul.f32.gmra.mxu0 %v5593
  %v5595 = vpop.f32.mrf.mxu0
  %v5596 = vadd.f32 %v5518, %v5595
  %v5597 = vand.u32 %v904, 4294901760
  %v5598 = vsub.f32 %v904, %v5597
  %v5599 = vand.u32 %v5598, 4294901760
  %5600 = vmatmul.f32.gmra.mxu0 %v5599
  %v5601 = vpop.f32.mrf.mxu0
  %v5602 = vadd.f32 %v5523, %v5601
  %v5603 = vand.u32 %v1028, 4294901760
  %v5604 = vsub.f32 %v1028, %v5603
  %v5605 = vand.u32 %v5604, 4294901760
  %5606 = vmatmul.f32.gmra.mxu0 %v5605
  %v5607 = vpop.f32.mrf.mxu0
  %v5608 = vadd.f32 %v5528, %v5607
  %v5609 = vand.u32 %v1152, 4294901760
  %v5610 = vsub.f32 %v1152, %v5609
  %v5611 = vand.u32 %v5610, 4294901760
  %5612 = vmatmul.f32.gmra.mxu0 %v5611
  %v5613 = vpop.f32.mrf.mxu0
  %v5614 = vadd.f32 %v5533, %v5613
  %5615 = vdwg.mxu0
  %v5616 = vand.u32 %v1249, 4294901760
  %v5617 = vsub.f32 %v1249, %v5616
  %v5618 = vand.u32 %v5617, 4294901760
  %5619 = vmatpush.msra.mxu0 %v5618
  %v5620 = vand.u32 %v1245, 4294901760
  %v5621 = vsub.f32 %v1245, %v5620
  %v5622 = vand.u32 %v5621, 4294901760
  %5623 = vmatpush.msra.mxu0 %v5622
  %v5624 = vand.u32 %v1241, 4294901760
  %v5625 = vsub.f32 %v1241, %v5624
  %v5626 = vand.u32 %v5625, 4294901760
  %5627 = vmatpush.msra.mxu0 %v5626
  %v5628 = vand.u32 %v1237, 4294901760
  %v5629 = vsub.f32 %v1237, %v5628
  %v5630 = vand.u32 %v5629, 4294901760
  %5631 = vmatpush.msra.mxu0 %v5630
  %v5632 = vand.u32 %v1233, 4294901760
  %v5633 = vsub.f32 %v1233, %v5632
  %v5634 = vand.u32 %v5633, 4294901760
  %5635 = vmatpush.msra.mxu0 %v5634
  %v5636 = vand.u32 %v1229, 4294901760
  %v5637 = vsub.f32 %v1229, %v5636
  %v5638 = vand.u32 %v5637, 4294901760
  %5639 = vmatpush.msra.mxu0 %v5638
  %v5640 = vand.u32 %v1225, 4294901760
  %v5641 = vsub.f32 %v1225, %v5640
  %v5642 = vand.u32 %v5641, 4294901760
  %5643 = vmatpush.msra.mxu0 %v5642
  %v5644 = vand.u32 %v1221, 4294901760
  %v5645 = vsub.f32 %v1221, %v5644
  %v5646 = vand.u32 %v5645, 4294901760
  %5647 = vmatpush.msra.mxu0 %v5646
  %v5648 = vand.u32 %v1217, 4294901760
  %v5649 = vsub.f32 %v1217, %v5648
  %v5650 = vand.u32 %v5649, 4294901760
  %5651 = vmatpush.msra.mxu0 %v5650
  %v5652 = vand.u32 %v1213, 4294901760
  %v5653 = vsub.f32 %v1213, %v5652
  %v5654 = vand.u32 %v5653, 4294901760
  %5655 = vmatpush.msra.mxu0 %v5654
  %v5656 = vand.u32 %v1209, 4294901760
  %v5657 = vsub.f32 %v1209, %v5656
  %v5658 = vand.u32 %v5657, 4294901760
  %5659 = vmatpush.msra.mxu0 %v5658
  %v5660 = vand.u32 %v1205, 4294901760
  %v5661 = vsub.f32 %v1205, %v5660
  %v5662 = vand.u32 %v5661, 4294901760
  %5663 = vmatpush.msra.mxu0 %v5662
  %v5664 = vand.u32 %v1201, 4294901760
  %v5665 = vsub.f32 %v1201, %v5664
  %v5666 = vand.u32 %v5665, 4294901760
  %5667 = vmatpush.msra.mxu0 %v5666
  %v5668 = vand.u32 %v1197, 4294901760
  %v5669 = vsub.f32 %v1197, %v5668
  %v5670 = vand.u32 %v5669, 4294901760
  %5671 = vmatpush.msra.mxu0 %v5670
  %v5672 = vand.u32 %v1193, 4294901760
  %v5673 = vsub.f32 %v1193, %v5672
  %v5674 = vand.u32 %v5673, 4294901760
  %5675 = vmatpush.msra.mxu0 %v5674
  %v5676 = vand.u32 %v1189, 4294901760
  %v5677 = vsub.f32 %v1189, %v5676
  %v5678 = vand.u32 %v5677, 4294901760
  %5679 = vmatpush.msra.mxu0 %v5678
  %v5680 = vand.u32 %v124, 4294901760
  %5681 = vmatmul.f32.gmra.mxu0 %v5680
  %v5682 = vpop.f32.mrf.mxu0
  %v5683 = vadd.f32 %v5572, %v5682
  %v5684 = vand.u32 %v408, 4294901760
  %5685 = vmatmul.f32.gmra.mxu0 %v5684
  %v5686 = vpop.f32.mrf.mxu0
  %v5687 = vadd.f32 %v5578, %v5686
  %v5688 = vand.u32 %v532, 4294901760
  %5689 = vmatmul.f32.gmra.mxu0 %v5688
  %v5690 = vpop.f32.mrf.mxu0
  %v5691 = vadd.f32 %v5584, %v5690
  %v5692 = vand.u32 %v656, 4294901760
  %5693 = vmatmul.f32.gmra.mxu0 %v5692
  %v5694 = vpop.f32.mrf.mxu0
  %v5695 = vadd.f32 %v5590, %v5694
  %v5696 = vand.u32 %v780, 4294901760
  %5697 = vmatmul.f32.gmra.mxu0 %v5696
  %v5698 = vpop.f32.mrf.mxu0
  %v5699 = vadd.f32 %v5596, %v5698
  %v5700 = vand.u32 %v904, 4294901760
  %5701 = vmatmul.f32.gmra.mxu0 %v5700
  %v5702 = vpop.f32.mrf.mxu0
  %v5703 = vadd.f32 %v5602, %v5702
  %v5704 = vand.u32 %v1028, 4294901760
  %5705 = vmatmul.f32.gmra.mxu0 %v5704
  %v5706 = vpop.f32.mrf.mxu0
  %v5707 = vadd.f32 %v5608, %v5706
  %v5708 = vand.u32 %v1152, 4294901760
  %5709 = vmatmul.f32.gmra.mxu0 %v5708
  %v5710 = vpop.f32.mrf.mxu0
  %v5711 = vadd.f32 %v5614, %v5710
  %5712 = vdwg.mxu0
  %v5713 = vand.u32 %v1249, 4294901760
  %5714 = vmatpush.msra.mxu0 %v5713
  %v5715 = vand.u32 %v1245, 4294901760
  %5716 = vmatpush.msra.mxu0 %v5715
  %v5717 = vand.u32 %v1241, 4294901760
  %5718 = vmatpush.msra.mxu0 %v5717
  %v5719 = vand.u32 %v1237, 4294901760
  %5720 = vmatpush.msra.mxu0 %v5719
  %v5721 = vand.u32 %v1233, 4294901760
  %5722 = vmatpush.msra.mxu0 %v5721
  %v5723 = vand.u32 %v1229, 4294901760
  %5724 = vmatpush.msra.mxu0 %v5723
  %v5725 = vand.u32 %v1225, 4294901760
  %5726 = vmatpush.msra.mxu0 %v5725
  %v5727 = vand.u32 %v1221, 4294901760
  %5728 = vmatpush.msra.mxu0 %v5727
  %v5729 = vand.u32 %v1217, 4294901760
  %5730 = vmatpush.msra.mxu0 %v5729
  %v5731 = vand.u32 %v1213, 4294901760
  %5732 = vmatpush.msra.mxu0 %v5731
  %v5733 = vand.u32 %v1209, 4294901760
  %5734 = vmatpush.msra.mxu0 %v5733
  %v5735 = vand.u32 %v1205, 4294901760
  %5736 = vmatpush.msra.mxu0 %v5735
  %v5737 = vand.u32 %v1201, 4294901760
  %5738 = vmatpush.msra.mxu0 %v5737
  %v5739 = vand.u32 %v1197, 4294901760
  %5740 = vmatpush.msra.mxu0 %v5739
  %v5741 = vand.u32 %v1193, 4294901760
  %5742 = vmatpush.msra.mxu0 %v5741
  %v5743 = vand.u32 %v1189, 4294901760
  %5744 = vmatpush.msra.mxu0 %v5743
  %v5745 = vand.u32 %v124, 4294901760
  %5746 = vmatmul.f32.gmra.mxu0 %v5745
  %v5747 = vpop.f32.mrf.mxu0
  %v5748 = vadd.f32 %v5683, %v5747
  %v5749 = vand.u32 %v408, 4294901760
  %5750 = vmatmul.f32.gmra.mxu0 %v5749
  %v5751 = vpop.f32.mrf.mxu0
  %v5752 = vadd.f32 %v5687, %v5751
  %v5753 = vand.u32 %v532, 4294901760
  %5754 = vmatmul.f32.gmra.mxu0 %v5753
  %v5755 = vpop.f32.mrf.mxu0
  %v5756 = vadd.f32 %v5691, %v5755
  %v5757 = vand.u32 %v656, 4294901760
  %5758 = vmatmul.f32.gmra.mxu0 %v5757
  %v5759 = vpop.f32.mrf.mxu0
  %v5760 = vadd.f32 %v5695, %v5759
  %v5761 = vand.u32 %v780, 4294901760
  %5762 = vmatmul.f32.gmra.mxu0 %v5761
  %v5763 = vpop.f32.mrf.mxu0
  %v5764 = vadd.f32 %v5699, %v5763
  %v5765 = vand.u32 %v904, 4294901760
  %5766 = vmatmul.f32.gmra.mxu0 %v5765
  %v5767 = vpop.f32.mrf.mxu0
  %v5768 = vadd.f32 %v5703, %v5767
  %v5769 = vand.u32 %v1028, 4294901760
  %5770 = vmatmul.f32.gmra.mxu0 %v5769
  %v5771 = vpop.f32.mrf.mxu0
  %v5772 = vadd.f32 %v5707, %v5771
  %v5773 = vand.u32 %v1152, 4294901760
  %5774 = vmatmul.f32.gmra.mxu0 %v5773
  %v5775 = vpop.f32.mrf.mxu0
  %v5776 = vadd.f32 %v5711, %v5775
  %5777 = vdwg.mxu0
  %v5778 = vld [vmem:[%s4] sm:$0xf]
  %v5780 = vperm.slane %v5778, 0
  %v5781 = vperm.slane %v5778, 1
  %v5782 = vperm.slane %v5778, 2
  %v5783 = vperm.slane %v5778, 3
  %v5788 = vadd.f32 %v4074, %v5780
  %v5789 = vadd.f32 %v4632, %v5781
  %v5790 = vadd.f32 %v5190, %v5782
  %v5791 = vadd.f32 %v5748, %v5783
  %v5792 = vadd.f32 %v4078, %v5780
  %v5793 = vadd.f32 %v4636, %v5781
  %v5794 = vadd.f32 %v5194, %v5782
  %v5795 = vadd.f32 %v5752, %v5783
  %v5796 = vadd.f32 %v4082, %v5780
  %v5797 = vadd.f32 %v4640, %v5781
  %v5798 = vadd.f32 %v5198, %v5782
  %v5799 = vadd.f32 %v5756, %v5783
  %v5800 = vadd.f32 %v4086, %v5780
  %v5801 = vadd.f32 %v4644, %v5781
  %v5802 = vadd.f32 %v5202, %v5782
  %v5803 = vadd.f32 %v5760, %v5783
  %v5804 = vadd.f32 %v4090, %v5780
  %v5805 = vadd.f32 %v4648, %v5781
  %v5806 = vadd.f32 %v5206, %v5782
  %v5807 = vadd.f32 %v5764, %v5783
  %v5808 = vadd.f32 %v4094, %v5780
  %v5809 = vadd.f32 %v4652, %v5781
  %v5810 = vadd.f32 %v5210, %v5782
  %v5811 = vadd.f32 %v5768, %v5783
  %v5812 = vadd.f32 %v4098, %v5780
  %v5813 = vadd.f32 %v4656, %v5781
  %v5814 = vadd.f32 %v5214, %v5782
  %v5815 = vadd.f32 %v5772, %v5783
  %v5816 = vadd.f32 %v4102, %v5780
  %v5817 = vadd.f32 %v4660, %v5781
  %v5818 = vadd.f32 %v5218, %v5782
  %v5819 = vadd.f32 %v5776, %v5783
  %5820 = vst [vmem:[#allocation2] sm:$0xff] %v5788
  %5821 = vst [vmem:[#allocation2 + $0x8] sm:$0xff] %v5789
  %5822 = vst [vmem:[#allocation2 + $0x10] sm:$0xff] %v5790
  %5823 = vst [vmem:[#allocation2 + $0x18] sm:$0xff] %v5791
  %5824 = vst [vmem:[#allocation2 + $0x20] sm:$0xff] %v5792
  %5825 = vst [vmem:[#allocation2 + $0x28] sm:$0xff] %v5793
  %5826 = vst [vmem:[#allocation2 + $0x30] sm:$0xff] %v5794
  %5827 = vst [vmem:[#allocation2 + $0x38] sm:$0xff] %v5795
  %5828 = vst [vmem:[#allocation2 + $0x40] sm:$0xff] %v5796
  %5829 = vst [vmem:[#allocation2 + $0x48] sm:$0xff] %v5797
  %5830 = vst [vmem:[#allocation2 + $0x50] sm:$0xff] %v5798
  %5831 = vst [vmem:[#allocation2 + $0x58] sm:$0xff] %v5799
  %5832 = vst [vmem:[#allocation2 + $0x60] sm:$0xff] %v5800
  %5833 = vst [vmem:[#allocation2 + $0x68] sm:$0xff] %v5801
  %5834 = vst [vmem:[#allocation2 + $0x70] sm:$0xff] %v5802
  %5835 = vst [vmem:[#allocation2 + $0x78] sm:$0xff] %v5803
  %5836 = vst [vmem:[#allocation2 + $0x80] sm:$0xff] %v5804
  %5837 = vst [vmem:[#allocation2 + $0x88] sm:$0xff] %v5805
  %5838 = vst [vmem:[#allocation2 + $0x90] sm:$0xff] %v5806
  %5839 = vst [vmem:[#allocation2 + $0x98] sm:$0xff] %v5807
  %5840 = vst [vmem:[#allocation2 + $0xa0] sm:$0xff] %v5808
  %5841 = vst [vmem:[#allocation2 + $0xa8] sm:$0xff] %v5809
  %5842 = vst [vmem:[#allocation2 + $0xb0] sm:$0xff] %v5810
  %5843 = vst [vmem:[#allocation2 + $0xb8] sm:$0xff] %v5811
  %5844 = vst [vmem:[#allocation2 + $0xc0] sm:$0xff] %v5812
  %5845 = vst [vmem:[#allocation2 + $0xc8] sm:$0xff] %v5813
  %5846 = vst [vmem:[#allocation2 + $0xd0] sm:$0xff] %v5814
  %5847 = vst [vmem:[#allocation2 + $0xd8] sm:$0xff] %v5815
  %5848 = vst [vmem:[#allocation2 + $0xe0] sm:$0xff] %v5816
  %5849 = vst [vmem:[#allocation2 + $0xe8] sm:$0xff] %v5817
  %5850 = vst [vmem:[#allocation2 + $0xf0] sm:$0xff] %v5818
  %5851 = vst [vmem:[#allocation2 + $0xf8] sm:$0xff] %v5819
  %v5852 = vld [vmem:[#allocation2] sm:$0xff]
  %v5853 = vld [vmem:[#allocation2 + $0x8] sm:$0xff]
  %v5854 = vld [vmem:[#allocation2 + $0x10] sm:$0xff]
  %v5855 = vld [vmem:[#allocation2 + $0x18] sm:$0xff]
  %v5856 = vxor.u32 %v5852, 2147483648
  %v5857 = vmul.f32 %v5856, 1.442695
  %v5858 = vpow.pop %v5857
  %v5859 = vadd.f32 %v5858, 1.0
  %v5860 = vrcp.pop %v5859
  %v5861 = vmul.f32 %v5859, %v5860
  %v5862 = vsub.f32 1.0, %v5861
  %v5863 = vmul.f32 %v5860, %v5862
  %v5864 = vadd.f32 %v5860, %v5863
  %vm5865 = vweird.f32 %v5859
  %vm5866 = vweird.f32 %v5860
  %vm5867 = vmor %vm5865, %vm5866
  %v5868 = vsel %vm5867, %v5860, %v5864
  %v5869 = vand.u32 2147483647, %v5859
  %vm5870 = vcmp.eq.f32.partialorder %v5869, 8.507059e+37
  %v5871 = vand.u32 %v5859, 2147483648
  %v5872 = vor.u32 1.1754944e-38, %v5871
  %v5873 = vsel %vm5870, %v5872, %v5868
  %v5874 = vmul.f32 1.0, %v5873
  %v5875 = vxor.u32 %v5853, 2147483648
  %v5876 = vmul.f32 %v5875, 1.442695
  %v5877 = vpow.pop %v5876
  %v5878 = vadd.f32 %v5877, 1.0
  %v5879 = vrcp.pop %v5878
  %v5880 = vmul.f32 %v5878, %v5879
  %v5881 = vsub.f32 1.0, %v5880
  %v5882 = vmul.f32 %v5879, %v5881
  %v5883 = vadd.f32 %v5879, %v5882
  %vm5884 = vweird.f32 %v5878
  %vm5885 = vweird.f32 %v5879
  %vm5886 = vmor %vm5884, %vm5885
  %v5887 = vsel %vm5886, %v5879, %v5883
  %v5888 = vand.u32 2147483647, %v5878
  %vm5889 = vcmp.eq.f32.partialorder %v5888, 8.507059e+37
  %v5890 = vand.u32 %v5878, 2147483648
  %v5891 = vor.u32 1.1754944e-38, %v5890
  %v5892 = vsel %vm5889, %v5891, %v5887
  %v5893 = vmul.f32 1.0, %v5892
  %v5894 = vtanh.pop %v5854
  %v5895 = vxor.u32 %v5855, 2147483648
  %v5896 = vmul.f32 %v5895, 1.442695
  %v5897 = vpow.pop %v5896
  %v5898 = vadd.f32 %v5897, 1.0
  %v5899 = vrcp.pop %v5898
  %v5900 = vmul.f32 %v5898, %v5899
  %v5901 = vsub.f32 1.0, %v5900
  %v5902 = vmul.f32 %v5899, %v5901
  %v5903 = vadd.f32 %v5899, %v5902
  %vm5904 = vweird.f32 %v5898
  %vm5905 = vweird.f32 %v5899
  %vm5906 = vmor %vm5904, %vm5905
  %v5907 = vsel %vm5906, %v5899, %v5903
  %v5908 = vand.u32 2147483647, %v5898
  %vm5909 = vcmp.eq.f32.partialorder %v5908, 8.507059e+37
  %v5910 = vand.u32 %v5898, 2147483648
  %v5911 = vor.u32 1.1754944e-38, %v5910
  %v5912 = vsel %vm5909, %v5911, %v5907
  %v5913 = vmul.f32 1.0, %v5912
  %v5914 = vmul.f32 %v5893, 0.0
  %v5915 = vmul.f32 %v5874, %v5894
  %v5916 = vadd.f32 %v5914, %v5915
  %v5917 = vtanh.pop %v5916
  %v5918 = vmul.f32 %v5913, %v5917
  %v5919 = vld [vmem:[#allocation2 + $0x20] sm:$0xff]
  %v5920 = vld [vmem:[#allocation2 + $0x28] sm:$0xff]
  %v5921 = vld [vmem:[#allocation2 + $0x30] sm:$0xff]
  %v5922 = vld [vmem:[#allocation2 + $0x38] sm:$0xff]
  %v5923 = vpack.c.bf16 %v5918, %v5918
  %v5956 = vunpack.c.l.b16 %v1154
  %v5957 = vunpack.c.h.b16 %v1154
  %v5958 = vunpack.c.l.b16 %v1155
  %v5959 = vunpack.c.h.b16 %v1155
  %v5960 = vunpack.c.l.b16 %v1156
  %v5961 = vunpack.c.h.b16 %v1156
  %v5962 = vunpack.c.l.b16 %v1157
  %v5963 = vunpack.c.h.b16 %v1157
  %v5964 = vunpack.c.l.b16 %v1158
  %v5965 = vunpack.c.h.b16 %v1158
  %v5966 = vunpack.c.l.b16 %v1159
  %v5967 = vunpack.c.h.b16 %v1159
  %v5968 = vunpack.c.l.b16 %v1160
  %v5969 = vunpack.c.h.b16 %v1160
  %v5970 = vunpack.c.l.b16 %v1161
  %v5971 = vunpack.c.h.b16 %v1161
  %v5972 = vunpack.c.l.b16 %v1162
  %v5973 = vunpack.c.h.b16 %v1162
  %v5974 = vunpack.c.l.b16 %v1163
  %v5975 = vunpack.c.h.b16 %v1163
  %v5976 = vunpack.c.l.b16 %v1164
  %v5977 = vunpack.c.h.b16 %v1164
  %v5978 = vunpack.c.l.b16 %v1165
  %v5979 = vunpack.c.h.b16 %v1165
  %v5980 = vunpack.c.l.b16 %v1166
  %v5981 = vunpack.c.h.b16 %v1166
  %v5982 = vunpack.c.l.b16 %v1167
  %v5983 = vunpack.c.h.b16 %v1167
  %v5984 = vunpack.c.l.b16 %v1168
  %v5985 = vunpack.c.h.b16 %v1168
  %v5986 = vunpack.c.l.b16 %v1169
  %v5987 = vunpack.c.h.b16 %v1169
  %v5988 = vunpack.c.l.b16 %v1170
  %v5989 = vunpack.c.h.b16 %v1170
  %v5990 = vunpack.c.l.b16 %v1171
  %v5991 = vunpack.c.h.b16 %v1171
  %v5992 = vunpack.c.l.b16 %v1172
  %v5993 = vunpack.c.h.b16 %v1172
  %v5994 = vunpack.c.l.b16 %v1173
  %v5995 = vunpack.c.h.b16 %v1173
  %v5996 = vunpack.c.l.b16 %v1174
  %v5997 = vunpack.c.h.b16 %v1174
  %v5998 = vunpack.c.l.b16 %v1175
  %v5999 = vunpack.c.h.b16 %v1175
  %v6000 = vunpack.c.l.b16 %v1176
  %v6001 = vunpack.c.h.b16 %v1176
  %v6002 = vunpack.c.l.b16 %v1177
  %v6003 = vunpack.c.h.b16 %v1177
  %v6004 = vunpack.c.l.b16 %v1178
  %v6005 = vunpack.c.h.b16 %v1178
  %v6006 = vunpack.c.l.b16 %v1179
  %v6007 = vunpack.c.h.b16 %v1179
  %v6008 = vunpack.c.l.b16 %v1180
  %v6009 = vunpack.c.h.b16 %v1180
  %v6010 = vunpack.c.l.b16 %v1181
  %v6011 = vunpack.c.h.b16 %v1181
  %v6012 = vunpack.c.l.b16 %v1182
  %v6013 = vunpack.c.h.b16 %v1182
  %v6014 = vunpack.c.l.b16 %v1183
  %v6015 = vunpack.c.h.b16 %v1183
  %v6016 = vunpack.c.l.b16 %v1184
  %v6017 = vunpack.c.h.b16 %v1184
  %v6018 = vunpack.c.l.b16 %v1185
  %v6019 = vunpack.c.h.b16 %v1185
  %v6020 = vpack.c.b16 %v5960, %v5956
  %v6021 = vpack.c.b16 %v5961, %v5957
  %v6022 = vpack.c.b16 %v5962, %v5958
  %v6023 = vpack.c.b16 %v5963, %v5959
  %v6024 = vpack.c.b16 %v5968, %v5964
  %v6025 = vpack.c.b16 %v5969, %v5965
  %v6026 = vpack.c.b16 %v5970, %v5966
  %v6027 = vpack.c.b16 %v5971, %v5967
  %v6028 = vpack.c.b16 %v5976, %v5972
  %v6029 = vpack.c.b16 %v5977, %v5973
  %v6030 = vpack.c.b16 %v5978, %v5974
  %v6031 = vpack.c.b16 %v5979, %v5975
  %v6032 = vpack.c.b16 %v5984, %v5980
  %v6033 = vpack.c.b16 %v5985, %v5981
  %v6034 = vpack.c.b16 %v5986, %v5982
  %v6035 = vpack.c.b16 %v5987, %v5983
  %v6036 = vpack.c.b16 %v5992, %v5988
  %v6037 = vpack.c.b16 %v5993, %v5989
  %v6038 = vpack.c.b16 %v5994, %v5990
  %v6039 = vpack.c.b16 %v5995, %v5991
  %v6040 = vpack.c.b16 %v6000, %v5996
  %v6041 = vpack.c.b16 %v6001, %v5997
  %v6042 = vpack.c.b16 %v6002, %v5998
  %v6043 = vpack.c.b16 %v6003, %v5999
  %v6044 = vpack.c.b16 %v6008, %v6004
  %v6045 = vpack.c.b16 %v6009, %v6005
  %v6046 = vpack.c.b16 %v6010, %v6006
  %v6047 = vpack.c.b16 %v6011, %v6007
  %v6048 = vpack.c.b16 %v6016, %v6012
  %v6049 = vpack.c.b16 %v6017, %v6013
  %v6050 = vpack.c.b16 %v6018, %v6014
  %v6051 = vpack.c.b16 %v6019, %v6015
  %6084 = vmatpush.bf16.msra.mxu0 %v6048
  %6085 = vmatpush.bf16.msra.mxu0 %v6044
  %6086 = vmatpush.bf16.msra.mxu0 %v6040
  %6087 = vmatpush.bf16.msra.mxu0 %v6036
  %6088 = vmatpush.bf16.msra.mxu0 %v6032
  %6089 = vmatpush.bf16.msra.mxu0 %v6028
  %6090 = vmatpush.bf16.msra.mxu0 %v6024
  %6091 = vmatpush.bf16.msra.mxu0 %v6020
  %6092 = vmatmul.bf16.gmra.mxu0 %v5923
  %v6093 = vpop.f32.mrf.mxu0
  %v6094 = vadd.f32 0.0, %v6093
  %v6095 = vpop.f32.mrf.mxu0
  %6096 = vdwg.mxu0
  %6097 = vmatpush.bf16.msra.mxu0 %v6049
  %6098 = vmatpush.bf16.msra.mxu0 %v6045
  %6099 = vmatpush.bf16.msra.mxu0 %v6041
  %6100 = vmatpush.bf16.msra.mxu0 %v6037
  %6101 = vmatpush.bf16.msra.mxu0 %v6033
  %6102 = vmatpush.bf16.msra.mxu0 %v6029
  %6103 = vmatpush.bf16.msra.mxu0 %v6025
  %6104 = vmatpush.bf16.msra.mxu0 %v6021
  %6105 = vmatmul.bf16.gmra.mxu0 %v5923
  %v6106 = vpop.f32.mrf.mxu0
  %v6107 = vadd.f32 0.0, %v6106
  %v6108 = vpop.f32.mrf.mxu0
  %6109 = vdwg.mxu0
  %6110 = vmatpush.bf16.msra.mxu0 %v6050
  %6111 = vmatpush.bf16.msra.mxu0 %v6046
  %6112 = vmatpush.bf16.msra.mxu0 %v6042
  %6113 = vmatpush.bf16.msra.mxu0 %v6038
  %6114 = vmatpush.bf16.msra.mxu0 %v6034
  %6115 = vmatpush.bf16.msra.mxu0 %v6030
  %6116 = vmatpush.bf16.msra.mxu0 %v6026
  %6117 = vmatpush.bf16.msra.mxu0 %v6022
  %6118 = vmatmul.bf16.gmra.mxu0 %v5923
  %v6119 = vpop.f32.mrf.mxu0
  %v6120 = vadd.f32 0.0, %v6119
  %v6121 = vpop.f32.mrf.mxu0
  %6122 = vdwg.mxu0
  %6123 = vmatpush.bf16.msra.mxu0 %v6051
  %6124 = vmatpush.bf16.msra.mxu0 %v6047
  %6125 = vmatpush.bf16.msra.mxu0 %v6043
  %6126 = vmatpush.bf16.msra.mxu0 %v6039
  %6127 = vmatpush.bf16.msra.mxu0 %v6035
  %6128 = vmatpush.bf16.msra.mxu0 %v6031
  %6129 = vmatpush.bf16.msra.mxu0 %v6027
  %6130 = vmatpush.bf16.msra.mxu0 %v6023
  %6131 = vmatmul.bf16.gmra.mxu0 %v5923
  %v6132 = vpop.f32.mrf.mxu0
  %v6133 = vadd.f32 0.0, %v6132
  %v6134 = vpop.f32.mrf.mxu0
  %6135 = vdwg.mxu0
  %v6136 = vadd.f32 %v5919, %v6094
  %v6137 = vadd.f32 %v5920, %v6107
  %v6138 = vadd.f32 %v5921, %v6120
  %v6139 = vadd.f32 %v5922, %v6133
  %v6140 = vxor.u32 %v6136, 2147483648
  %v6141 = vmul.f32 %v6140, 1.442695
  %v6142 = vpow.pop %v6141
  %v6143 = vadd.f32 %v6142, 1.0
  %v6144 = vrcp.pop %v6143
  %v6145 = vmul.f32 %v6143, %v6144
  %v6146 = vsub.f32 1.0, %v6145
  %v6147 = vmul.f32 %v6144, %v6146
  %v6148 = vadd.f32 %v6144, %v6147
  %vm6149 = vweird.f32 %v6143
  %vm6150 = vweird.f32 %v6144
  %vm6151 = vmor %vm6149, %vm6150
  %v6152 = vsel %vm6151, %v6144, %v6148
  %v6153 = vand.u32 2147483647, %v6143
  %vm6154 = vcmp.eq.f32.partialorder %v6153, 8.507059e+37
  %v6155 = vand.u32 %v6143, 2147483648
  %v6156 = vor.u32 1.1754944e-38, %v6155
  %v6157 = vsel %vm6154, %v6156, %v6152
  %v6158 = vmul.f32 1.0, %v6157
  %v6159 = vxor.u32 %v6137, 2147483648
  %v6160 = vmul.f32 %v6159, 1.442695
  %v6161 = vpow.pop %v6160
  %v6162 = vadd.f32 %v6161, 1.0
  %v6163 = vrcp.pop %v6162
  %v6164 = vmul.f32 %v6162, %v6163
  %v6165 = vsub.f32 1.0, %v6164
  %v6166 = vmul.f32 %v6163, %v6165
  %v6167 = vadd.f32 %v6163, %v6166
  %vm6168 = vweird.f32 %v6162
  %vm6169 = vweird.f32 %v6163
  %vm6170 = vmor %vm6168, %vm6169
  %v6171 = vsel %vm6170, %v6163, %v6167
  %v6172 = vand.u32 2147483647, %v6162
  %vm6173 = vcmp.eq.f32.partialorder %v6172, 8.507059e+37
  %v6174 = vand.u32 %v6162, 2147483648
  %v6175 = vor.u32 1.1754944e-38, %v6174
  %v6176 = vsel %vm6173, %v6175, %v6171
  %v6177 = vmul.f32 1.0, %v6176
  %v6178 = vtanh.pop %v6138
  %v6179 = vxor.u32 %v6139, 2147483648
  %v6180 = vmul.f32 %v6179, 1.442695
  %v6181 = vpow.pop %v6180
  %v6182 = vadd.f32 %v6181, 1.0
  %v6183 = vrcp.pop %v6182
  %v6184 = vmul.f32 %v6182, %v6183
  %v6185 = vsub.f32 1.0, %v6184
  %v6186 = vmul.f32 %v6183, %v6185
  %v6187 = vadd.f32 %v6183, %v6186
  %vm6188 = vweird.f32 %v6182
  %vm6189 = vweird.f32 %v6183
  %vm6190 = vmor %vm6188, %vm6189
  %v6191 = vsel %vm6190, %v6183, %v6187
  %v6192 = vand.u32 2147483647, %v6182
  %vm6193 = vcmp.eq.f32.partialorder %v6192, 8.507059e+37
  %v6194 = vand.u32 %v6182, 2147483648
  %v6195 = vor.u32 1.1754944e-38, %v6194
  %v6196 = vsel %vm6193, %v6195, %v6191
  %v6197 = vmul.f32 1.0, %v6196
  %v6198 = vmul.f32 %v6177, %v5916
  %v6199 = vmul.f32 %v6158, %v6178
  %v6200 = vadd.f32 %v6198, %v6199
  %v6201 = vtanh.pop %v6200
  %v6202 = vmul.f32 %v6197, %v6201
  %v6203 = vld [vmem:[#allocation2 + $0x40] sm:$0xff]
  %v6204 = vld [vmem:[#allocation2 + $0x48] sm:$0xff]
  %v6205 = vld [vmem:[#allocation2 + $0x50] sm:$0xff]
  %v6206 = vld [vmem:[#allocation2 + $0x58] sm:$0xff]
  %v6207 = vpack.c.bf16 %v6202, %v6202
  %6208 = vmatpush.bf16.msra.mxu0 %v6048
  %6209 = vmatpush.bf16.msra.mxu0 %v6044
  %6210 = vmatpush.bf16.msra.mxu0 %v6040
  %6211 = vmatpush.bf16.msra.mxu0 %v6036
  %6212 = vmatpush.bf16.msra.mxu0 %v6032
  %6213 = vmatpush.bf16.msra.mxu0 %v6028
  %6214 = vmatpush.bf16.msra.mxu0 %v6024
  %6215 = vmatpush.bf16.msra.mxu0 %v6020
  %6216 = vmatmul.bf16.gmra.mxu0 %v6207
  %v6217 = vpop.f32.mrf.mxu0
  %v6218 = vadd.f32 0.0, %v6217
  %v6219 = vpop.f32.mrf.mxu0
  %6220 = vdwg.mxu0
  %6221 = vmatpush.bf16.msra.mxu0 %v6049
  %6222 = vmatpush.bf16.msra.mxu0 %v6045
  %6223 = vmatpush.bf16.msra.mxu0 %v6041
  %6224 = vmatpush.bf16.msra.mxu0 %v6037
  %6225 = vmatpush.bf16.msra.mxu0 %v6033
  %6226 = vmatpush.bf16.msra.mxu0 %v6029
  %6227 = vmatpush.bf16.msra.mxu0 %v6025
  %6228 = vmatpush.bf16.msra.mxu0 %v6021
  %6229 = vmatmul.bf16.gmra.mxu0 %v6207
  %v6230 = vpop.f32.mrf.mxu0
  %v6231 = vadd.f32 0.0, %v6230
  %v6232 = vpop.f32.mrf.mxu0
  %6233 = vdwg.mxu0
  %6234 = vmatpush.bf16.msra.mxu0 %v6050
  %6235 = vmatpush.bf16.msra.mxu0 %v6046
  %6236 = vmatpush.bf16.msra.mxu0 %v6042
  %6237 = vmatpush.bf16.msra.mxu0 %v6038
  %6238 = vmatpush.bf16.msra.mxu0 %v6034
  %6239 = vmatpush.bf16.msra.mxu0 %v6030
  %6240 = vmatpush.bf16.msra.mxu0 %v6026
  %6241 = vmatpush.bf16.msra.mxu0 %v6022
  %6242 = vmatmul.bf16.gmra.mxu0 %v6207
  %v6243 = vpop.f32.mrf.mxu0
  %v6244 = vadd.f32 0.0, %v6243
  %v6245 = vpop.f32.mrf.mxu0
  %6246 = vdwg.mxu0
  %6247 = vmatpush.bf16.msra.mxu0 %v6051
  %6248 = vmatpush.bf16.msra.mxu0 %v6047
  %6249 = vmatpush.bf16.msra.mxu0 %v6043
  %6250 = vmatpush.bf16.msra.mxu0 %v6039
  %6251 = vmatpush.bf16.msra.mxu0 %v6035
  %6252 = vmatpush.bf16.msra.mxu0 %v6031
  %6253 = vmatpush.bf16.msra.mxu0 %v6027
  %6254 = vmatpush.bf16.msra.mxu0 %v6023
  %6255 = vmatmul.bf16.gmra.mxu0 %v6207
  %v6256 = vpop.f32.mrf.mxu0
  %v6257 = vadd.f32 0.0, %v6256
  %v6258 = vpop.f32.mrf.mxu0
  %6259 = vdwg.mxu0
  %v6260 = vadd.f32 %v6203, %v6218
  %v6261 = vadd.f32 %v6204, %v6231
  %v6262 = vadd.f32 %v6205, %v6244
  %v6263 = vadd.f32 %v6206, %v6257
  %v6264 = vxor.u32 %v6260, 2147483648
  %v6265 = vmul.f32 %v6264, 1.442695
  %v6266 = vpow.pop %v6265
  %v6267 = vadd.f32 %v6266, 1.0
  %v6268 = vrcp.pop %v6267
  %v6269 = vmul.f32 %v6267, %v6268
  %v6270 = vsub.f32 1.0, %v6269
  %v6271 = vmul.f32 %v6268, %v6270
  %v6272 = vadd.f32 %v6268, %v6271
  %vm6273 = vweird.f32 %v6267
  %vm6274 = vweird.f32 %v6268
  %vm6275 = vmor %vm6273, %vm6274
  %v6276 = vsel %vm6275, %v6268, %v6272
  %v6277 = vand.u32 2147483647, %v6267
  %vm6278 = vcmp.eq.f32.partialorder %v6277, 8.507059e+37
  %v6279 = vand.u32 %v6267, 2147483648
  %v6280 = vor.u32 1.1754944e-38, %v6279
  %v6281 = vsel %vm6278, %v6280, %v6276
  %v6282 = vmul.f32 1.0, %v6281
  %v6283 = vxor.u32 %v6261, 2147483648
  %v6284 = vmul.f32 %v6283, 1.442695
  %v6285 = vpow.pop %v6284
  %v6286 = vadd.f32 %v6285, 1.0
  %v6287 = vrcp.pop %v6286
  %v6288 = vmul.f32 %v6286, %v6287
  %v6289 = vsub.f32 1.0, %v6288
  %v6290 = vmul.f32 %v6287, %v6289
  %v6291 = vadd.f32 %v6287, %v6290
  %vm6292 = vweird.f32 %v6286
  %vm6293 = vweird.f32 %v6287
  %vm6294 = vmor %vm6292, %vm6293
  %v6295 = vsel %vm6294, %v6287, %v6291
  %v6296 = vand.u32 2147483647, %v6286
  %vm6297 = vcmp.eq.f32.partialorder %v6296, 8.507059e+37
  %v6298 = vand.u32 %v6286, 2147483648
  %v6299 = vor.u32 1.1754944e-38, %v6298
  %v6300 = vsel %vm6297, %v6299, %v6295
  %v6301 = vmul.f32 1.0, %v6300
  %v6302 = vtanh.pop %v6262
  %v6303 = vxor.u32 %v6263, 2147483648
  %v6304 = vmul.f32 %v6303, 1.442695
  %v6305 = vpow.pop %v6304
  %v6306 = vadd.f32 %v6305, 1.0
  %v6307 = vrcp.pop %v6306
  %v6308 = vmul.f32 %v6306, %v6307
  %v6309 = vsub.f32 1.0, %v6308
  %v6310 = vmul.f32 %v6307, %v6309
  %v6311 = vadd.f32 %v6307, %v6310
  %vm6312 = vweird.f32 %v6306
  %vm6313 = vweird.f32 %v6307
  %vm6314 = vmor %vm6312, %vm6313
  %v6315 = vsel %vm6314, %v6307, %v6311
  %v6316 = vand.u32 2147483647, %v6306
  %vm6317 = vcmp.eq.f32.partialorder %v6316, 8.507059e+37
  %v6318 = vand.u32 %v6306, 2147483648
  %v6319 = vor.u32 1.1754944e-38, %v6318
  %v6320 = vsel %vm6317, %v6319, %v6315
  %v6321 = vmul.f32 1.0, %v6320
  %v6322 = vmul.f32 %v6301, %v6200
  %v6323 = vmul.f32 %v6282, %v6302
  %v6324 = vadd.f32 %v6322, %v6323
  %v6325 = vtanh.pop %v6324
  %v6326 = vmul.f32 %v6321, %v6325
  %v6327 = vld [vmem:[#allocation2 + $0x60] sm:$0xff]
  %v6328 = vld [vmem:[#allocation2 + $0x68] sm:$0xff]
  %v6329 = vld [vmem:[#allocation2 + $0x70] sm:$0xff]
  %v6330 = vld [vmem:[#allocation2 + $0x78] sm:$0xff]
  %v6331 = vpack.c.bf16 %v6326, %v6326
  %6332 = vmatpush.bf16.msra.mxu0 %v6048
  %6333 = vmatpush.bf16.msra.mxu0 %v6044
  %6334 = vmatpush.bf16.msra.mxu0 %v6040
  %6335 = vmatpush.bf16.msra.mxu0 %v6036
  %6336 = vmatpush.bf16.msra.mxu0 %v6032
  %6337 = vmatpush.bf16.msra.mxu0 %v6028
  %6338 = vmatpush.bf16.msra.mxu0 %v6024
  %6339 = vmatpush.bf16.msra.mxu0 %v6020
  %6340 = vmatmul.bf16.gmra.mxu0 %v6331
  %v6341 = vpop.f32.mrf.mxu0
  %v6342 = vadd.f32 0.0, %v6341
  %v6343 = vpop.f32.mrf.mxu0
  %6344 = vdwg.mxu0
  %6345 = vmatpush.bf16.msra.mxu0 %v6049
  %6346 = vmatpush.bf16.msra.mxu0 %v6045
  %6347 = vmatpush.bf16.msra.mxu0 %v6041
  %6348 = vmatpush.bf16.msra.mxu0 %v6037
  %6349 = vmatpush.bf16.msra.mxu0 %v6033
  %6350 = vmatpush.bf16.msra.mxu0 %v6029
  %6351 = vmatpush.bf16.msra.mxu0 %v6025
  %6352 = vmatpush.bf16.msra.mxu0 %v6021
  %6353 = vmatmul.bf16.gmra.mxu0 %v6331
  %v6354 = vpop.f32.mrf.mxu0
  %v6355 = vadd.f32 0.0, %v6354
  %v6356 = vpop.f32.mrf.mxu0
  %6357 = vdwg.mxu0
  %6358 = vmatpush.bf16.msra.mxu0 %v6050
  %6359 = vmatpush.bf16.msra.mxu0 %v6046
  %6360 = vmatpush.bf16.msra.mxu0 %v6042
  %6361 = vmatpush.bf16.msra.mxu0 %v6038
  %6362 = vmatpush.bf16.msra.mxu0 %v6034
  %6363 = vmatpush.bf16.msra.mxu0 %v6030
  %6364 = vmatpush.bf16.msra.mxu0 %v6026
  %6365 = vmatpush.bf16.msra.mxu0 %v6022
  %6366 = vmatmul.bf16.gmra.mxu0 %v6331
  %v6367 = vpop.f32.mrf.mxu0
  %v6368 = vadd.f32 0.0, %v6367
  %v6369 = vpop.f32.mrf.mxu0
  %6370 = vdwg.mxu0
  %6371 = vmatpush.bf16.msra.mxu0 %v6051
  %6372 = vmatpush.bf16.msra.mxu0 %v6047
  %6373 = vmatpush.bf16.msra.mxu0 %v6043
  %6374 = vmatpush.bf16.msra.mxu0 %v6039
  %6375 = vmatpush.bf16.msra.mxu0 %v6035
  %6376 = vmatpush.bf16.msra.mxu0 %v6031
  %6377 = vmatpush.bf16.msra.mxu0 %v6027
  %6378 = vmatpush.bf16.msra.mxu0 %v6023
  %6379 = vmatmul.bf16.gmra.mxu0 %v6331
  %v6380 = vpop.f32.mrf.mxu0
  %v6381 = vadd.f32 0.0, %v6380
  %v6382 = vpop.f32.mrf.mxu0
  %6383 = vdwg.mxu0
  %v6384 = vadd.f32 %v6327, %v6342
  %v6385 = vadd.f32 %v6328, %v6355
  %v6386 = vadd.f32 %v6329, %v6368
  %v6387 = vadd.f32 %v6330, %v6381
  %v6388 = vxor.u32 %v6384, 2147483648
  %v6389 = vmul.f32 %v6388, 1.442695
  %v6390 = vpow.pop %v6389
  %v6391 = vadd.f32 %v6390, 1.0
  %v6392 = vrcp.pop %v6391
  %v6393 = vmul.f32 %v6391, %v6392
  %v6394 = vsub.f32 1.0, %v6393
  %v6395 = vmul.f32 %v6392, %v6394
  %v6396 = vadd.f32 %v6392, %v6395
  %vm6397 = vweird.f32 %v6391
  %vm6398 = vweird.f32 %v6392
  %vm6399 = vmor %vm6397, %vm6398
  %v6400 = vsel %vm6399, %v6392, %v6396
  %v6401 = vand.u32 2147483647, %v6391
  %vm6402 = vcmp.eq.f32.partialorder %v6401, 8.507059e+37
  %v6403 = vand.u32 %v6391, 2147483648
  %v6404 = vor.u32 1.1754944e-38, %v6403
  %v6405 = vsel %vm6402, %v6404, %v6400
  %v6406 = vmul.f32 1.0, %v6405
  %v6407 = vxor.u32 %v6385, 2147483648
  %v6408 = vmul.f32 %v6407, 1.442695
  %v6409 = vpow.pop %v6408
  %v6410 = vadd.f32 %v6409, 1.0
  %v6411 = vrcp.pop %v6410
  %v6412 = vmul.f32 %v6410, %v6411
  %v6413 = vsub.f32 1.0, %v6412
  %v6414 = vmul.f32 %v6411, %v6413
  %v6415 = vadd.f32 %v6411, %v6414
  %vm6416 = vweird.f32 %v6410
  %vm6417 = vweird.f32 %v6411
  %vm6418 = vmor %vm6416, %vm6417
  %v6419 = vsel %vm6418, %v6411, %v6415
  %v6420 = vand.u32 2147483647, %v6410
  %vm6421 = vcmp.eq.f32.partialorder %v6420, 8.507059e+37
  %v6422 = vand.u32 %v6410, 2147483648
  %v6423 = vor.u32 1.1754944e-38, %v6422
  %v6424 = vsel %vm6421, %v6423, %v6419
  %v6425 = vmul.f32 1.0, %v6424
  %v6426 = vtanh.pop %v6386
  %v6427 = vxor.u32 %v6387, 2147483648
  %v6428 = vmul.f32 %v6427, 1.442695
  %v6429 = vpow.pop %v6428
  %v6430 = vadd.f32 %v6429, 1.0
  %v6431 = vrcp.pop %v6430
  %v6432 = vmul.f32 %v6430, %v6431
  %v6433 = vsub.f32 1.0, %v6432
  %v6434 = vmul.f32 %v6431, %v6433
  %v6435 = vadd.f32 %v6431, %v6434
  %vm6436 = vweird.f32 %v6430
  %vm6437 = vweird.f32 %v6431
  %vm6438 = vmor %vm6436, %vm6437
  %v6439 = vsel %vm6438, %v6431, %v6435
  %v6440 = vand.u32 2147483647, %v6430
  %vm6441 = vcmp.eq.f32.partialorder %v6440, 8.507059e+37
  %v6442 = vand.u32 %v6430, 2147483648
  %v6443 = vor.u32 1.1754944e-38, %v6442
  %v6444 = vsel %vm6441, %v6443, %v6439
  %v6445 = vmul.f32 1.0, %v6444
  %v6446 = vmul.f32 %v6425, %v6324
  %v6447 = vmul.f32 %v6406, %v6426
  %v6448 = vadd.f32 %v6446, %v6447
  %v6449 = vtanh.pop %v6448
  %v6450 = vmul.f32 %v6445, %v6449
  %v6451 = vld [vmem:[#allocation2 + $0x80] sm:$0xff]
  %v6452 = vld [vmem:[#allocation2 + $0x88] sm:$0xff]
  %v6453 = vld [vmem:[#allocation2 + $0x90] sm:$0xff]
  %v6454 = vld [vmem:[#allocation2 + $0x98] sm:$0xff]
  %v6455 = vpack.c.bf16 %v6450, %v6450
  %6456 = vmatpush.bf16.msra.mxu0 %v6048
  %6457 = vmatpush.bf16.msra.mxu0 %v6044
  %6458 = vmatpush.bf16.msra.mxu0 %v6040
  %6459 = vmatpush.bf16.msra.mxu0 %v6036
  %6460 = vmatpush.bf16.msra.mxu0 %v6032
  %6461 = vmatpush.bf16.msra.mxu0 %v6028
  %6462 = vmatpush.bf16.msra.mxu0 %v6024
  %6463 = vmatpush.bf16.msra.mxu0 %v6020
  %6464 = vmatmul.bf16.gmra.mxu0 %v6455
  %v6465 = vpop.f32.mrf.mxu0
  %v6466 = vadd.f32 0.0, %v6465
  %v6467 = vpop.f32.mrf.mxu0
  %6468 = vdwg.mxu0
  %6469 = vmatpush.bf16.msra.mxu0 %v6049
  %6470 = vmatpush.bf16.msra.mxu0 %v6045
  %6471 = vmatpush.bf16.msra.mxu0 %v6041
  %6472 = vmatpush.bf16.msra.mxu0 %v6037
  %6473 = vmatpush.bf16.msra.mxu0 %v6033
  %6474 = vmatpush.bf16.msra.mxu0 %v6029
  %6475 = vmatpush.bf16.msra.mxu0 %v6025
  %6476 = vmatpush.bf16.msra.mxu0 %v6021
  %6477 = vmatmul.bf16.gmra.mxu0 %v6455
  %v6478 = vpop.f32.mrf.mxu0
  %v6479 = vadd.f32 0.0, %v6478
  %v6480 = vpop.f32.mrf.mxu0
  %6481 = vdwg.mxu0
  %6482 = vmatpush.bf16.msra.mxu0 %v6050
  %6483 = vmatpush.bf16.msra.mxu0 %v6046
  %6484 = vmatpush.bf16.msra.mxu0 %v6042
  %6485 = vmatpush.bf16.msra.mxu0 %v6038
  %6486 = vmatpush.bf16.msra.mxu0 %v6034
  %6487 = vmatpush.bf16.msra.mxu0 %v6030
  %6488 = vmatpush.bf16.msra.mxu0 %v6026
  %6489 = vmatpush.bf16.msra.mxu0 %v6022
  %6490 = vmatmul.bf16.gmra.mxu0 %v6455
  %v6491 = vpop.f32.mrf.mxu0
  %v6492 = vadd.f32 0.0, %v6491
  %v6493 = vpop.f32.mrf.mxu0
  %6494 = vdwg.mxu0
  %6495 = vmatpush.bf16.msra.mxu0 %v6051
  %6496 = vmatpush.bf16.msra.mxu0 %v6047
  %6497 = vmatpush.bf16.msra.mxu0 %v6043
  %6498 = vmatpush.bf16.msra.mxu0 %v6039
  %6499 = vmatpush.bf16.msra.mxu0 %v6035
  %6500 = vmatpush.bf16.msra.mxu0 %v6031
  %6501 = vmatpush.bf16.msra.mxu0 %v6027
  %6502 = vmatpush.bf16.msra.mxu0 %v6023
  %6503 = vmatmul.bf16.gmra.mxu0 %v6455
  %v6504 = vpop.f32.mrf.mxu0
  %v6505 = vadd.f32 0.0, %v6504
  %v6506 = vpop.f32.mrf.mxu0
  %6507 = vdwg.mxu0
  %v6508 = vadd.f32 %v6451, %v6466
  %v6509 = vadd.f32 %v6452, %v6479
  %v6510 = vadd.f32 %v6453, %v6492
  %v6511 = vadd.f32 %v6454, %v6505
  %v6512 = vxor.u32 %v6508, 2147483648
  %v6513 = vmul.f32 %v6512, 1.442695
  %v6514 = vpow.pop %v6513
  %v6515 = vadd.f32 %v6514, 1.0
  %v6516 = vrcp.pop %v6515
  %v6517 = vmul.f32 %v6515, %v6516
  %v6518 = vsub.f32 1.0, %v6517
  %v6519 = vmul.f32 %v6516, %v6518
  %v6520 = vadd.f32 %v6516, %v6519
  %vm6521 = vweird.f32 %v6515
  %vm6522 = vweird.f32 %v6516
  %vm6523 = vmor %vm6521, %vm6522
  %v6524 = vsel %vm6523, %v6516, %v6520
  %v6525 = vand.u32 2147483647, %v6515
  %vm6526 = vcmp.eq.f32.partialorder %v6525, 8.507059e+37
  %v6527 = vand.u32 %v6515, 2147483648
  %v6528 = vor.u32 1.1754944e-38, %v6527
  %v6529 = vsel %vm6526, %v6528, %v6524
  %v6530 = vmul.f32 1.0, %v6529
  %v6531 = vxor.u32 %v6509, 2147483648
  %v6532 = vmul.f32 %v6531, 1.442695
  %v6533 = vpow.pop %v6532
  %v6534 = vadd.f32 %v6533, 1.0
  %v6535 = vrcp.pop %v6534
  %v6536 = vmul.f32 %v6534, %v6535
  %v6537 = vsub.f32 1.0, %v6536
  %v6538 = vmul.f32 %v6535, %v6537
  %v6539 = vadd.f32 %v6535, %v6538
  %vm6540 = vweird.f32 %v6534
  %vm6541 = vweird.f32 %v6535
  %vm6542 = vmor %vm6540, %vm6541
  %v6543 = vsel %vm6542, %v6535, %v6539
  %v6544 = vand.u32 2147483647, %v6534
  %vm6545 = vcmp.eq.f32.partialorder %v6544, 8.507059e+37
  %v6546 = vand.u32 %v6534, 2147483648
  %v6547 = vor.u32 1.1754944e-38, %v6546
  %v6548 = vsel %vm6545, %v6547, %v6543
  %v6549 = vmul.f32 1.0, %v6548
  %v6550 = vtanh.pop %v6510
  %v6551 = vxor.u32 %v6511, 2147483648
  %v6552 = vmul.f32 %v6551, 1.442695
  %v6553 = vpow.pop %v6552
  %v6554 = vadd.f32 %v6553, 1.0
  %v6555 = vrcp.pop %v6554
  %v6556 = vmul.f32 %v6554, %v6555
  %v6557 = vsub.f32 1.0, %v6556
  %v6558 = vmul.f32 %v6555, %v6557
  %v6559 = vadd.f32 %v6555, %v6558
  %vm6560 = vweird.f32 %v6554
  %vm6561 = vweird.f32 %v6555
  %vm6562 = vmor %vm6560, %vm6561
  %v6563 = vsel %vm6562, %v6555, %v6559
  %v6564 = vand.u32 2147483647, %v6554
  %vm6565 = vcmp.eq.f32.partialorder %v6564, 8.507059e+37
  %v6566 = vand.u32 %v6554, 2147483648
  %v6567 = vor.u32 1.1754944e-38, %v6566
  %v6568 = vsel %vm6565, %v6567, %v6563
  %v6569 = vmul.f32 1.0, %v6568
  %v6570 = vmul.f32 %v6549, %v6448
  %v6571 = vmul.f32 %v6530, %v6550
  %v6572 = vadd.f32 %v6570, %v6571
  %v6573 = vtanh.pop %v6572
  %v6574 = vmul.f32 %v6569, %v6573
  %v6575 = vld [vmem:[#allocation2 + $0xa0] sm:$0xff]
  %v6576 = vld [vmem:[#allocation2 + $0xa8] sm:$0xff]
  %v6577 = vld [vmem:[#allocation2 + $0xb0] sm:$0xff]
  %v6578 = vld [vmem:[#allocation2 + $0xb8] sm:$0xff]
  %v6579 = vpack.c.bf16 %v6574, %v6574
  %6580 = vmatpush.bf16.msra.mxu0 %v6048
  %6581 = vmatpush.bf16.msra.mxu0 %v6044
  %6582 = vmatpush.bf16.msra.mxu0 %v6040
  %6583 = vmatpush.bf16.msra.mxu0 %v6036
  %6584 = vmatpush.bf16.msra.mxu0 %v6032
  %6585 = vmatpush.bf16.msra.mxu0 %v6028
  %6586 = vmatpush.bf16.msra.mxu0 %v6024
  %6587 = vmatpush.bf16.msra.mxu0 %v6020
  %6588 = vmatmul.bf16.gmra.mxu0 %v6579
  %v6589 = vpop.f32.mrf.mxu0
  %v6590 = vadd.f32 0.0, %v6589
  %v6591 = vpop.f32.mrf.mxu0
  %6592 = vdwg.mxu0
  %6593 = vmatpush.bf16.msra.mxu0 %v6049
  %6594 = vmatpush.bf16.msra.mxu0 %v6045
  %6595 = vmatpush.bf16.msra.mxu0 %v6041
  %6596 = vmatpush.bf16.msra.mxu0 %v6037
  %6597 = vmatpush.bf16.msra.mxu0 %v6033
  %6598 = vmatpush.bf16.msra.mxu0 %v6029
  %6599 = vmatpush.bf16.msra.mxu0 %v6025
  %6600 = vmatpush.bf16.msra.mxu0 %v6021
  %6601 = vmatmul.bf16.gmra.mxu0 %v6579
  %v6602 = vpop.f32.mrf.mxu0
  %v6603 = vadd.f32 0.0, %v6602
  %v6604 = vpop.f32.mrf.mxu0
  %6605 = vdwg.mxu0
  %6606 = vmatpush.bf16.msra.mxu0 %v6050
  %6607 = vmatpush.bf16.msra.mxu0 %v6046
  %6608 = vmatpush.bf16.msra.mxu0 %v6042
  %6609 = vmatpush.bf16.msra.mxu0 %v6038
  %6610 = vmatpush.bf16.msra.mxu0 %v6034
  %6611 = vmatpush.bf16.msra.mxu0 %v6030
  %6612 = vmatpush.bf16.msra.mxu0 %v6026
  %6613 = vmatpush.bf16.msra.mxu0 %v6022
  %6614 = vmatmul.bf16.gmra.mxu0 %v6579
  %v6615 = vpop.f32.mrf.mxu0
  %v6616 = vadd.f32 0.0, %v6615
  %v6617 = vpop.f32.mrf.mxu0
  %6618 = vdwg.mxu0
  %6619 = vmatpush.bf16.msra.mxu0 %v6051
  %6620 = vmatpush.bf16.msra.mxu0 %v6047
  %6621 = vmatpush.bf16.msra.mxu0 %v6043
  %6622 = vmatpush.bf16.msra.mxu0 %v6039
  %6623 = vmatpush.bf16.msra.mxu0 %v6035
  %6624 = vmatpush.bf16.msra.mxu0 %v6031
  %6625 = vmatpush.bf16.msra.mxu0 %v6027
  %6626 = vmatpush.bf16.msra.mxu0 %v6023
  %6627 = vmatmul.bf16.gmra.mxu0 %v6579
  %v6628 = vpop.f32.mrf.mxu0
  %v6629 = vadd.f32 0.0, %v6628
  %v6630 = vpop.f32.mrf.mxu0
  %6631 = vdwg.mxu0
  %v6632 = vadd.f32 %v6575, %v6590
  %v6633 = vadd.f32 %v6576, %v6603
  %v6634 = vadd.f32 %v6577, %v6616
  %v6635 = vadd.f32 %v6578, %v6629
  %v6636 = vxor.u32 %v6632, 2147483648
  %v6637 = vmul.f32 %v6636, 1.442695
  %v6638 = vpow.pop %v6637
  %v6639 = vadd.f32 %v6638, 1.0
  %v6640 = vrcp.pop %v6639
  %v6641 = vmul.f32 %v6639, %v6640
  %v6642 = vsub.f32 1.0, %v6641
  %v6643 = vmul.f32 %v6640, %v6642
  %v6644 = vadd.f32 %v6640, %v6643
  %vm6645 = vweird.f32 %v6639
  %vm6646 = vweird.f32 %v6640
  %vm6647 = vmor %vm6645, %vm6646
  %v6648 = vsel %vm6647, %v6640, %v6644
  %v6649 = vand.u32 2147483647, %v6639
  %vm6650 = vcmp.eq.f32.partialorder %v6649, 8.507059e+37
  %v6651 = vand.u32 %v6639, 2147483648
  %v6652 = vor.u32 1.1754944e-38, %v6651
  %v6653 = vsel %vm6650, %v6652, %v6648
  %v6654 = vmul.f32 1.0, %v6653
  %v6655 = vxor.u32 %v6633, 2147483648
  %v6656 = vmul.f32 %v6655, 1.442695
  %v6657 = vpow.pop %v6656
  %v6658 = vadd.f32 %v6657, 1.0
  %v6659 = vrcp.pop %v6658
  %v6660 = vmul.f32 %v6658, %v6659
  %v6661 = vsub.f32 1.0, %v6660
  %v6662 = vmul.f32 %v6659, %v6661
  %v6663 = vadd.f32 %v6659, %v6662
  %vm6664 = vweird.f32 %v6658
  %vm6665 = vweird.f32 %v6659
  %vm6666 = vmor %vm6664, %vm6665
  %v6667 = vsel %vm6666, %v6659, %v6663
  %v6668 = vand.u32 2147483647, %v6658
  %vm6669 = vcmp.eq.f32.partialorder %v6668, 8.507059e+37
  %v6670 = vand.u32 %v6658, 2147483648
  %v6671 = vor.u32 1.1754944e-38, %v6670
  %v6672 = vsel %vm6669, %v6671, %v6667
  %v6673 = vmul.f32 1.0, %v6672
  %v6674 = vtanh.pop %v6634
  %v6675 = vxor.u32 %v6635, 2147483648
  %v6676 = vmul.f32 %v6675, 1.442695
  %v6677 = vpow.pop %v6676
  %v6678 = vadd.f32 %v6677, 1.0
  %v6679 = vrcp.pop %v6678
  %v6680 = vmul.f32 %v6678, %v6679
  %v6681 = vsub.f32 1.0, %v6680
  %v6682 = vmul.f32 %v6679, %v6681
  %v6683 = vadd.f32 %v6679, %v6682
  %vm6684 = vweird.f32 %v6678
  %vm6685 = vweird.f32 %v6679
  %vm6686 = vmor %vm6684, %vm6685
  %v6687 = vsel %vm6686, %v6679, %v6683
  %v6688 = vand.u32 2147483647, %v6678
  %vm6689 = vcmp.eq.f32.partialorder %v6688, 8.507059e+37
  %v6690 = vand.u32 %v6678, 2147483648
  %v6691 = vor.u32 1.1754944e-38, %v6690
  %v6692 = vsel %vm6689, %v6691, %v6687
  %v6693 = vmul.f32 1.0, %v6692
  %v6694 = vmul.f32 %v6673, %v6572
  %v6695 = vmul.f32 %v6654, %v6674
  %v6696 = vadd.f32 %v6694, %v6695
  %v6697 = vtanh.pop %v6696
  %v6698 = vmul.f32 %v6693, %v6697
  %v6699 = vld [vmem:[#allocation2 + $0xc0] sm:$0xff]
  %v6700 = vld [vmem:[#allocation2 + $0xc8] sm:$0xff]
  %v6701 = vld [vmem:[#allocation2 + $0xd0] sm:$0xff]
  %v6702 = vld [vmem:[#allocation2 + $0xd8] sm:$0xff]
  %v6703 = vpack.c.bf16 %v6698, %v6698
  %6704 = vmatpush.bf16.msra.mxu0 %v6048
  %6705 = vmatpush.bf16.msra.mxu0 %v6044
  %6706 = vmatpush.bf16.msra.mxu0 %v6040
  %6707 = vmatpush.bf16.msra.mxu0 %v6036
  %6708 = vmatpush.bf16.msra.mxu0 %v6032
  %6709 = vmatpush.bf16.msra.mxu0 %v6028
  %6710 = vmatpush.bf16.msra.mxu0 %v6024
  %6711 = vmatpush.bf16.msra.mxu0 %v6020
  %6712 = vmatmul.bf16.gmra.mxu0 %v6703
  %v6713 = vpop.f32.mrf.mxu0
  %v6714 = vadd.f32 0.0, %v6713
  %v6715 = vpop.f32.mrf.mxu0
  %6716 = vdwg.mxu0
  %6717 = vmatpush.bf16.msra.mxu0 %v6049
  %6718 = vmatpush.bf16.msra.mxu0 %v6045
  %6719 = vmatpush.bf16.msra.mxu0 %v6041
  %6720 = vmatpush.bf16.msra.mxu0 %v6037
  %6721 = vmatpush.bf16.msra.mxu0 %v6033
  %6722 = vmatpush.bf16.msra.mxu0 %v6029
  %6723 = vmatpush.bf16.msra.mxu0 %v6025
  %6724 = vmatpush.bf16.msra.mxu0 %v6021
  %6725 = vmatmul.bf16.gmra.mxu0 %v6703
  %v6726 = vpop.f32.mrf.mxu0
  %v6727 = vadd.f32 0.0, %v6726
  %v6728 = vpop.f32.mrf.mxu0
  %6729 = vdwg.mxu0
  %6730 = vmatpush.bf16.msra.mxu0 %v6050
  %6731 = vmatpush.bf16.msra.mxu0 %v6046
  %6732 = vmatpush.bf16.msra.mxu0 %v6042
  %6733 = vmatpush.bf16.msra.mxu0 %v6038
  %6734 = vmatpush.bf16.msra.mxu0 %v6034
  %6735 = vmatpush.bf16.msra.mxu0 %v6030
  %6736 = vmatpush.bf16.msra.mxu0 %v6026
  %6737 = vmatpush.bf16.msra.mxu0 %v6022
  %6738 = vmatmul.bf16.gmra.mxu0 %v6703
  %v6739 = vpop.f32.mrf.mxu0
  %v6740 = vadd.f32 0.0, %v6739
  %v6741 = vpop.f32.mrf.mxu0
  %6742 = vdwg.mxu0
  %6743 = vmatpush.bf16.msra.mxu0 %v6051
  %6744 = vmatpush.bf16.msra.mxu0 %v6047
  %6745 = vmatpush.bf16.msra.mxu0 %v6043
  %6746 = vmatpush.bf16.msra.mxu0 %v6039
  %6747 = vmatpush.bf16.msra.mxu0 %v6035
  %6748 = vmatpush.bf16.msra.mxu0 %v6031
  %6749 = vmatpush.bf16.msra.mxu0 %v6027
  %6750 = vmatpush.bf16.msra.mxu0 %v6023
  %6751 = vmatmul.bf16.gmra.mxu0 %v6703
  %v6752 = vpop.f32.mrf.mxu0
  %v6753 = vadd.f32 0.0, %v6752
  %v6754 = vpop.f32.mrf.mxu0
  %6755 = vdwg.mxu0
  %v6756 = vadd.f32 %v6699, %v6714
  %v6757 = vadd.f32 %v6700, %v6727
  %v6758 = vadd.f32 %v6701, %v6740
  %v6759 = vadd.f32 %v6702, %v6753
  %v6760 = vxor.u32 %v6756, 2147483648
  %v6761 = vmul.f32 %v6760, 1.442695
  %v6762 = vpow.pop %v6761
  %v6763 = vadd.f32 %v6762, 1.0
  %v6764 = vrcp.pop %v6763
  %v6765 = vmul.f32 %v6763, %v6764
  %v6766 = vsub.f32 1.0, %v6765
  %v6767 = vmul.f32 %v6764, %v6766
  %v6768 = vadd.f32 %v6764, %v6767
  %vm6769 = vweird.f32 %v6763
  %vm6770 = vweird.f32 %v6764
  %vm6771 = vmor %vm6769, %vm6770
  %v6772 = vsel %vm6771, %v6764, %v6768
  %v6773 = vand.u32 2147483647, %v6763
  %vm6774 = vcmp.eq.f32.partialorder %v6773, 8.507059e+37
  %v6775 = vand.u32 %v6763, 2147483648
  %v6776 = vor.u32 1.1754944e-38, %v6775
  %v6777 = vsel %vm6774, %v6776, %v6772
  %v6778 = vmul.f32 1.0, %v6777
  %v6779 = vxor.u32 %v6757, 2147483648
  %v6780 = vmul.f32 %v6779, 1.442695
  %v6781 = vpow.pop %v6780
  %v6782 = vadd.f32 %v6781, 1.0
  %v6783 = vrcp.pop %v6782
  %v6784 = vmul.f32 %v6782, %v6783
  %v6785 = vsub.f32 1.0, %v6784
  %v6786 = vmul.f32 %v6783, %v6785
  %v6787 = vadd.f32 %v6783, %v6786
  %vm6788 = vweird.f32 %v6782
  %vm6789 = vweird.f32 %v6783
  %vm6790 = vmor %vm6788, %vm6789
  %v6791 = vsel %vm6790, %v6783, %v6787
  %v6792 = vand.u32 2147483647, %v6782
  %vm6793 = vcmp.eq.f32.partialorder %v6792, 8.507059e+37
  %v6794 = vand.u32 %v6782, 2147483648
  %v6795 = vor.u32 1.1754944e-38, %v6794
  %v6796 = vsel %vm6793, %v6795, %v6791
  %v6797 = vmul.f32 1.0, %v6796
  %v6798 = vtanh.pop %v6758
  %v6799 = vxor.u32 %v6759, 2147483648
  %v6800 = vmul.f32 %v6799, 1.442695
  %v6801 = vpow.pop %v6800
  %v6802 = vadd.f32 %v6801, 1.0
  %v6803 = vrcp.pop %v6802
  %v6804 = vmul.f32 %v6802, %v6803
  %v6805 = vsub.f32 1.0, %v6804
  %v6806 = vmul.f32 %v6803, %v6805
  %v6807 = vadd.f32 %v6803, %v6806
  %vm6808 = vweird.f32 %v6802
  %vm6809 = vweird.f32 %v6803
  %vm6810 = vmor %vm6808, %vm6809
  %v6811 = vsel %vm6810, %v6803, %v6807
  %v6812 = vand.u32 2147483647, %v6802
  %vm6813 = vcmp.eq.f32.partialorder %v6812, 8.507059e+37
  %v6814 = vand.u32 %v6802, 2147483648
  %v6815 = vor.u32 1.1754944e-38, %v6814
  %v6816 = vsel %vm6813, %v6815, %v6811
  %v6817 = vmul.f32 1.0, %v6816
  %v6818 = vmul.f32 %v6797, %v6696
  %v6819 = vmul.f32 %v6778, %v6798
  %v6820 = vadd.f32 %v6818, %v6819
  %v6821 = vtanh.pop %v6820
  %v6822 = vmul.f32 %v6817, %v6821
  %v6823 = vld [vmem:[#allocation2 + $0xe0] sm:$0xff]
  %v6824 = vld [vmem:[#allocation2 + $0xe8] sm:$0xff]
  %v6825 = vld [vmem:[#allocation2 + $0xf0] sm:$0xff]
  %v6826 = vld [vmem:[#allocation2 + $0xf8] sm:$0xff]
  %v6827 = vpack.c.bf16 %v6822, %v6822
  %6828 = vmatpush.bf16.msra.mxu0 %v6048
  %6829 = vmatpush.bf16.msra.mxu0 %v6044
  %6830 = vmatpush.bf16.msra.mxu0 %v6040
  %6831 = vmatpush.bf16.msra.mxu0 %v6036
  %6832 = vmatpush.bf16.msra.mxu0 %v6032
  %6833 = vmatpush.bf16.msra.mxu0 %v6028
  %6834 = vmatpush.bf16.msra.mxu0 %v6024
  %6835 = vmatpush.bf16.msra.mxu0 %v6020
  %6836 = vmatmul.bf16.gmra.mxu0 %v6827
  %v6837 = vpop.f32.mrf.mxu0
  %v6838 = vadd.f32 0.0, %v6837
  %v6839 = vpop.f32.mrf.mxu0
  %6840 = vdwg.mxu0
  %6841 = vmatpush.bf16.msra.mxu0 %v6049
  %6842 = vmatpush.bf16.msra.mxu0 %v6045
  %6843 = vmatpush.bf16.msra.mxu0 %v6041
  %6844 = vmatpush.bf16.msra.mxu0 %v6037
  %6845 = vmatpush.bf16.msra.mxu0 %v6033
  %6846 = vmatpush.bf16.msra.mxu0 %v6029
  %6847 = vmatpush.bf16.msra.mxu0 %v6025
  %6848 = vmatpush.bf16.msra.mxu0 %v6021
  %6849 = vmatmul.bf16.gmra.mxu0 %v6827
  %v6850 = vpop.f32.mrf.mxu0
  %v6851 = vadd.f32 0.0, %v6850
  %v6852 = vpop.f32.mrf.mxu0
  %6853 = vdwg.mxu0
  %6854 = vmatpush.bf16.msra.mxu0 %v6050
  %6855 = vmatpush.bf16.msra.mxu0 %v6046
  %6856 = vmatpush.bf16.msra.mxu0 %v6042
  %6857 = vmatpush.bf16.msra.mxu0 %v6038
  %6858 = vmatpush.bf16.msra.mxu0 %v6034
  %6859 = vmatpush.bf16.msra.mxu0 %v6030
  %6860 = vmatpush.bf16.msra.mxu0 %v6026
  %6861 = vmatpush.bf16.msra.mxu0 %v6022
  %6862 = vmatmul.bf16.gmra.mxu0 %v6827
  %v6863 = vpop.f32.mrf.mxu0
  %v6864 = vadd.f32 0.0, %v6863
  %v6865 = vpop.f32.mrf.mxu0
  %6866 = vdwg.mxu0
  %6867 = vmatpush.bf16.msra.mxu0 %v6051
  %6868 = vmatpush.bf16.msra.mxu0 %v6047
  %6869 = vmatpush.bf16.msra.mxu0 %v6043
  %6870 = vmatpush.bf16.msra.mxu0 %v6039
  %6871 = vmatpush.bf16.msra.mxu0 %v6035
  %6872 = vmatpush.bf16.msra.mxu0 %v6031
  %6873 = vmatpush.bf16.msra.mxu0 %v6027
  %6874 = vmatpush.bf16.msra.mxu0 %v6023
  %6875 = vmatmul.bf16.gmra.mxu0 %v6827
  %v6876 = vpop.f32.mrf.mxu0
  %v6877 = vadd.f32 0.0, %v6876
  %v6878 = vpop.f32.mrf.mxu0
  %6879 = vdwg.mxu0
  %v6880 = vadd.f32 %v6823, %v6838
  %v6881 = vadd.f32 %v6824, %v6851
  %v6882 = vadd.f32 %v6825, %v6864
  %v6883 = vadd.f32 %v6826, %v6877
  %v6884 = vxor.u32 %v6880, 2147483648
  %v6885 = vmul.f32 %v6884, 1.442695
  %v6886 = vpow.pop %v6885
  %v6887 = vadd.f32 %v6886, 1.0
  %v6888 = vrcp.pop %v6887
  %v6889 = vmul.f32 %v6887, %v6888
  %v6890 = vsub.f32 1.0, %v6889
  %v6891 = vmul.f32 %v6888, %v6890
  %v6892 = vadd.f32 %v6888, %v6891
  %vm6893 = vweird.f32 %v6887
  %vm6894 = vweird.f32 %v6888
  %vm6895 = vmor %vm6893, %vm6894
  %v6896 = vsel %vm6895, %v6888, %v6892
  %v6897 = vand.u32 2147483647, %v6887
  %vm6898 = vcmp.eq.f32.partialorder %v6897, 8.507059e+37
  %v6899 = vand.u32 %v6887, 2147483648
  %v6900 = vor.u32 1.1754944e-38, %v6899
  %v6901 = vsel %vm6898, %v6900, %v6896
  %v6902 = vmul.f32 1.0, %v6901
  %v6903 = vxor.u32 %v6881, 2147483648
  %v6904 = vmul.f32 %v6903, 1.442695
  %v6905 = vpow.pop %v6904
  %v6906 = vadd.f32 %v6905, 1.0
  %v6907 = vrcp.pop %v6906
  %v6908 = vmul.f32 %v6906, %v6907
  %v6909 = vsub.f32 1.0, %v6908
  %v6910 = vmul.f32 %v6907, %v6909
  %v6911 = vadd.f32 %v6907, %v6910
  %vm6912 = vweird.f32 %v6906
  %vm6913 = vweird.f32 %v6907
  %vm6914 = vmor %vm6912, %vm6913
  %v6915 = vsel %vm6914, %v6907, %v6911
  %v6916 = vand.u32 2147483647, %v6906
  %vm6917 = vcmp.eq.f32.partialorder %v6916, 8.507059e+37
  %v6918 = vand.u32 %v6906, 2147483648
  %v6919 = vor.u32 1.1754944e-38, %v6918
  %v6920 = vsel %vm6917, %v6919, %v6915
  %v6921 = vmul.f32 1.0, %v6920
  %v6922 = vtanh.pop %v6882
  %v6923 = vxor.u32 %v6883, 2147483648
  %v6924 = vmul.f32 %v6923, 1.442695
  %v6925 = vpow.pop %v6924
  %v6926 = vadd.f32 %v6925, 1.0
  %v6927 = vrcp.pop %v6926
  %v6928 = vmul.f32 %v6926, %v6927
  %v6929 = vsub.f32 1.0, %v6928
  %v6930 = vmul.f32 %v6927, %v6929
  %v6931 = vadd.f32 %v6927, %v6930
  %vm6932 = vweird.f32 %v6926
  %vm6933 = vweird.f32 %v6927
  %vm6934 = vmor %vm6932, %vm6933
  %v6935 = vsel %vm6934, %v6927, %v6931
  %v6936 = vand.u32 2147483647, %v6926
  %vm6937 = vcmp.eq.f32.partialorder %v6936, 8.507059e+37
  %v6938 = vand.u32 %v6926, 2147483648
  %v6939 = vor.u32 1.1754944e-38, %v6938
  %v6940 = vsel %vm6937, %v6939, %v6935
  %v6941 = vmul.f32 1.0, %v6940
  %v6942 = vmul.f32 %v6921, %v6820
  %v6943 = vmul.f32 %v6902, %v6922
  %v6944 = vadd.f32 %v6942, %v6943
  %v6945 = vtanh.pop %v6944
  %v6946 = vmul.f32 %v6941, %v6945
  %v6947 = vld [vmem:[%s5] sm:$0xff]
  %v6948 = vld [vmem:[%s5 + $0x8] sm:$0xff]
  %v6949 = vld [vmem:[%s5 + $0x10] sm:$0xff]
  %v6950 = vld [vmem:[%s5 + $0x18] sm:$0xff]
  %v6951 = vld [vmem:[%s5 + $0x20] sm:$0xff]
  %v6952 = vld [vmem:[%s5 + $0x28] sm:$0xff]
  %v6953 = vld [vmem:[%s5 + $0x30] sm:$0xff]
  %v6954 = vld [vmem:[%s5 + $0x38] sm:$0xff]
  %v6955 = vld [vmem:[%s5 + $0x40] sm:$0xff]
  %v6956 = vld [vmem:[%s5 + $0x48] sm:$0xff]
  %v6957 = vld [vmem:[%s5 + $0x50] sm:$0xff]
  %v6958 = vld [vmem:[%s5 + $0x58] sm:$0xff]
  %v6959 = vld [vmem:[%s5 + $0x60] sm:$0xff]
  %v6960 = vld [vmem:[%s5 + $0x68] sm:$0xff]
  %v6961 = vld [vmem:[%s5 + $0x70] sm:$0xff]
  %v6962 = vld [vmem:[%s5 + $0x78] sm:$0xff]
  %s6963 = scalar_lea.vmem %s5, 128
  %v6964 = vld [vmem:[%s6963] sm:$0xff]
  %v6965 = vld [vmem:[%s6963 + $0x8] sm:$0xff]
  %v6966 = vld [vmem:[%s6963 + $0x10] sm:$0xff]
  %v6967 = vld [vmem:[%s6963 + $0x18] sm:$0xff]
  %v6968 = vld [vmem:[%s6963 + $0x20] sm:$0xff]
  %v6969 = vld [vmem:[%s6963 + $0x28] sm:$0xff]
  %v6970 = vld [vmem:[%s6963 + $0x30] sm:$0xff]
  %v6971 = vld [vmem:[%s6963 + $0x38] sm:$0xff]
  %v6972 = vld [vmem:[%s6963 + $0x40] sm:$0xff]
  %v6973 = vld [vmem:[%s6963 + $0x48] sm:$0xff]
  %v6974 = vld [vmem:[%s6963 + $0x50] sm:$0xff]
  %v6975 = vld [vmem:[%s6963 + $0x58] sm:$0xff]
  %v6976 = vld [vmem:[%s6963 + $0x60] sm:$0xff]
  %v6977 = vld [vmem:[%s6963 + $0x68] sm:$0xff]
  %v6978 = vld [vmem:[%s6963 + $0x70] sm:$0xff]
  %v6979 = vld [vmem:[%s6963 + $0x78] sm:$0xff]
  %v6980 = vand.u32 %v6979, 4294901760
  %6981 = vmatpush.msra.mxu0 %v6980
  %v6982 = vand.u32 %v6978, 4294901760
  %6983 = vmatpush.msra.mxu0 %v6982
  %v6984 = vand.u32 %v6977, 4294901760
  %6985 = vmatpush.msra.mxu0 %v6984
  %v6986 = vand.u32 %v6976, 4294901760
  %6987 = vmatpush.msra.mxu0 %v6986
  %v6988 = vand.u32 %v6975, 4294901760
  %6989 = vmatpush.msra.mxu0 %v6988
  %v6990 = vand.u32 %v6974, 4294901760
  %6991 = vmatpush.msra.mxu0 %v6990
  %v6992 = vand.u32 %v6973, 4294901760
  %6993 = vmatpush.msra.mxu0 %v6992
  %v6994 = vand.u32 %v6972, 4294901760
  %6995 = vmatpush.msra.mxu0 %v6994
  %v6996 = vand.u32 %v6971, 4294901760
  %6997 = vmatpush.msra.mxu0 %v6996
  %v6998 = vand.u32 %v6970, 4294901760
  %6999 = vmatpush.msra.mxu0 %v6998
  %v7000 = vand.u32 %v6969, 4294901760
  %7001 = vmatpush.msra.mxu0 %v7000
  %v7002 = vand.u32 %v6968, 4294901760
  %7003 = vmatpush.msra.mxu0 %v7002
  %v7004 = vand.u32 %v6967, 4294901760
  %7005 = vmatpush.msra.mxu0 %v7004
  %v7006 = vand.u32 %v6966, 4294901760
  %7007 = vmatpush.msra.mxu0 %v7006
  %v7008 = vand.u32 %v6965, 4294901760
  %7009 = vmatpush.msra.mxu0 %v7008
  %v7010 = vand.u32 %v6964, 4294901760
  %7011 = vmatpush.msra.mxu0 %v7010
  %v7012 = vand.u32 %v6946, 4294901760
  %v7013 = vsub.f32 %v6946, %v7012
  %v7014 = vand.u32 %v7013, 4294901760
  %v7015 = vsub.f32 %v7013, %v7014
  %v7016 = vand.u32 %v7015, 4294901760
  %7017 = vmatmul.f32.gmra.mxu0 %v7016
  %v7018 = vpop.f32.mrf.mxu0
  %v7019 = vadd.f32 0.0, %v7018
  %7020 = vdwg.mxu0
  %v7021 = vand.u32 %v6979, 4294901760
  %v7022 = vsub.f32 %v6979, %v7021
  %v7023 = vand.u32 %v7022, 4294901760
  %v7024 = vsub.f32 %v7022, %v7023
  %v7025 = vand.u32 %v7024, 4294901760
  %7026 = vmatpush.msra.mxu0 %v7025
  %v7027 = vand.u32 %v6978, 4294901760
  %v7028 = vsub.f32 %v6978, %v7027
  %v7029 = vand.u32 %v7028, 4294901760
  %v7030 = vsub.f32 %v7028, %v7029
  %v7031 = vand.u32 %v7030, 4294901760
  %7032 = vmatpush.msra.mxu0 %v7031
  %v7033 = vand.u32 %v6977, 4294901760
  %v7034 = vsub.f32 %v6977, %v7033
  %v7035 = vand.u32 %v7034, 4294901760
  %v7036 = vsub.f32 %v7034, %v7035
  %v7037 = vand.u32 %v7036, 4294901760
  %7038 = vmatpush.msra.mxu0 %v7037
  %v7039 = vand.u32 %v6976, 4294901760
  %v7040 = vsub.f32 %v6976, %v7039
  %v7041 = vand.u32 %v7040, 4294901760
  %v7042 = vsub.f32 %v7040, %v7041
  %v7043 = vand.u32 %v7042, 4294901760
  %7044 = vmatpush.msra.mxu0 %v7043
  %v7045 = vand.u32 %v6975, 4294901760
  %v7046 = vsub.f32 %v6975, %v7045
  %v7047 = vand.u32 %v7046, 4294901760
  %v7048 = vsub.f32 %v7046, %v7047
  %v7049 = vand.u32 %v7048, 4294901760
  %7050 = vmatpush.msra.mxu0 %v7049
  %v7051 = vand.u32 %v6974, 4294901760
  %v7052 = vsub.f32 %v6974, %v7051
  %v7053 = vand.u32 %v7052, 4294901760
  %v7054 = vsub.f32 %v7052, %v7053
  %v7055 = vand.u32 %v7054, 4294901760
  %7056 = vmatpush.msra.mxu0 %v7055
  %v7057 = vand.u32 %v6973, 4294901760
  %v7058 = vsub.f32 %v6973, %v7057
  %v7059 = vand.u32 %v7058, 4294901760
  %v7060 = vsub.f32 %v7058, %v7059
  %v7061 = vand.u32 %v7060, 4294901760
  %7062 = vmatpush.msra.mxu0 %v7061
  %v7063 = vand.u32 %v6972, 4294901760
  %v7064 = vsub.f32 %v6972, %v7063
  %v7065 = vand.u32 %v7064, 4294901760
  %v7066 = vsub.f32 %v7064, %v7065
  %v7067 = vand.u32 %v7066, 4294901760
  %7068 = vmatpush.msra.mxu0 %v7067
  %v7069 = vand.u32 %v6971, 4294901760
  %v7070 = vsub.f32 %v6971, %v7069
  %v7071 = vand.u32 %v7070, 4294901760
  %v7072 = vsub.f32 %v7070, %v7071
  %v7073 = vand.u32 %v7072, 4294901760
  %7074 = vmatpush.msra.mxu0 %v7073
  %v7075 = vand.u32 %v6970, 4294901760
  %v7076 = vsub.f32 %v6970, %v7075
  %v7077 = vand.u32 %v7076, 4294901760
  %v7078 = vsub.f32 %v7076, %v7077
  %v7079 = vand.u32 %v7078, 4294901760
  %7080 = vmatpush.msra.mxu0 %v7079
  %v7081 = vand.u32 %v6969, 4294901760
  %v7082 = vsub.f32 %v6969, %v7081
  %v7083 = vand.u32 %v7082, 4294901760
  %v7084 = vsub.f32 %v7082, %v7083
  %v7085 = vand.u32 %v7084, 4294901760
  %7086 = vmatpush.msra.mxu0 %v7085
  %v7087 = vand.u32 %v6968, 4294901760
  %v7088 = vsub.f32 %v6968, %v7087
  %v7089 = vand.u32 %v7088, 4294901760
  %v7090 = vsub.f32 %v7088, %v7089
  %v7091 = vand.u32 %v7090, 4294901760
  %7092 = vmatpush.msra.mxu0 %v7091
  %v7093 = vand.u32 %v6967, 4294901760
  %v7094 = vsub.f32 %v6967, %v7093
  %v7095 = vand.u32 %v7094, 4294901760
  %v7096 = vsub.f32 %v7094, %v7095
  %v7097 = vand.u32 %v7096, 4294901760
  %7098 = vmatpush.msra.mxu0 %v7097
  %v7099 = vand.u32 %v6966, 4294901760
  %v7100 = vsub.f32 %v6966, %v7099
  %v7101 = vand.u32 %v7100, 4294901760
  %v7102 = vsub.f32 %v7100, %v7101
  %v7103 = vand.u32 %v7102, 4294901760
  %7104 = vmatpush.msra.mxu0 %v7103
  %v7105 = vand.u32 %v6965, 4294901760
  %v7106 = vsub.f32 %v6965, %v7105
  %v7107 = vand.u32 %v7106, 4294901760
  %v7108 = vsub.f32 %v7106, %v7107
  %v7109 = vand.u32 %v7108, 4294901760
  %7110 = vmatpush.msra.mxu0 %v7109
  %v7111 = vand.u32 %v6964, 4294901760
  %v7112 = vsub.f32 %v6964, %v7111
  %v7113 = vand.u32 %v7112, 4294901760
  %v7114 = vsub.f32 %v7112, %v7113
  %v7115 = vand.u32 %v7114, 4294901760
  %7116 = vmatpush.msra.mxu0 %v7115
  %v7117 = vand.u32 %v6946, 4294901760
  %7118 = vmatmul.f32.gmra.mxu0 %v7117
  %v7119 = vpop.f32.mrf.mxu0
  %v7120 = vadd.f32 %v7019, %v7119
  %7121 = vdwg.mxu0
  %v7122 = vand.u32 %v6979, 4294901760
  %v7123 = vsub.f32 %v6979, %v7122
  %7124 = vmatpush.msra.mxu0 %v7123
  %v7125 = vand.u32 %v6978, 4294901760
  %v7126 = vsub.f32 %v6978, %v7125
  %7127 = vmatpush.msra.mxu0 %v7126
  %v7128 = vand.u32 %v6977, 4294901760
  %v7129 = vsub.f32 %v6977, %v7128
  %7130 = vmatpush.msra.mxu0 %v7129
  %v7131 = vand.u32 %v6976, 4294901760
  %v7132 = vsub.f32 %v6976, %v7131
  %7133 = vmatpush.msra.mxu0 %v7132
  %v7134 = vand.u32 %v6975, 4294901760
  %v7135 = vsub.f32 %v6975, %v7134
  %7136 = vmatpush.msra.mxu0 %v7135
  %v7137 = vand.u32 %v6974, 4294901760
  %v7138 = vsub.f32 %v6974, %v7137
  %7139 = vmatpush.msra.mxu0 %v7138
  %v7140 = vand.u32 %v6973, 4294901760
  %v7141 = vsub.f32 %v6973, %v7140
  %7142 = vmatpush.msra.mxu0 %v7141
  %v7143 = vand.u32 %v6972, 4294901760
  %v7144 = vsub.f32 %v6972, %v7143
  %7145 = vmatpush.msra.mxu0 %v7144
  %v7146 = vand.u32 %v6971, 4294901760
  %v7147 = vsub.f32 %v6971, %v7146
  %7148 = vmatpush.msra.mxu0 %v7147
  %v7149 = vand.u32 %v6970, 4294901760
  %v7150 = vsub.f32 %v6970, %v7149
  %7151 = vmatpush.msra.mxu0 %v7150
  %v7152 = vand.u32 %v6969, 4294901760
  %v7153 = vsub.f32 %v6969, %v7152
  %7154 = vmatpush.msra.mxu0 %v7153
  %v7155 = vand.u32 %v6968, 4294901760
  %v7156 = vsub.f32 %v6968, %v7155
  %7157 = vmatpush.msra.mxu0 %v7156
  %v7158 = vand.u32 %v6967, 4294901760
  %v7159 = vsub.f32 %v6967, %v7158
  %7160 = vmatpush.msra.mxu0 %v7159
  %v7161 = vand.u32 %v6966, 4294901760
  %v7162 = vsub.f32 %v6966, %v7161
  %7163 = vmatpush.msra.mxu0 %v7162
  %v7164 = vand.u32 %v6965, 4294901760
  %v7165 = vsub.f32 %v6965, %v7164
  %7166 = vmatpush.msra.mxu0 %v7165
  %v7167 = vand.u32 %v6964, 4294901760
  %v7168 = vsub.f32 %v6964, %v7167
  %7169 = vmatpush.msra.mxu0 %v7168
  %v7170 = vand.u32 %v6946, 4294901760
  %v7171 = vsub.f32 %v6946, %v7170
  %7172 = vmatmul.f32.gmra.mxu0 %v7171
  %v7173 = vpop.f32.mrf.mxu0
  %v7174 = vadd.f32 %v7120, %v7173
  %7175 = vdwg.mxu0
  %v7176 = vand.u32 %v6979, 4294901760
  %7177 = vmatpush.msra.mxu0 %v7176
  %v7178 = vand.u32 %v6978, 4294901760
  %7179 = vmatpush.msra.mxu0 %v7178
  %v7180 = vand.u32 %v6977, 4294901760
  %7181 = vmatpush.msra.mxu0 %v7180
  %v7182 = vand.u32 %v6976, 4294901760
  %7183 = vmatpush.msra.mxu0 %v7182
  %v7184 = vand.u32 %v6975, 4294901760
  %7185 = vmatpush.msra.mxu0 %v7184
  %v7186 = vand.u32 %v6974, 4294901760
  %7187 = vmatpush.msra.mxu0 %v7186
  %v7188 = vand.u32 %v6973, 4294901760
  %7189 = vmatpush.msra.mxu0 %v7188
  %v7190 = vand.u32 %v6972, 4294901760
  %7191 = vmatpush.msra.mxu0 %v7190
  %v7192 = vand.u32 %v6971, 4294901760
  %7193 = vmatpush.msra.mxu0 %v7192
  %v7194 = vand.u32 %v6970, 4294901760
  %7195 = vmatpush.msra.mxu0 %v7194
  %v7196 = vand.u32 %v6969, 4294901760
  %7197 = vmatpush.msra.mxu0 %v7196
  %v7198 = vand.u32 %v6968, 4294901760
  %7199 = vmatpush.msra.mxu0 %v7198
  %v7200 = vand.u32 %v6967, 4294901760
  %7201 = vmatpush.msra.mxu0 %v7200
  %v7202 = vand.u32 %v6966, 4294901760
  %7203 = vmatpush.msra.mxu0 %v7202
  %v7204 = vand.u32 %v6965, 4294901760
  %7205 = vmatpush.msra.mxu0 %v7204
  %v7206 = vand.u32 %v6964, 4294901760
  %7207 = vmatpush.msra.mxu0 %v7206
  %v7208 = vand.u32 %v6946, 4294901760
  %v7209 = vsub.f32 %v6946, %v7208
  %v7210 = vand.u32 %v7209, 4294901760
  %7211 = vmatmul.f32.gmra.mxu0 %v7210
  %v7212 = vpop.f32.mrf.mxu0
  %v7213 = vadd.f32 %v7174, %v7212
  %7214 = vdwg.mxu0
  %v7215 = vand.u32 %v6979, 4294901760
  %v7216 = vsub.f32 %v6979, %v7215
  %v7217 = vand.u32 %v7216, 4294901760
  %7218 = vmatpush.msra.mxu0 %v7217
  %v7219 = vand.u32 %v6978, 4294901760
  %v7220 = vsub.f32 %v6978, %v7219
  %v7221 = vand.u32 %v7220, 4294901760
  %7222 = vmatpush.msra.mxu0 %v7221
  %v7223 = vand.u32 %v6977, 4294901760
  %v7224 = vsub.f32 %v6977, %v7223
  %v7225 = vand.u32 %v7224, 4294901760
  %7226 = vmatpush.msra.mxu0 %v7225
  %v7227 = vand.u32 %v6976, 4294901760
  %v7228 = vsub.f32 %v6976, %v7227
  %v7229 = vand.u32 %v7228, 4294901760
  %7230 = vmatpush.msra.mxu0 %v7229
  %v7231 = vand.u32 %v6975, 4294901760
  %v7232 = vsub.f32 %v6975, %v7231
  %v7233 = vand.u32 %v7232, 4294901760
  %7234 = vmatpush.msra.mxu0 %v7233
  %v7235 = vand.u32 %v6974, 4294901760
  %v7236 = vsub.f32 %v6974, %v7235
  %v7237 = vand.u32 %v7236, 4294901760
  %7238 = vmatpush.msra.mxu0 %v7237
  %v7239 = vand.u32 %v6973, 4294901760
  %v7240 = vsub.f32 %v6973, %v7239
  %v7241 = vand.u32 %v7240, 4294901760
  %7242 = vmatpush.msra.mxu0 %v7241
  %v7243 = vand.u32 %v6972, 4294901760
  %v7244 = vsub.f32 %v6972, %v7243
  %v7245 = vand.u32 %v7244, 4294901760
  %7246 = vmatpush.msra.mxu0 %v7245
  %v7247 = vand.u32 %v6971, 4294901760
  %v7248 = vsub.f32 %v6971, %v7247
  %v7249 = vand.u32 %v7248, 4294901760
  %7250 = vmatpush.msra.mxu0 %v7249
  %v7251 = vand.u32 %v6970, 4294901760
  %v7252 = vsub.f32 %v6970, %v7251
  %v7253 = vand.u32 %v7252, 4294901760
  %7254 = vmatpush.msra.mxu0 %v7253
  %v7255 = vand.u32 %v6969, 4294901760
  %v7256 = vsub.f32 %v6969, %v7255
  %v7257 = vand.u32 %v7256, 4294901760
  %7258 = vmatpush.msra.mxu0 %v7257
  %v7259 = vand.u32 %v6968, 4294901760
  %v7260 = vsub.f32 %v6968, %v7259
  %v7261 = vand.u32 %v7260, 4294901760
  %7262 = vmatpush.msra.mxu0 %v7261
  %v7263 = vand.u32 %v6967, 4294901760
  %v7264 = vsub.f32 %v6967, %v7263
  %v7265 = vand.u32 %v7264, 4294901760
  %7266 = vmatpush.msra.mxu0 %v7265
  %v7267 = vand.u32 %v6966, 4294901760
  %v7268 = vsub.f32 %v6966, %v7267
  %v7269 = vand.u32 %v7268, 4294901760
  %7270 = vmatpush.msra.mxu0 %v7269
  %v7271 = vand.u32 %v6965, 4294901760
  %v7272 = vsub.f32 %v6965, %v7271
  %v7273 = vand.u32 %v7272, 4294901760
  %7274 = vmatpush.msra.mxu0 %v7273
  %v7275 = vand.u32 %v6964, 4294901760
  %v7276 = vsub.f32 %v6964, %v7275
  %v7277 = vand.u32 %v7276, 4294901760
  %7278 = vmatpush.msra.mxu0 %v7277
  %v7279 = vand.u32 %v6946, 4294901760
  %7280 = vmatmul.f32.gmra.mxu0 %v7279
  %v7281 = vpop.f32.mrf.mxu0
  %v7282 = vadd.f32 %v7213, %v7281
  %7283 = vdwg.mxu0
  %v7284 = vand.u32 %v6979, 4294901760
  %7285 = vmatpush.msra.mxu0 %v7284
  %v7286 = vand.u32 %v6978, 4294901760
  %7287 = vmatpush.msra.mxu0 %v7286
  %v7288 = vand.u32 %v6977, 4294901760
  %7289 = vmatpush.msra.mxu0 %v7288
  %v7290 = vand.u32 %v6976, 4294901760
  %7291 = vmatpush.msra.mxu0 %v7290
  %v7292 = vand.u32 %v6975, 4294901760
  %7293 = vmatpush.msra.mxu0 %v7292
  %v7294 = vand.u32 %v6974, 4294901760
  %7295 = vmatpush.msra.mxu0 %v7294
  %v7296 = vand.u32 %v6973, 4294901760
  %7297 = vmatpush.msra.mxu0 %v7296
  %v7298 = vand.u32 %v6972, 4294901760
  %7299 = vmatpush.msra.mxu0 %v7298
  %v7300 = vand.u32 %v6971, 4294901760
  %7301 = vmatpush.msra.mxu0 %v7300
  %v7302 = vand.u32 %v6970, 4294901760
  %7303 = vmatpush.msra.mxu0 %v7302
  %v7304 = vand.u32 %v6969, 4294901760
  %7305 = vmatpush.msra.mxu0 %v7304
  %v7306 = vand.u32 %v6968, 4294901760
  %7307 = vmatpush.msra.mxu0 %v7306
  %v7308 = vand.u32 %v6967, 4294901760
  %7309 = vmatpush.msra.mxu0 %v7308
  %v7310 = vand.u32 %v6966, 4294901760
  %7311 = vmatpush.msra.mxu0 %v7310
  %v7312 = vand.u32 %v6965, 4294901760
  %7313 = vmatpush.msra.mxu0 %v7312
  %v7314 = vand.u32 %v6964, 4294901760
  %7315 = vmatpush.msra.mxu0 %v7314
  %v7316 = vand.u32 %v6946, 4294901760
  %7317 = vmatmul.f32.gmra.mxu0 %v7316
  %v7318 = vpop.f32.mrf.mxu0
  %v7319 = vadd.f32 %v7282, %v7318
  %7320 = vdwg.mxu0
  %v7321 = vand.u32 %v6962, 4294901760
  %7322 = vmatpush.msra.mxu0 %v7321
  %v7323 = vand.u32 %v6961, 4294901760
  %7324 = vmatpush.msra.mxu0 %v7323
  %v7325 = vand.u32 %v6960, 4294901760
  %7326 = vmatpush.msra.mxu0 %v7325
  %v7327 = vand.u32 %v6959, 4294901760
  %7328 = vmatpush.msra.mxu0 %v7327
  %v7329 = vand.u32 %v6958, 4294901760
  %7330 = vmatpush.msra.mxu0 %v7329
  %v7331 = vand.u32 %v6957, 4294901760
  %7332 = vmatpush.msra.mxu0 %v7331
  %v7333 = vand.u32 %v6956, 4294901760
  %7334 = vmatpush.msra.mxu0 %v7333
  %v7335 = vand.u32 %v6955, 4294901760
  %7336 = vmatpush.msra.mxu0 %v7335
  %v7337 = vand.u32 %v6954, 4294901760
  %7338 = vmatpush.msra.mxu0 %v7337
  %v7339 = vand.u32 %v6953, 4294901760
  %7340 = vmatpush.msra.mxu0 %v7339
  %v7341 = vand.u32 %v6952, 4294901760
  %7342 = vmatpush.msra.mxu0 %v7341
  %v7343 = vand.u32 %v6951, 4294901760
  %7344 = vmatpush.msra.mxu0 %v7343
  %v7345 = vand.u32 %v6950, 4294901760
  %7346 = vmatpush.msra.mxu0 %v7345
  %v7347 = vand.u32 %v6949, 4294901760
  %7348 = vmatpush.msra.mxu0 %v7347
  %v7349 = vand.u32 %v6948, 4294901760
  %7350 = vmatpush.msra.mxu0 %v7349
  %v7351 = vand.u32 %v6947, 4294901760
  %7352 = vmatpush.msra.mxu0 %v7351
  %v7353 = vand.u32 %v1152, 4294901760
  %v7354 = vsub.f32 %v1152, %v7353
  %v7355 = vand.u32 %v7354, 4294901760
  %v7356 = vsub.f32 %v7354, %v7355
  %v7357 = vand.u32 %v7356, 4294901760
  %7358 = vmatmul.f32.gmra.mxu0 %v7357
  %v7359 = vpop.f32.mrf.mxu0
  %v7360 = vadd.f32 %v7319, %v7359
  %7361 = vdwg.mxu0
  %v7362 = vand.u32 %v6962, 4294901760
  %v7363 = vsub.f32 %v6962, %v7362
  %v7364 = vand.u32 %v7363, 4294901760
  %v7365 = vsub.f32 %v7363, %v7364
  %v7366 = vand.u32 %v7365, 4294901760
  %7367 = vmatpush.msra.mxu0 %v7366
  %v7368 = vand.u32 %v6961, 4294901760
  %v7369 = vsub.f32 %v6961, %v7368
  %v7370 = vand.u32 %v7369, 4294901760
  %v7371 = vsub.f32 %v7369, %v7370
  %v7372 = vand.u32 %v7371, 4294901760
  %7373 = vmatpush.msra.mxu0 %v7372
  %v7374 = vand.u32 %v6960, 4294901760
  %v7375 = vsub.f32 %v6960, %v7374
  %v7376 = vand.u32 %v7375, 4294901760
  %v7377 = vsub.f32 %v7375, %v7376
  %v7378 = vand.u32 %v7377, 4294901760
  %7379 = vmatpush.msra.mxu0 %v7378
  %v7380 = vand.u32 %v6959, 4294901760
  %v7381 = vsub.f32 %v6959, %v7380
  %v7382 = vand.u32 %v7381, 4294901760
  %v7383 = vsub.f32 %v7381, %v7382
  %v7384 = vand.u32 %v7383, 4294901760
  %7385 = vmatpush.msra.mxu0 %v7384
  %v7386 = vand.u32 %v6958, 4294901760
  %v7387 = vsub.f32 %v6958, %v7386
  %v7388 = vand.u32 %v7387, 4294901760
  %v7389 = vsub.f32 %v7387, %v7388
  %v7390 = vand.u32 %v7389, 4294901760
  %7391 = vmatpush.msra.mxu0 %v7390
  %v7392 = vand.u32 %v6957, 4294901760
  %v7393 = vsub.f32 %v6957, %v7392
  %v7394 = vand.u32 %v7393, 4294901760
  %v7395 = vsub.f32 %v7393, %v7394
  %v7396 = vand.u32 %v7395, 4294901760
  %7397 = vmatpush.msra.mxu0 %v7396
  %v7398 = vand.u32 %v6956, 4294901760
  %v7399 = vsub.f32 %v6956, %v7398
  %v7400 = vand.u32 %v7399, 4294901760
  %v7401 = vsub.f32 %v7399, %v7400
  %v7402 = vand.u32 %v7401, 4294901760
  %7403 = vmatpush.msra.mxu0 %v7402
  %v7404 = vand.u32 %v6955, 4294901760
  %v7405 = vsub.f32 %v6955, %v7404
  %v7406 = vand.u32 %v7405, 4294901760
  %v7407 = vsub.f32 %v7405, %v7406
  %v7408 = vand.u32 %v7407, 4294901760
  %7409 = vmatpush.msra.mxu0 %v7408
  %v7410 = vand.u32 %v6954, 4294901760
  %v7411 = vsub.f32 %v6954, %v7410
  %v7412 = vand.u32 %v7411, 4294901760
  %v7413 = vsub.f32 %v7411, %v7412
  %v7414 = vand.u32 %v7413, 4294901760
  %7415 = vmatpush.msra.mxu0 %v7414
  %v7416 = vand.u32 %v6953, 4294901760
  %v7417 = vsub.f32 %v6953, %v7416
  %v7418 = vand.u32 %v7417, 4294901760
  %v7419 = vsub.f32 %v7417, %v7418
  %v7420 = vand.u32 %v7419, 4294901760
  %7421 = vmatpush.msra.mxu0 %v7420
  %v7422 = vand.u32 %v6952, 4294901760
  %v7423 = vsub.f32 %v6952, %v7422
  %v7424 = vand.u32 %v7423, 4294901760
  %v7425 = vsub.f32 %v7423, %v7424
  %v7426 = vand.u32 %v7425, 4294901760
  %7427 = vmatpush.msra.mxu0 %v7426
  %v7428 = vand.u32 %v6951, 4294901760
  %v7429 = vsub.f32 %v6951, %v7428
  %v7430 = vand.u32 %v7429, 4294901760
  %v7431 = vsub.f32 %v7429, %v7430
  %v7432 = vand.u32 %v7431, 4294901760
  %7433 = vmatpush.msra.mxu0 %v7432
  %v7434 = vand.u32 %v6950, 4294901760
  %v7435 = vsub.f32 %v6950, %v7434
  %v7436 = vand.u32 %v7435, 4294901760
  %v7437 = vsub.f32 %v7435, %v7436
  %v7438 = vand.u32 %v7437, 4294901760
  %7439 = vmatpush.msra.mxu0 %v7438
  %v7440 = vand.u32 %v6949, 4294901760
  %v7441 = vsub.f32 %v6949, %v7440
  %v7442 = vand.u32 %v7441, 4294901760
  %v7443 = vsub.f32 %v7441, %v7442
  %v7444 = vand.u32 %v7443, 4294901760
  %7445 = vmatpush.msra.mxu0 %v7444
  %v7446 = vand.u32 %v6948, 4294901760
  %v7447 = vsub.f32 %v6948, %v7446
  %v7448 = vand.u32 %v7447, 4294901760
  %v7449 = vsub.f32 %v7447, %v7448
  %v7450 = vand.u32 %v7449, 4294901760
  %7451 = vmatpush.msra.mxu0 %v7450
  %v7452 = vand.u32 %v6947, 4294901760
  %v7453 = vsub.f32 %v6947, %v7452
  %v7454 = vand.u32 %v7453, 4294901760
  %v7455 = vsub.f32 %v7453, %v7454
  %v7456 = vand.u32 %v7455, 4294901760
  %7457 = vmatpush.msra.mxu0 %v7456
  %v7458 = vand.u32 %v1152, 4294901760
  %7459 = vmatmul.f32.gmra.mxu0 %v7458
  %v7460 = vpop.f32.mrf.mxu0
  %v7461 = vadd.f32 %v7360, %v7460
  %7462 = vdwg.mxu0
  %v7463 = vand.u32 %v6962, 4294901760
  %v7464 = vsub.f32 %v6962, %v7463
  %7465 = vmatpush.msra.mxu0 %v7464
  %v7466 = vand.u32 %v6961, 4294901760
  %v7467 = vsub.f32 %v6961, %v7466
  %7468 = vmatpush.msra.mxu0 %v7467
  %v7469 = vand.u32 %v6960, 4294901760
  %v7470 = vsub.f32 %v6960, %v7469
  %7471 = vmatpush.msra.mxu0 %v7470
  %v7472 = vand.u32 %v6959, 4294901760
  %v7473 = vsub.f32 %v6959, %v7472
  %7474 = vmatpush.msra.mxu0 %v7473
  %v7475 = vand.u32 %v6958, 4294901760
  %v7476 = vsub.f32 %v6958, %v7475
  %7477 = vmatpush.msra.mxu0 %v7476
  %v7478 = vand.u32 %v6957, 4294901760
  %v7479 = vsub.f32 %v6957, %v7478
  %7480 = vmatpush.msra.mxu0 %v7479
  %v7481 = vand.u32 %v6956, 4294901760
  %v7482 = vsub.f32 %v6956, %v7481
  %7483 = vmatpush.msra.mxu0 %v7482
  %v7484 = vand.u32 %v6955, 4294901760
  %v7485 = vsub.f32 %v6955, %v7484
  %7486 = vmatpush.msra.mxu0 %v7485
  %v7487 = vand.u32 %v6954, 4294901760
  %v7488 = vsub.f32 %v6954, %v7487
  %7489 = vmatpush.msra.mxu0 %v7488
  %v7490 = vand.u32 %v6953, 4294901760
  %v7491 = vsub.f32 %v6953, %v7490
  %7492 = vmatpush.msra.mxu0 %v7491
  %v7493 = vand.u32 %v6952, 4294901760
  %v7494 = vsub.f32 %v6952, %v7493
  %7495 = vmatpush.msra.mxu0 %v7494
  %v7496 = vand.u32 %v6951, 4294901760
  %v7497 = vsub.f32 %v6951, %v7496
  %7498 = vmatpush.msra.mxu0 %v7497
  %v7499 = vand.u32 %v6950, 4294901760
  %v7500 = vsub.f32 %v6950, %v7499
  %7501 = vmatpush.msra.mxu0 %v7500
  %v7502 = vand.u32 %v6949, 4294901760
  %v7503 = vsub.f32 %v6949, %v7502
  %7504 = vmatpush.msra.mxu0 %v7503
  %v7505 = vand.u32 %v6948, 4294901760
  %v7506 = vsub.f32 %v6948, %v7505
  %7507 = vmatpush.msra.mxu0 %v7506
  %v7508 = vand.u32 %v6947, 4294901760
  %v7509 = vsub.f32 %v6947, %v7508
  %7510 = vmatpush.msra.mxu0 %v7509
  %v7511 = vand.u32 %v1152, 4294901760
  %v7512 = vsub.f32 %v1152, %v7511
  %7513 = vmatmul.f32.gmra.mxu0 %v7512
  %v7514 = vpop.f32.mrf.mxu0
  %v7515 = vadd.f32 %v7461, %v7514
  %7516 = vdwg.mxu0
  %v7517 = vand.u32 %v6962, 4294901760
  %7518 = vmatpush.msra.mxu0 %v7517
  %v7519 = vand.u32 %v6961, 4294901760
  %7520 = vmatpush.msra.mxu0 %v7519
  %v7521 = vand.u32 %v6960, 4294901760
  %7522 = vmatpush.msra.mxu0 %v7521
  %v7523 = vand.u32 %v6959, 4294901760
  %7524 = vmatpush.msra.mxu0 %v7523
  %v7525 = vand.u32 %v6958, 4294901760
  %7526 = vmatpush.msra.mxu0 %v7525
  %v7527 = vand.u32 %v6957, 4294901760
  %7528 = vmatpush.msra.mxu0 %v7527
  %v7529 = vand.u32 %v6956, 4294901760
  %7530 = vmatpush.msra.mxu0 %v7529
  %v7531 = vand.u32 %v6955, 4294901760
  %7532 = vmatpush.msra.mxu0 %v7531
  %v7533 = vand.u32 %v6954, 4294901760
  %7534 = vmatpush.msra.mxu0 %v7533
  %v7535 = vand.u32 %v6953, 4294901760
  %7536 = vmatpush.msra.mxu0 %v7535
  %v7537 = vand.u32 %v6952, 4294901760
  %7538 = vmatpush.msra.mxu0 %v7537
  %v7539 = vand.u32 %v6951, 4294901760
  %7540 = vmatpush.msra.mxu0 %v7539
  %v7541 = vand.u32 %v6950, 4294901760
  %7542 = vmatpush.msra.mxu0 %v7541
  %v7543 = vand.u32 %v6949, 4294901760
  %7544 = vmatpush.msra.mxu0 %v7543
  %v7545 = vand.u32 %v6948, 4294901760
  %7546 = vmatpush.msra.mxu0 %v7545
  %v7547 = vand.u32 %v6947, 4294901760
  %7548 = vmatpush.msra.mxu0 %v7547
  %v7549 = vand.u32 %v1152, 4294901760
  %v7550 = vsub.f32 %v1152, %v7549
  %v7551 = vand.u32 %v7550, 4294901760
  %7552 = vmatmul.f32.gmra.mxu0 %v7551
  %v7553 = vpop.f32.mrf.mxu0
  %v7554 = vadd.f32 %v7515, %v7553
  %7555 = vdwg.mxu0
  %v7556 = vand.u32 %v6962, 4294901760
  %v7557 = vsub.f32 %v6962, %v7556
  %v7558 = vand.u32 %v7557, 4294901760
  %7559 = vmatpush.msra.mxu0 %v7558
  %v7560 = vand.u32 %v6961, 4294901760
  %v7561 = vsub.f32 %v6961, %v7560
  %v7562 = vand.u32 %v7561, 4294901760
  %7563 = vmatpush.msra.mxu0 %v7562
  %v7564 = vand.u32 %v6960, 4294901760
  %v7565 = vsub.f32 %v6960, %v7564
  %v7566 = vand.u32 %v7565, 4294901760
  %7567 = vmatpush.msra.mxu0 %v7566
  %v7568 = vand.u32 %v6959, 4294901760
  %v7569 = vsub.f32 %v6959, %v7568
  %v7570 = vand.u32 %v7569, 4294901760
  %7571 = vmatpush.msra.mxu0 %v7570
  %v7572 = vand.u32 %v6958, 4294901760
  %v7573 = vsub.f32 %v6958, %v7572
  %v7574 = vand.u32 %v7573, 4294901760
  %7575 = vmatpush.msra.mxu0 %v7574
  %v7576 = vand.u32 %v6957, 4294901760
  %v7577 = vsub.f32 %v6957, %v7576
  %v7578 = vand.u32 %v7577, 4294901760
  %7579 = vmatpush.msra.mxu0 %v7578
  %v7580 = vand.u32 %v6956, 4294901760
  %v7581 = vsub.f32 %v6956, %v7580
  %v7582 = vand.u32 %v7581, 4294901760
  %7583 = vmatpush.msra.mxu0 %v7582
  %v7584 = vand.u32 %v6955, 4294901760
  %v7585 = vsub.f32 %v6955, %v7584
  %v7586 = vand.u32 %v7585, 4294901760
  %7587 = vmatpush.msra.mxu0 %v7586
  %v7588 = vand.u32 %v6954, 4294901760
  %v7589 = vsub.f32 %v6954, %v7588
  %v7590 = vand.u32 %v7589, 4294901760
  %7591 = vmatpush.msra.mxu0 %v7590
  %v7592 = vand.u32 %v6953, 4294901760
  %v7593 = vsub.f32 %v6953, %v7592
  %v7594 = vand.u32 %v7593, 4294901760
  %7595 = vmatpush.msra.mxu0 %v7594
  %v7596 = vand.u32 %v6952, 4294901760
  %v7597 = vsub.f32 %v6952, %v7596
  %v7598 = vand.u32 %v7597, 4294901760
  %7599 = vmatpush.msra.mxu0 %v7598
  %v7600 = vand.u32 %v6951, 4294901760
  %v7601 = vsub.f32 %v6951, %v7600
  %v7602 = vand.u32 %v7601, 4294901760
  %7603 = vmatpush.msra.mxu0 %v7602
  %v7604 = vand.u32 %v6950, 4294901760
  %v7605 = vsub.f32 %v6950, %v7604
  %v7606 = vand.u32 %v7605, 4294901760
  %7607 = vmatpush.msra.mxu0 %v7606
  %v7608 = vand.u32 %v6949, 4294901760
  %v7609 = vsub.f32 %v6949, %v7608
  %v7610 = vand.u32 %v7609, 4294901760
  %7611 = vmatpush.msra.mxu0 %v7610
  %v7612 = vand.u32 %v6948, 4294901760
  %v7613 = vsub.f32 %v6948, %v7612
  %v7614 = vand.u32 %v7613, 4294901760
  %7615 = vmatpush.msra.mxu0 %v7614
  %v7616 = vand.u32 %v6947, 4294901760
  %v7617 = vsub.f32 %v6947, %v7616
  %v7618 = vand.u32 %v7617, 4294901760
  %7619 = vmatpush.msra.mxu0 %v7618
  %v7620 = vand.u32 %v1152, 4294901760
  %7621 = vmatmul.f32.gmra.mxu0 %v7620
  %v7622 = vpop.f32.mrf.mxu0
  %v7623 = vadd.f32 %v7554, %v7622
  %7624 = vdwg.mxu0
  %v7625 = vand.u32 %v6962, 4294901760
  %7626 = vmatpush.msra.mxu0 %v7625
  %v7627 = vand.u32 %v6961, 4294901760
  %7628 = vmatpush.msra.mxu0 %v7627
  %v7629 = vand.u32 %v6960, 4294901760
  %7630 = vmatpush.msra.mxu0 %v7629
  %v7631 = vand.u32 %v6959, 4294901760
  %7632 = vmatpush.msra.mxu0 %v7631
  %v7633 = vand.u32 %v6958, 4294901760
  %7634 = vmatpush.msra.mxu0 %v7633
  %v7635 = vand.u32 %v6957, 4294901760
  %7636 = vmatpush.msra.mxu0 %v7635
  %v7637 = vand.u32 %v6956, 4294901760
  %7638 = vmatpush.msra.mxu0 %v7637
  %v7639 = vand.u32 %v6955, 4294901760
  %7640 = vmatpush.msra.mxu0 %v7639
  %v7641 = vand.u32 %v6954, 4294901760
  %7642 = vmatpush.msra.mxu0 %v7641
  %v7643 = vand.u32 %v6953, 4294901760
  %7644 = vmatpush.msra.mxu0 %v7643
  %v7645 = vand.u32 %v6952, 4294901760
  %7646 = vmatpush.msra.mxu0 %v7645
  %v7647 = vand.u32 %v6951, 4294901760
  %7648 = vmatpush.msra.mxu0 %v7647
  %v7649 = vand.u32 %v6950, 4294901760
  %7650 = vmatpush.msra.mxu0 %v7649
  %v7651 = vand.u32 %v6949, 4294901760
  %7652 = vmatpush.msra.mxu0 %v7651
  %v7653 = vand.u32 %v6948, 4294901760
  %7654 = vmatpush.msra.mxu0 %v7653
  %v7655 = vand.u32 %v6947, 4294901760
  %7656 = vmatpush.msra.mxu0 %v7655
  %v7657 = vand.u32 %v1152, 4294901760
  %7658 = vmatmul.f32.gmra.mxu0 %v7657
  %v7659 = vpop.f32.mrf.mxu0
  %v7660 = vadd.f32 %v7623, %v7659
  %7661 = vdwg.mxu0
  %v7662 = vld [vmem:[%s6] sm:$0x1]
  %v7664 = vperm.slane %v7662, 0
  %v7666 = vadd.f32 %v7660, %v7664
  %vm7667 = vcmask 23552
  %7668 = vst.msk [vmem:[%s7] sm:$0xff] %vm7667, %v7666
  // Predicated region
  $region30: #{_lambda_.1} parent=0 // pred_check
    _
  $region31: #{_lambda_.1} parent=0 // pred_check_branch
    %7670 = sbr.rel (0) target = $region33
  $region32: #{_lambda_.1} parent=0 // pred_region
    _
  $region33: #{_lambda_.1} parent=0 // pred_fallthru
    _
  // Predicated region
  $region34: #{_lambda_.1} parent=0 // pred_check
    _
  $region35: #{_lambda_.1} parent=0 // pred_check_branch
    %7672 = sbr.rel (0) target = $region37
  $region36: #{_lambda_.1} parent=0 // pred_region
    _
  $region37: #{_lambda_.1} parent=0 // pred_fallthru
    _

</llo_original>
